<compile_context>
chip_gen: v7x
topology: tpu7x:2x2x1
jax: 0.10.0
libtpu: 0.0.40
codegen_flags: <defaults>
</compile_context>

<pallas_src>
import functools

import jax
import jax.numpy as jnp
from jax import lax
from jax.experimental import pallas as pl
from jax.experimental.pallas import tpu as pltpu

F32 = jnp.float32
BF16 = jnp.bfloat16

# ----------------------------- small config -----------------------------------
B = 2                 # batch
AUDIO_LEN = 320       # raw audio samples
CONV_DIMS = (16, 16, 16)
CONV_KERNELS = (10, 3, 2)
CONV_STRIDES = (5, 2, 2)
HIDDEN = 32           # roberta hidden (768 in the real model)
ATT_DIM = 16          # LAA attention dim
N_AGG = 2             # LAA produces 2 audio tokens (forward skips logits[:,1:3])
HEADS = 2
HEAD_DIM = HIDDEN // HEADS
FFN = 64
LAYERS = 2
VOCAB = 64            # 50265 in the real model
MAX_POS = 64
SEQ = 8               # masked_ids length
EPS = 1e-5
S_TOTAL = SEQ + N_AGG  # [CLS] + 2 audio tokens + remaining text tokens


def _conv_time_lens():
    t, lens = AUDIO_LEN, []
    for k, s in zip(CONV_KERNELS, CONV_STRIDES):
        t = (t - k) // s + 1
        lens.append(t)
    return tuple(lens)


T_CONV = _conv_time_lens()      # (63, 31, 15)


# ----------------------------- in-kernel helpers -------------------------------
def _mm(a, b):
    """MXU matmul: bf16 operands (weights already bf16), f32 accumulation."""
    return jnp.dot(a.astype(BF16), b.astype(BF16), preferred_element_type=F32)


def _mm_t(a, b):
    """(m, d) x (n, d) -> (m, n): contract the last dim of both operands."""
    return lax.dot_general(a.astype(BF16), b.astype(BF16),
                           dimension_numbers=(((1,), (1,)), ((), ())),
                           preferred_element_type=F32)


def _ln(x, g, b, eps=EPS):
    mu = jnp.mean(x, axis=-1, keepdims=True)
    d = x - mu
    var = jnp.mean(d * d, axis=-1, keepdims=True)
    return d * lax.rsqrt(var + eps) * g + b


def _softmax_last(x):
    m = jnp.max(x, axis=-1, keepdims=True)
    p = jnp.exp(x - m)
    return p / jnp.sum(p, axis=-1, keepdims=True)


def _gelu(x):
    # TODO(synk): PyTorch wav2vec2/RoBERTa use exact erf GELU; tanh approx here.
    return jax.nn.gelu(x, approximate=True)


# ----------------------------- kernel A: audio front-end -----------------------
def _frontend_kernel(audio_ref, w0_ref, w1_ref, w2_ref, gng_ref, gnb_ref,
                     fpg_ref, fpb_ref, fpw_ref, fpc_ref,
                     lw1_ref, lb1_ref, lw2_ref,
                     ca_ref, s0, s1, s2, *, batch, eps):
    """Conv stack + GroupNorm/GELU + feature projection + LAA, whole batch.

    Activations stay time-major (T, B*C); batch is folded into the lane dim via
    block-diagonal per-tap conv weights, so each conv layer is K strided-tap
    ref loads + K small matmuls with no im2col and no transposes."""

    def conv(src_ref, w_ref, ksz, stride, tout):
        acc = None
        for k in range(ksz):
            xk = src_ref[pl.ds(k, tout, stride=stride), :]   # (tout, B*Cin)
            y = _mm(xk, w_ref[k])                            # (tout, B*Cout)
            acc = y if acc is None else acc + y
        return acc

    # layer 0: conv -> GroupNorm(groups == channels, norm over time) -> GELU
    y0 = conv(audio_ref, w0_ref, CONV_KERNELS[0], CONV_STRIDES[0], T_CONV[0])
    mu = jnp.mean(y0, axis=0, keepdims=True)
    d = y0 - mu
    var = jnp.mean(d * d, axis=0, keepdims=True)
    s0[...] = _gelu(d * lax.rsqrt(var + eps) * gng_ref[...] + gnb_ref[...])

    # layers 1, 2: conv -> GELU
    s1[...] = _gelu(conv(s0, w1_ref, CONV_KERNELS[1], CONV_STRIDES[1], T_CONV[1]))
    s2[...] = _gelu(conv(s1, w2_ref, CONV_KERNELS[2], CONV_STRIDES[2], T_CONV[2]))

    # feature projection (LN + Linear) + LAA attentive pooling, per batch elem.
    c = CONV_DIMS[-1]
    for b in range(batch):                                   # static unroll (B=2)
        xb = s2[:, b * c:(b + 1) * c]                        # (T, C)
        xn = _ln(xb, fpg_ref[...], fpb_ref[...], eps)
        proj = _mm(xn, fpw_ref[...]) + fpc_ref[...]          # (T, HIDDEN)
        # TODO(synk): exact LightAttentiveAggregation internals are external
        # code; approximated with tanh-scored multi-query attentive pooling.
        hh = jnp.tanh(_mm(proj, lw1_ref[...]) + lb1_ref[...])  # (T, ATT)
        sc = _mm(hh, lw2_ref[...])                           # (T, N_AGG)
        m = jnp.max(sc, axis=0, keepdims=True)
        p = jnp.exp(sc - m)
        alpha = p / jnp.sum(p, axis=0, keepdims=True)        # softmax over time
        ca_ref[b] = lax.dot_general(alpha.astype(BF16), proj.astype(BF16),
                                    (((0,), (0,)), ((), ())),
                                    preferred_element_type=F32)  # (N_AGG, HIDDEN)


def audio_frontend(pk, audio):
    batch = audio.shape[0]
    audio_t = jnp.transpose(audio.astype(F32))               # (T0, B): time on sublanes
    kernel = functools.partial(_frontend_kernel, batch=batch, eps=EPS)
    return pl.pallas_call(
        kernel,
        out_shape=jax.ShapeDtypeStruct((batch, N_AGG, HIDDEN), F32),
        scratch_shapes=[pltpu.VMEM((T_CONV[0], batch * CONV_DIMS[0]), F32),
                        pltpu.VMEM((T_CONV[1], batch * CONV_DIMS[1]), F32),
                        pltpu.VMEM((T_CONV[2], batch * CONV_DIMS[2]), F32)],
    )(audio_t, pk["conv0_taps"], pk["conv1_taps"], pk["conv2_taps"],
      pk["gn_g"], pk["gn_b"], pk["fp_ln_g"], pk["fp_ln_b"], pk["fp_w"], pk["fp_b"],
      pk["laa_w1"], pk["laa_b1"], pk["laa_w2"])


# --------------------- kernel B: RoBERTa encoder + LM head ---------------------
def _encoder_kernel(x_ref, am_ref, pt_ref, eg_ref, eb_ref,
                    wq_ref, bq_ref, wk_ref, bk_ref, wv_ref, bv_ref,
                    wo_ref, bo_ref, g1_ref, c1_ref,
                    f1_ref, fb1_ref, f2_ref, fb2_ref, g2_ref, c2_ref,
                    dw_ref, db_ref, lg_ref, lb_ref, vw_ref, vb_ref,
                    out_ref, *, batch, layers, heads, scale, eps):
    """pos/type add + embedding LN + all transformer layers + LM head.

    Per-layer / per-head weights arrive stacked along a leading axis and are
    read with static indices, so there are no lane-offset slices of fused
    qkv / wo tensors inside the kernel."""
    pt = pt_ref[...]
    eg, eb = eg_ref[...], eb_ref[...]
    for b in range(batch):                                   # static unroll (B=2)
        h = _ln(x_ref[b] + pt, eg, eb, eps)                  # (s, HIDDEN)
        bias = (1.0 - am_ref[b]) * -1e9                      # (1, s) additive mask
        for l in range(layers):                              # static unroll
            acc = None
            for hh in range(heads):                          # static unroll
                i = l * heads + hh
                q = _mm(h, wq_ref[i]) + bq_ref[i]            # (s, hd), K=HIDDEN deep
                k = _mm(h, wk_ref[i]) + bk_ref[i]
                v = _mm(h, wv_ref[i]) + bv_ref[i]
                p = _softmax_last(_mm_t(q, k) * scale + bias)
                part = _mm(_mm(p, v), wo_ref[i])             # (s, HIDDEN)
                acc = part if acc is None else acc + part
            h1 = _ln(h + acc + bo_ref[l], g1_ref[l], c1_ref[l], eps)
            ff = _gelu(_mm(h1, f1_ref[l]) + fb1_ref[l])
            ff = _mm(ff, f2_ref[l]) + fb2_ref[l]
            h = _ln(h1 + ff, g2_ref[l], c2_ref[l], eps)
        # LM head: dense -> gelu -> LN -> decoder
        y = _gelu(_mm(h, dw_ref[...]) + db_ref[...])
        y = _ln(y, lg_ref[...], lb_ref[...], eps)
        out_ref[b] = (_mm(y, vw_ref[...]) + vb_ref[...]).astype(out_ref.dtype)


def roberta_masked_lm(pk, ca, masked_ids, attention_mask):
    batch = masked_ids.shape[0]
    word = pk["emb_word"][masked_ids]                        # (B, SEQ, H) gather = XLA glue
    embeds = jnp.concatenate([word[:, :1], ca, word[:, 1:]], axis=1)  # audio after [CLS]
    s = embeds.shape[1]
    am = attention_mask.astype(F32)
    am_full = jnp.concatenate(
        [am[:, :1], jnp.ones((batch, N_AGG), F32), am[:, 1:]], axis=1)[:, None, :]

    kernel = functools.partial(_encoder_kernel, batch=batch, layers=LAYERS,
                               heads=HEADS, scale=1.0 / (HEAD_DIM ** 0.5), eps=EPS)
    logits = pl.pallas_call(
        kernel,
        out_shape=jax.ShapeDtypeStruct((batch, s, VOCAB), F32),
    )(embeds, am_full, pk["pos_type"], pk["emb_ln_g"], pk["emb_ln_b"],
      pk["wq"], pk["bq"], pk["wk"], pk["bk"], pk["wv"], pk["bv"],
      pk["wo"], pk["bo"], pk["ln1_g"], pk["ln1_b"],
      pk["ffn_w1"], pk["ffn_b1"], pk["ffn_w2"], pk["ffn_b2"],
      pk["ln2_g"], pk["ln2_b"],
      pk["lm_dense_w"], pk["lm_dense_b"], pk["lm_ln_g"], pk["lm_ln_b"],
      pk["lm_dec_w"], pk["lm_dec_b"])
    return logits


# ----------------------------- forward ------------------------------------------
def teasel_forward(pk, input_audio, masked_ids, attention_mask, gt_unmasked_ids=None):
    ca = audio_frontend(pk, input_audio)                     # (B, N_AGG, HIDDEN)
    logits = roberta_masked_lm(pk, ca, masked_ids, attention_mask)
    loss = None
    if gt_unmasked_ids is not None:
        # loss on [CLS] logit + logits after the 2 audio tokens (matches torch ref).
        sel = jnp.concatenate([logits[:, :1, :], logits[:, 1 + N_AGG:, :]], axis=1)
        # TODO(synk): CrossEntropyLoss reduction kept in plain JAX (tiny glue).
        logp = jax.nn.log_softmax(sel.reshape(-1, VOCAB), axis=-1)
        labels = gt_unmasked_ids.reshape(-1)
        loss = -jnp.mean(jnp.take_along_axis(logp, labels[:, None], axis=1))
    return {"loss": loss, "logits": logits, "hidden_states": None, "attentions": None}


# ----------------------------- parameter init / packing -------------------------
def init_params(key):
    """PyTorch-like 'natural' parameter shapes."""
    keys = iter(jax.random.split(key, 64))
    nrm = lambda shape: 0.02 * jax.random.normal(next(keys), shape, dtype=F32)
    p = {}
    conv_w, cin = [], 1
    for cout, k in zip(CONV_DIMS, CONV_KERNELS):
        conv_w.append(nrm((cout, cin, k)))
        cin = cout
    p["conv_w"] = conv_w
    p["gn_gamma"] = jnp.ones((CONV_DIMS[0],), F32)
    p["gn_beta"] = jnp.zeros((CONV_DIMS[0],), F32)
    c = CONV_DIMS[-1]
    p["fp_ln_g"], p["fp_ln_b"] = jnp.ones((c,), F32), jnp.zeros((c,), F32)
    p["fp_w"], p["fp_b"] = nrm((c, HIDDEN)), jnp.zeros((HIDDEN,), F32)
    p["laa_w1"], p["laa_b1"] = nrm((HIDDEN, ATT_DIM)), jnp.zeros((ATT_DIM,), F32)
    p["laa_w2"] = nrm((ATT_DIM, N_AGG))
    p["emb_word"] = nrm((VOCAB, HIDDEN))
    p["emb_pos"] = nrm((MAX_POS, HIDDEN))
    p["emb_type"] = nrm((1, HIDDEN))
    p["emb_ln_g"], p["emb_ln_b"] = jnp.ones((HIDDEN,), F32), jnp.zeros((HIDDEN,), F32)
    layers = []
    for _ in range(LAYERS):
        layers.append({
            "wq": nrm((HIDDEN, HIDDEN)), "bq": jnp.zeros((HIDDEN,), F32),
            "wk": nrm((HIDDEN, HIDDEN)), "bk": jnp.zeros((HIDDEN,), F32),
            "wv": nrm((HIDDEN, HIDDEN)), "bv": jnp.zeros((HIDDEN,), F32),
            "wo": nrm((HIDDEN, HIDDEN)), "bo": jnp.zeros((HIDDEN,), F32),
            "ln1_g": jnp.ones((HIDDEN,), F32), "ln1_b": jnp.zeros((HIDDEN,), F32),
            "ffn_w1": nrm((HIDDEN, FFN)), "ffn_b1": jnp.zeros((FFN,), F32),
            "ffn_w2": nrm((FFN, HIDDEN)), "ffn_b2": jnp.zeros((HIDDEN,), F32),
            "ln2_g": jnp.ones((HIDDEN,), F32), "ln2_b": jnp.zeros((HIDDEN,), F32),
        })
    p["layers"] = layers
    p["lm_dense_w"], p["lm_dense_b"] = nrm((HIDDEN, HIDDEN)), jnp.zeros((HIDDEN,), F32)
    p["lm_ln_g"], p["lm_ln_b"] = jnp.ones((HIDDEN,), F32), jnp.zeros((HIDDEN,), F32)
    p["lm_dec_w"], p["lm_dec_b"] = nrm((HIDDEN, VOCAB)), jnp.zeros((VOCAB,), F32)
    return p


def pack_params(p, batch):
    """One-time repack (outside jit) into kernel-ready layouts: bf16 MXU weights,
    block-diagonal per-tap conv matrices (batch folded into lanes), per-head
    attention weights and per-layer stacks indexed statically inside kernels."""
    pk = {}
    eye = jnp.eye(batch, dtype=F32)

    def conv_taps(w):                                        # w: (Cout, Cin, K)
        taps = [jnp.kron(eye, w[:, :, k].T) for k in range(w.shape[2])]
        return jnp.stack(taps).astype(BF16)                  # (K, B*Cin, B*Cout)

    pk["conv0_taps"] = conv_taps(p["conv_w"][0])
    pk["conv1_taps"] = conv_taps(p["conv_w"][1])
    pk["conv2_taps"] = conv_taps(p["conv_w"][2])
    pk["gn_g"] = jnp.tile(p["gn_gamma"], batch)[None, :]     # (1, B*C0)
    pk["gn_b"] = jnp.tile(p["gn_beta"], batch)[None, :]
    pk["fp_ln_g"], pk["fp_ln_b"] = p["fp_ln_g"][None, :], p["fp_ln_b"][None, :]
    pk["fp_w"], pk["fp_b"] = p["fp_w"].astype(BF16), p["fp_b"][None, :]
    pk["laa_w1"], pk["laa_b1"] = p["laa_w1"].astype(BF16), p["laa_b1"][None, :]
    pk["laa_w2"] = p["laa_w2"].astype(BF16)

    pk["emb_word"] = p["emb_word"]
    # TODO(synk): RoBERTa pad-aware position ids approximated with a fixed +2
    # offset (exact when attention_mask is all ones, as in this harness).
    pk["pos_type"] = p["emb_pos"][2:2 + S_TOTAL] + p["emb_type"][0][None, :]
    pk["emb_ln_g"], pk["emb_ln_b"] = p["emb_ln_g"][None, :], p["emb_ln_b"][None, :]

    hd = HEAD_DIM
    wq, bq, wk, bk, wv, bv, wo = [], [], [], [], [], [], []
    bo, g1, c1, f1, fb1, f2, fb2, g2, c2 = [], [], [], [], [], [], [], [], []
    for lp in p["layers"]:
        for h in range(HEADS):
            sl = slice(h * hd, (h + 1) * hd)
            wq.append(lp["wq"][:, sl]); bq.append(lp["bq"][sl][None, :])
            wk.append(lp["wk"][:, sl]); bk.append(lp["bk"][sl][None, :])
            wv.append(lp["wv"][:, sl]); bv.append(lp["bv"][sl][None, :])
            wo.append(lp["wo"][sl, :])
        bo.append(lp["bo"][None, :])
        g1.append(lp["ln1_g"][None, :]); c1.append(lp["ln1_b"][None, :])
        f1.append(lp["ffn_w1"]); fb1.append(lp["ffn_b1"][None, :])
        f2.append(lp["ffn_w2"]); fb2.append(lp["ffn_b2"][None, :])
        g2.append(lp["ln2_g"][None, :]); c2.append(lp["ln2_b"][None, :])
    pk["wq"] = jnp.stack(wq).astype(BF16); pk["bq"] = jnp.stack(bq)
    pk["wk"] = jnp.stack(wk).astype(BF16); pk["bk"] = jnp.stack(bk)
    pk["wv"] = jnp.stack(wv).astype(BF16); pk["bv"] = jnp.stack(bv)
    pk["wo"] = jnp.stack(wo).astype(BF16); pk["bo"] = jnp.stack(bo)
    pk["ln1_g"] = jnp.stack(g1); pk["ln1_b"] = jnp.stack(c1)
    pk["ffn_w1"] = jnp.stack(f1).astype(BF16); pk["ffn_b1"] = jnp.stack(fb1)
    pk["ffn_w2"] = jnp.stack(f2).astype(BF16); pk["ffn_b2"] = jnp.stack(fb2)
    pk["ln2_g"] = jnp.stack(g2); pk["ln2_b"] = jnp.stack(c2)

    pk["lm_dense_w"] = p["lm_dense_w"].astype(BF16)
    pk["lm_dense_b"] = p["lm_dense_b"][None, :]
    pk["lm_ln_g"], pk["lm_ln_b"] = p["lm_ln_g"][None, :], p["lm_ln_b"][None, :]
    pk["lm_dec_w"] = p["lm_dec_w"].astype(BF16)
    pk["lm_dec_b"] = p["lm_dec_b"][None, :]
    return pk


# ----------------------------- main ---------------------------------------------
if __name__ == "__main__":
    key = jax.random.PRNGKey(0)
    pkey, akey, ikey, gkey = jax.random.split(key, 4)
    params = init_params(pkey)
    packed = pack_params(params, B)

    input_audio = jax.random.normal(akey, (B, AUDIO_LEN), dtype=F32)
    masked_ids = jax.random.randint(ikey, (B, SEQ), 0, VOCAB, dtype=jnp.int32)
    attention_mask = jnp.ones((B, SEQ), jnp.int32)
    gt_unmasked_ids = jax.random.randint(gkey, (B, SEQ), 0, VOCAB, dtype=jnp.int32)

    fwd = jax.jit(teasel_forward)
    out = fwd(packed, input_audio, masked_ids, attention_mask, gt_unmasked_ids)
    jax.block_until_ready(out)

    assert out["logits"].shape == (B, S_TOTAL, VOCAB)
    assert bool(jnp.isfinite(out["loss"]))
    print("KERNEL_OK")
</pallas_src>

<mosaic_0001>
module attributes {stable_mosaic.version = 11 : i64} {
  func.func @_frontend_kernel(%arg0: memref<320x2xf32, #tpu.memory_space<vmem>>, %arg1: memref<10x2x32xbf16, #tpu.memory_space<vmem>>, %arg2: memref<3x32x32xbf16, #tpu.memory_space<vmem>>, %arg3: memref<2x32x32xbf16, #tpu.memory_space<vmem>>, %arg4: memref<1x32xf32, #tpu.memory_space<vmem>>, %arg5: memref<1x32xf32, #tpu.memory_space<vmem>>, %arg6: memref<1x16xf32, #tpu.memory_space<vmem>>, %arg7: memref<1x16xf32, #tpu.memory_space<vmem>>, %arg8: memref<16x32xbf16, #tpu.memory_space<vmem>>, %arg9: memref<1x32xf32, #tpu.memory_space<vmem>>, %arg10: memref<32x16xbf16, #tpu.memory_space<vmem>>, %arg11: memref<1x16xf32, #tpu.memory_space<vmem>>, %arg12: memref<16x2xbf16, #tpu.memory_space<vmem>>, %arg13: memref<2x2x32xf32, #tpu.memory_space<vmem>>, %arg14: memref<63x32xf32, #tpu.memory_space<vmem>>, %arg15: memref<31x32xf32, #tpu.memory_space<vmem>>, %arg16: memref<15x32xf32, #tpu.memory_space<vmem>>) attributes {dimension_semantics = [], scalar_prefetch = 0 : i64, scratch_operands = 3 : i64, tpu.core_type = #tpu.core_type<tc>} {
    %c0 = arith.constant 0 : index
    %c0_0 = arith.constant 0 : index
    %0 = tpu.strided_load %arg0[%c0, %c0_0] {strides = array<i32: 5, 1>} : memref<320x2xf32, #tpu.memory_space<vmem>>, vector<63x2xf32>
    %c0_1 = arith.constant 0 : index
    %c0_2 = arith.constant 0 : index
    %c0_3 = arith.constant 0 : index
    %1 = vector.load %arg1[%c0_1, %c0_2, %c0_3] : memref<10x2x32xbf16, #tpu.memory_space<vmem>>, vector<1x2x32xbf16>
    %2 = vector.shape_cast %1 : vector<1x2x32xbf16> to vector<2x32xbf16>
    %3 = arith.truncf %0 : vector<63x2xf32> to vector<63x2xbf16>
    %cst = arith.constant dense<0.000000e+00> : vector<63x32xf32>
    %4 = tpu.matmul %3, %2, %cst {dimension_numbers = #tpu.dot_dimension_numbers<[1], [0], [0], [1], [0, 0, 1, 1], [], []>} : vector<63x2xbf16>, vector<2x32xbf16>, vector<63x32xf32> -> vector<63x32xf32>
    %c1 = arith.constant 1 : index
    %c0_4 = arith.constant 0 : index
    %5 = tpu.strided_load %arg0[%c1, %c0_4] {strides = array<i32: 5, 1>} : memref<320x2xf32, #tpu.memory_space<vmem>>, vector<63x2xf32>
    %c1_5 = arith.constant 1 : index
    %c0_6 = arith.constant 0 : index
    %c0_7 = arith.constant 0 : index
    %6 = vector.load %arg1[%c1_5, %c0_6, %c0_7] : memref<10x2x32xbf16, #tpu.memory_space<vmem>>, vector<1x2x32xbf16>
    %7 = vector.shape_cast %6 : vector<1x2x32xbf16> to vector<2x32xbf16>
    %8 = arith.truncf %5 : vector<63x2xf32> to vector<63x2xbf16>
    %cst_8 = arith.constant dense<0.000000e+00> : vector<63x32xf32>
    %9 = tpu.matmul %8, %7, %cst_8 {dimension_numbers = #tpu.dot_dimension_numbers<[1], [0], [0], [1], [0, 0, 1, 1], [], []>} : vector<63x2xbf16>, vector<2x32xbf16>, vector<63x32xf32> -> vector<63x32xf32>
    %10 = arith.addf %4, %9 : vector<63x32xf32>
    %c2 = arith.constant 2 : index
    %c0_9 = arith.constant 0 : index
    %11 = tpu.strided_load %arg0[%c2, %c0_9] {strides = array<i32: 5, 1>} : memref<320x2xf32, #tpu.memory_space<vmem>>, vector<63x2xf32>
    %c2_10 = arith.constant 2 : index
    %c0_11 = arith.constant 0 : index
    %c0_12 = arith.constant 0 : index
    %12 = vector.load %arg1[%c2_10, %c0_11, %c0_12] : memref<10x2x32xbf16, #tpu.memory_space<vmem>>, vector<1x2x32xbf16>
    %13 = vector.shape_cast %12 : vector<1x2x32xbf16> to vector<2x32xbf16>
    %14 = arith.truncf %11 : vector<63x2xf32> to vector<63x2xbf16>
    %cst_13 = arith.constant dense<0.000000e+00> : vector<63x32xf32>
    %15 = tpu.matmul %14, %13, %cst_13 {dimension_numbers = #tpu.dot_dimension_numbers<[1], [0], [0], [1], [0, 0, 1, 1], [], []>} : vector<63x2xbf16>, vector<2x32xbf16>, vector<63x32xf32> -> vector<63x32xf32>
    %16 = arith.addf %10, %15 : vector<63x32xf32>
    %c3 = arith.constant 3 : index
    %c0_14 = arith.constant 0 : index
    %17 = tpu.strided_load %arg0[%c3, %c0_14] {strides = array<i32: 5, 1>} : memref<320x2xf32, #tpu.memory_space<vmem>>, vector<63x2xf32>
    %c3_15 = arith.constant 3 : index
    %c0_16 = arith.constant 0 : index
    %c0_17 = arith.constant 0 : index
    %18 = vector.load %arg1[%c3_15, %c0_16, %c0_17] : memref<10x2x32xbf16, #tpu.memory_space<vmem>>, vector<1x2x32xbf16>
    %19 = vector.shape_cast %18 : vector<1x2x32xbf16> to vector<2x32xbf16>
    %20 = arith.truncf %17 : vector<63x2xf32> to vector<63x2xbf16>
    %cst_18 = arith.constant dense<0.000000e+00> : vector<63x32xf32>
    %21 = tpu.matmul %20, %19, %cst_18 {dimension_numbers = #tpu.dot_dimension_numbers<[1], [0], [0], [1], [0, 0, 1, 1], [], []>} : vector<63x2xbf16>, vector<2x32xbf16>, vector<63x32xf32> -> vector<63x32xf32>
    %22 = arith.addf %16, %21 : vector<63x32xf32>
    %c4 = arith.constant 4 : index
    %c0_19 = arith.constant 0 : index
    %23 = tpu.strided_load %arg0[%c4, %c0_19] {strides = array<i32: 5, 1>} : memref<320x2xf32, #tpu.memory_space<vmem>>, vector<63x2xf32>
    %c4_20 = arith.constant 4 : index
    %c0_21 = arith.constant 0 : index
    %c0_22 = arith.constant 0 : index
    %24 = vector.load %arg1[%c4_20, %c0_21, %c0_22] : memref<10x2x32xbf16, #tpu.memory_space<vmem>>, vector<1x2x32xbf16>
    %25 = vector.shape_cast %24 : vector<1x2x32xbf16> to vector<2x32xbf16>
    %26 = arith.truncf %23 : vector<63x2xf32> to vector<63x2xbf16>
    %cst_23 = arith.constant dense<0.000000e+00> : vector<63x32xf32>
    %27 = tpu.matmul %26, %25, %cst_23 {dimension_numbers = #tpu.dot_dimension_numbers<[1], [0], [0], [1], [0, 0, 1, 1], [], []>} : vector<63x2xbf16>, vector<2x32xbf16>, vector<63x32xf32> -> vector<63x32xf32>
    %28 = arith.addf %22, %27 : vector<63x32xf32>
    %c5 = arith.constant 5 : index
    %c0_24 = arith.constant 0 : index
    %29 = tpu.strided_load %arg0[%c5, %c0_24] {strides = array<i32: 5, 1>} : memref<320x2xf32, #tpu.memory_space<vmem>>, vector<63x2xf32>
    %c5_25 = arith.constant 5 : index
    %c0_26 = arith.constant 0 : index
    %c0_27 = arith.constant 0 : index
    %30 = vector.load %arg1[%c5_25, %c0_26, %c0_27] : memref<10x2x32xbf16, #tpu.memory_space<vmem>>, vector<1x2x32xbf16>
    %31 = vector.shape_cast %30 : vector<1x2x32xbf16> to vector<2x32xbf16>
    %32 = arith.truncf %29 : vector<63x2xf32> to vector<63x2xbf16>
    %cst_28 = arith.constant dense<0.000000e+00> : vector<63x32xf32>
    %33 = tpu.matmul %32, %31, %cst_28 {dimension_numbers = #tpu.dot_dimension_numbers<[1], [0], [0], [1], [0, 0, 1, 1], [], []>} : vector<63x2xbf16>, vector<2x32xbf16>, vector<63x32xf32> -> vector<63x32xf32>
    %34 = arith.addf %28, %33 : vector<63x32xf32>
    %c6 = arith.constant 6 : index
    %c0_29 = arith.constant 0 : index
    %35 = tpu.strided_load %arg0[%c6, %c0_29] {strides = array<i32: 5, 1>} : memref<320x2xf32, #tpu.memory_space<vmem>>, vector<63x2xf32>
    %c6_30 = arith.constant 6 : index
    %c0_31 = arith.constant 0 : index
    %c0_32 = arith.constant 0 : index
    %36 = vector.load %arg1[%c6_30, %c0_31, %c0_32] : memref<10x2x32xbf16, #tpu.memory_space<vmem>>, vector<1x2x32xbf16>
    %37 = vector.shape_cast %36 : vector<1x2x32xbf16> to vector<2x32xbf16>
    %38 = arith.truncf %35 : vector<63x2xf32> to vector<63x2xbf16>
    %cst_33 = arith.constant dense<0.000000e+00> : vector<63x32xf32>
    %39 = tpu.matmul %38, %37, %cst_33 {dimension_numbers = #tpu.dot_dimension_numbers<[1], [0], [0], [1], [0, 0, 1, 1], [], []>} : vector<63x2xbf16>, vector<2x32xbf16>, vector<63x32xf32> -> vector<63x32xf32>
    %40 = arith.addf %34, %39 : vector<63x32xf32>
    %c7 = arith.constant 7 : index
    %c0_34 = arith.constant 0 : index
    %41 = tpu.strided_load %arg0[%c7, %c0_34] {strides = array<i32: 5, 1>} : memref<320x2xf32, #tpu.memory_space<vmem>>, vector<63x2xf32>
    %c7_35 = arith.constant 7 : index
    %c0_36 = arith.constant 0 : index
    %c0_37 = arith.constant 0 : index
    %42 = vector.load %arg1[%c7_35, %c0_36, %c0_37] : memref<10x2x32xbf16, #tpu.memory_space<vmem>>, vector<1x2x32xbf16>
    %43 = vector.shape_cast %42 : vector<1x2x32xbf16> to vector<2x32xbf16>
    %44 = arith.truncf %41 : vector<63x2xf32> to vector<63x2xbf16>
    %cst_38 = arith.constant dense<0.000000e+00> : vector<63x32xf32>
    %45 = tpu.matmul %44, %43, %cst_38 {dimension_numbers = #tpu.dot_dimension_numbers<[1], [0], [0], [1], [0, 0, 1, 1], [], []>} : vector<63x2xbf16>, vector<2x32xbf16>, vector<63x32xf32> -> vector<63x32xf32>
    %46 = arith.addf %40, %45 : vector<63x32xf32>
    %c8 = arith.constant 8 : index
    %c0_39 = arith.constant 0 : index
    %47 = tpu.strided_load %arg0[%c8, %c0_39] {strides = array<i32: 5, 1>} : memref<320x2xf32, #tpu.memory_space<vmem>>, vector<63x2xf32>
    %c8_40 = arith.constant 8 : index
    %c0_41 = arith.constant 0 : index
    %c0_42 = arith.constant 0 : index
    %48 = vector.load %arg1[%c8_40, %c0_41, %c0_42] : memref<10x2x32xbf16, #tpu.memory_space<vmem>>, vector<1x2x32xbf16>
    %49 = vector.shape_cast %48 : vector<1x2x32xbf16> to vector<2x32xbf16>
    %50 = arith.truncf %47 : vector<63x2xf32> to vector<63x2xbf16>
    %cst_43 = arith.constant dense<0.000000e+00> : vector<63x32xf32>
    %51 = tpu.matmul %50, %49, %cst_43 {dimension_numbers = #tpu.dot_dimension_numbers<[1], [0], [0], [1], [0, 0, 1, 1], [], []>} : vector<63x2xbf16>, vector<2x32xbf16>, vector<63x32xf32> -> vector<63x32xf32>
    %52 = arith.addf %46, %51 : vector<63x32xf32>
    %c9 = arith.constant 9 : index
    %c0_44 = arith.constant 0 : index
    %53 = tpu.strided_load %arg0[%c9, %c0_44] {strides = array<i32: 5, 1>} : memref<320x2xf32, #tpu.memory_space<vmem>>, vector<63x2xf32>
    %c9_45 = arith.constant 9 : index
    %c0_46 = arith.constant 0 : index
    %c0_47 = arith.constant 0 : index
    %54 = vector.load %arg1[%c9_45, %c0_46, %c0_47] : memref<10x2x32xbf16, #tpu.memory_space<vmem>>, vector<1x2x32xbf16>
    %55 = vector.shape_cast %54 : vector<1x2x32xbf16> to vector<2x32xbf16>
    %56 = arith.truncf %53 : vector<63x2xf32> to vector<63x2xbf16>
    %cst_48 = arith.constant dense<0.000000e+00> : vector<63x32xf32>
    %57 = tpu.matmul %56, %55, %cst_48 {dimension_numbers = #tpu.dot_dimension_numbers<[1], [0], [0], [1], [0, 0, 1, 1], [], []>} : vector<63x2xbf16>, vector<2x32xbf16>, vector<63x32xf32> -> vector<63x32xf32>
    %58 = arith.addf %52, %57 : vector<63x32xf32>
    %cst_49 = arith.constant dense<0.000000e+00> : vector<32xf32>
    %59 = vector.multi_reduction <add>, %58, %cst_49 [0] : vector<63x32xf32> to vector<32xf32>
    %60 = vector.shape_cast %59 : vector<32xf32> to vector<1x32xf32>
    %cst_50 = arith.constant 6.300000e+01 : f32
    %61 = vector.broadcast %cst_50 : f32 to vector<1x32xf32>
    %62 = arith.divf %60, %61 : vector<1x32xf32>
    %63 = vector.broadcast %62 : vector<1x32xf32> to vector<63x32xf32>
    %64 = arith.subf %58, %63 : vector<63x32xf32>
    %65 = arith.mulf %64, %64 : vector<63x32xf32>
    %cst_51 = arith.constant dense<0.000000e+00> : vector<32xf32>
    %66 = vector.multi_reduction <add>, %65, %cst_51 [0] : vector<63x32xf32> to vector<32xf32>
    %67 = vector.shape_cast %66 : vector<32xf32> to vector<1x32xf32>
    %cst_52 = arith.constant 6.300000e+01 : f32
    %68 = vector.broadcast %cst_52 : f32 to vector<1x32xf32>
    %69 = arith.divf %67, %68 : vector<1x32xf32>
    %cst_53 = arith.constant 9.99999974E-6 : f32
    %70 = vector.broadcast %cst_53 : f32 to vector<1x32xf32>
    %71 = arith.addf %69, %70 : vector<1x32xf32>
    %72 = math.rsqrt %71 : vector<1x32xf32>
    %73 = vector.broadcast %72 : vector<1x32xf32> to vector<63x32xf32>
    %74 = arith.mulf %64, %73 : vector<63x32xf32>
    %c0_54 = arith.constant 0 : index
    %c0_55 = arith.constant 0 : index
    %75 = vector.load %arg4[%c0_54, %c0_55] : memref<1x32xf32, #tpu.memory_space<vmem>>, vector<1x32xf32>
    %76 = vector.broadcast %75 : vector<1x32xf32> to vector<63x32xf32>
    %77 = arith.mulf %74, %76 : vector<63x32xf32>
    %c0_56 = arith.constant 0 : index
    %c0_57 = arith.constant 0 : index
    %78 = vector.load %arg5[%c0_56, %c0_57] : memref<1x32xf32, #tpu.memory_space<vmem>>, vector<1x32xf32>
    %79 = vector.broadcast %78 : vector<1x32xf32> to vector<63x32xf32>
    %80 = arith.addf %77, %79 : vector<63x32xf32>
    %81 = arith.mulf %80, %80 : vector<63x32xf32>
    %82 = arith.mulf %80, %81 : vector<63x32xf32>
    %cst_58 = arith.constant 4.471500e-02 : f32
    %83 = vector.broadcast %cst_58 : f32 to vector<63x32xf32>
    %84 = arith.mulf %83, %82 : vector<63x32xf32>
    %85 = arith.addf %80, %84 : vector<63x32xf32>
    %cst_59 = arith.constant 0.797884583 : f32
    %86 = vector.broadcast %cst_59 : f32 to vector<63x32xf32>
    %87 = arith.mulf %86, %85 : vector<63x32xf32>
    %88 = math.tanh %87 : vector<63x32xf32>
    %cst_60 = arith.constant 1.000000e+00 : f32
    %89 = vector.broadcast %cst_60 : f32 to vector<63x32xf32>
    %90 = arith.addf %89, %88 : vector<63x32xf32>
    %cst_61 = arith.constant 5.000000e-01 : f32
    %91 = vector.broadcast %cst_61 : f32 to vector<63x32xf32>
    %92 = arith.mulf %91, %90 : vector<63x32xf32>
    %93 = arith.mulf %80, %92 : vector<63x32xf32>
    %c0_62 = arith.constant 0 : index
    %c0_63 = arith.constant 0 : index
    %94 = vector.load %arg14[%c0_62, %c0_63] : memref<63x32xf32, #tpu.memory_space<vmem>>, vector<63x32xf32>
    tpu.vector_store %arg14[%c0_62, %c0_63], %93 {strides = array<i32>} : memref<63x32xf32, #tpu.memory_space<vmem>>, vector<63x32xf32>,
    %c0_64 = arith.constant 0 : index
    %c0_65 = arith.constant 0 : index
    %95 = tpu.strided_load %arg14[%c0_64, %c0_65] {strides = array<i32: 2, 1>} : memref<63x32xf32, #tpu.memory_space<vmem>>, vector<31x32xf32>
    %c0_66 = arith.constant 0 : index
    %c0_67 = arith.constant 0 : index
    %c0_68 = arith.constant 0 : index
    %96 = vector.load %arg2[%c0_66, %c0_67, %c0_68] : memref<3x32x32xbf16, #tpu.memory_space<vmem>>, vector<1x32x32xbf16>
    %97 = vector.shape_cast %96 : vector<1x32x32xbf16> to vector<32x32xbf16>
    %98 = arith.truncf %95 : vector<31x32xf32> to vector<31x32xbf16>
    %cst_69 = arith.constant dense<0.000000e+00> : vector<31x32xf32>
    %99 = tpu.matmul %98, %97, %cst_69 {dimension_numbers = #tpu.dot_dimension_numbers<[1], [0], [0], [1], [0, 0, 1, 1], [], []>} : vector<31x32xbf16>, vector<32x32xbf16>, vector<31x32xf32> -> vector<31x32xf32>
    %c1_70 = arith.constant 1 : index
    %c0_71 = arith.constant 0 : index
    %100 = tpu.strided_load %arg14[%c1_70, %c0_71] {strides = array<i32: 2, 1>} : memref<63x32xf32, #tpu.memory_space<vmem>>, vector<31x32xf32>
    %c1_72 = arith.constant 1 : index
    %c0_73 = arith.constant 0 : index
    %c0_74 = arith.constant 0 : index
    %101 = vector.load %arg2[%c1_72, %c0_73, %c0_74] : memref<3x32x32xbf16, #tpu.memory_space<vmem>>, vector<1x32x32xbf16>
    %102 = vector.shape_cast %101 : vector<1x32x32xbf16> to vector<32x32xbf16>
    %103 = arith.truncf %100 : vector<31x32xf32> to vector<31x32xbf16>
    %cst_75 = arith.constant dense<0.000000e+00> : vector<31x32xf32>
    %104 = tpu.matmul %103, %102, %cst_75 {dimension_numbers = #tpu.dot_dimension_numbers<[1], [0], [0], [1], [0, 0, 1, 1], [], []>} : vector<31x32xbf16>, vector<32x32xbf16>, vector<31x32xf32> -> vector<31x32xf32>
    %105 = arith.addf %99, %104 : vector<31x32xf32>
    %c2_76 = arith.constant 2 : index
    %c0_77 = arith.constant 0 : index
    %106 = tpu.strided_load %arg14[%c2_76, %c0_77] {strides = array<i32: 2, 1>} : memref<63x32xf32, #tpu.memory_space<vmem>>, vector<31x32xf32>
    %c2_78 = arith.constant 2 : index
    %c0_79 = arith.constant 0 : index
    %c0_80 = arith.constant 0 : index
    %107 = vector.load %arg2[%c2_78, %c0_79, %c0_80] : memref<3x32x32xbf16, #tpu.memory_space<vmem>>, vector<1x32x32xbf16>
    %108 = vector.shape_cast %107 : vector<1x32x32xbf16> to vector<32x32xbf16>
    %109 = arith.truncf %106 : vector<31x32xf32> to vector<31x32xbf16>
    %cst_81 = arith.constant dense<0.000000e+00> : vector<31x32xf32>
    %110 = tpu.matmul %109, %108, %cst_81 {dimension_numbers = #tpu.dot_dimension_numbers<[1], [0], [0], [1], [0, 0, 1, 1], [], []>} : vector<31x32xbf16>, vector<32x32xbf16>, vector<31x32xf32> -> vector<31x32xf32>
    %111 = arith.addf %105, %110 : vector<31x32xf32>
    %112 = arith.mulf %111, %111 : vector<31x32xf32>
    %113 = arith.mulf %111, %112 : vector<31x32xf32>
    %cst_82 = arith.constant 4.471500e-02 : f32
    %114 = vector.broadcast %cst_82 : f32 to vector<31x32xf32>
    %115 = arith.mulf %114, %113 : vector<31x32xf32>
    %116 = arith.addf %111, %115 : vector<31x32xf32>
    %cst_83 = arith.constant 0.797884583 : f32
    %117 = vector.broadcast %cst_83 : f32 to vector<31x32xf32>
    %118 = arith.mulf %117, %116 : vector<31x32xf32>
    %119 = math.tanh %118 : vector<31x32xf32>
    %cst_84 = arith.constant 1.000000e+00 : f32
    %120 = vector.broadcast %cst_84 : f32 to vector<31x32xf32>
    %121 = arith.addf %120, %119 : vector<31x32xf32>
    %cst_85 = arith.constant 5.000000e-01 : f32
    %122 = vector.broadcast %cst_85 : f32 to vector<31x32xf32>
    %123 = arith.mulf %122, %121 : vector<31x32xf32>
    %124 = arith.mulf %111, %123 : vector<31x32xf32>
    %c0_86 = arith.constant 0 : index
    %c0_87 = arith.constant 0 : index
    %125 = vector.load %arg15[%c0_86, %c0_87] : memref<31x32xf32, #tpu.memory_space<vmem>>, vector<31x32xf32>
    tpu.vector_store %arg15[%c0_86, %c0_87], %124 {strides = array<i32>} : memref<31x32xf32, #tpu.memory_space<vmem>>, vector<31x32xf32>,
    %c0_88 = arith.constant 0 : index
    %c0_89 = arith.constant 0 : index
    %126 = tpu.strided_load %arg15[%c0_88, %c0_89] {strides = array<i32: 2, 1>} : memref<31x32xf32, #tpu.memory_space<vmem>>, vector<15x32xf32>
    %c0_90 = arith.constant 0 : index
    %c0_91 = arith.constant 0 : index
    %c0_92 = arith.constant 0 : index
    %127 = vector.load %arg3[%c0_90, %c0_91, %c0_92] : memref<2x32x32xbf16, #tpu.memory_space<vmem>>, vector<1x32x32xbf16>
    %128 = vector.shape_cast %127 : vector<1x32x32xbf16> to vector<32x32xbf16>
    %129 = arith.truncf %126 : vector<15x32xf32> to vector<15x32xbf16>
    %cst_93 = arith.constant dense<0.000000e+00> : vector<15x32xf32>
    %130 = tpu.matmul %129, %128, %cst_93 {dimension_numbers = #tpu.dot_dimension_numbers<[1], [0], [0], [1], [0, 0, 1, 1], [], []>} : vector<15x32xbf16>, vector<32x32xbf16>, vector<15x32xf32> -> vector<15x32xf32>
    %c1_94 = arith.constant 1 : index
    %c0_95 = arith.constant 0 : index
    %131 = tpu.strided_load %arg15[%c1_94, %c0_95] {strides = array<i32: 2, 1>} : memref<31x32xf32, #tpu.memory_space<vmem>>, vector<15x32xf32>
    %c1_96 = arith.constant 1 : index
    %c0_97 = arith.constant 0 : index
    %c0_98 = arith.constant 0 : index
    %132 = vector.load %arg3[%c1_96, %c0_97, %c0_98] : memref<2x32x32xbf16, #tpu.memory_space<vmem>>, vector<1x32x32xbf16>
    %133 = vector.shape_cast %132 : vector<1x32x32xbf16> to vector<32x32xbf16>
    %134 = arith.truncf %131 : vector<15x32xf32> to vector<15x32xbf16>
    %cst_99 = arith.constant dense<0.000000e+00> : vector<15x32xf32>
    %135 = tpu.matmul %134, %133, %cst_99 {dimension_numbers = #tpu.dot_dimension_numbers<[1], [0], [0], [1], [0, 0, 1, 1], [], []>} : vector<15x32xbf16>, vector<32x32xbf16>, vector<15x32xf32> -> vector<15x32xf32>
    %136 = arith.addf %130, %135 : vector<15x32xf32>
    %137 = arith.mulf %136, %136 : vector<15x32xf32>
    %138 = arith.mulf %136, %137 : vector<15x32xf32>
    %cst_100 = arith.constant 4.471500e-02 : f32
    %139 = vector.broadcast %cst_100 : f32 to vector<15x32xf32>
    %140 = arith.mulf %139, %138 : vector<15x32xf32>
    %141 = arith.addf %136, %140 : vector<15x32xf32>
    %cst_101 = arith.constant 0.797884583 : f32
    %142 = vector.broadcast %cst_101 : f32 to vector<15x32xf32>
    %143 = arith.mulf %142, %141 : vector<15x32xf32>
    %144 = math.tanh %143 : vector<15x32xf32>
    %cst_102 = arith.constant 1.000000e+00 : f32
    %145 = vector.broadcast %cst_102 : f32 to vector<15x32xf32>
    %146 = arith.addf %145, %144 : vector<15x32xf32>
    %cst_103 = arith.constant 5.000000e-01 : f32
    %147 = vector.broadcast %cst_103 : f32 to vector<15x32xf32>
    %148 = arith.mulf %147, %146 : vector<15x32xf32>
    %149 = arith.mulf %136, %148 : vector<15x32xf32>
    %c0_104 = arith.constant 0 : index
    %c0_105 = arith.constant 0 : index
    %150 = vector.load %arg16[%c0_104, %c0_105] : memref<15x32xf32, #tpu.memory_space<vmem>>, vector<15x32xf32>
    tpu.vector_store %arg16[%c0_104, %c0_105], %149 {strides = array<i32>} : memref<15x32xf32, #tpu.memory_space<vmem>>, vector<15x32xf32>,
    %c0_106 = arith.constant 0 : index
    %c0_107 = arith.constant 0 : index
    %151 = vector.load %arg16[%c0_106, %c0_107] : memref<15x32xf32, #tpu.memory_space<vmem>>, vector<15x16xf32>
    %c0_108 = arith.constant 0 : index
    %c0_109 = arith.constant 0 : index
    %152 = vector.load %arg6[%c0_108, %c0_109] : memref<1x16xf32, #tpu.memory_space<vmem>>, vector<1x16xf32>
    %c0_110 = arith.constant 0 : index
    %c0_111 = arith.constant 0 : index
    %153 = vector.load %arg7[%c0_110, %c0_111] : memref<1x16xf32, #tpu.memory_space<vmem>>, vector<1x16xf32>
    %cst_112 = arith.constant dense<0.000000e+00> : vector<15xf32>
    %154 = vector.multi_reduction <add>, %151, %cst_112 [1] : vector<15x16xf32> to vector<15xf32>
    %155 = vector.shape_cast %154 : vector<15xf32> to vector<15x1xf32>
    %cst_113 = arith.constant 1.600000e+01 : f32
    %156 = vector.broadcast %cst_113 : f32 to vector<15x1xf32>
    %157 = arith.divf %155, %156 : vector<15x1xf32>
    %158 = vector.broadcast %157 : vector<15x1xf32> to vector<15x16xf32>
    %159 = arith.subf %151, %158 : vector<15x16xf32>
    %160 = arith.mulf %159, %159 : vector<15x16xf32>
    %cst_114 = arith.constant dense<0.000000e+00> : vector<15xf32>
    %161 = vector.multi_reduction <add>, %160, %cst_114 [1] : vector<15x16xf32> to vector<15xf32>
    %162 = vector.shape_cast %161 : vector<15xf32> to vector<15x1xf32>
    %cst_115 = arith.constant 1.600000e+01 : f32
    %163 = vector.broadcast %cst_115 : f32 to vector<15x1xf32>
    %164 = arith.divf %162, %163 : vector<15x1xf32>
    %cst_116 = arith.constant 9.99999974E-6 : f32
    %165 = vector.broadcast %cst_116 : f32 to vector<15x1xf32>
    %166 = arith.addf %164, %165 : vector<15x1xf32>
    %167 = math.rsqrt %166 : vector<15x1xf32>
    %168 = vector.broadcast %167 : vector<15x1xf32> to vector<15x16xf32>
    %169 = arith.mulf %159, %168 : vector<15x16xf32>
    %170 = vector.broadcast %152 : vector<1x16xf32> to vector<15x16xf32>
    %171 = arith.mulf %169, %170 : vector<15x16xf32>
    %172 = vector.broadcast %153 : vector<1x16xf32> to vector<15x16xf32>
    %173 = arith.addf %171, %172 : vector<15x16xf32>
    %c0_117 = arith.constant 0 : index
    %c0_118 = arith.constant 0 : index
    %174 = vector.load %arg8[%c0_117, %c0_118] : memref<16x32xbf16, #tpu.memory_space<vmem>>, vector<16x32xbf16>
    %175 = arith.truncf %173 : vector<15x16xf32> to vector<15x16xbf16>
    %cst_119 = arith.constant dense<0.000000e+00> : vector<15x32xf32>
    %176 = tpu.matmul %175, %174, %cst_119 {dimension_numbers = #tpu.dot_dimension_numbers<[1], [0], [0], [1], [0, 0, 1, 1], [], []>} : vector<15x16xbf16>, vector<16x32xbf16>, vector<15x32xf32> -> vector<15x32xf32>
    %c0_120 = arith.constant 0 : index
    %c0_121 = arith.constant 0 : index
    %177 = vector.load %arg9[%c0_120, %c0_121] : memref<1x32xf32, #tpu.memory_space<vmem>>, vector<1x32xf32>
    %178 = vector.broadcast %177 : vector<1x32xf32> to vector<15x32xf32>
    %179 = arith.addf %176, %178 : vector<15x32xf32>
    %c0_122 = arith.constant 0 : index
    %c0_123 = arith.constant 0 : index
    %180 = vector.load %arg10[%c0_122, %c0_123] : memref<32x16xbf16, #tpu.memory_space<vmem>>, vector<32x16xbf16>
    %181 = arith.truncf %179 : vector<15x32xf32> to vector<15x32xbf16>
    %cst_124 = arith.constant dense<0.000000e+00> : vector<15x16xf32>
    %182 = tpu.matmul %181, %180, %cst_124 {dimension_numbers = #tpu.dot_dimension_numbers<[1], [0], [0], [1], [0, 0, 1, 1], [], []>} : vector<15x32xbf16>, vector<32x16xbf16>, vector<15x16xf32> -> vector<15x16xf32>
    %c0_125 = arith.constant 0 : index
    %c0_126 = arith.constant 0 : index
    %183 = vector.load %arg11[%c0_125, %c0_126] : memref<1x16xf32, #tpu.memory_space<vmem>>, vector<1x16xf32>
    %184 = vector.broadcast %183 : vector<1x16xf32> to vector<15x16xf32>
    %185 = arith.addf %182, %184 : vector<15x16xf32>
    %186 = math.tanh %185 : vector<15x16xf32>
    %c0_127 = arith.constant 0 : index
    %c0_128 = arith.constant 0 : index
    %187 = vector.load %arg12[%c0_127, %c0_128] : memref<16x2xbf16, #tpu.memory_space<vmem>>, vector<16x2xbf16>
    %188 = arith.truncf %186 : vector<15x16xf32> to vector<15x16xbf16>
    %cst_129 = arith.constant dense<0.000000e+00> : vector<15x2xf32>
    %189 = tpu.matmul %188, %187, %cst_129 {dimension_numbers = #tpu.dot_dimension_numbers<[1], [0], [0], [1], [0, 0, 1, 1], [], []>} : vector<15x16xbf16>, vector<16x2xbf16>, vector<15x2xf32> -> vector<15x2xf32>
    %cst_130 = arith.constant dense<0xFF800000> : vector<2xf32>
    %190 = vector.multi_reduction <maximumf>, %189, %cst_130 [0] : vector<15x2xf32> to vector<2xf32>
    %191 = vector.shape_cast %190 : vector<2xf32> to vector<1x2xf32>
    %192 = vector.broadcast %191 : vector<1x2xf32> to vector<15x2xf32>
    %193 = arith.subf %189, %192 : vector<15x2xf32>
    %194 = math.exp %193 : vector<15x2xf32>
    %cst_131 = arith.constant dense<0.000000e+00> : vector<2xf32>
    %195 = vector.multi_reduction <add>, %194, %cst_131 [0] : vector<15x2xf32> to vector<2xf32>
    %196 = vector.shape_cast %195 : vector<2xf32> to vector<1x2xf32>
    %197 = vector.broadcast %196 : vector<1x2xf32> to vector<15x2xf32>
    %198 = arith.divf %194, %197 : vector<15x2xf32>
    %199 = arith.truncf %198 : vector<15x2xf32> to vector<15x2xbf16>
    %200 = arith.truncf %179 : vector<15x32xf32> to vector<15x32xbf16>
    %cst_132 = arith.constant dense<0.000000e+00> : vector<2x32xf32>
    %201 = tpu.matmul %199, %200, %cst_132 {dimension_numbers = #tpu.dot_dimension_numbers<[0], [0], [1], [1], [0, 1, 1, 1], [], []>} : vector<15x2xbf16>, vector<15x32xbf16>, vector<2x32xf32> -> vector<2x32xf32>
    %c0_133 = arith.constant 0 : index
    %c0_134 = arith.constant 0 : index
    %c0_135 = arith.constant 0 : index
    %202 = vector.load %arg13[%c0_133, %c0_134, %c0_135] : memref<2x2x32xf32, #tpu.memory_space<vmem>>, vector<1x2x32xf32>
    %203 = vector.shape_cast %202 : vector<1x2x32xf32> to vector<2x32xf32>
    %204 = vector.shape_cast %201 : vector<2x32xf32> to vector<1x2x32xf32>
    tpu.vector_store %arg13[%c0_133, %c0_134, %c0_135], %204 {strides = array<i32>} : memref<2x2x32xf32, #tpu.memory_space<vmem>>, vector<1x2x32xf32>,
    %c0_136 = arith.constant 0 : index
    %c16 = arith.constant 16 : index
    %205 = vector.load %arg16[%c0_136, %c16] : memref<15x32xf32, #tpu.memory_space<vmem>>, vector<15x16xf32>
    %c0_137 = arith.constant 0 : index
    %c0_138 = arith.constant 0 : index
    %206 = vector.load %arg6[%c0_137, %c0_138] : memref<1x16xf32, #tpu.memory_space<vmem>>, vector<1x16xf32>
    %c0_139 = arith.constant 0 : index
    %c0_140 = arith.constant 0 : index
    %207 = vector.load %arg7[%c0_139, %c0_140] : memref<1x16xf32, #tpu.memory_space<vmem>>, vector<1x16xf32>
    %cst_141 = arith.constant dense<0.000000e+00> : vector<15xf32>
    %208 = vector.multi_reduction <add>, %205, %cst_141 [1] : vector<15x16xf32> to vector<15xf32>
    %209 = vector.shape_cast %208 : vector<15xf32> to vector<15x1xf32>
    %cst_142 = arith.constant 1.600000e+01 : f32
    %210 = vector.broadcast %cst_142 : f32 to vector<15x1xf32>
    %211 = arith.divf %209, %210 : vector<15x1xf32>
    %212 = vector.broadcast %211 : vector<15x1xf32> to vector<15x16xf32>
    %213 = arith.subf %205, %212 : vector<15x16xf32>
    %214 = arith.mulf %213, %213 : vector<15x16xf32>
    %cst_143 = arith.constant dense<0.000000e+00> : vector<15xf32>
    %215 = vector.multi_reduction <add>, %214, %cst_143 [1] : vector<15x16xf32> to vector<15xf32>
    %216 = vector.shape_cast %215 : vector<15xf32> to vector<15x1xf32>
    %cst_144 = arith.constant 1.600000e+01 : f32
    %217 = vector.broadcast %cst_144 : f32 to vector<15x1xf32>
    %218 = arith.divf %216, %217 : vector<15x1xf32>
    %cst_145 = arith.constant 9.99999974E-6 : f32
    %219 = vector.broadcast %cst_145 : f32 to vector<15x1xf32>
    %220 = arith.addf %218, %219 : vector<15x1xf32>
    %221 = math.rsqrt %220 : vector<15x1xf32>
    %222 = vector.broadcast %221 : vector<15x1xf32> to vector<15x16xf32>
    %223 = arith.mulf %213, %222 : vector<15x16xf32>
    %224 = vector.broadcast %206 : vector<1x16xf32> to vector<15x16xf32>
    %225 = arith.mulf %223, %224 : vector<15x16xf32>
    %226 = vector.broadcast %207 : vector<1x16xf32> to vector<15x16xf32>
    %227 = arith.addf %225, %226 : vector<15x16xf32>
    %c0_146 = arith.constant 0 : index
    %c0_147 = arith.constant 0 : index
    %228 = vector.load %arg8[%c0_146, %c0_147] : memref<16x32xbf16, #tpu.memory_space<vmem>>, vector<16x32xbf16>
    %229 = arith.truncf %227 : vector<15x16xf32> to vector<15x16xbf16>
    %cst_148 = arith.constant dense<0.000000e+00> : vector<15x32xf32>
    %230 = tpu.matmul %229, %228, %cst_148 {dimension_numbers = #tpu.dot_dimension_numbers<[1], [0], [0], [1], [0, 0, 1, 1], [], []>} : vector<15x16xbf16>, vector<16x32xbf16>, vector<15x32xf32> -> vector<15x32xf32>
    %c0_149 = arith.constant 0 : index
    %c0_150 = arith.constant 0 : index
    %231 = vector.load %arg9[%c0_149, %c0_150] : memref<1x32xf32, #tpu.memory_space<vmem>>, vector<1x32xf32>
    %232 = vector.broadcast %231 : vector<1x32xf32> to vector<15x32xf32>
    %233 = arith.addf %230, %232 : vector<15x32xf32>
    %c0_151 = arith.constant 0 : index
    %c0_152 = arith.constant 0 : index
    %234 = vector.load %arg10[%c0_151, %c0_152] : memref<32x16xbf16, #tpu.memory_space<vmem>>, vector<32x16xbf16>
    %235 = arith.truncf %233 : vector<15x32xf32> to vector<15x32xbf16>
    %cst_153 = arith.constant dense<0.000000e+00> : vector<15x16xf32>
    %236 = tpu.matmul %235, %234, %cst_153 {dimension_numbers = #tpu.dot_dimension_numbers<[1], [0], [0], [1], [0, 0, 1, 1], [], []>} : vector<15x32xbf16>, vector<32x16xbf16>, vector<15x16xf32> -> vector<15x16xf32>
    %c0_154 = arith.constant 0 : index
    %c0_155 = arith.constant 0 : index
    %237 = vector.load %arg11[%c0_154, %c0_155] : memref<1x16xf32, #tpu.memory_space<vmem>>, vector<1x16xf32>
    %238 = vector.broadcast %237 : vector<1x16xf32> to vector<15x16xf32>
    %239 = arith.addf %236, %238 : vector<15x16xf32>
    %240 = math.tanh %239 : vector<15x16xf32>
    %c0_156 = arith.constant 0 : index
    %c0_157 = arith.constant 0 : index
    %241 = vector.load %arg12[%c0_156, %c0_157] : memref<16x2xbf16, #tpu.memory_space<vmem>>, vector<16x2xbf16>
    %242 = arith.truncf %240 : vector<15x16xf32> to vector<15x16xbf16>
    %cst_158 = arith.constant dense<0.000000e+00> : vector<15x2xf32>
    %243 = tpu.matmul %242, %241, %cst_158 {dimension_numbers = #tpu.dot_dimension_numbers<[1], [0], [0], [1], [0, 0, 1, 1], [], []>} : vector<15x16xbf16>, vector<16x2xbf16>, vector<15x2xf32> -> vector<15x2xf32>
    %cst_159 = arith.constant dense<0xFF800000> : vector<2xf32>
    %244 = vector.multi_reduction <maximumf>, %243, %cst_159 [0] : vector<15x2xf32> to vector<2xf32>
    %245 = vector.shape_cast %244 : vector<2xf32> to vector<1x2xf32>
    %246 = vector.broadcast %245 : vector<1x2xf32> to vector<15x2xf32>
    %247 = arith.subf %243, %246 : vector<15x2xf32>
    %248 = math.exp %247 : vector<15x2xf32>
    %cst_160 = arith.constant dense<0.000000e+00> : vector<2xf32>
    %249 = vector.multi_reduction <add>, %248, %cst_160 [0] : vector<15x2xf32> to vector<2xf32>
    %250 = vector.shape_cast %249 : vector<2xf32> to vector<1x2xf32>
    %251 = vector.broadcast %250 : vector<1x2xf32> to vector<15x2xf32>
    %252 = arith.divf %248, %251 : vector<15x2xf32>
    %253 = arith.truncf %252 : vector<15x2xf32> to vector<15x2xbf16>
    %254 = arith.truncf %233 : vector<15x32xf32> to vector<15x32xbf16>
    %cst_161 = arith.constant dense<0.000000e+00> : vector<2x32xf32>
    %255 = tpu.matmul %253, %254, %cst_161 {dimension_numbers = #tpu.dot_dimension_numbers<[0], [0], [1], [1], [0, 1, 1, 1], [], []>} : vector<15x2xbf16>, vector<15x32xbf16>, vector<2x32xf32> -> vector<2x32xf32>
    %c1_162 = arith.constant 1 : index
    %c0_163 = arith.constant 0 : index
    %c0_164 = arith.constant 0 : index
    %256 = vector.load %arg13[%c1_162, %c0_163, %c0_164] : memref<2x2x32xf32, #tpu.memory_space<vmem>>, vector<1x2x32xf32>
    %257 = vector.shape_cast %256 : vector<1x2x32xf32> to vector<2x32xf32>
    %258 = vector.shape_cast %255 : vector<2x32xf32> to vector<1x2x32xf32>
    tpu.vector_store %arg13[%c1_162, %c0_163, %c0_164], %258 {strides = array<i32>} : memref<2x2x32xf32, #tpu.memory_space<vmem>>, vector<1x2x32xf32>,
    return
  }
}

module attributes {stable_mosaic.version = 11 : i64} {
  func.func @_encoder_kernel(%arg0: memref<2x10x32xf32, #tpu.memory_space<vmem>>, %arg1: memref<2x1x10xf32, #tpu.memory_space<vmem>>, %arg2: memref<10x32xf32, #tpu.memory_space<vmem>>, %arg3: memref<1x32xf32, #tpu.memory_space<vmem>>, %arg4: memref<1x32xf32, #tpu.memory_space<vmem>>, %arg5: memref<4x32x16xbf16, #tpu.memory_space<vmem>>, %arg6: memref<4x1x16xf32, #tpu.memory_space<vmem>>, %arg7: memref<4x32x16xbf16, #tpu.memory_space<vmem>>, %arg8: memref<4x1x16xf32, #tpu.memory_space<vmem>>, %arg9: memref<4x32x16xbf16, #tpu.memory_space<vmem>>, %arg10: memref<4x1x16xf32, #tpu.memory_space<vmem>>, %arg11: memref<4x16x32xbf16, #tpu.memory_space<vmem>>, %arg12: memref<2x1x32xf32, #tpu.memory_space<vmem>>, %arg13: memref<2x1x32xf32, #tpu.memory_space<vmem>>, %arg14: memref<2x1x32xf32, #tpu.memory_space<vmem>>, %arg15: memref<2x32x64xbf16, #tpu.memory_space<vmem>>, %arg16: memref<2x1x64xf32, #tpu.memory_space<vmem>>, %arg17: memref<2x64x32xbf16, #tpu.memory_space<vmem>>, %arg18: memref<2x1x32xf32, #tpu.memory_space<vmem>>, %arg19: memref<2x1x32xf32, #tpu.memory_space<vmem>>, %arg20: memref<2x1x32xf32, #tpu.memory_space<vmem>>, %arg21: memref<32x32xbf16, #tpu.memory_space<vmem>>, %arg22: memref<1x32xf32, #tpu.memory_space<vmem>>, %arg23: memref<1x32xf32, #tpu.memory_space<vmem>>, %arg24: memref<1x32xf32, #tpu.memory_space<vmem>>, %arg25: memref<32x64xbf16, #tpu.memory_space<vmem>>, %arg26: memref<1x64xf32, #tpu.memory_space<vmem>>, %arg27: memref<2x10x64xf32, #tpu.memory_space<vmem>>) attributes {dimension_semantics = [], scalar_prefetch = 0 : i64, scratch_operands = 0 : i64, tpu.core_type = #tpu.core_type<tc>} {
    %c0 = arith.constant 0 : index
    %c0_0 = arith.constant 0 : index
    %0 = vector.load %arg2[%c0, %c0_0] : memref<10x32xf32, #tpu.memory_space<vmem>>, vector<10x32xf32>
    %c0_1 = arith.constant 0 : index
    %c0_2 = arith.constant 0 : index
    %1 = vector.load %arg3[%c0_1, %c0_2] : memref<1x32xf32, #tpu.memory_space<vmem>>, vector<1x32xf32>
    %c0_3 = arith.constant 0 : index
    %c0_4 = arith.constant 0 : index
    %2 = vector.load %arg4[%c0_3, %c0_4] : memref<1x32xf32, #tpu.memory_space<vmem>>, vector<1x32xf32>
    %c0_5 = arith.constant 0 : index
    %c0_6 = arith.constant 0 : index
    %c0_7 = arith.constant 0 : index
    %3 = vector.load %arg0[%c0_5, %c0_6, %c0_7] : memref<2x10x32xf32, #tpu.memory_space<vmem>>, vector<1x10x32xf32>
    %4 = vector.shape_cast %3 : vector<1x10x32xf32> to vector<10x32xf32>
    %5 = arith.addf %4, %0 : vector<10x32xf32>
    %cst = arith.constant dense<0.000000e+00> : vector<10xf32>
    %6 = vector.multi_reduction <add>, %5, %cst [1] : vector<10x32xf32> to vector<10xf32>
    %7 = vector.shape_cast %6 : vector<10xf32> to vector<10x1xf32>
    %cst_8 = arith.constant 3.200000e+01 : f32
    %8 = vector.broadcast %cst_8 : f32 to vector<10x1xf32>
    %9 = arith.divf %7, %8 : vector<10x1xf32>
    %10 = vector.broadcast %9 : vector<10x1xf32> to vector<10x32xf32>
    %11 = arith.subf %5, %10 : vector<10x32xf32>
    %12 = arith.mulf %11, %11 : vector<10x32xf32>
    %cst_9 = arith.constant dense<0.000000e+00> : vector<10xf32>
    %13 = vector.multi_reduction <add>, %12, %cst_9 [1] : vector<10x32xf32> to vector<10xf32>
    %14 = vector.shape_cast %13 : vector<10xf32> to vector<10x1xf32>
    %cst_10 = arith.constant 3.200000e+01 : f32
    %15 = vector.broadcast %cst_10 : f32 to vector<10x1xf32>
    %16 = arith.divf %14, %15 : vector<10x1xf32>
    %cst_11 = arith.constant 9.99999974E-6 : f32
    %17 = vector.broadcast %cst_11 : f32 to vector<10x1xf32>
    %18 = arith.addf %16, %17 : vector<10x1xf32>
    %19 = math.rsqrt %18 : vector<10x1xf32>
    %20 = vector.broadcast %19 : vector<10x1xf32> to vector<10x32xf32>
    %21 = arith.mulf %11, %20 : vector<10x32xf32>
    %22 = vector.broadcast %1 : vector<1x32xf32> to vector<10x32xf32>
    %23 = arith.mulf %21, %22 : vector<10x32xf32>
    %24 = vector.broadcast %2 : vector<1x32xf32> to vector<10x32xf32>
    %25 = arith.addf %23, %24 : vector<10x32xf32>
    %c0_12 = arith.constant 0 : index
    %c0_13 = arith.constant 0 : index
    %c0_14 = arith.constant 0 : index
    %26 = vector.load %arg1[%c0_12, %c0_13, %c0_14] : memref<2x1x10xf32, #tpu.memory_space<vmem>>, vector<1x1x10xf32>
    %27 = vector.shape_cast %26 : vector<1x1x10xf32> to vector<1x10xf32>
    %cst_15 = arith.constant 1.000000e+00 : f32
    %28 = vector.broadcast %cst_15 : f32 to vector<1x10xf32>
    %29 = arith.subf %28, %27 : vector<1x10xf32>
    %cst_16 = arith.constant -1.000000e+09 : f32
    %30 = vector.broadcast %cst_16 : f32 to vector<1x10xf32>
    %31 = arith.mulf %29, %30 : vector<1x10xf32>
    %c0_17 = arith.constant 0 : index
    %c0_18 = arith.constant 0 : index
    %c0_19 = arith.constant 0 : index
    %32 = vector.load %arg5[%c0_17, %c0_18, %c0_19] : memref<4x32x16xbf16, #tpu.memory_space<vmem>>, vector<1x32x16xbf16>
    %33 = vector.shape_cast %32 : vector<1x32x16xbf16> to vector<32x16xbf16>
    %34 = arith.truncf %25 : vector<10x32xf32> to vector<10x32xbf16>
    %cst_20 = arith.constant dense<0.000000e+00> : vector<10x16xf32>
    %35 = tpu.matmul %34, %33, %cst_20 {dimension_numbers = #tpu.dot_dimension_numbers<[1], [0], [0], [1], [0, 0, 1, 1], [], []>} : vector<10x32xbf16>, vector<32x16xbf16>, vector<10x16xf32> -> vector<10x16xf32>
    %c0_21 = arith.constant 0 : index
    %c0_22 = arith.constant 0 : index
    %c0_23 = arith.constant 0 : index
    %36 = vector.load %arg6[%c0_21, %c0_22, %c0_23] : memref<4x1x16xf32, #tpu.memory_space<vmem>>, vector<1x1x16xf32>
    %37 = vector.shape_cast %36 : vector<1x1x16xf32> to vector<1x16xf32>
    %38 = vector.broadcast %37 : vector<1x16xf32> to vector<10x16xf32>
    %39 = arith.addf %35, %38 : vector<10x16xf32>
    %c0_24 = arith.constant 0 : index
    %c0_25 = arith.constant 0 : index
    %c0_26 = arith.constant 0 : index
    %40 = vector.load %arg7[%c0_24, %c0_25, %c0_26] : memref<4x32x16xbf16, #tpu.memory_space<vmem>>, vector<1x32x16xbf16>
    %41 = vector.shape_cast %40 : vector<1x32x16xbf16> to vector<32x16xbf16>
    %42 = arith.truncf %25 : vector<10x32xf32> to vector<10x32xbf16>
    %cst_27 = arith.constant dense<0.000000e+00> : vector<10x16xf32>
    %43 = tpu.matmul %42, %41, %cst_27 {dimension_numbers = #tpu.dot_dimension_numbers<[1], [0], [0], [1], [0, 0, 1, 1], [], []>} : vector<10x32xbf16>, vector<32x16xbf16>, vector<10x16xf32> -> vector<10x16xf32>
    %c0_28 = arith.constant 0 : index
    %c0_29 = arith.constant 0 : index
    %c0_30 = arith.constant 0 : index
    %44 = vector.load %arg8[%c0_28, %c0_29, %c0_30] : memref<4x1x16xf32, #tpu.memory_space<vmem>>, vector<1x1x16xf32>
    %45 = vector.shape_cast %44 : vector<1x1x16xf32> to vector<1x16xf32>
    %46 = vector.broadcast %45 : vector<1x16xf32> to vector<10x16xf32>
    %47 = arith.addf %43, %46 : vector<10x16xf32>
    %c0_31 = arith.constant 0 : index
    %c0_32 = arith.constant 0 : index
    %c0_33 = arith.constant 0 : index
    %48 = vector.load %arg9[%c0_31, %c0_32, %c0_33] : memref<4x32x16xbf16, #tpu.memory_space<vmem>>, vector<1x32x16xbf16>
    %49 = vector.shape_cast %48 : vector<1x32x16xbf16> to vector<32x16xbf16>
    %50 = arith.truncf %25 : vector<10x32xf32> to vector<10x32xbf16>
    %cst_34 = arith.constant dense<0.000000e+00> : vector<10x16xf32>
    %51 = tpu.matmul %50, %49, %cst_34 {dimension_numbers = #tpu.dot_dimension_numbers<[1], [0], [0], [1], [0, 0, 1, 1], [], []>} : vector<10x32xbf16>, vector<32x16xbf16>, vector<10x16xf32> -> vector<10x16xf32>
    %c0_35 = arith.constant 0 : index
    %c0_36 = arith.constant 0 : index
    %c0_37 = arith.constant 0 : index
    %52 = vector.load %arg10[%c0_35, %c0_36, %c0_37] : memref<4x1x16xf32, #tpu.memory_space<vmem>>, vector<1x1x16xf32>
    %53 = vector.shape_cast %52 : vector<1x1x16xf32> to vector<1x16xf32>
    %54 = vector.broadcast %53 : vector<1x16xf32> to vector<10x16xf32>
    %55 = arith.addf %51, %54 : vector<10x16xf32>
    %56 = arith.truncf %39 : vector<10x16xf32> to vector<10x16xbf16>
    %57 = arith.truncf %47 : vector<10x16xf32> to vector<10x16xbf16>
    %cst_38 = arith.constant dense<0.000000e+00> : vector<10x10xf32>
    %58 = tpu.matmul %56, %57, %cst_38 {dimension_numbers = #tpu.dot_dimension_numbers<[1], [1], [0], [0], [0, 0, 1, 0], [], []>} : vector<10x16xbf16>, vector<10x16xbf16>, vector<10x10xf32> -> vector<10x10xf32>
    %cst_39 = arith.constant 2.500000e-01 : f32
    %59 = vector.broadcast %cst_39 : f32 to vector<10x10xf32>
    %60 = arith.mulf %58, %59 : vector<10x10xf32>
    %61 = vector.broadcast %31 : vector<1x10xf32> to vector<10x10xf32>
    %62 = arith.addf %60, %61 : vector<10x10xf32>
    %cst_40 = arith.constant dense<0xFF800000> : vector<10xf32>
    %63 = vector.multi_reduction <maximumf>, %62, %cst_40 [1] : vector<10x10xf32> to vector<10xf32>
    %64 = vector.shape_cast %63 : vector<10xf32> to vector<10x1xf32>
    %65 = vector.broadcast %64 : vector<10x1xf32> to vector<10x10xf32>
    %66 = arith.subf %62, %65 : vector<10x10xf32>
    %67 = math.exp %66 : vector<10x10xf32>
    %cst_41 = arith.constant dense<0.000000e+00> : vector<10xf32>
    %68 = vector.multi_reduction <add>, %67, %cst_41 [1] : vector<10x10xf32> to vector<10xf32>
    %69 = vector.shape_cast %68 : vector<10xf32> to vector<10x1xf32>
    %70 = vector.broadcast %69 : vector<10x1xf32> to vector<10x10xf32>
    %71 = arith.divf %67, %70 : vector<10x10xf32>
    %72 = arith.truncf %71 : vector<10x10xf32> to vector<10x10xbf16>
    %73 = arith.truncf %55 : vector<10x16xf32> to vector<10x16xbf16>
    %cst_42 = arith.constant dense<0.000000e+00> : vector<10x16xf32>
    %74 = tpu.matmul %72, %73, %cst_42 {dimension_numbers = #tpu.dot_dimension_numbers<[1], [0], [0], [1], [0, 0, 1, 1], [], []>} : vector<10x10xbf16>, vector<10x16xbf16>, vector<10x16xf32> -> vector<10x16xf32>
    %c0_43 = arith.constant 0 : index
    %c0_44 = arith.constant 0 : index
    %c0_45 = arith.constant 0 : index
    %75 = vector.load %arg11[%c0_43, %c0_44, %c0_45] : memref<4x16x32xbf16, #tpu.memory_space<vmem>>, vector<1x16x32xbf16>
    %76 = vector.shape_cast %75 : vector<1x16x32xbf16> to vector<16x32xbf16>
    %77 = arith.truncf %74 : vector<10x16xf32> to vector<10x16xbf16>
    %cst_46 = arith.constant dense<0.000000e+00> : vector<10x32xf32>
    %78 = tpu.matmul %77, %76, %cst_46 {dimension_numbers = #tpu.dot_dimension_numbers<[1], [0], [0], [1], [0, 0, 1, 1], [], []>} : vector<10x16xbf16>, vector<16x32xbf16>, vector<10x32xf32> -> vector<10x32xf32>
    %c1 = arith.constant 1 : index
    %c0_47 = arith.constant 0 : index
    %c0_48 = arith.constant 0 : index
    %79 = vector.load %arg5[%c1, %c0_47, %c0_48] : memref<4x32x16xbf16, #tpu.memory_space<vmem>>, vector<1x32x16xbf16>
    %80 = vector.shape_cast %79 : vector<1x32x16xbf16> to vector<32x16xbf16>
    %81 = arith.truncf %25 : vector<10x32xf32> to vector<10x32xbf16>
    %cst_49 = arith.constant dense<0.000000e+00> : vector<10x16xf32>
    %82 = tpu.matmul %81, %80, %cst_49 {dimension_numbers = #tpu.dot_dimension_numbers<[1], [0], [0], [1], [0, 0, 1, 1], [], []>} : vector<10x32xbf16>, vector<32x16xbf16>, vector<10x16xf32> -> vector<10x16xf32>
    %c1_50 = arith.constant 1 : index
    %c0_51 = arith.constant 0 : index
    %c0_52 = arith.constant 0 : index
    %83 = vector.load %arg6[%c1_50, %c0_51, %c0_52] : memref<4x1x16xf32, #tpu.memory_space<vmem>>, vector<1x1x16xf32>
    %84 = vector.shape_cast %83 : vector<1x1x16xf32> to vector<1x16xf32>
    %85 = vector.broadcast %84 : vector<1x16xf32> to vector<10x16xf32>
    %86 = arith.addf %82, %85 : vector<10x16xf32>
    %c1_53 = arith.constant 1 : index
    %c0_54 = arith.constant 0 : index
    %c0_55 = arith.constant 0 : index
    %87 = vector.load %arg7[%c1_53, %c0_54, %c0_55] : memref<4x32x16xbf16, #tpu.memory_space<vmem>>, vector<1x32x16xbf16>
    %88 = vector.shape_cast %87 : vector<1x32x16xbf16> to vector<32x16xbf16>
    %89 = arith.truncf %25 : vector<10x32xf32> to vector<10x32xbf16>
    %cst_56 = arith.constant dense<0.000000e+00> : vector<10x16xf32>
    %90 = tpu.matmul %89, %88, %cst_56 {dimension_numbers = #tpu.dot_dimension_numbers<[1], [0], [0], [1], [0, 0, 1, 1], [], []>} : vector<10x32xbf16>, vector<32x16xbf16>, vector<10x16xf32> -> vector<10x16xf32>
    %c1_57 = arith.constant 1 : index
    %c0_58 = arith.constant 0 : index
    %c0_59 = arith.constant 0 : index
    %91 = vector.load %arg8[%c1_57, %c0_58, %c0_59] : memref<4x1x16xf32, #tpu.memory_space<vmem>>, vector<1x1x16xf32>
    %92 = vector.shape_cast %91 : vector<1x1x16xf32> to vector<1x16xf32>
    %93 = vector.broadcast %92 : vector<1x16xf32> to vector<10x16xf32>
    %94 = arith.addf %90, %93 : vector<10x16xf32>
    %c1_60 = arith.constant 1 : index
    %c0_61 = arith.constant 0 : index
    %c0_62 = arith.constant 0 : index
    %95 = vector.load %arg9[%c1_60, %c0_61, %c0_62] : memref<4x32x16xbf16, #tpu.memory_space<vmem>>, vector<1x32x16xbf16>
    %96 = vector.shape_cast %95 : vector<1x32x16xbf16> to vector<32x16xbf16>
    %97 = arith.truncf %25 : vector<10x32xf32> to vector<10x32xbf16>
    %cst_63 = arith.constant dense<0.000000e+00> : vector<10x16xf32>
    %98 = tpu.matmul %97, %96, %cst_63 {dimension_numbers = #tpu.dot_dimension_numbers<[1], [0], [0], [1], [0, 0, 1, 1], [], []>} : vector<10x32xbf16>, vector<32x16xbf16>, vector<10x16xf32> -> vector<10x16xf32>
    %c1_64 = arith.constant 1 : index
    %c0_65 = arith.constant 0 : index
    %c0_66 = arith.constant 0 : index
    %99 = vector.load %arg10[%c1_64, %c0_65, %c0_66] : memref<4x1x16xf32, #tpu.memory_space<vmem>>, vector<1x1x16xf32>
    %100 = vector.shape_cast %99 : vector<1x1x16xf32> to vector<1x16xf32>
    %101 = vector.broadcast %100 : vector<1x16xf32> to vector<10x16xf32>
    %102 = arith.addf %98, %101 : vector<10x16xf32>
    %103 = arith.truncf %86 : vector<10x16xf32> to vector<10x16xbf16>
    %104 = arith.truncf %94 : vector<10x16xf32> to vector<10x16xbf16>
    %cst_67 = arith.constant dense<0.000000e+00> : vector<10x10xf32>
    %105 = tpu.matmul %103, %104, %cst_67 {dimension_numbers = #tpu.dot_dimension_numbers<[1], [1], [0], [0], [0, 0, 1, 0], [], []>} : vector<10x16xbf16>, vector<10x16xbf16>, vector<10x10xf32> -> vector<10x10xf32>
    %cst_68 = arith.constant 2.500000e-01 : f32
    %106 = vector.broadcast %cst_68 : f32 to vector<10x10xf32>
    %107 = arith.mulf %105, %106 : vector<10x10xf32>
    %108 = vector.broadcast %31 : vector<1x10xf32> to vector<10x10xf32>
    %109 = arith.addf %107, %108 : vector<10x10xf32>
    %cst_69 = arith.constant dense<0xFF800000> : vector<10xf32>
    %110 = vector.multi_reduction <maximumf>, %109, %cst_69 [1] : vector<10x10xf32> to vector<10xf32>
    %111 = vector.shape_cast %110 : vector<10xf32> to vector<10x1xf32>
    %112 = vector.broadcast %111 : vector<10x1xf32> to vector<10x10xf32>
    %113 = arith.subf %109, %112 : vector<10x10xf32>
    %114 = math.exp %113 : vector<10x10xf32>
    %cst_70 = arith.constant dense<0.000000e+00> : vector<10xf32>
    %115 = vector.multi_reduction <add>, %114, %cst_70 [1] : vector<10x10xf32> to vector<10xf32>
    %116 = vector.shape_cast %115 : vector<10xf32> to vector<10x1xf32>
    %117 = vector.broadcast %116 : vector<10x1xf32> to vector<10x10xf32>
    %118 = arith.divf %114, %117 : vector<10x10xf32>
    %119 = arith.truncf %118 : vector<10x10xf32> to vector<10x10xbf16>
    %120 = arith.truncf %102 : vector<10x16xf32> to vector<10x16xbf16>
    %cst_71 = arith.constant dense<0.000000e+00> : vector<10x16xf32>
    %121 = tpu.matmul %119, %120, %cst_71 {dimension_numbers = #tpu.dot_dimension_numbers<[1], [0], [0], [1], [0, 0, 1, 1], [], []>} : vector<10x10xbf16>, vector<10x16xbf16>, vector<10x16xf32> -> vector<10x16xf32>
    %c1_72 = arith.constant 1 : index
    %c0_73 = arith.constant 0 : index
    %c0_74 = arith.constant 0 : index
    %122 = vector.load %arg11[%c1_72, %c0_73, %c0_74] : memref<4x16x32xbf16, #tpu.memory_space<vmem>>, vector<1x16x32xbf16>
    %123 = vector.shape_cast %122 : vector<1x16x32xbf16> to vector<16x32xbf16>
    %124 = arith.truncf %121 : vector<10x16xf32> to vector<10x16xbf16>
    %cst_75 = arith.constant dense<0.000000e+00> : vector<10x32xf32>
    %125 = tpu.matmul %124, %123, %cst_75 {dimension_numbers = #tpu.dot_dimension_numbers<[1], [0], [0], [1], [0, 0, 1, 1], [], []>} : vector<10x16xbf16>, vector<16x32xbf16>, vector<10x32xf32> -> vector<10x32xf32>
    %126 = arith.addf %78, %125 : vector<10x32xf32>
    %127 = arith.addf %25, %126 : vector<10x32xf32>
    %c0_76 = arith.constant 0 : index
    %c0_77 = arith.constant 0 : index
    %c0_78 = arith.constant 0 : index
    %128 = vector.load %arg12[%c0_76, %c0_77, %c0_78] : memref<2x1x32xf32, #tpu.memory_space<vmem>>, vector<1x1x32xf32>
    %129 = vector.shape_cast %128 : vector<1x1x32xf32> to vector<1x32xf32>
    %130 = vector.broadcast %129 : vector<1x32xf32> to vector<10x32xf32>
    %131 = arith.addf %127, %130 : vector<10x32xf32>
    %c0_79 = arith.constant 0 : index
    %c0_80 = arith.constant 0 : index
    %c0_81 = arith.constant 0 : index
    %132 = vector.load %arg13[%c0_79, %c0_80, %c0_81] : memref<2x1x32xf32, #tpu.memory_space<vmem>>, vector<1x1x32xf32>
    %133 = vector.shape_cast %132 : vector<1x1x32xf32> to vector<1x32xf32>
    %c0_82 = arith.constant 0 : index
    %c0_83 = arith.constant 0 : index
    %c0_84 = arith.constant 0 : index
    %134 = vector.load %arg14[%c0_82, %c0_83, %c0_84] : memref<2x1x32xf32, #tpu.memory_space<vmem>>, vector<1x1x32xf32>
    %135 = vector.shape_cast %134 : vector<1x1x32xf32> to vector<1x32xf32>
    %cst_85 = arith.constant dense<0.000000e+00> : vector<10xf32>
    %136 = vector.multi_reduction <add>, %131, %cst_85 [1] : vector<10x32xf32> to vector<10xf32>
    %137 = vector.shape_cast %136 : vector<10xf32> to vector<10x1xf32>
    %cst_86 = arith.constant 3.200000e+01 : f32
    %138 = vector.broadcast %cst_86 : f32 to vector<10x1xf32>
    %139 = arith.divf %137, %138 : vector<10x1xf32>
    %140 = vector.broadcast %139 : vector<10x1xf32> to vector<10x32xf32>
    %141 = arith.subf %131, %140 : vector<10x32xf32>
    %142 = arith.mulf %141, %141 : vector<10x32xf32>
    %cst_87 = arith.constant dense<0.000000e+00> : vector<10xf32>
    %143 = vector.multi_reduction <add>, %142, %cst_87 [1] : vector<10x32xf32> to vector<10xf32>
    %144 = vector.shape_cast %143 : vector<10xf32> to vector<10x1xf32>
    %cst_88 = arith.constant 3.200000e+01 : f32
    %145 = vector.broadcast %cst_88 : f32 to vector<10x1xf32>
    %146 = arith.divf %144, %145 : vector<10x1xf32>
    %cst_89 = arith.constant 9.99999974E-6 : f32
    %147 = vector.broadcast %cst_89 : f32 to vector<10x1xf32>
    %148 = arith.addf %146, %147 : vector<10x1xf32>
    %149 = math.rsqrt %148 : vector<10x1xf32>
    %150 = vector.broadcast %149 : vector<10x1xf32> to vector<10x32xf32>
    %151 = arith.mulf %141, %150 : vector<10x32xf32>
    %152 = vector.broadcast %133 : vector<1x32xf32> to vector<10x32xf32>
    %153 = arith.mulf %151, %152 : vector<10x32xf32>
    %154 = vector.broadcast %135 : vector<1x32xf32> to vector<10x32xf32>
    %155 = arith.addf %153, %154 : vector<10x32xf32>
    %c0_90 = arith.constant 0 : index
    %c0_91 = arith.constant 0 : index
    %c0_92 = arith.constant 0 : index
    %156 = vector.load %arg15[%c0_90, %c0_91, %c0_92] : memref<2x32x64xbf16, #tpu.memory_space<vmem>>, vector<1x32x64xbf16>
    %157 = vector.shape_cast %156 : vector<1x32x64xbf16> to vector<32x64xbf16>
    %158 = arith.truncf %155 : vector<10x32xf32> to vector<10x32xbf16>
    %cst_93 = arith.constant dense<0.000000e+00> : vector<10x64xf32>
    %159 = tpu.matmul %158, %157, %cst_93 {dimension_numbers = #tpu.dot_dimension_numbers<[1], [0], [0], [1], [0, 0, 1, 1], [], []>} : vector<10x32xbf16>, vector<32x64xbf16>, vector<10x64xf32> -> vector<10x64xf32>
    %c0_94 = arith.constant 0 : index
    %c0_95 = arith.constant 0 : index
    %c0_96 = arith.constant 0 : index
    %160 = vector.load %arg16[%c0_94, %c0_95, %c0_96] : memref<2x1x64xf32, #tpu.memory_space<vmem>>, vector<1x1x64xf32>
    %161 = vector.shape_cast %160 : vector<1x1x64xf32> to vector<1x64xf32>
    %162 = vector.broadcast %161 : vector<1x64xf32> to vector<10x64xf32>
    %163 = arith.addf %159, %162 : vector<10x64xf32>
    %164 = arith.mulf %163, %163 : vector<10x64xf32>
    %165 = arith.mulf %163, %164 : vector<10x64xf32>
    %cst_97 = arith.constant 4.471500e-02 : f32
    %166 = vector.broadcast %cst_97 : f32 to vector<10x64xf32>
    %167 = arith.mulf %166, %165 : vector<10x64xf32>
    %168 = arith.addf %163, %167 : vector<10x64xf32>
    %cst_98 = arith.constant 0.797884583 : f32
    %169 = vector.broadcast %cst_98 : f32 to vector<10x64xf32>
    %170 = arith.mulf %169, %168 : vector<10x64xf32>
    %171 = math.tanh %170 : vector<10x64xf32>
    %cst_99 = arith.constant 1.000000e+00 : f32
    %172 = vector.broadcast %cst_99 : f32 to vector<10x64xf32>
    %173 = arith.addf %172, %171 : vector<10x64xf32>
    %cst_100 = arith.constant 5.000000e-01 : f32
    %174 = vector.broadcast %cst_100 : f32 to vector<10x64xf32>
    %175 = arith.mulf %174, %173 : vector<10x64xf32>
    %176 = arith.mulf %163, %175 : vector<10x64xf32>
    %c0_101 = arith.constant 0 : index
    %c0_102 = arith.constant 0 : index
    %c0_103 = arith.constant 0 : index
    %177 = vector.load %arg17[%c0_101, %c0_102, %c0_103] : memref<2x64x32xbf16, #tpu.memory_space<vmem>>, vector<1x64x32xbf16>
    %178 = vector.shape_cast %177 : vector<1x64x32xbf16> to vector<64x32xbf16>
    %179 = arith.truncf %176 : vector<10x64xf32> to vector<10x64xbf16>
    %cst_104 = arith.constant dense<0.000000e+00> : vector<10x32xf32>
    %180 = tpu.matmul %179, %178, %cst_104 {dimension_numbers = #tpu.dot_dimension_numbers<[1], [0], [0], [1], [0, 0, 1, 1], [], []>} : vector<10x64xbf16>, vector<64x32xbf16>, vector<10x32xf32> -> vector<10x32xf32>
    %c0_105 = arith.constant 0 : index
    %c0_106 = arith.constant 0 : index
    %c0_107 = arith.constant 0 : index
    %181 = vector.load %arg18[%c0_105, %c0_106, %c0_107] : memref<2x1x32xf32, #tpu.memory_space<vmem>>, vector<1x1x32xf32>
    %182 = vector.shape_cast %181 : vector<1x1x32xf32> to vector<1x32xf32>
    %183 = vector.broadcast %182 : vector<1x32xf32> to vector<10x32xf32>
    %184 = arith.addf %180, %183 : vector<10x32xf32>
    %185 = arith.addf %155, %184 : vector<10x32xf32>
    %c0_108 = arith.constant 0 : index
    %c0_109 = arith.constant 0 : index
    %c0_110 = arith.constant 0 : index
    %186 = vector.load %arg19[%c0_108, %c0_109, %c0_110] : memref<2x1x32xf32, #tpu.memory_space<vmem>>, vector<1x1x32xf32>
    %187 = vector.shape_cast %186 : vector<1x1x32xf32> to vector<1x32xf32>
    %c0_111 = arith.constant 0 : index
    %c0_112 = arith.constant 0 : index
    %c0_113 = arith.constant 0 : index
    %188 = vector.load %arg20[%c0_111, %c0_112, %c0_113] : memref<2x1x32xf32, #tpu.memory_space<vmem>>, vector<1x1x32xf32>
    %189 = vector.shape_cast %188 : vector<1x1x32xf32> to vector<1x32xf32>
    %cst_114 = arith.constant dense<0.000000e+00> : vector<10xf32>
    %190 = vector.multi_reduction <add>, %185, %cst_114 [1] : vector<10x32xf32> to vector<10xf32>
    %191 = vector.shape_cast %190 : vector<10xf32> to vector<10x1xf32>
    %cst_115 = arith.constant 3.200000e+01 : f32
    %192 = vector.broadcast %cst_115 : f32 to vector<10x1xf32>
    %193 = arith.divf %191, %192 : vector<10x1xf32>
    %194 = vector.broadcast %193 : vector<10x1xf32> to vector<10x32xf32>
    %195 = arith.subf %185, %194 : vector<10x32xf32>
    %196 = arith.mulf %195, %195 : vector<10x32xf32>
    %cst_116 = arith.constant dense<0.000000e+00> : vector<10xf32>
    %197 = vector.multi_reduction <add>, %196, %cst_116 [1] : vector<10x32xf32> to vector<10xf32>
    %198 = vector.shape_cast %197 : vector<10xf32> to vector<10x1xf32>
    %cst_117 = arith.constant 3.200000e+01 : f32
    %199 = vector.broadcast %cst_117 : f32 to vector<10x1xf32>
    %200 = arith.divf %198, %199 : vector<10x1xf32>
    %cst_118 = arith.constant 9.99999974E-6 : f32
    %201 = vector.broadcast %cst_118 : f32 to vector<10x1xf32>
    %202 = arith.addf %200, %201 : vector<10x1xf32>
    %203 = math.rsqrt %202 : vector<10x1xf32>
    %204 = vector.broadcast %203 : vector<10x1xf32> to vector<10x32xf32>
    %205 = arith.mulf %195, %204 : vector<10x32xf32>
    %206 = vector.broadcast %187 : vector<1x32xf32> to vector<10x32xf32>
    %207 = arith.mulf %205, %206 : vector<10x32xf32>
    %208 = vector.broadcast %189 : vector<1x32xf32> to vector<10x32xf32>
    %209 = arith.addf %207, %208 : vector<10x32xf32>
    %c2 = arith.constant 2 : index
    %c0_119 = arith.constant 0 : index
    %c0_120 = arith.constant 0 : index
    %210 = vector.load %arg5[%c2, %c0_119, %c0_120] : memref<4x32x16xbf16, #tpu.memory_space<vmem>>, vector<1x32x16xbf16>
    %211 = vector.shape_cast %210 : vector<1x32x16xbf16> to vector<32x16xbf16>
    %212 = arith.truncf %209 : vector<10x32xf32> to vector<10x32xbf16>
    %cst_121 = arith.constant dense<0.000000e+00> : vector<10x16xf32>
    %213 = tpu.matmul %212, %211, %cst_121 {dimension_numbers = #tpu.dot_dimension_numbers<[1], [0], [0], [1], [0, 0, 1, 1], [], []>} : vector<10x32xbf16>, vector<32x16xbf16>, vector<10x16xf32> -> vector<10x16xf32>
    %c2_122 = arith.constant 2 : index
    %c0_123 = arith.constant 0 : index
    %c0_124 = arith.constant 0 : index
    %214 = vector.load %arg6[%c2_122, %c0_123, %c0_124] : memref<4x1x16xf32, #tpu.memory_space<vmem>>, vector<1x1x16xf32>
    %215 = vector.shape_cast %214 : vector<1x1x16xf32> to vector<1x16xf32>
    %216 = vector.broadcast %215 : vector<1x16xf32> to vector<10x16xf32>
    %217 = arith.addf %213, %216 : vector<10x16xf32>
    %c2_125 = arith.constant 2 : index
    %c0_126 = arith.constant 0 : index
    %c0_127 = arith.constant 0 : index
    %218 = vector.load %arg7[%c2_125, %c0_126, %c0_127] : memref<4x32x16xbf16, #tpu.memory_space<vmem>>, vector<1x32x16xbf16>
    %219 = vector.shape_cast %218 : vector<1x32x16xbf16> to vector<32x16xbf16>
    %220 = arith.truncf %209 : vector<10x32xf32> to vector<10x32xbf16>
    %cst_128 = arith.constant dense<0.000000e+00> : vector<10x16xf32>
    %221 = tpu.matmul %220, %219, %cst_128 {dimension_numbers = #tpu.dot_dimension_numbers<[1], [0], [0], [1], [0, 0, 1, 1], [], []>} : vector<10x32xbf16>, vector<32x16xbf16>, vector<10x16xf32> -> vector<10x16xf32>
    %c2_129 = arith.constant 2 : index
    %c0_130 = arith.constant 0 : index
    %c0_131 = arith.constant 0 : index
    %222 = vector.load %arg8[%c2_129, %c0_130, %c0_131] : memref<4x1x16xf32, #tpu.memory_space<vmem>>, vector<1x1x16xf32>
    %223 = vector.shape_cast %222 : vector<1x1x16xf32> to vector<1x16xf32>
    %224 = vector.broadcast %223 : vector<1x16xf32> to vector<10x16xf32>
    %225 = arith.addf %221, %224 : vector<10x16xf32>
    %c2_132 = arith.constant 2 : index
    %c0_133 = arith.constant 0 : index
    %c0_134 = arith.constant 0 : index
    %226 = vector.load %arg9[%c2_132, %c0_133, %c0_134] : memref<4x32x16xbf16, #tpu.memory_space<vmem>>, vector<1x32x16xbf16>
    %227 = vector.shape_cast %226 : vector<1x32x16xbf16> to vector<32x16xbf16>
    %228 = arith.truncf %209 : vector<10x32xf32> to vector<10x32xbf16>
    %cst_135 = arith.constant dense<0.000000e+00> : vector<10x16xf32>
    %229 = tpu.matmul %228, %227, %cst_135 {dimension_numbers = #tpu.dot_dimension_numbers<[1], [0], [0], [1], [0, 0, 1, 1], [], []>} : vector<10x32xbf16>, vector<32x16xbf16>, vector<10x16xf32> -> vector<10x16xf32>
    %c2_136 = arith.constant 2 : index
    %c0_137 = arith.constant 0 : index
    %c0_138 = arith.constant 0 : index
    %230 = vector.load %arg10[%c2_136, %c0_137, %c0_138] : memref<4x1x16xf32, #tpu.memory_space<vmem>>, vector<1x1x16xf32>
    %231 = vector.shape_cast %230 : vector<1x1x16xf32> to vector<1x16xf32>
    %232 = vector.broadcast %231 : vector<1x16xf32> to vector<10x16xf32>
    %233 = arith.addf %229, %232 : vector<10x16xf32>
    %234 = arith.truncf %217 : vector<10x16xf32> to vector<10x16xbf16>
    %235 = arith.truncf %225 : vector<10x16xf32> to vector<10x16xbf16>
    %cst_139 = arith.constant dense<0.000000e+00> : vector<10x10xf32>
    %236 = tpu.matmul %234, %235, %cst_139 {dimension_numbers = #tpu.dot_dimension_numbers<[1], [1], [0], [0], [0, 0, 1, 0], [], []>} : vector<10x16xbf16>, vector<10x16xbf16>, vector<10x10xf32> -> vector<10x10xf32>
    %cst_140 = arith.constant 2.500000e-01 : f32
    %237 = vector.broadcast %cst_140 : f32 to vector<10x10xf32>
    %238 = arith.mulf %236, %237 : vector<10x10xf32>
    %239 = vector.broadcast %31 : vector<1x10xf32> to vector<10x10xf32>
    %240 = arith.addf %238, %239 : vector<10x10xf32>
    %cst_141 = arith.constant dense<0xFF800000> : vector<10xf32>
    %241 = vector.multi_reduction <maximumf>, %240, %cst_141 [1] : vector<10x10xf32> to vector<10xf32>
    %242 = vector.shape_cast %241 : vector<10xf32> to vector<10x1xf32>
    %243 = vector.broadcast %242 : vector<10x1xf32> to vector<10x10xf32>
    %244 = arith.subf %240, %243 : vector<10x10xf32>
    %245 = math.exp %244 : vector<10x10xf32>
    %cst_142 = arith.constant dense<0.000000e+00> : vector<10xf32>
    %246 = vector.multi_reduction <add>, %245, %cst_142 [1] : vector<10x10xf32> to vector<10xf32>
    %247 = vector.shape_cast %246 : vector<10xf32> to vector<10x1xf32>
    %248 = vector.broadcast %247 : vector<10x1xf32> to vector<10x10xf32>
    %249 = arith.divf %245, %248 : vector<10x10xf32>
    %250 = arith.truncf %249 : vector<10x10xf32> to vector<10x10xbf16>
    %251 = arith.truncf %233 : vector<10x16xf32> to vector<10x16xbf16>
    %cst_143 = arith.constant dense<0.000000e+00> : vector<10x16xf32>
    %252 = tpu.matmul %250, %251, %cst_143 {dimension_numbers = #tpu.dot_dimension_numbers<[1], [0], [0], [1], [0, 0, 1, 1], [], []>} : vector<10x10xbf16>, vector<10x16xbf16>, vector<10x16xf32> -> vector<10x16xf32>
    %c2_144 = arith.constant 2 : index
    %c0_145 = arith.constant 0 : index
    %c0_146 = arith.constant 0 : index
    %253 = vector.load %arg11[%c2_144, %c0_145, %c0_146] : memref<4x16x32xbf16, #tpu.memory_space<vmem>>, vector<1x16x32xbf16>
    %254 = vector.shape_cast %253 : vector<1x16x32xbf16> to vector<16x32xbf16>
    %255 = arith.truncf %252 : vector<10x16xf32> to vector<10x16xbf16>
    %cst_147 = arith.constant dense<0.000000e+00> : vector<10x32xf32>
    %256 = tpu.matmul %255, %254, %cst_147 {dimension_numbers = #tpu.dot_dimension_numbers<[1], [0], [0], [1], [0, 0, 1, 1], [], []>} : vector<10x16xbf16>, vector<16x32xbf16>, vector<10x32xf32> -> vector<10x32xf32>
    %c3 = arith.constant 3 : index
    %c0_148 = arith.constant 0 : index
    %c0_149 = arith.constant 0 : index
    %257 = vector.load %arg5[%c3, %c0_148, %c0_149] : memref<4x32x16xbf16, #tpu.memory_space<vmem>>, vector<1x32x16xbf16>
    %258 = vector.shape_cast %257 : vector<1x32x16xbf16> to vector<32x16xbf16>
    %259 = arith.truncf %209 : vector<10x32xf32> to vector<10x32xbf16>
    %cst_150 = arith.constant dense<0.000000e+00> : vector<10x16xf32>
    %260 = tpu.matmul %259, %258, %cst_150 {dimension_numbers = #tpu.dot_dimension_numbers<[1], [0], [0], [1], [0, 0, 1, 1], [], []>} : vector<10x32xbf16>, vector<32x16xbf16>, vector<10x16xf32> -> vector<10x16xf32>
    %c3_151 = arith.constant 3 : index
    %c0_152 = arith.constant 0 : index
    %c0_153 = arith.constant 0 : index
    %261 = vector.load %arg6[%c3_151, %c0_152, %c0_153] : memref<4x1x16xf32, #tpu.memory_space<vmem>>, vector<1x1x16xf32>
    %262 = vector.shape_cast %261 : vector<1x1x16xf32> to vector<1x16xf32>
    %263 = vector.broadcast %262 : vector<1x16xf32> to vector<10x16xf32>
    %264 = arith.addf %260, %263 : vector<10x16xf32>
    %c3_154 = arith.constant 3 : index
    %c0_155 = arith.constant 0 : index
    %c0_156 = arith.constant 0 : index
    %265 = vector.load %arg7[%c3_154, %c0_155, %c0_156] : memref<4x32x16xbf16, #tpu.memory_space<vmem>>, vector<1x32x16xbf16>
    %266 = vector.shape_cast %265 : vector<1x32x16xbf16> to vector<32x16xbf16>
    %267 = arith.truncf %209 : vector<10x32xf32> to vector<10x32xbf16>
    %cst_157 = arith.constant dense<0.000000e+00> : vector<10x16xf32>
    %268 = tpu.matmul %267, %266, %cst_157 {dimension_numbers = #tpu.dot_dimension_numbers<[1], [0], [0], [1], [0, 0, 1, 1], [], []>} : vector<10x32xbf16>, vector<32x16xbf16>, vector<10x16xf32> -> vector<10x16xf32>
    %c3_158 = arith.constant 3 : index
    %c0_159 = arith.constant 0 : index
    %c0_160 = arith.constant 0 : index
    %269 = vector.load %arg8[%c3_158, %c0_159, %c0_160] : memref<4x1x16xf32, #tpu.memory_space<vmem>>, vector<1x1x16xf32>
    %270 = vector.shape_cast %269 : vector<1x1x16xf32> to vector<1x16xf32>
    %271 = vector.broadcast %270 : vector<1x16xf32> to vector<10x16xf32>
    %272 = arith.addf %268, %271 : vector<10x16xf32>
    %c3_161 = arith.constant 3 : index
    %c0_162 = arith.constant 0 : index
    %c0_163 = arith.constant 0 : index
    %273 = vector.load %arg9[%c3_161, %c0_162, %c0_163] : memref<4x32x16xbf16, #tpu.memory_space<vmem>>, vector<1x32x16xbf16>
    %274 = vector.shape_cast %273 : vector<1x32x16xbf16> to vector<32x16xbf16>
    %275 = arith.truncf %209 : vector<10x32xf32> to vector<10x32xbf16>
    %cst_164 = arith.constant dense<0.000000e+00> : vector<10x16xf32>
    %276 = tpu.matmul %275, %274, %cst_164 {dimension_numbers = #tpu.dot_dimension_numbers<[1], [0], [0], [1], [0, 0, 1, 1], [], []>} : vector<10x32xbf16>, vector<32x16xbf16>, vector<10x16xf32> -> vector<10x16xf32>
    %c3_165 = arith.constant 3 : index
    %c0_166 = arith.constant 0 : index
    %c0_167 = arith.constant 0 : index
    %277 = vector.load %arg10[%c3_165, %c0_166, %c0_167] : memref<4x1x16xf32, #tpu.memory_space<vmem>>, vector<1x1x16xf32>
    %278 = vector.shape_cast %277 : vector<1x1x16xf32> to vector<1x16xf32>
    %279 = vector.broadcast %278 : vector<1x16xf32> to vector<10x16xf32>
    %280 = arith.addf %276, %279 : vector<10x16xf32>
    %281 = arith.truncf %264 : vector<10x16xf32> to vector<10x16xbf16>
    %282 = arith.truncf %272 : vector<10x16xf32> to vector<10x16xbf16>
    %cst_168 = arith.constant dense<0.000000e+00> : vector<10x10xf32>
    %283 = tpu.matmul %281, %282, %cst_168 {dimension_numbers = #tpu.dot_dimension_numbers<[1], [1], [0], [0], [0, 0, 1, 0], [], []>} : vector<10x16xbf16>, vector<10x16xbf16>, vector<10x10xf32> -> vector<10x10xf32>
    %cst_169 = arith.constant 2.500000e-01 : f32
    %284 = vector.broadcast %cst_169 : f32 to vector<10x10xf32>
    %285 = arith.mulf %283, %284 : vector<10x10xf32>
    %286 = vector.broadcast %31 : vector<1x10xf32> to vector<10x10xf32>
    %287 = arith.addf %285, %286 : vector<10x10xf32>
    %cst_170 = arith.constant dense<0xFF800000> : vector<10xf32>
    %288 = vector.multi_reduction <maximumf>, %287, %cst_170 [1] : vector<10x10xf32> to vector<10xf32>
    %289 = vector.shape_cast %288 : vector<10xf32> to vector<10x1xf32>
    %290 = vector.broadcast %289 : vector<10x1xf32> to vector<10x10xf32>
    %291 = arith.subf %287, %290 : vector<10x10xf32>
    %292 = math.exp %291 : vector<10x10xf32>
    %cst_171 = arith.constant dense<0.000000e+00> : vector<10xf32>
    %293 = vector.multi_reduction <add>, %292, %cst_171 [1] : vector<10x10xf32> to vector<10xf32>
    %294 = vector.shape_cast %293 : vector<10xf32> to vector<10x1xf32>
    %295 = vector.broadcast %294 : vector<10x1xf32> to vector<10x10xf32>
    %296 = arith.divf %292, %295 : vector<10x10xf32>
    %297 = arith.truncf %296 : vector<10x10xf32> to vector<10x10xbf16>
    %298 = arith.truncf %280 : vector<10x16xf32> to vector<10x16xbf16>
    %cst_172 = arith.constant dense<0.000000e+00> : vector<10x16xf32>
    %299 = tpu.matmul %297, %298, %cst_172 {dimension_numbers = #tpu.dot_dimension_numbers<[1], [0], [0], [1], [0, 0, 1, 1], [], []>} : vector<10x10xbf16>, vector<10x16xbf16>, vector<10x16xf32> -> vector<10x16xf32>
    %c3_173 = arith.constant 3 : index
    %c0_174 = arith.constant 0 : index
    %c0_175 = arith.constant 0 : index
    %300 = vector.load %arg11[%c3_173, %c0_174, %c0_175] : memref<4x16x32xbf16, #tpu.memory_space<vmem>>, vector<1x16x32xbf16>
    %301 = vector.shape_cast %300 : vector<1x16x32xbf16> to vector<16x32xbf16>
    %302 = arith.truncf %299 : vector<10x16xf32> to vector<10x16xbf16>
    %cst_176 = arith.constant dense<0.000000e+00> : vector<10x32xf32>
    %303 = tpu.matmul %302, %301, %cst_176 {dimension_numbers = #tpu.dot_dimension_numbers<[1], [0], [0], [1], [0, 0, 1, 1], [], []>} : vector<10x16xbf16>, vector<16x32xbf16>, vector<10x32xf32> -> vector<10x32xf32>
    %304 = arith.addf %256, %303 : vector<10x32xf32>
    %305 = arith.addf %209, %304 : vector<10x32xf32>
    %c1_177 = arith.constant 1 : index
    %c0_178 = arith.constant 0 : index
    %c0_179 = arith.constant 0 : index
    %306 = vector.load %arg12[%c1_177, %c0_178, %c0_179] : memref<2x1x32xf32, #tpu.memory_space<vmem>>, vector<1x1x32xf32>
    %307 = vector.shape_cast %306 : vector<1x1x32xf32> to vector<1x32xf32>
    %308 = vector.broadcast %307 : vector<1x32xf32> to vector<10x32xf32>
    %309 = arith.addf %305, %308 : vector<10x32xf32>
    %c1_180 = arith.constant 1 : index
    %c0_181 = arith.constant 0 : index
    %c0_182 = arith.constant 0 : index
    %310 = vector.load %arg13[%c1_180, %c0_181, %c0_182] : memref<2x1x32xf32, #tpu.memory_space<vmem>>, vector<1x1x32xf32>
    %311 = vector.shape_cast %310 : vector<1x1x32xf32> to vector<1x32xf32>
    %c1_183 = arith.constant 1 : index
    %c0_184 = arith.constant 0 : index
    %c0_185 = arith.constant 0 : index
    %312 = vector.load %arg14[%c1_183, %c0_184, %c0_185] : memref<2x1x32xf32, #tpu.memory_space<vmem>>, vector<1x1x32xf32>
    %313 = vector.shape_cast %312 : vector<1x1x32xf32> to vector<1x32xf32>
    %cst_186 = arith.constant dense<0.000000e+00> : vector<10xf32>
    %314 = vector.multi_reduction <add>, %309, %cst_186 [1] : vector<10x32xf32> to vector<10xf32>
    %315 = vector.shape_cast %314 : vector<10xf32> to vector<10x1xf32>
    %cst_187 = arith.constant 3.200000e+01 : f32
    %316 = vector.broadcast %cst_187 : f32 to vector<10x1xf32>
    %317 = arith.divf %315, %316 : vector<10x1xf32>
    %318 = vector.broadcast %317 : vector<10x1xf32> to vector<10x32xf32>
    %319 = arith.subf %309, %318 : vector<10x32xf32>
    %320 = arith.mulf %319, %319 : vector<10x32xf32>
    %cst_188 = arith.constant dense<0.000000e+00> : vector<10xf32>
    %321 = vector.multi_reduction <add>, %320, %cst_188 [1] : vector<10x32xf32> to vector<10xf32>
    %322 = vector.shape_cast %321 : vector<10xf32> to vector<10x1xf32>
    %cst_189 = arith.constant 3.200000e+01 : f32
    %323 = vector.broadcast %cst_189 : f32 to vector<10x1xf32>
    %324 = arith.divf %322, %323 : vector<10x1xf32>
    %cst_190 = arith.constant 9.99999974E-6 : f32
    %325 = vector.broadcast %cst_190 : f32 to vector<10x1xf32>
    %326 = arith.addf %324, %325 : vector<10x1xf32>
    %327 = math.rsqrt %326 : vector<10x1xf32>
    %328 = vector.broadcast %327 : vector<10x1xf32> to vector<10x32xf32>
    %329 = arith.mulf %319, %328 : vector<10x32xf32>
    %330 = vector.broadcast %311 : vector<1x32xf32> to vector<10x32xf32>
    %331 = arith.mulf %329, %330 : vector<10x32xf32>
    %332 = vector.broadcast %313 : vector<1x32xf32> to vector<10x32xf32>
    %333 = arith.addf %331, %332 : vector<10x32xf32>
    %c1_191 = arith.constant 1 : index
    %c0_192 = arith.constant 0 : index
    %c0_193 = arith.constant 0 : index
    %334 = vector.load %arg15[%c1_191, %c0_192, %c0_193] : memref<2x32x64xbf16, #tpu.memory_space<vmem>>, vector<1x32x64xbf16>
    %335 = vector.shape_cast %334 : vector<1x32x64xbf16> to vector<32x64xbf16>
    %336 = arith.truncf %333 : vector<10x32xf32> to vector<10x32xbf16>
    %cst_194 = arith.constant dense<0.000000e+00> : vector<10x64xf32>
    %337 = tpu.matmul %336, %335, %cst_194 {dimension_numbers = #tpu.dot_dimension_numbers<[1], [0], [0], [1], [0, 0, 1, 1], [], []>} : vector<10x32xbf16>, vector<32x64xbf16>, vector<10x64xf32> -> vector<10x64xf32>
    %c1_195 = arith.constant 1 : index
    %c0_196 = arith.constant 0 : index
    %c0_197 = arith.constant 0 : index
    %338 = vector.load %arg16[%c1_195, %c0_196, %c0_197] : memref<2x1x64xf32, #tpu.memory_space<vmem>>, vector<1x1x64xf32>
    %339 = vector.shape_cast %338 : vector<1x1x64xf32> to vector<1x64xf32>
    %340 = vector.broadcast %339 : vector<1x64xf32> to vector<10x64xf32>
    %341 = arith.addf %337, %340 : vector<10x64xf32>
    %342 = arith.mulf %341, %341 : vector<10x64xf32>
    %343 = arith.mulf %341, %342 : vector<10x64xf32>
    %cst_198 = arith.constant 4.471500e-02 : f32
    %344 = vector.broadcast %cst_198 : f32 to vector<10x64xf32>
    %345 = arith.mulf %344, %343 : vector<10x64xf32>
    %346 = arith.addf %341, %345 : vector<10x64xf32>
    %cst_199 = arith.constant 0.797884583 : f32
    %347 = vector.broadcast %cst_199 : f32 to vector<10x64xf32>
    %348 = arith.mulf %347, %346 : vector<10x64xf32>
    %349 = math.tanh %348 : vector<10x64xf32>
    %cst_200 = arith.constant 1.000000e+00 : f32
    %350 = vector.broadcast %cst_200 : f32 to vector<10x64xf32>
    %351 = arith.addf %350, %349 : vector<10x64xf32>
    %cst_201 = arith.constant 5.000000e-01 : f32
    %352 = vector.broadcast %cst_201 : f32 to vector<10x64xf32>
    %353 = arith.mulf %352, %351 : vector<10x64xf32>
    %354 = arith.mulf %341, %353 : vector<10x64xf32>
    %c1_202 = arith.constant 1 : index
    %c0_203 = arith.constant 0 : index
    %c0_204 = arith.constant 0 : index
    %355 = vector.load %arg17[%c1_202, %c0_203, %c0_204] : memref<2x64x32xbf16, #tpu.memory_space<vmem>>, vector<1x64x32xbf16>
    %356 = vector.shape_cast %355 : vector<1x64x32xbf16> to vector<64x32xbf16>
    %357 = arith.truncf %354 : vector<10x64xf32> to vector<10x64xbf16>
    %cst_205 = arith.constant dense<0.000000e+00> : vector<10x32xf32>
    %358 = tpu.matmul %357, %356, %cst_205 {dimension_numbers = #tpu.dot_dimension_numbers<[1], [0], [0], [1], [0, 0, 1, 1], [], []>} : vector<10x64xbf16>, vector<64x32xbf16>, vector<10x32xf32> -> vector<10x32xf32>
    %c1_206 = arith.constant 1 : index
    %c0_207 = arith.constant 0 : index
    %c0_208 = arith.constant 0 : index
    %359 = vector.load %arg18[%c1_206, %c0_207, %c0_208] : memref<2x1x32xf32, #tpu.memory_space<vmem>>, vector<1x1x32xf32>
    %360 = vector.shape_cast %359 : vector<1x1x32xf32> to vector<1x32xf32>
    %361 = vector.broadcast %360 : vector<1x32xf32> to vector<10x32xf32>
    %362 = arith.addf %358, %361 : vector<10x32xf32>
    %363 = arith.addf %333, %362 : vector<10x32xf32>
    %c1_209 = arith.constant 1 : index
    %c0_210 = arith.constant 0 : index
    %c0_211 = arith.constant 0 : index
    %364 = vector.load %arg19[%c1_209, %c0_210, %c0_211] : memref<2x1x32xf32, #tpu.memory_space<vmem>>, vector<1x1x32xf32>
    %365 = vector.shape_cast %364 : vector<1x1x32xf32> to vector<1x32xf32>
    %c1_212 = arith.constant 1 : index
    %c0_213 = arith.constant 0 : index
    %c0_214 = arith.constant 0 : index
    %366 = vector.load %arg20[%c1_212, %c0_213, %c0_214] : memref<2x1x32xf32, #tpu.memory_space<vmem>>, vector<1x1x32xf32>
    %367 = vector.shape_cast %366 : vector<1x1x32xf32> to vector<1x32xf32>
    %cst_215 = arith.constant dense<0.000000e+00> : vector<10xf32>
    %368 = vector.multi_reduction <add>, %363, %cst_215 [1] : vector<10x32xf32> to vector<10xf32>
    %369 = vector.shape_cast %368 : vector<10xf32> to vector<10x1xf32>
    %cst_216 = arith.constant 3.200000e+01 : f32
    %370 = vector.broadcast %cst_216 : f32 to vector<10x1xf32>
    %371 = arith.divf %369, %370 : vector<10x1xf32>
    %372 = vector.broadcast %371 : vector<10x1xf32> to vector<10x32xf32>
    %373 = arith.subf %363, %372 : vector<10x32xf32>
    %374 = arith.mulf %373, %373 : vector<10x32xf32>
    %cst_217 = arith.constant dense<0.000000e+00> : vector<10xf32>
    %375 = vector.multi_reduction <add>, %374, %cst_217 [1] : vector<10x32xf32> to vector<10xf32>
    %376 = vector.shape_cast %375 : vector<10xf32> to vector<10x1xf32>
    %cst_218 = arith.constant 3.200000e+01 : f32
    %377 = vector.broadcast %cst_218 : f32 to vector<10x1xf32>
    %378 = arith.divf %376, %377 : vector<10x1xf32>
    %cst_219 = arith.constant 9.99999974E-6 : f32
    %379 = vector.broadcast %cst_219 : f32 to vector<10x1xf32>
    %380 = arith.addf %378, %379 : vector<10x1xf32>
    %381 = math.rsqrt %380 : vector<10x1xf32>
    %382 = vector.broadcast %381 : vector<10x1xf32> to vector<10x32xf32>
    %383 = arith.mulf %373, %382 : vector<10x32xf32>
    %384 = vector.broadcast %365 : vector<1x32xf32> to vector<10x32xf32>
    %385 = arith.mulf %383, %384 : vector<10x32xf32>
    %386 = vector.broadcast %367 : vector<1x32xf32> to vector<10x32xf32>
    %387 = arith.addf %385, %386 : vector<10x32xf32>
    %c0_220 = arith.constant 0 : index
    %c0_221 = arith.constant 0 : index
    %388 = vector.load %arg21[%c0_220, %c0_221] : memref<32x32xbf16, #tpu.memory_space<vmem>>, vector<32x32xbf16>
    %389 = arith.truncf %387 : vector<10x32xf32> to vector<10x32xbf16>
    %cst_222 = arith.constant dense<0.000000e+00> : vector<10x32xf32>
    %390 = tpu.matmul %389, %388, %cst_222 {dimension_numbers = #tpu.dot_dimension_numbers<[1], [0], [0], [1], [0, 0, 1, 1], [], []>} : vector<10x32xbf16>, vector<32x32xbf16>, vector<10x32xf32> -> vector<10x32xf32>
    %c0_223 = arith.constant 0 : index
    %c0_224 = arith.constant 0 : index
    %391 = vector.load %arg22[%c0_223, %c0_224] : memref<1x32xf32, #tpu.memory_space<vmem>>, vector<1x32xf32>
    %392 = vector.broadcast %391 : vector<1x32xf32> to vector<10x32xf32>
    %393 = arith.addf %390, %392 : vector<10x32xf32>
    %394 = arith.mulf %393, %393 : vector<10x32xf32>
    %395 = arith.mulf %393, %394 : vector<10x32xf32>
    %cst_225 = arith.constant 4.471500e-02 : f32
    %396 = vector.broadcast %cst_225 : f32 to vector<10x32xf32>
    %397 = arith.mulf %396, %395 : vector<10x32xf32>
    %398 = arith.addf %393, %397 : vector<10x32xf32>
    %cst_226 = arith.constant 0.797884583 : f32
    %399 = vector.broadcast %cst_226 : f32 to vector<10x32xf32>
    %400 = arith.mulf %399, %398 : vector<10x32xf32>
    %401 = math.tanh %400 : vector<10x32xf32>
    %cst_227 = arith.constant 1.000000e+00 : f32
    %402 = vector.broadcast %cst_227 : f32 to vector<10x32xf32>
    %403 = arith.addf %402, %401 : vector<10x32xf32>
    %cst_228 = arith.constant 5.000000e-01 : f32
    %404 = vector.broadcast %cst_228 : f32 to vector<10x32xf32>
    %405 = arith.mulf %404, %403 : vector<10x32xf32>
    %406 = arith.mulf %393, %405 : vector<10x32xf32>
    %c0_229 = arith.constant 0 : index
    %c0_230 = arith.constant 0 : index
    %407 = vector.load %arg23[%c0_229, %c0_230] : memref<1x32xf32, #tpu.memory_space<vmem>>, vector<1x32xf32>
    %c0_231 = arith.constant 0 : index
    %c0_232 = arith.constant 0 : index
    %408 = vector.load %arg24[%c0_231, %c0_232] : memref<1x32xf32, #tpu.memory_space<vmem>>, vector<1x32xf32>
    %cst_233 = arith.constant dense<0.000000e+00> : vector<10xf32>
    %409 = vector.multi_reduction <add>, %406, %cst_233 [1] : vector<10x32xf32> to vector<10xf32>
    %410 = vector.shape_cast %409 : vector<10xf32> to vector<10x1xf32>
    %cst_234 = arith.constant 3.200000e+01 : f32
    %411 = vector.broadcast %cst_234 : f32 to vector<10x1xf32>
    %412 = arith.divf %410, %411 : vector<10x1xf32>
    %413 = vector.broadcast %412 : vector<10x1xf32> to vector<10x32xf32>
    %414 = arith.subf %406, %413 : vector<10x32xf32>
    %415 = arith.mulf %414, %414 : vector<10x32xf32>
    %cst_235 = arith.constant dense<0.000000e+00> : vector<10xf32>
    %416 = vector.multi_reduction <add>, %415, %cst_235 [1] : vector<10x32xf32> to vector<10xf32>
    %417 = vector.shape_cast %416 : vector<10xf32> to vector<10x1xf32>
    %cst_236 = arith.constant 3.200000e+01 : f32
    %418 = vector.broadcast %cst_236 : f32 to vector<10x1xf32>
    %419 = arith.divf %417, %418 : vector<10x1xf32>
    %cst_237 = arith.constant 9.99999974E-6 : f32
    %420 = vector.broadcast %cst_237 : f32 to vector<10x1xf32>
    %421 = arith.addf %419, %420 : vector<10x1xf32>
    %422 = math.rsqrt %421 : vector<10x1xf32>
    %423 = vector.broadcast %422 : vector<10x1xf32> to vector<10x32xf32>
    %424 = arith.mulf %414, %423 : vector<10x32xf32>
    %425 = vector.broadcast %407 : vector<1x32xf32> to vector<10x32xf32>
    %426 = arith.mulf %424, %425 : vector<10x32xf32>
    %427 = vector.broadcast %408 : vector<1x32xf32> to vector<10x32xf32>
    %428 = arith.addf %426, %427 : vector<10x32xf32>
    %c0_238 = arith.constant 0 : index
    %c0_239 = arith.constant 0 : index
    %429 = vector.load %arg25[%c0_238, %c0_239] : memref<32x64xbf16, #tpu.memory_space<vmem>>, vector<32x64xbf16>
    %430 = arith.truncf %428 : vector<10x32xf32> to vector<10x32xbf16>
    %cst_240 = arith.constant dense<0.000000e+00> : vector<10x64xf32>
    %431 = tpu.matmul %430, %429, %cst_240 {dimension_numbers = #tpu.dot_dimension_numbers<[1], [0], [0], [1], [0, 0, 1, 1], [], []>} : vector<10x32xbf16>, vector<32x64xbf16>, vector<10x64xf32> -> vector<10x64xf32>
    %c0_241 = arith.constant 0 : index
    %c0_242 = arith.constant 0 : index
    %432 = vector.load %arg26[%c0_241, %c0_242] : memref<1x64xf32, #tpu.memory_space<vmem>>, vector<1x64xf32>
    %433 = vector.broadcast %432 : vector<1x64xf32> to vector<10x64xf32>
    %434 = arith.addf %431, %433 : vector<10x64xf32>
    %c0_243 = arith.constant 0 : index
    %c0_244 = arith.constant 0 : index
    %c0_245 = arith.constant 0 : index
    %435 = vector.load %arg27[%c0_243, %c0_244, %c0_245] : memref<2x10x64xf32, #tpu.memory_space<vmem>>, vector<1x10x64xf32>
    %436 = vector.shape_cast %435 : vector<1x10x64xf32> to vector<10x64xf32>
    %437 = vector.shape_cast %434 : vector<10x64xf32> to vector<1x10x64xf32>
    tpu.vector_store %arg27[%c0_243, %c0_244, %c0_245], %437 {strides = array<i32>} : memref<2x10x64xf32, #tpu.memory_space<vmem>>, vector<1x10x64xf32>,
    %c1_246 = arith.constant 1 : index
    %c0_247 = arith.constant 0 : index
    %c0_248 = arith.constant 0 : index
    %438 = vector.load %arg0[%c1_246, %c0_247, %c0_248] : memref<2x10x32xf32, #tpu.memory_space<vmem>>, vector<1x10x32xf32>
    %439 = vector.shape_cast %438 : vector<1x10x32xf32> to vector<10x32xf32>
    %440 = arith.addf %439, %0 : vector<10x32xf32>
    %cst_249 = arith.constant dense<0.000000e+00> : vector<10xf32>
    %441 = vector.multi_reduction <add>, %440, %cst_249 [1] : vector<10x32xf32> to vector<10xf32>
    %442 = vector.shape_cast %441 : vector<10xf32> to vector<10x1xf32>
    %cst_250 = arith.constant 3.200000e+01 : f32
    %443 = vector.broadcast %cst_250 : f32 to vector<10x1xf32>
    %444 = arith.divf %442, %443 : vector<10x1xf32>
    %445 = vector.broadcast %444 : vector<10x1xf32> to vector<10x32xf32>
    %446 = arith.subf %440, %445 : vector<10x32xf32>
    %447 = arith.mulf %446, %446 : vector<10x32xf32>
    %cst_251 = arith.constant dense<0.000000e+00> : vector<10xf32>
    %448 = vector.multi_reduction <add>, %447, %cst_251 [1] : vector<10x32xf32> to vector<10xf32>
    %449 = vector.shape_cast %448 : vector<10xf32> to vector<10x1xf32>
    %cst_252 = arith.constant 3.200000e+01 : f32
    %450 = vector.broadcast %cst_252 : f32 to vector<10x1xf32>
    %451 = arith.divf %449, %450 : vector<10x1xf32>
    %cst_253 = arith.constant 9.99999974E-6 : f32
    %452 = vector.broadcast %cst_253 : f32 to vector<10x1xf32>
    %453 = arith.addf %451, %452 : vector<10x1xf32>
    %454 = math.rsqrt %453 : vector<10x1xf32>
    %455 = vector.broadcast %454 : vector<10x1xf32> to vector<10x32xf32>
    %456 = arith.mulf %446, %455 : vector<10x32xf32>
    %457 = vector.broadcast %1 : vector<1x32xf32> to vector<10x32xf32>
    %458 = arith.mulf %456, %457 : vector<10x32xf32>
    %459 = vector.broadcast %2 : vector<1x32xf32> to vector<10x32xf32>
    %460 = arith.addf %458, %459 : vector<10x32xf32>
    %c1_254 = arith.constant 1 : index
    %c0_255 = arith.constant 0 : index
    %c0_256 = arith.constant 0 : index
    %461 = vector.load %arg1[%c1_254, %c0_255, %c0_256] : memref<2x1x10xf32, #tpu.memory_space<vmem>>, vector<1x1x10xf32>
    %462 = vector.shape_cast %461 : vector<1x1x10xf32> to vector<1x10xf32>
    %cst_257 = arith.constant 1.000000e+00 : f32
    %463 = vector.broadcast %cst_257 : f32 to vector<1x10xf32>
    %464 = arith.subf %463, %462 : vector<1x10xf32>
    %cst_258 = arith.constant -1.000000e+09 : f32
    %465 = vector.broadcast %cst_258 : f32 to vector<1x10xf32>
    %466 = arith.mulf %464, %465 : vector<1x10xf32>
    %c0_259 = arith.constant 0 : index
    %c0_260 = arith.constant 0 : index
    %c0_261 = arith.constant 0 : index
    %467 = vector.load %arg5[%c0_259, %c0_260, %c0_261] : memref<4x32x16xbf16, #tpu.memory_space<vmem>>, vector<1x32x16xbf16>
    %468 = vector.shape_cast %467 : vector<1x32x16xbf16> to vector<32x16xbf16>
    %469 = arith.truncf %460 : vector<10x32xf32> to vector<10x32xbf16>
    %cst_262 = arith.constant dense<0.000000e+00> : vector<10x16xf32>
    %470 = tpu.matmul %469, %468, %cst_262 {dimension_numbers = #tpu.dot_dimension_numbers<[1], [0], [0], [1], [0, 0, 1, 1], [], []>} : vector<10x32xbf16>, vector<32x16xbf16>, vector<10x16xf32> -> vector<10x16xf32>
    %c0_263 = arith.constant 0 : index
    %c0_264 = arith.constant 0 : index
    %c0_265 = arith.constant 0 : index
    %471 = vector.load %arg6[%c0_263, %c0_264, %c0_265] : memref<4x1x16xf32, #tpu.memory_space<vmem>>, vector<1x1x16xf32>
    %472 = vector.shape_cast %471 : vector<1x1x16xf32> to vector<1x16xf32>
    %473 = vector.broadcast %472 : vector<1x16xf32> to vector<10x16xf32>
    %474 = arith.addf %470, %473 : vector<10x16xf32>
    %c0_266 = arith.constant 0 : index
    %c0_267 = arith.constant 0 : index
    %c0_268 = arith.constant 0 : index
    %475 = vector.load %arg7[%c0_266, %c0_267, %c0_268] : memref<4x32x16xbf16, #tpu.memory_space<vmem>>, vector<1x32x16xbf16>
    %476 = vector.shape_cast %475 : vector<1x32x16xbf16> to vector<32x16xbf16>
    %477 = arith.truncf %460 : vector<10x32xf32> to vector<10x32xbf16>
    %cst_269 = arith.constant dense<0.000000e+00> : vector<10x16xf32>
    %478 = tpu.matmul %477, %476, %cst_269 {dimension_numbers = #tpu.dot_dimension_numbers<[1], [0], [0], [1], [0, 0, 1, 1], [], []>} : vector<10x32xbf16>, vector<32x16xbf16>, vector<10x16xf32> -> vector<10x16xf32>
    %c0_270 = arith.constant 0 : index
    %c0_271 = arith.constant 0 : index
    %c0_272 = arith.constant 0 : index
    %479 = vector.load %arg8[%c0_270, %c0_271, %c0_272] : memref<4x1x16xf32, #tpu.memory_space<vmem>>, vector<1x1x16xf32>
    %480 = vector.shape_cast %479 : vector<1x1x16xf32> to vector<1x16xf32>
    %481 = vector.broadcast %480 : vector<1x16xf32> to vector<10x16xf32>
    %482 = arith.addf %478, %481 : vector<10x16xf32>
    %c0_273 = arith.constant 0 : index
    %c0_274 = arith.constant 0 : index
    %c0_275 = arith.constant 0 : index
    %483 = vector.load %arg9[%c0_273, %c0_274, %c0_275] : memref<4x32x16xbf16, #tpu.memory_space<vmem>>, vector<1x32x16xbf16>
    %484 = vector.shape_cast %483 : vector<1x32x16xbf16> to vector<32x16xbf16>
    %485 = arith.truncf %460 : vector<10x32xf32> to vector<10x32xbf16>
    %cst_276 = arith.constant dense<0.000000e+00> : vector<10x16xf32>
    %486 = tpu.matmul %485, %484, %cst_276 {dimension_numbers = #tpu.dot_dimension_numbers<[1], [0], [0], [1], [0, 0, 1, 1], [], []>} : vector<10x32xbf16>, vector<32x16xbf16>, vector<10x16xf32> -> vector<10x16xf32>
    %c0_277 = arith.constant 0 : index
    %c0_278 = arith.constant 0 : index
    %c0_279 = arith.constant 0 : index
    %487 = vector.load %arg10[%c0_277, %c0_278, %c0_279] : memref<4x1x16xf32, #tpu.memory_space<vmem>>, vector<1x1x16xf32>
    %488 = vector.shape_cast %487 : vector<1x1x16xf32> to vector<1x16xf32>
    %489 = vector.broadcast %488 : vector<1x16xf32> to vector<10x16xf32>
    %490 = arith.addf %486, %489 : vector<10x16xf32>
    %491 = arith.truncf %474 : vector<10x16xf32> to vector<10x16xbf16>
    %492 = arith.truncf %482 : vector<10x16xf32> to vector<10x16xbf16>
    %cst_280 = arith.constant dense<0.000000e+00> : vector<10x10xf32>
    %493 = tpu.matmul %491, %492, %cst_280 {dimension_numbers = #tpu.dot_dimension_numbers<[1], [1], [0], [0], [0, 0, 1, 0], [], []>} : vector<10x16xbf16>, vector<10x16xbf16>, vector<10x10xf32> -> vector<10x10xf32>
    %cst_281 = arith.constant 2.500000e-01 : f32
    %494 = vector.broadcast %cst_281 : f32 to vector<10x10xf32>
    %495 = arith.mulf %493, %494 : vector<10x10xf32>
    %496 = vector.broadcast %466 : vector<1x10xf32> to vector<10x10xf32>
    %497 = arith.addf %495, %496 : vector<10x10xf32>
    %cst_282 = arith.constant dense<0xFF800000> : vector<10xf32>
    %498 = vector.multi_reduction <maximumf>, %497, %cst_282 [1] : vector<10x10xf32> to vector<10xf32>
    %499 = vector.shape_cast %498 : vector<10xf32> to vector<10x1xf32>
    %500 = vector.broadcast %499 : vector<10x1xf32> to vector<10x10xf32>
    %501 = arith.subf %497, %500 : vector<10x10xf32>
    %502 = math.exp %501 : vector<10x10xf32>
    %cst_283 = arith.constant dense<0.000000e+00> : vector<10xf32>
    %503 = vector.multi_reduction <add>, %502, %cst_283 [1] : vector<10x10xf32> to vector<10xf32>
    %504 = vector.shape_cast %503 : vector<10xf32> to vector<10x1xf32>
    %505 = vector.broadcast %504 : vector<10x1xf32> to vector<10x10xf32>
    %506 = arith.divf %502, %505 : vector<10x10xf32>
    %507 = arith.truncf %506 : vector<10x10xf32> to vector<10x10xbf16>
    %508 = arith.truncf %490 : vector<10x16xf32> to vector<10x16xbf16>
    %cst_284 = arith.constant dense<0.000000e+00> : vector<10x16xf32>
    %509 = tpu.matmul %507, %508, %cst_284 {dimension_numbers = #tpu.dot_dimension_numbers<[1], [0], [0], [1], [0, 0, 1, 1], [], []>} : vector<10x10xbf16>, vector<10x16xbf16>, vector<10x16xf32> -> vector<10x16xf32>
    %c0_285 = arith.constant 0 : index
    %c0_286 = arith.constant 0 : index
    %c0_287 = arith.constant 0 : index
    %510 = vector.load %arg11[%c0_285, %c0_286, %c0_287] : memref<4x16x32xbf16, #tpu.memory_space<vmem>>, vector<1x16x32xbf16>
    %511 = vector.shape_cast %510 : vector<1x16x32xbf16> to vector<16x32xbf16>
    %512 = arith.truncf %509 : vector<10x16xf32> to vector<10x16xbf16>
    %cst_288 = arith.constant dense<0.000000e+00> : vector<10x32xf32>
    %513 = tpu.matmul %512, %511, %cst_288 {dimension_numbers = #tpu.dot_dimension_numbers<[1], [0], [0], [1], [0, 0, 1, 1], [], []>} : vector<10x16xbf16>, vector<16x32xbf16>, vector<10x32xf32> -> vector<10x32xf32>
    %c1_289 = arith.constant 1 : index
    %c0_290 = arith.constant 0 : index
    %c0_291 = arith.constant 0 : index
    %514 = vector.load %arg5[%c1_289, %c0_290, %c0_291] : memref<4x32x16xbf16, #tpu.memory_space<vmem>>, vector<1x32x16xbf16>
    %515 = vector.shape_cast %514 : vector<1x32x16xbf16> to vector<32x16xbf16>
    %516 = arith.truncf %460 : vector<10x32xf32> to vector<10x32xbf16>
    %cst_292 = arith.constant dense<0.000000e+00> : vector<10x16xf32>
    %517 = tpu.matmul %516, %515, %cst_292 {dimension_numbers = #tpu.dot_dimension_numbers<[1], [0], [0], [1], [0, 0, 1, 1], [], []>} : vector<10x32xbf16>, vector<32x16xbf16>, vector<10x16xf32> -> vector<10x16xf32>
    %c1_293 = arith.constant 1 : index
    %c0_294 = arith.constant 0 : index
    %c0_295 = arith.constant 0 : index
    %518 = vector.load %arg6[%c1_293, %c0_294, %c0_295] : memref<4x1x16xf32, #tpu.memory_space<vmem>>, vector<1x1x16xf32>
    %519 = vector.shape_cast %518 : vector<1x1x16xf32> to vector<1x16xf32>
    %520 = vector.broadcast %519 : vector<1x16xf32> to vector<10x16xf32>
    %521 = arith.addf %517, %520 : vector<10x16xf32>
    %c1_296 = arith.constant 1 : index
    %c0_297 = arith.constant 0 : index
    %c0_298 = arith.constant 0 : index
    %522 = vector.load %arg7[%c1_296, %c0_297, %c0_298] : memref<4x32x16xbf16, #tpu.memory_space<vmem>>, vector<1x32x16xbf16>
    %523 = vector.shape_cast %522 : vector<1x32x16xbf16> to vector<32x16xbf16>
    %524 = arith.truncf %460 : vector<10x32xf32> to vector<10x32xbf16>
    %cst_299 = arith.constant dense<0.000000e+00> : vector<10x16xf32>
    %525 = tpu.matmul %524, %523, %cst_299 {dimension_numbers = #tpu.dot_dimension_numbers<[1], [0], [0], [1], [0, 0, 1, 1], [], []>} : vector<10x32xbf16>, vector<32x16xbf16>, vector<10x16xf32> -> vector<10x16xf32>
    %c1_300 = arith.constant 1 : index
    %c0_301 = arith.constant 0 : index
    %c0_302 = arith.constant 0 : index
    %526 = vector.load %arg8[%c1_300, %c0_301, %c0_302] : memref<4x1x16xf32, #tpu.memory_space<vmem>>, vector<1x1x16xf32>
    %527 = vector.shape_cast %526 : vector<1x1x16xf32> to vector<1x16xf32>
    %528 = vector.broadcast %527 : vector<1x16xf32> to vector<10x16xf32>
    %529 = arith.addf %525, %528 : vector<10x16xf32>
    %c1_303 = arith.constant 1 : index
    %c0_304 = arith.constant 0 : index
    %c0_305 = arith.constant 0 : index
    %530 = vector.load %arg9[%c1_303, %c0_304, %c0_305] : memref<4x32x16xbf16, #tpu.memory_space<vmem>>, vector<1x32x16xbf16>
    %531 = vector.shape_cast %530 : vector<1x32x16xbf16> to vector<32x16xbf16>
    %532 = arith.truncf %460 : vector<10x32xf32> to vector<10x32xbf16>
    %cst_306 = arith.constant dense<0.000000e+00> : vector<10x16xf32>
    %533 = tpu.matmul %532, %531, %cst_306 {dimension_numbers = #tpu.dot_dimension_numbers<[1], [0], [0], [1], [0, 0, 1, 1], [], []>} : vector<10x32xbf16>, vector<32x16xbf16>, vector<10x16xf32> -> vector<10x16xf32>
    %c1_307 = arith.constant 1 : index
    %c0_308 = arith.constant 0 : index
    %c0_309 = arith.constant 0 : index
    %534 = vector.load %arg10[%c1_307, %c0_308, %c0_309] : memref<4x1x16xf32, #tpu.memory_space<vmem>>, vector<1x1x16xf32>
    %535 = vector.shape_cast %534 : vector<1x1x16xf32> to vector<1x16xf32>
    %536 = vector.broadcast %535 : vector<1x16xf32> to vector<10x16xf32>
    %537 = arith.addf %533, %536 : vector<10x16xf32>
    %538 = arith.truncf %521 : vector<10x16xf32> to vector<10x16xbf16>
    %539 = arith.truncf %529 : vector<10x16xf32> to vector<10x16xbf16>
    %cst_310 = arith.constant dense<0.000000e+00> : vector<10x10xf32>
    %540 = tpu.matmul %538, %539, %cst_310 {dimension_numbers = #tpu.dot_dimension_numbers<[1], [1], [0], [0], [0, 0, 1, 0], [], []>} : vector<10x16xbf16>, vector<10x16xbf16>, vector<10x10xf32> -> vector<10x10xf32>
    %cst_311 = arith.constant 2.500000e-01 : f32
    %541 = vector.broadcast %cst_311 : f32 to vector<10x10xf32>
    %542 = arith.mulf %540, %541 : vector<10x10xf32>
    %543 = vector.broadcast %466 : vector<1x10xf32> to vector<10x10xf32>
    %544 = arith.addf %542, %543 : vector<10x10xf32>
    %cst_312 = arith.constant dense<0xFF800000> : vector<10xf32>
    %545 = vector.multi_reduction <maximumf>, %544, %cst_312 [1] : vector<10x10xf32> to vector<10xf32>
    %546 = vector.shape_cast %545 : vector<10xf32> to vector<10x1xf32>
    %547 = vector.broadcast %546 : vector<10x1xf32> to vector<10x10xf32>
    %548 = arith.subf %544, %547 : vector<10x10xf32>
    %549 = math.exp %548 : vector<10x10xf32>
    %cst_313 = arith.constant dense<0.000000e+00> : vector<10xf32>
    %550 = vector.multi_reduction <add>, %549, %cst_313 [1] : vector<10x10xf32> to vector<10xf32>
    %551 = vector.shape_cast %550 : vector<10xf32> to vector<10x1xf32>
    %552 = vector.broadcast %551 : vector<10x1xf32> to vector<10x10xf32>
    %553 = arith.divf %549, %552 : vector<10x10xf32>
    %554 = arith.truncf %553 : vector<10x10xf32> to vector<10x10xbf16>
    %555 = arith.truncf %537 : vector<10x16xf32> to vector<10x16xbf16>
    %cst_314 = arith.constant dense<0.000000e+00> : vector<10x16xf32>
    %556 = tpu.matmul %554, %555, %cst_314 {dimension_numbers = #tpu.dot_dimension_numbers<[1], [0], [0], [1], [0, 0, 1, 1], [], []>} : vector<10x10xbf16>, vector<10x16xbf16>, vector<10x16xf32> -> vector<10x16xf32>
    %c1_315 = arith.constant 1 : index
    %c0_316 = arith.constant 0 : index
    %c0_317 = arith.constant 0 : index
    %557 = vector.load %arg11[%c1_315, %c0_316, %c0_317] : memref<4x16x32xbf16, #tpu.memory_space<vmem>>, vector<1x16x32xbf16>
    %558 = vector.shape_cast %557 : vector<1x16x32xbf16> to vector<16x32xbf16>
    %559 = arith.truncf %556 : vector<10x16xf32> to vector<10x16xbf16>
    %cst_318 = arith.constant dense<0.000000e+00> : vector<10x32xf32>
    %560 = tpu.matmul %559, %558, %cst_318 {dimension_numbers = #tpu.dot_dimension_numbers<[1], [0], [0], [1], [0, 0, 1, 1], [], []>} : vector<10x16xbf16>, vector<16x32xbf16>, vector<10x32xf32> -> vector<10x32xf32>
    %561 = arith.addf %513, %560 : vector<10x32xf32>
    %562 = arith.addf %460, %561 : vector<10x32xf32>
    %c0_319 = arith.constant 0 : index
    %c0_320 = arith.constant 0 : index
    %c0_321 = arith.constant 0 : index
    %563 = vector.load %arg12[%c0_319, %c0_320, %c0_321] : memref<2x1x32xf32, #tpu.memory_space<vmem>>, vector<1x1x32xf32>
    %564 = vector.shape_cast %563 : vector<1x1x32xf32> to vector<1x32xf32>
    %565 = vector.broadcast %564 : vector<1x32xf32> to vector<10x32xf32>
    %566 = arith.addf %562, %565 : vector<10x32xf32>
    %c0_322 = arith.constant 0 : index
    %c0_323 = arith.constant 0 : index
    %c0_324 = arith.constant 0 : index
    %567 = vector.load %arg13[%c0_322, %c0_323, %c0_324] : memref<2x1x32xf32, #tpu.memory_space<vmem>>, vector<1x1x32xf32>
    %568 = vector.shape_cast %567 : vector<1x1x32xf32> to vector<1x32xf32>
    %c0_325 = arith.constant 0 : index
    %c0_326 = arith.constant 0 : index
    %c0_327 = arith.constant 0 : index
    %569 = vector.load %arg14[%c0_325, %c0_326, %c0_327] : memref<2x1x32xf32, #tpu.memory_space<vmem>>, vector<1x1x32xf32>
    %570 = vector.shape_cast %569 : vector<1x1x32xf32> to vector<1x32xf32>
    %cst_328 = arith.constant dense<0.000000e+00> : vector<10xf32>
    %571 = vector.multi_reduction <add>, %566, %cst_328 [1] : vector<10x32xf32> to vector<10xf32>
    %572 = vector.shape_cast %571 : vector<10xf32> to vector<10x1xf32>
    %cst_329 = arith.constant 3.200000e+01 : f32
    %573 = vector.broadcast %cst_329 : f32 to vector<10x1xf32>
    %574 = arith.divf %572, %573 : vector<10x1xf32>
    %575 = vector.broadcast %574 : vector<10x1xf32> to vector<10x32xf32>
    %576 = arith.subf %566, %575 : vector<10x32xf32>
    %577 = arith.mulf %576, %576 : vector<10x32xf32>
    %cst_330 = arith.constant dense<0.000000e+00> : vector<10xf32>
    %578 = vector.multi_reduction <add>, %577, %cst_330 [1] : vector<10x32xf32> to vector<10xf32>
    %579 = vector.shape_cast %578 : vector<10xf32> to vector<10x1xf32>
    %cst_331 = arith.constant 3.200000e+01 : f32
    %580 = vector.broadcast %cst_331 : f32 to vector<10x1xf32>
    %581 = arith.divf %579, %580 : vector<10x1xf32>
    %cst_332 = arith.constant 9.99999974E-6 : f32
    %582 = vector.broadcast %cst_332 : f32 to vector<10x1xf32>
    %583 = arith.addf %581, %582 : vector<10x1xf32>
    %584 = math.rsqrt %583 : vector<10x1xf32>
    %585 = vector.broadcast %584 : vector<10x1xf32> to vector<10x32xf32>
    %586 = arith.mulf %576, %585 : vector<10x32xf32>
    %587 = vector.broadcast %568 : vector<1x32xf32> to vector<10x32xf32>
    %588 = arith.mulf %586, %587 : vector<10x32xf32>
    %589 = vector.broadcast %570 : vector<1x32xf32> to vector<10x32xf32>
    %590 = arith.addf %588, %589 : vector<10x32xf32>
    %c0_333 = arith.constant 0 : index
    %c0_334 = arith.constant 0 : index
    %c0_335 = arith.constant 0 : index
    %591 = vector.load %arg15[%c0_333, %c0_334, %c0_335] : memref<2x32x64xbf16, #tpu.memory_space<vmem>>, vector<1x32x64xbf16>
    %592 = vector.shape_cast %591 : vector<1x32x64xbf16> to vector<32x64xbf16>
    %593 = arith.truncf %590 : vector<10x32xf32> to vector<10x32xbf16>
    %cst_336 = arith.constant dense<0.000000e+00> : vector<10x64xf32>
    %594 = tpu.matmul %593, %592, %cst_336 {dimension_numbers = #tpu.dot_dimension_numbers<[1], [0], [0], [1], [0, 0, 1, 1], [], []>} : vector<10x32xbf16>, vector<32x64xbf16>, vector<10x64xf32> -> vector<10x64xf32>
    %c0_337 = arith.constant 0 : index
    %c0_338 = arith.constant 0 : index
    %c0_339 = arith.constant 0 : index
    %595 = vector.load %arg16[%c0_337, %c0_338, %c0_339] : memref<2x1x64xf32, #tpu.memory_space<vmem>>, vector<1x1x64xf32>
    %596 = vector.shape_cast %595 : vector<1x1x64xf32> to vector<1x64xf32>
    %597 = vector.broadcast %596 : vector<1x64xf32> to vector<10x64xf32>
    %598 = arith.addf %594, %597 : vector<10x64xf32>
    %599 = arith.mulf %598, %598 : vector<10x64xf32>
    %600 = arith.mulf %598, %599 : vector<10x64xf32>
    %cst_340 = arith.constant 4.471500e-02 : f32
    %601 = vector.broadcast %cst_340 : f32 to vector<10x64xf32>
    %602 = arith.mulf %601, %600 : vector<10x64xf32>
    %603 = arith.addf %598, %602 : vector<10x64xf32>
    %cst_341 = arith.constant 0.797884583 : f32
    %604 = vector.broadcast %cst_341 : f32 to vector<10x64xf32>
    %605 = arith.mulf %604, %603 : vector<10x64xf32>
    %606 = math.tanh %605 : vector<10x64xf32>
    %cst_342 = arith.constant 1.000000e+00 : f32
    %607 = vector.broadcast %cst_342 : f32 to vector<10x64xf32>
    %608 = arith.addf %607, %606 : vector<10x64xf32>
    %cst_343 = arith.constant 5.000000e-01 : f32
    %609 = vector.broadcast %cst_343 : f32 to vector<10x64xf32>
    %610 = arith.mulf %609, %608 : vector<10x64xf32>
    %611 = arith.mulf %598, %610 : vector<10x64xf32>
    %c0_344 = arith.constant 0 : index
    %c0_345 = arith.constant 0 : index
    %c0_346 = arith.constant 0 : index
    %612 = vector.load %arg17[%c0_344, %c0_345, %c0_346] : memref<2x64x32xbf16, #tpu.memory_space<vmem>>, vector<1x64x32xbf16>
    %613 = vector.shape_cast %612 : vector<1x64x32xbf16> to vector<64x32xbf16>
    %614 = arith.truncf %611 : vector<10x64xf32> to vector<10x64xbf16>
    %cst_347 = arith.constant dense<0.000000e+00> : vector<10x32xf32>
    %615 = tpu.matmul %614, %613, %cst_347 {dimension_numbers = #tpu.dot_dimension_numbers<[1], [0], [0], [1], [0, 0, 1, 1], [], []>} : vector<10x64xbf16>, vector<64x32xbf16>, vector<10x32xf32> -> vector<10x32xf32>
    %c0_348 = arith.constant 0 : index
    %c0_349 = arith.constant 0 : index
    %c0_350 = arith.constant 0 : index
    %616 = vector.load %arg18[%c0_348, %c0_349, %c0_350] : memref<2x1x32xf32, #tpu.memory_space<vmem>>, vector<1x1x32xf32>
    %617 = vector.shape_cast %616 : vector<1x1x32xf32> to vector<1x32xf32>
    %618 = vector.broadcast %617 : vector<1x32xf32> to vector<10x32xf32>
    %619 = arith.addf %615, %618 : vector<10x32xf32>
    %620 = arith.addf %590, %619 : vector<10x32xf32>
    %c0_351 = arith.constant 0 : index
    %c0_352 = arith.constant 0 : index
    %c0_353 = arith.constant 0 : index
    %621 = vector.load %arg19[%c0_351, %c0_352, %c0_353] : memref<2x1x32xf32, #tpu.memory_space<vmem>>, vector<1x1x32xf32>
    %622 = vector.shape_cast %621 : vector<1x1x32xf32> to vector<1x32xf32>
    %c0_354 = arith.constant 0 : index
    %c0_355 = arith.constant 0 : index
    %c0_356 = arith.constant 0 : index
    %623 = vector.load %arg20[%c0_354, %c0_355, %c0_356] : memref<2x1x32xf32, #tpu.memory_space<vmem>>, vector<1x1x32xf32>
    %624 = vector.shape_cast %623 : vector<1x1x32xf32> to vector<1x32xf32>
    %cst_357 = arith.constant dense<0.000000e+00> : vector<10xf32>
    %625 = vector.multi_reduction <add>, %620, %cst_357 [1] : vector<10x32xf32> to vector<10xf32>
    %626 = vector.shape_cast %625 : vector<10xf32> to vector<10x1xf32>
    %cst_358 = arith.constant 3.200000e+01 : f32
    %627 = vector.broadcast %cst_358 : f32 to vector<10x1xf32>
    %628 = arith.divf %626, %627 : vector<10x1xf32>
    %629 = vector.broadcast %628 : vector<10x1xf32> to vector<10x32xf32>
    %630 = arith.subf %620, %629 : vector<10x32xf32>
    %631 = arith.mulf %630, %630 : vector<10x32xf32>
    %cst_359 = arith.constant dense<0.000000e+00> : vector<10xf32>
    %632 = vector.multi_reduction <add>, %631, %cst_359 [1] : vector<10x32xf32> to vector<10xf32>
    %633 = vector.shape_cast %632 : vector<10xf32> to vector<10x1xf32>
    %cst_360 = arith.constant 3.200000e+01 : f32
    %634 = vector.broadcast %cst_360 : f32 to vector<10x1xf32>
    %635 = arith.divf %633, %634 : vector<10x1xf32>
    %cst_361 = arith.constant 9.99999974E-6 : f32
    %636 = vector.broadcast %cst_361 : f32 to vector<10x1xf32>
    %637 = arith.addf %635, %636 : vector<10x1xf32>
    %638 = math.rsqrt %637 : vector<10x1xf32>
    %639 = vector.broadcast %638 : vector<10x1xf32> to vector<10x32xf32>
    %640 = arith.mulf %630, %639 : vector<10x32xf32>
    %641 = vector.broadcast %622 : vector<1x32xf32> to vector<10x32xf32>
    %642 = arith.mulf %640, %641 : vector<10x32xf32>
    %643 = vector.broadcast %624 : vector<1x32xf32> to vector<10x32xf32>
    %644 = arith.addf %642, %643 : vector<10x32xf32>
    %c2_362 = arith.constant 2 : index
    %c0_363 = arith.constant 0 : index
    %c0_364 = arith.constant 0 : index
    %645 = vector.load %arg5[%c2_362, %c0_363, %c0_364] : memref<4x32x16xbf16, #tpu.memory_space<vmem>>, vector<1x32x16xbf16>
    %646 = vector.shape_cast %645 : vector<1x32x16xbf16> to vector<32x16xbf16>
    %647 = arith.truncf %644 : vector<10x32xf32> to vector<10x32xbf16>
    %cst_365 = arith.constant dense<0.000000e+00> : vector<10x16xf32>
    %648 = tpu.matmul %647, %646, %cst_365 {dimension_numbers = #tpu.dot_dimension_numbers<[1], [0], [0], [1], [0, 0, 1, 1], [], []>} : vector<10x32xbf16>, vector<32x16xbf16>, vector<10x16xf32> -> vector<10x16xf32>
    %c2_366 = arith.constant 2 : index
    %c0_367 = arith.constant 0 : index
    %c0_368 = arith.constant 0 : index
    %649 = vector.load %arg6[%c2_366, %c0_367, %c0_368] : memref<4x1x16xf32, #tpu.memory_space<vmem>>, vector<1x1x16xf32>
    %650 = vector.shape_cast %649 : vector<1x1x16xf32> to vector<1x16xf32>
    %651 = vector.broadcast %650 : vector<1x16xf32> to vector<10x16xf32>
    %652 = arith.addf %648, %651 : vector<10x16xf32>
    %c2_369 = arith.constant 2 : index
    %c0_370 = arith.constant 0 : index
    %c0_371 = arith.constant 0 : index
    %653 = vector.load %arg7[%c2_369, %c0_370, %c0_371] : memref<4x32x16xbf16, #tpu.memory_space<vmem>>, vector<1x32x16xbf16>
    %654 = vector.shape_cast %653 : vector<1x32x16xbf16> to vector<32x16xbf16>
    %655 = arith.truncf %644 : vector<10x32xf32> to vector<10x32xbf16>
    %cst_372 = arith.constant dense<0.000000e+00> : vector<10x16xf32>
    %656 = tpu.matmul %655, %654, %cst_372 {dimension_numbers = #tpu.dot_dimension_numbers<[1], [0], [0], [1], [0, 0, 1, 1], [], []>} : vector<10x32xbf16>, vector<32x16xbf16>, vector<10x16xf32> -> vector<10x16xf32>
    %c2_373 = arith.constant 2 : index
    %c0_374 = arith.constant 0 : index
    %c0_375 = arith.constant 0 : index
    %657 = vector.load %arg8[%c2_373, %c0_374, %c0_375] : memref<4x1x16xf32, #tpu.memory_space<vmem>>, vector<1x1x16xf32>
    %658 = vector.shape_cast %657 : vector<1x1x16xf32> to vector<1x16xf32>
    %659 = vector.broadcast %658 : vector<1x16xf32> to vector<10x16xf32>
    %660 = arith.addf %656, %659 : vector<10x16xf32>
    %c2_376 = arith.constant 2 : index
    %c0_377 = arith.constant 0 : index
    %c0_378 = arith.constant 0 : index
    %661 = vector.load %arg9[%c2_376, %c0_377, %c0_378] : memref<4x32x16xbf16, #tpu.memory_space<vmem>>, vector<1x32x16xbf16>
    %662 = vector.shape_cast %661 : vector<1x32x16xbf16> to vector<32x16xbf16>
    %663 = arith.truncf %644 : vector<10x32xf32> to vector<10x32xbf16>
    %cst_379 = arith.constant dense<0.000000e+00> : vector<10x16xf32>
    %664 = tpu.matmul %663, %662, %cst_379 {dimension_numbers = #tpu.dot_dimension_numbers<[1], [0], [0], [1], [0, 0, 1, 1], [], []>} : vector<10x32xbf16>, vector<32x16xbf16>, vector<10x16xf32> -> vector<10x16xf32>
    %c2_380 = arith.constant 2 : index
    %c0_381 = arith.constant 0 : index
    %c0_382 = arith.constant 0 : index
    %665 = vector.load %arg10[%c2_380, %c0_381, %c0_382] : memref<4x1x16xf32, #tpu.memory_space<vmem>>, vector<1x1x16xf32>
    %666 = vector.shape_cast %665 : vector<1x1x16xf32> to vector<1x16xf32>
    %667 = vector.broadcast %666 : vector<1x16xf32> to vector<10x16xf32>
    %668 = arith.addf %664, %667 : vector<10x16xf32>
    %669 = arith.truncf %652 : vector<10x16xf32> to vector<10x16xbf16>
    %670 = arith.truncf %660 : vector<10x16xf32> to vector<10x16xbf16>
    %cst_383 = arith.constant dense<0.000000e+00> : vector<10x10xf32>
    %671 = tpu.matmul %669, %670, %cst_383 {dimension_numbers = #tpu.dot_dimension_numbers<[1], [1], [0], [0], [0, 0, 1, 0], [], []>} : vector<10x16xbf16>, vector<10x16xbf16>, vector<10x10xf32> -> vector<10x10xf32>
    %cst_384 = arith.constant 2.500000e-01 : f32
    %672 = vector.broadcast %cst_384 : f32 to vector<10x10xf32>
    %673 = arith.mulf %671, %672 : vector<10x10xf32>
    %674 = vector.broadcast %466 : vector<1x10xf32> to vector<10x10xf32>
    %675 = arith.addf %673, %674 : vector<10x10xf32>
    %cst_385 = arith.constant dense<0xFF800000> : vector<10xf32>
    %676 = vector.multi_reduction <maximumf>, %675, %cst_385 [1] : vector<10x10xf32> to vector<10xf32>
    %677 = vector.shape_cast %676 : vector<10xf32> to vector<10x1xf32>
    %678 = vector.broadcast %677 : vector<10x1xf32> to vector<10x10xf32>
    %679 = arith.subf %675, %678 : vector<10x10xf32>
    %680 = math.exp %679 : vector<10x10xf32>
    %cst_386 = arith.constant dense<0.000000e+00> : vector<10xf32>
    %681 = vector.multi_reduction <add>, %680, %cst_386 [1] : vector<10x10xf32> to vector<10xf32>
    %682 = vector.shape_cast %681 : vector<10xf32> to vector<10x1xf32>
    %683 = vector.broadcast %682 : vector<10x1xf32> to vector<10x10xf32>
    %684 = arith.divf %680, %683 : vector<10x10xf32>
    %685 = arith.truncf %684 : vector<10x10xf32> to vector<10x10xbf16>
    %686 = arith.truncf %668 : vector<10x16xf32> to vector<10x16xbf16>
    %cst_387 = arith.constant dense<0.000000e+00> : vector<10x16xf32>
    %687 = tpu.matmul %685, %686, %cst_387 {dimension_numbers = #tpu.dot_dimension_numbers<[1], [0], [0], [1], [0, 0, 1, 1], [], []>} : vector<10x10xbf16>, vector<10x16xbf16>, vector<10x16xf32> -> vector<10x16xf32>
    %c2_388 = arith.constant 2 : index
    %c0_389 = arith.constant 0 : index
    %c0_390 = arith.constant 0 : index
    %688 = vector.load %arg11[%c2_388, %c0_389, %c0_390] : memref<4x16x32xbf16, #tpu.memory_space<vmem>>, vector<1x16x32xbf16>
    %689 = vector.shape_cast %688 : vector<1x16x32xbf16> to vector<16x32xbf16>
    %690 = arith.truncf %687 : vector<10x16xf32> to vector<10x16xbf16>
    %cst_391 = arith.constant dense<0.000000e+00> : vector<10x32xf32>
    %691 = tpu.matmul %690, %689, %cst_391 {dimension_numbers = #tpu.dot_dimension_numbers<[1], [0], [0], [1], [0, 0, 1, 1], [], []>} : vector<10x16xbf16>, vector<16x32xbf16>, vector<10x32xf32> -> vector<10x32xf32>
    %c3_392 = arith.constant 3 : index
    %c0_393 = arith.constant 0 : index
    %c0_394 = arith.constant 0 : index
    %692 = vector.load %arg5[%c3_392, %c0_393, %c0_394] : memref<4x32x16xbf16, #tpu.memory_space<vmem>>, vector<1x32x16xbf16>
    %693 = vector.shape_cast %692 : vector<1x32x16xbf16> to vector<32x16xbf16>
    %694 = arith.truncf %644 : vector<10x32xf32> to vector<10x32xbf16>
    %cst_395 = arith.constant dense<0.000000e+00> : vector<10x16xf32>
    %695 = tpu.matmul %694, %693, %cst_395 {dimension_numbers = #tpu.dot_dimension_numbers<[1], [0], [0], [1], [0, 0, 1, 1], [], []>} : vector<10x32xbf16>, vector<32x16xbf16>, vector<10x16xf32> -> vector<10x16xf32>
    %c3_396 = arith.constant 3 : index
    %c0_397 = arith.constant 0 : index
    %c0_398 = arith.constant 0 : index
    %696 = vector.load %arg6[%c3_396, %c0_397, %c0_398] : memref<4x1x16xf32, #tpu.memory_space<vmem>>, vector<1x1x16xf32>
    %697 = vector.shape_cast %696 : vector<1x1x16xf32> to vector<1x16xf32>
    %698 = vector.broadcast %697 : vector<1x16xf32> to vector<10x16xf32>
    %699 = arith.addf %695, %698 : vector<10x16xf32>
    %c3_399 = arith.constant 3 : index
    %c0_400 = arith.constant 0 : index
    %c0_401 = arith.constant 0 : index
    %700 = vector.load %arg7[%c3_399, %c0_400, %c0_401] : memref<4x32x16xbf16, #tpu.memory_space<vmem>>, vector<1x32x16xbf16>
    %701 = vector.shape_cast %700 : vector<1x32x16xbf16> to vector<32x16xbf16>
    %702 = arith.truncf %644 : vector<10x32xf32> to vector<10x32xbf16>
    %cst_402 = arith.constant dense<0.000000e+00> : vector<10x16xf32>
    %703 = tpu.matmul %702, %701, %cst_402 {dimension_numbers = #tpu.dot_dimension_numbers<[1], [0], [0], [1], [0, 0, 1, 1], [], []>} : vector<10x32xbf16>, vector<32x16xbf16>, vector<10x16xf32> -> vector<10x16xf32>
    %c3_403 = arith.constant 3 : index
    %c0_404 = arith.constant 0 : index
    %c0_405 = arith.constant 0 : index
    %704 = vector.load %arg8[%c3_403, %c0_404, %c0_405] : memref<4x1x16xf32, #tpu.memory_space<vmem>>, vector<1x1x16xf32>
    %705 = vector.shape_cast %704 : vector<1x1x16xf32> to vector<1x16xf32>
    %706 = vector.broadcast %705 : vector<1x16xf32> to vector<10x16xf32>
    %707 = arith.addf %703, %706 : vector<10x16xf32>
    %c3_406 = arith.constant 3 : index
    %c0_407 = arith.constant 0 : index
    %c0_408 = arith.constant 0 : index
    %708 = vector.load %arg9[%c3_406, %c0_407, %c0_408] : memref<4x32x16xbf16, #tpu.memory_space<vmem>>, vector<1x32x16xbf16>
    %709 = vector.shape_cast %708 : vector<1x32x16xbf16> to vector<32x16xbf16>
    %710 = arith.truncf %644 : vector<10x32xf32> to vector<10x32xbf16>
    %cst_409 = arith.constant dense<0.000000e+00> : vector<10x16xf32>
    %711 = tpu.matmul %710, %709, %cst_409 {dimension_numbers = #tpu.dot_dimension_numbers<[1], [0], [0], [1], [0, 0, 1, 1], [], []>} : vector<10x32xbf16>, vector<32x16xbf16>, vector<10x16xf32> -> vector<10x16xf32>
    %c3_410 = arith.constant 3 : index
    %c0_411 = arith.constant 0 : index
    %c0_412 = arith.constant 0 : index
    %712 = vector.load %arg10[%c3_410, %c0_411, %c0_412] : memref<4x1x16xf32, #tpu.memory_space<vmem>>, vector<1x1x16xf32>
    %713 = vector.shape_cast %712 : vector<1x1x16xf32> to vector<1x16xf32>
    %714 = vector.broadcast %713 : vector<1x16xf32> to vector<10x16xf32>
    %715 = arith.addf %711, %714 : vector<10x16xf32>
    %716 = arith.truncf %699 : vector<10x16xf32> to vector<10x16xbf16>
    %717 = arith.truncf %707 : vector<10x16xf32> to vector<10x16xbf16>
    %cst_413 = arith.constant dense<0.000000e+00> : vector<10x10xf32>
    %718 = tpu.matmul %716, %717, %cst_413 {dimension_numbers = #tpu.dot_dimension_numbers<[1], [1], [0], [0], [0, 0, 1, 0], [], []>} : vector<10x16xbf16>, vector<10x16xbf16>, vector<10x10xf32> -> vector<10x10xf32>
    %cst_414 = arith.constant 2.500000e-01 : f32
    %719 = vector.broadcast %cst_414 : f32 to vector<10x10xf32>
    %720 = arith.mulf %718, %719 : vector<10x10xf32>
    %721 = vector.broadcast %466 : vector<1x10xf32> to vector<10x10xf32>
    %722 = arith.addf %720, %721 : vector<10x10xf32>
    %cst_415 = arith.constant dense<0xFF800000> : vector<10xf32>
    %723 = vector.multi_reduction <maximumf>, %722, %cst_415 [1] : vector<10x10xf32> to vector<10xf32>
    %724 = vector.shape_cast %723 : vector<10xf32> to vector<10x1xf32>
    %725 = vector.broadcast %724 : vector<10x1xf32> to vector<10x10xf32>
    %726 = arith.subf %722, %725 : vector<10x10xf32>
    %727 = math.exp %726 : vector<10x10xf32>
    %cst_416 = arith.constant dense<0.000000e+00> : vector<10xf32>
    %728 = vector.multi_reduction <add>, %727, %cst_416 [1] : vector<10x10xf32> to vector<10xf32>
    %729 = vector.shape_cast %728 : vector<10xf32> to vector<10x1xf32>
    %730 = vector.broadcast %729 : vector<10x1xf32> to vector<10x10xf32>
    %731 = arith.divf %727, %730 : vector<10x10xf32>
    %732 = arith.truncf %731 : vector<10x10xf32> to vector<10x10xbf16>
    %733 = arith.truncf %715 : vector<10x16xf32> to vector<10x16xbf16>
    %cst_417 = arith.constant dense<0.000000e+00> : vector<10x16xf32>
    %734 = tpu.matmul %732, %733, %cst_417 {dimension_numbers = #tpu.dot_dimension_numbers<[1], [0], [0], [1], [0, 0, 1, 1], [], []>} : vector<10x10xbf16>, vector<10x16xbf16>, vector<10x16xf32> -> vector<10x16xf32>
    %c3_418 = arith.constant 3 : index
    %c0_419 = arith.constant 0 : index
    %c0_420 = arith.constant 0 : index
    %735 = vector.load %arg11[%c3_418, %c0_419, %c0_420] : memref<4x16x32xbf16, #tpu.memory_space<vmem>>, vector<1x16x32xbf16>
    %736 = vector.shape_cast %735 : vector<1x16x32xbf16> to vector<16x32xbf16>
    %737 = arith.truncf %734 : vector<10x16xf32> to vector<10x16xbf16>
    %cst_421 = arith.constant dense<0.000000e+00> : vector<10x32xf32>
    %738 = tpu.matmul %737, %736, %cst_421 {dimension_numbers = #tpu.dot_dimension_numbers<[1], [0], [0], [1], [0, 0, 1, 1], [], []>} : vector<10x16xbf16>, vector<16x32xbf16>, vector<10x32xf32> -> vector<10x32xf32>
    %739 = arith.addf %691, %738 : vector<10x32xf32>
    %740 = arith.addf %644, %739 : vector<10x32xf32>
    %c1_422 = arith.constant 1 : index
    %c0_423 = arith.constant 0 : index
    %c0_424 = arith.constant 0 : index
    %741 = vector.load %arg12[%c1_422, %c0_423, %c0_424] : memref<2x1x32xf32, #tpu.memory_space<vmem>>, vector<1x1x32xf32>
    %742 = vector.shape_cast %741 : vector<1x1x32xf32> to vector<1x32xf32>
    %743 = vector.broadcast %742 : vector<1x32xf32> to vector<10x32xf32>
    %744 = arith.addf %740, %743 : vector<10x32xf32>
    %c1_425 = arith.constant 1 : index
    %c0_426 = arith.constant 0 : index
    %c0_427 = arith.constant 0 : index
    %745 = vector.load %arg13[%c1_425, %c0_426, %c0_427] : memref<2x1x32xf32, #tpu.memory_space<vmem>>, vector<1x1x32xf32>
    %746 = vector.shape_cast %745 : vector<1x1x32xf32> to vector<1x32xf32>
    %c1_428 = arith.constant 1 : index
    %c0_429 = arith.constant 0 : index
    %c0_430 = arith.constant 0 : index
    %747 = vector.load %arg14[%c1_428, %c0_429, %c0_430] : memref<2x1x32xf32, #tpu.memory_space<vmem>>, vector<1x1x32xf32>
    %748 = vector.shape_cast %747 : vector<1x1x32xf32> to vector<1x32xf32>
    %cst_431 = arith.constant dense<0.000000e+00> : vector<10xf32>
    %749 = vector.multi_reduction <add>, %744, %cst_431 [1] : vector<10x32xf32> to vector<10xf32>
    %750 = vector.shape_cast %749 : vector<10xf32> to vector<10x1xf32>
    %cst_432 = arith.constant 3.200000e+01 : f32
    %751 = vector.broadcast %cst_432 : f32 to vector<10x1xf32>
    %752 = arith.divf %750, %751 : vector<10x1xf32>
    %753 = vector.broadcast %752 : vector<10x1xf32> to vector<10x32xf32>
    %754 = arith.subf %744, %753 : vector<10x32xf32>
    %755 = arith.mulf %754, %754 : vector<10x32xf32>
    %cst_433 = arith.constant dense<0.000000e+00> : vector<10xf32>
    %756 = vector.multi_reduction <add>, %755, %cst_433 [1] : vector<10x32xf32> to vector<10xf32>
    %757 = vector.shape_cast %756 : vector<10xf32> to vector<10x1xf32>
    %cst_434 = arith.constant 3.200000e+01 : f32
    %758 = vector.broadcast %cst_434 : f32 to vector<10x1xf32>
    %759 = arith.divf %757, %758 : vector<10x1xf32>
    %cst_435 = arith.constant 9.99999974E-6 : f32
    %760 = vector.broadcast %cst_435 : f32 to vector<10x1xf32>
    %761 = arith.addf %759, %760 : vector<10x1xf32>
    %762 = math.rsqrt %761 : vector<10x1xf32>
    %763 = vector.broadcast %762 : vector<10x1xf32> to vector<10x32xf32>
    %764 = arith.mulf %754, %763 : vector<10x32xf32>
    %765 = vector.broadcast %746 : vector<1x32xf32> to vector<10x32xf32>
    %766 = arith.mulf %764, %765 : vector<10x32xf32>
    %767 = vector.broadcast %748 : vector<1x32xf32> to vector<10x32xf32>
    %768 = arith.addf %766, %767 : vector<10x32xf32>
    %c1_436 = arith.constant 1 : index
    %c0_437 = arith.constant 0 : index
    %c0_438 = arith.constant 0 : index
    %769 = vector.load %arg15[%c1_436, %c0_437, %c0_438] : memref<2x32x64xbf16, #tpu.memory_space<vmem>>, vector<1x32x64xbf16>
    %770 = vector.shape_cast %769 : vector<1x32x64xbf16> to vector<32x64xbf16>
    %771 = arith.truncf %768 : vector<10x32xf32> to vector<10x32xbf16>
    %cst_439 = arith.constant dense<0.000000e+00> : vector<10x64xf32>
    %772 = tpu.matmul %771, %770, %cst_439 {dimension_numbers = #tpu.dot_dimension_numbers<[1], [0], [0], [1], [0, 0, 1, 1], [], []>} : vector<10x32xbf16>, vector<32x64xbf16>, vector<10x64xf32> -> vector<10x64xf32>
    %c1_440 = arith.constant 1 : index
    %c0_441 = arith.constant 0 : index
    %c0_442 = arith.constant 0 : index
    %773 = vector.load %arg16[%c1_440, %c0_441, %c0_442] : memref<2x1x64xf32, #tpu.memory_space<vmem>>, vector<1x1x64xf32>
    %774 = vector.shape_cast %773 : vector<1x1x64xf32> to vector<1x64xf32>
    %775 = vector.broadcast %774 : vector<1x64xf32> to vector<10x64xf32>
    %776 = arith.addf %772, %775 : vector<10x64xf32>
    %777 = arith.mulf %776, %776 : vector<10x64xf32>
    %778 = arith.mulf %776, %777 : vector<10x64xf32>
    %cst_443 = arith.constant 4.471500e-02 : f32
    %779 = vector.broadcast %cst_443 : f32 to vector<10x64xf32>
    %780 = arith.mulf %779, %778 : vector<10x64xf32>
    %781 = arith.addf %776, %780 : vector<10x64xf32>
    %cst_444 = arith.constant 0.797884583 : f32
    %782 = vector.broadcast %cst_444 : f32 to vector<10x64xf32>
    %783 = arith.mulf %782, %781 : vector<10x64xf32>
    %784 = math.tanh %783 : vector<10x64xf32>
    %cst_445 = arith.constant 1.000000e+00 : f32
    %785 = vector.broadcast %cst_445 : f32 to vector<10x64xf32>
    %786 = arith.addf %785, %784 : vector<10x64xf32>
    %cst_446 = arith.constant 5.000000e-01 : f32
    %787 = vector.broadcast %cst_446 : f32 to vector<10x64xf32>
    %788 = arith.mulf %787, %786 : vector<10x64xf32>
    %789 = arith.mulf %776, %788 : vector<10x64xf32>
    %c1_447 = arith.constant 1 : index
    %c0_448 = arith.constant 0 : index
    %c0_449 = arith.constant 0 : index
    %790 = vector.load %arg17[%c1_447, %c0_448, %c0_449] : memref<2x64x32xbf16, #tpu.memory_space<vmem>>, vector<1x64x32xbf16>
    %791 = vector.shape_cast %790 : vector<1x64x32xbf16> to vector<64x32xbf16>
    %792 = arith.truncf %789 : vector<10x64xf32> to vector<10x64xbf16>
    %cst_450 = arith.constant dense<0.000000e+00> : vector<10x32xf32>
    %793 = tpu.matmul %792, %791, %cst_450 {dimension_numbers = #tpu.dot_dimension_numbers<[1], [0], [0], [1], [0, 0, 1, 1], [], []>} : vector<10x64xbf16>, vector<64x32xbf16>, vector<10x32xf32> -> vector<10x32xf32>
    %c1_451 = arith.constant 1 : index
    %c0_452 = arith.constant 0 : index
    %c0_453 = arith.constant 0 : index
    %794 = vector.load %arg18[%c1_451, %c0_452, %c0_453] : memref<2x1x32xf32, #tpu.memory_space<vmem>>, vector<1x1x32xf32>
    %795 = vector.shape_cast %794 : vector<1x1x32xf32> to vector<1x32xf32>
    %796 = vector.broadcast %795 : vector<1x32xf32> to vector<10x32xf32>
    %797 = arith.addf %793, %796 : vector<10x32xf32>
    %798 = arith.addf %768, %797 : vector<10x32xf32>
    %c1_454 = arith.constant 1 : index
    %c0_455 = arith.constant 0 : index
    %c0_456 = arith.constant 0 : index
    %799 = vector.load %arg19[%c1_454, %c0_455, %c0_456] : memref<2x1x32xf32, #tpu.memory_space<vmem>>, vector<1x1x32xf32>
    %800 = vector.shape_cast %799 : vector<1x1x32xf32> to vector<1x32xf32>
    %c1_457 = arith.constant 1 : index
    %c0_458 = arith.constant 0 : index
    %c0_459 = arith.constant 0 : index
    %801 = vector.load %arg20[%c1_457, %c0_458, %c0_459] : memref<2x1x32xf32, #tpu.memory_space<vmem>>, vector<1x1x32xf32>
    %802 = vector.shape_cast %801 : vector<1x1x32xf32> to vector<1x32xf32>
    %cst_460 = arith.constant dense<0.000000e+00> : vector<10xf32>
    %803 = vector.multi_reduction <add>, %798, %cst_460 [1] : vector<10x32xf32> to vector<10xf32>
    %804 = vector.shape_cast %803 : vector<10xf32> to vector<10x1xf32>
    %cst_461 = arith.constant 3.200000e+01 : f32
    %805 = vector.broadcast %cst_461 : f32 to vector<10x1xf32>
    %806 = arith.divf %804, %805 : vector<10x1xf32>
    %807 = vector.broadcast %806 : vector<10x1xf32> to vector<10x32xf32>
    %808 = arith.subf %798, %807 : vector<10x32xf32>
    %809 = arith.mulf %808, %808 : vector<10x32xf32>
    %cst_462 = arith.constant dense<0.000000e+00> : vector<10xf32>
    %810 = vector.multi_reduction <add>, %809, %cst_462 [1] : vector<10x32xf32> to vector<10xf32>
    %811 = vector.shape_cast %810 : vector<10xf32> to vector<10x1xf32>
    %cst_463 = arith.constant 3.200000e+01 : f32
    %812 = vector.broadcast %cst_463 : f32 to vector<10x1xf32>
    %813 = arith.divf %811, %812 : vector<10x1xf32>
    %cst_464 = arith.constant 9.99999974E-6 : f32
    %814 = vector.broadcast %cst_464 : f32 to vector<10x1xf32>
    %815 = arith.addf %813, %814 : vector<10x1xf32>
    %816 = math.rsqrt %815 : vector<10x1xf32>
    %817 = vector.broadcast %816 : vector<10x1xf32> to vector<10x32xf32>
    %818 = arith.mulf %808, %817 : vector<10x32xf32>
    %819 = vector.broadcast %800 : vector<1x32xf32> to vector<10x32xf32>
    %820 = arith.mulf %818, %819 : vector<10x32xf32>
    %821 = vector.broadcast %802 : vector<1x32xf32> to vector<10x32xf32>
    %822 = arith.addf %820, %821 : vector<10x32xf32>
    %c0_465 = arith.constant 0 : index
    %c0_466 = arith.constant 0 : index
    %823 = vector.load %arg21[%c0_465, %c0_466] : memref<32x32xbf16, #tpu.memory_space<vmem>>, vector<32x32xbf16>
    %824 = arith.truncf %822 : vector<10x32xf32> to vector<10x32xbf16>
    %cst_467 = arith.constant dense<0.000000e+00> : vector<10x32xf32>
    %825 = tpu.matmul %824, %823, %cst_467 {dimension_numbers = #tpu.dot_dimension_numbers<[1], [0], [0], [1], [0, 0, 1, 1], [], []>} : vector<10x32xbf16>, vector<32x32xbf16>, vector<10x32xf32> -> vector<10x32xf32>
    %c0_468 = arith.constant 0 : index
    %c0_469 = arith.constant 0 : index
    %826 = vector.load %arg22[%c0_468, %c0_469] : memref<1x32xf32, #tpu.memory_space<vmem>>, vector<1x32xf32>
    %827 = vector.broadcast %826 : vector<1x32xf32> to vector<10x32xf32>
    %828 = arith.addf %825, %827 : vector<10x32xf32>
    %829 = arith.mulf %828, %828 : vector<10x32xf32>
    %830 = arith.mulf %828, %829 : vector<10x32xf32>
    %cst_470 = arith.constant 4.471500e-02 : f32
    %831 = vector.broadcast %cst_470 : f32 to vector<10x32xf32>
    %832 = arith.mulf %831, %830 : vector<10x32xf32>
    %833 = arith.addf %828, %832 : vector<10x32xf32>
    %cst_471 = arith.constant 0.797884583 : f32
    %834 = vector.broadcast %cst_471 : f32 to vector<10x32xf32>
    %835 = arith.mulf %834, %833 : vector<10x32xf32>
    %836 = math.tanh %835 : vector<10x32xf32>
    %cst_472 = arith.constant 1.000000e+00 : f32
    %837 = vector.broadcast %cst_472 : f32 to vector<10x32xf32>
    %838 = arith.addf %837, %836 : vector<10x32xf32>
    %cst_473 = arith.constant 5.000000e-01 : f32
    %839 = vector.broadcast %cst_473 : f32 to vector<10x32xf32>
    %840 = arith.mulf %839, %838 : vector<10x32xf32>
    %841 = arith.mulf %828, %840 : vector<10x32xf32>
    %c0_474 = arith.constant 0 : index
    %c0_475 = arith.constant 0 : index
    %842 = vector.load %arg23[%c0_474, %c0_475] : memref<1x32xf32, #tpu.memory_space<vmem>>, vector<1x32xf32>
    %c0_476 = arith.constant 0 : index
    %c0_477 = arith.constant 0 : index
    %843 = vector.load %arg24[%c0_476, %c0_477] : memref<1x32xf32, #tpu.memory_space<vmem>>, vector<1x32xf32>
    %cst_478 = arith.constant dense<0.000000e+00> : vector<10xf32>
    %844 = vector.multi_reduction <add>, %841, %cst_478 [1] : vector<10x32xf32> to vector<10xf32>
    %845 = vector.shape_cast %844 : vector<10xf32> to vector<10x1xf32>
    %cst_479 = arith.constant 3.200000e+01 : f32
    %846 = vector.broadcast %cst_479 : f32 to vector<10x1xf32>
    %847 = arith.divf %845, %846 : vector<10x1xf32>
    %848 = vector.broadcast %847 : vector<10x1xf32> to vector<10x32xf32>
    %849 = arith.subf %841, %848 : vector<10x32xf32>
    %850 = arith.mulf %849, %849 : vector<10x32xf32>
    %cst_480 = arith.constant dense<0.000000e+00> : vector<10xf32>
    %851 = vector.multi_reduction <add>, %850, %cst_480 [1] : vector<10x32xf32> to vector<10xf32>
    %852 = vector.shape_cast %851 : vector<10xf32> to vector<10x1xf32>
    %cst_481 = arith.constant 3.200000e+01 : f32
    %853 = vector.broadcast %cst_481 : f32 to vector<10x1xf32>
    %854 = arith.divf %852, %853 : vector<10x1xf32>
    %cst_482 = arith.constant 9.99999974E-6 : f32
    %855 = vector.broadcast %cst_482 : f32 to vector<10x1xf32>
    %856 = arith.addf %854, %855 : vector<10x1xf32>
    %857 = math.rsqrt %856 : vector<10x1xf32>
    %858 = vector.broadcast %857 : vector<10x1xf32> to vector<10x32xf32>
    %859 = arith.mulf %849, %858 : vector<10x32xf32>
    %860 = vector.broadcast %842 : vector<1x32xf32> to vector<10x32xf32>
    %861 = arith.mulf %859, %860 : vector<10x32xf32>
    %862 = vector.broadcast %843 : vector<1x32xf32> to vector<10x32xf32>
    %863 = arith.addf %861, %862 : vector<10x32xf32>
    %c0_483 = arith.constant 0 : index
    %c0_484 = arith.constant 0 : index
    %864 = vector.load %arg25[%c0_483, %c0_484] : memref<32x64xbf16, #tpu.memory_space<vmem>>, vector<32x64xbf16>
    %865 = arith.truncf %863 : vector<10x32xf32> to vector<10x32xbf16>
    %cst_485 = arith.constant dense<0.000000e+00> : vector<10x64xf32>
    %866 = tpu.matmul %865, %864, %cst_485 {dimension_numbers = #tpu.dot_dimension_numbers<[1], [0], [0], [1], [0, 0, 1, 1], [], []>} : vector<10x32xbf16>, vector<32x64xbf16>, vector<10x64xf32> -> vector<10x64xf32>
    %c0_486 = arith.constant 0 : index
    %c0_487 = arith.constant 0 : index
    %867 = vector.load %arg26[%c0_486, %c0_487] : memref<1x64xf32, #tpu.memory_space<vmem>>, vector<1x64xf32>
    %868 = vector.broadcast %867 : vector<1x64xf32> to vector<10x64xf32>
    %869 = arith.addf %866, %868 : vector<10x64xf32>
    %c1_488 = arith.constant 1 : index
    %c0_489 = arith.constant 0 : index
    %c0_490 = arith.constant 0 : index
    %870 = vector.load %arg27[%c1_488, %c0_489, %c0_490] : memref<2x10x64xf32, #tpu.memory_space<vmem>>, vector<1x10x64xf32>
    %871 = vector.shape_cast %870 : vector<1x10x64xf32> to vector<10x64xf32>
    %872 = vector.shape_cast %869 : vector<10x64xf32> to vector<1x10x64xf32>
    tpu.vector_store %arg27[%c1_488, %c0_489, %c0_490], %872 {strides = array<i32>} : memref<2x10x64xf32, #tpu.memory_space<vmem>>, vector<1x10x64xf32>,
    return
  }
}

</mosaic_0001>

<llo_original>
// kernel: teasel_forward.2
$region0: #{teasel_forward.2}
  #allocation0 [shape = 'u32[]', space=smem, size = 0x4, offset = 0x4, fixed_abs, tag = 'smem constant byte address 0x4 - core index']
  #allocation1 [shape = 'u32[144,128]{1,0:T(1,128)}', space=vmem, size = 0x12000, scoped, tag = 'internal scratch']
  #allocation2 [shape = 'f32[63,32]{1,0:T(8,128)}', space=vmem, size = 0x8000, scoped, tag = 'scratch operand']
  #allocation3 [shape = 'f32[31,32]{1,0:T(8,128)}', space=vmem, size = 0x4000, scoped, tag = 'scratch operand']
  #allocation4 [shape = 'f32[15,32]{1,0:T(8,128)}', space=vmem, size = 0x2000, scoped, tag = 'scratch operand']
  %s0 = inlined_call_operand.vmem [shape: f32[320,2], index: 0, kind: input, shape index: {}]
  %s1 = inlined_call_operand.vmem [shape: bf16[10,2,32], index: 1, kind: input, shape index: {}]
  %s2 = inlined_call_operand.vmem [shape: bf16[3,32,32], index: 2, kind: input, shape index: {}]
  %s3 = inlined_call_operand.vmem [shape: bf16[2,32,32], index: 3, kind: input, shape index: {}]
  %s4 = inlined_call_operand.vmem [shape: f32[1,32], index: 4, kind: input, shape index: {}]
  %s5 = inlined_call_operand.vmem [shape: f32[1,32], index: 5, kind: input, shape index: {}]
  %s6 = inlined_call_operand.vmem [shape: f32[1,16], index: 6, kind: input, shape index: {}]
  %s7 = inlined_call_operand.vmem [shape: f32[1,16], index: 7, kind: input, shape index: {}]
  %s8 = inlined_call_operand.vmem [shape: bf16[16,32], index: 8, kind: input, shape index: {}]
  %s9 = inlined_call_operand.vmem [shape: f32[1,32], index: 9, kind: input, shape index: {}]
  %s10 = inlined_call_operand.vmem [shape: bf16[32,16], index: 10, kind: input, shape index: {}]
  %s11 = inlined_call_operand.vmem [shape: f32[1,16], index: 11, kind: input, shape index: {}]
  %s12 = inlined_call_operand.vmem [shape: bf16[16,2], index: 12, kind: input, shape index: {}]
  %s13 = inlined_call_operand.vmem [shape: f32[2,2,32], index: 13, kind: output, shape index: {}]
  %s14 = sld [smem:[#allocation0]]
  $region62: #{teasel_forward.2} parent=0
    _
  %s16 = ssub.s32 1, %s14
  %s17 = scalar_select 0, %s16, %s14
  // Predicated region
  $region2: #{teasel_forward.2} parent=0 // pred_check
    _
  $region3: #{teasel_forward.2} parent=0 // pred_check_branch
    %19 = sbr.rel (0) target = $region5
  $region4: #{teasel_forward.2} parent=0 // pred_region
    _
  $region5: #{teasel_forward.2} parent=0 // pred_fallthru
    _
  // Predicated region
  $region6: #{teasel_forward.2} parent=0 // pred_check
    _
  $region7: #{teasel_forward.2} parent=0 // pred_check_branch
    %21 = sbr.rel (0) target = $region9
  $region8: #{teasel_forward.2} parent=0 // pred_region
    _
  $region9: #{teasel_forward.2} parent=0 // pred_fallthru
    _
  // Predicated region
  $region10: #{teasel_forward.2} parent=0 // pred_check
    _
  $region11: #{teasel_forward.2} parent=0 // pred_check_branch
    %23 = sbr.rel (0) target = $region13
  $region12: #{teasel_forward.2} parent=0 // pred_region
    _
  $region13: #{teasel_forward.2} parent=0 // pred_fallthru
    _
  // Predicated region
  $region14: #{teasel_forward.2} parent=0 // pred_check
    _
  $region15: #{teasel_forward.2} parent=0 // pred_check_branch
    %25 = sbr.rel (0) target = $region17
  $region16: #{teasel_forward.2} parent=0 // pred_region
    _
  $region17: #{teasel_forward.2} parent=0 // pred_fallthru
    _
  // Predicated region
  $region18: #{teasel_forward.2} parent=0 // pred_check
    _
  $region19: #{teasel_forward.2} parent=0 // pred_check_branch
    %27 = sbr.rel (0) target = $region21
  $region20: #{teasel_forward.2} parent=0 // pred_region
    _
  $region21: #{teasel_forward.2} parent=0 // pred_fallthru
    _
  // Predicated region
  $region22: #{teasel_forward.2} parent=0 // pred_check
    _
  $region23: #{teasel_forward.2} parent=0 // pred_check_branch
    %29 = sbr.rel (0) target = $region25
  $region24: #{teasel_forward.2} parent=0 // pred_region
    _
  $region25: #{teasel_forward.2} parent=0 // pred_fallthru
    _
  // Predicated region
  $region26: #{teasel_forward.2} parent=0 // pred_check
    _
  $region27: #{teasel_forward.2} parent=0 // pred_check_branch
    %31 = sbr.rel (0) target = $region29
  $region28: #{teasel_forward.2} parent=0 // pred_region
    _
  $region29: #{teasel_forward.2} parent=0 // pred_fallthru
    _
  // Predicated region
  $region30: #{teasel_forward.2} parent=0 // pred_check
    _
  $region31: #{teasel_forward.2} parent=0 // pred_check_branch
    %33 = sbr.rel (0) target = $region33
  $region32: #{teasel_forward.2} parent=0 // pred_region
    _
  $region33: #{teasel_forward.2} parent=0 // pred_fallthru
    _
  // Predicated region
  $region34: #{teasel_forward.2} parent=0 // pred_check
    _
  $region35: #{teasel_forward.2} parent=0 // pred_check_branch
    %35 = sbr.rel (0) target = $region37
  $region36: #{teasel_forward.2} parent=0 // pred_region
    _
  $region37: #{teasel_forward.2} parent=0 // pred_fallthru
    _
  // Predicated region
  $region38: #{teasel_forward.2} parent=0 // pred_check
    _
  $region39: #{teasel_forward.2} parent=0 // pred_check_branch
    %37 = sbr.rel (0) target = $region41
  $region40: #{teasel_forward.2} parent=0 // pred_region
    _
  $region41: #{teasel_forward.2} parent=0 // pred_fallthru
    _
  // Predicated region
  $region42: #{teasel_forward.2} parent=0 // pred_check
    _
  $region43: #{teasel_forward.2} parent=0 // pred_check_branch
    %39 = sbr.rel (0) target = $region45
  $region44: #{teasel_forward.2} parent=0 // pred_region
    _
  $region45: #{teasel_forward.2} parent=0 // pred_fallthru
    _
  // Predicated region
  $region46: #{teasel_forward.2} parent=0 // pred_check
    _
  $region47: #{teasel_forward.2} parent=0 // pred_check_branch
    %41 = sbr.rel (0) target = $region49
  $region48: #{teasel_forward.2} parent=0 // pred_region
    _
  $region49: #{teasel_forward.2} parent=0 // pred_fallthru
    _
  // Predicated region
  $region50: #{teasel_forward.2} parent=0 // pred_check
    _
  $region51: #{teasel_forward.2} parent=0 // pred_check_branch
    %43 = sbr.rel (0) target = $region53
  $region52: #{teasel_forward.2} parent=0 // pred_region
    _
  $region53: #{teasel_forward.2} parent=0 // pred_fallthru
    _
  %v45 = vld [vmem:[%s0] ss:$5 sm:$0xff]
  %s46 = scalar_lea.vmem %s0, 40
  %v47 = vld [vmem:[%s46] ss:$5 sm:$0xff]
  %s48 = scalar_lea.vmem %s0, 80
  %v49 = vld [vmem:[%s48] ss:$5 sm:$0xff]
  %s50 = scalar_lea.vmem %s0, 120
  %v51 = vld [vmem:[%s50] ss:$5 sm:$0xff]
  %s52 = scalar_lea.vmem %s0, 160
  %v53 = vld [vmem:[%s52] ss:$5 sm:$0xff]
  %s54 = scalar_lea.vmem %s0, 200
  %v55 = vld [vmem:[%s54] ss:$5 sm:$0xff]
  %s56 = scalar_lea.vmem %s0, 240
  %v57 = vld [vmem:[%s56] ss:$5 sm:$0xff]
  %s58 = scalar_lea.vmem %s0, 280
  %v59 = vld [vmem:[%s58] ss:$5 sm:$0x7f]
  %v60 = vld [vmem:[%s1] sm:$0x1]
  %v61 = vpack.c.bf16 %v47, %v45
  %v62 = vpack.c.bf16 %v51, %v49
  %v63 = vpack.c.bf16 %v55, %v53
  %v64 = vpack.c.bf16 %v59, %v57
  %s65 = scalar_lea.vmem %s0, 1
  %v66 = vld [vmem:[%s65] ss:$5 sm:$0xff]
  %s67 = scalar_lea.vmem %s0, 41
  %v68 = vld [vmem:[%s67] ss:$5 sm:$0xff]
  %s69 = scalar_lea.vmem %s0, 81
  %v70 = vld [vmem:[%s69] ss:$5 sm:$0xff]
  %s71 = scalar_lea.vmem %s0, 121
  %v72 = vld [vmem:[%s71] ss:$5 sm:$0xff]
  %s73 = scalar_lea.vmem %s0, 161
  %v74 = vld [vmem:[%s73] ss:$5 sm:$0xff]
  %s75 = scalar_lea.vmem %s0, 201
  %v76 = vld [vmem:[%s75] ss:$5 sm:$0xff]
  %s77 = scalar_lea.vmem %s0, 241
  %v78 = vld [vmem:[%s77] ss:$5 sm:$0xff]
  %s79 = scalar_lea.vmem %s0, 281
  %v80 = vld [vmem:[%s79] ss:$5 sm:$0x7f]
  %s81 = scalar_lea.vmem %s1, 1
  %v82 = vld [vmem:[%s81] sm:$0x1]
  %v83 = vpack.c.bf16 %v68, %v66
  %v84 = vpack.c.bf16 %v72, %v70
  %v85 = vpack.c.bf16 %v76, %v74
  %v86 = vpack.c.bf16 %v80, %v78
  %vm87 = vcmask 15360
  %v89 = vsel %vm87, %v83, 0
  %v92 = vsel %vm87, %v84, 0
  %v95 = vsel %vm87, %v85, 0
  %v98 = vsel %vm87, %v86, 0
  %vm100 = vcmask 1040384
  %v102 = vsel %vm100, %v82, 0
  %104 = vmatprep.subr.bf16.mxu0 0
  %105 = vmatpush1.bf16.msra.mxu0 %v102
  %106 = vmatprep.subr.bf16.mxu0 0
  %107 = vmatpush1.bf16.msra.mxu0 0
  %108 = vmatprep.subr.bf16.mxu0 0
  %109 = vmatpush1.bf16.msra.mxu0 0
  %110 = vmatprep.subr.bf16.mxu0 0
  %111 = vmatpush1.bf16.msra.mxu0 0
  %112 = vmatprep.subr.bf16.mxu0 0
  %113 = vmatpush1.bf16.msra.mxu0 0
  %114 = vmatprep.subr.bf16.mxu0 0
  %115 = vmatpush1.bf16.msra.mxu0 0
  %116 = vmatprep.subr.bf16.mxu0 0
  %117 = vmatpush1.bf16.msra.mxu0 0
  %118 = vmatprep.subr.bf16.mxu0 0
  %119 = vmatpush1.bf16.msra.mxu0 0
  %120 = vmatprep.subr.bf16.mxu0 0
  %121 = vmatpush1.bf16.msra.mxu0 0
  %122 = vmatprep.subr.bf16.mxu0 0
  %123 = vmatpush1.bf16.msra.mxu0 0
  %124 = vmatprep.subr.bf16.mxu0 0
  %125 = vmatpush1.bf16.msra.mxu0 0
  %126 = vmatprep.subr.bf16.mxu0 0
  %127 = vmatpush1.bf16.msra.mxu0 0
  %128 = vmatprep.subr.bf16.mxu0 0
  %129 = vmatpush1.bf16.msra.mxu0 0
  %130 = vmatprep.subr.bf16.mxu0 0
  %131 = vmatpush1.bf16.msra.mxu0 0
  %132 = vmatprep.subr.bf16.mxu0 0
  %133 = vmatpush1.bf16.msra.mxu0 0
  %134 = vmatprep.subr.bf16.mxu0 0
  %135 = vmatpush1.bf16.msra.mxu0 0
  %136 = vmatprep.mubr.bf16.mxu0 0
  %137 = vmatmul.mubr.bf16.gmra.mrb[0].mxu0 %v89
  %v138 = vpop.f32.mrb[0].mxu0
  %v139 = vadd.f32 0.0, %v138
  %v140 = vpop.f32.mrb[0].mxu0
  %v141 = vpop.f32.mrb[0].mxu0
  %v142 = vadd.f32 0.0, %v141
  %v143 = vpop.f32.mrb[0].mxu0
  %144 = vmatprep.mubr.bf16.mxu0 0
  %145 = vmatmul.mubr.bf16.gmra.mrb[0].mxu0 %v92
  %v146 = vpop.f32.mrb[0].mxu0
  %v147 = vadd.f32 0.0, %v146
  %v148 = vpop.f32.mrb[0].mxu0
  %v149 = vpop.f32.mrb[0].mxu0
  %v150 = vadd.f32 0.0, %v149
  %v151 = vpop.f32.mrb[0].mxu0
  %152 = vmatprep.mubr.bf16.mxu0 0
  %153 = vmatmul.mubr.bf16.gmra.mrb[0].mxu0 %v95
  %v154 = vpop.f32.mrb[0].mxu0
  %v155 = vadd.f32 0.0, %v154
  %v156 = vpop.f32.mrb[0].mxu0
  %v157 = vpop.f32.mrb[0].mxu0
  %v158 = vadd.f32 0.0, %v157
  %v159 = vpop.f32.mrb[0].mxu0
  %160 = vmatprep.mubr.bf16.mxu0 0
  %161 = vmatmul.mubr.bf16.gmra.mrb[0].mxu0 %v98
  %v162 = vpop.f32.mrb[0].mxu0
  %v163 = vadd.f32 0.0, %v162
  %v164 = vpop.f32.mrb[0].mxu0
  %v165 = vpop.f32.mrb[0].mxu0
  %v166 = vadd.f32 0.0, %v165
  %v167 = vpop.f32.mrb[0].mxu0
  %168 = vdwg.mxu0
  %v170 = vsel %vm87, %v61, 0
  %v173 = vsel %vm87, %v62, 0
  %v176 = vsel %vm87, %v63, 0
  %v179 = vsel %vm87, %v64, 0
  %v182 = vsel %vm100, %v60, 0
  %184 = vmatprep.subr.bf16.mxu0 0
  %185 = vmatpush1.bf16.msra.mxu0 %v182
  %186 = vmatprep.subr.bf16.mxu0 0
  %187 = vmatpush1.bf16.msra.mxu0 0
  %188 = vmatprep.subr.bf16.mxu0 0
  %189 = vmatpush1.bf16.msra.mxu0 0
  %190 = vmatprep.subr.bf16.mxu0 0
  %191 = vmatpush1.bf16.msra.mxu0 0
  %192 = vmatprep.subr.bf16.mxu0 0
  %193 = vmatpush1.bf16.msra.mxu0 0
  %194 = vmatprep.subr.bf16.mxu0 0
  %195 = vmatpush1.bf16.msra.mxu0 0
  %196 = vmatprep.subr.bf16.mxu0 0
  %197 = vmatpush1.bf16.msra.mxu0 0
  %198 = vmatprep.subr.bf16.mxu0 0
  %199 = vmatpush1.bf16.msra.mxu0 0
  %200 = vmatprep.subr.bf16.mxu0 0
  %201 = vmatpush1.bf16.msra.mxu0 0
  %202 = vmatprep.subr.bf16.mxu0 0
  %203 = vmatpush1.bf16.msra.mxu0 0
  %204 = vmatprep.subr.bf16.mxu0 0
  %205 = vmatpush1.bf16.msra.mxu0 0
  %206 = vmatprep.subr.bf16.mxu0 0
  %207 = vmatpush1.bf16.msra.mxu0 0
  %208 = vmatprep.subr.bf16.mxu0 0
  %209 = vmatpush1.bf16.msra.mxu0 0
  %210 = vmatprep.subr.bf16.mxu0 0
  %211 = vmatpush1.bf16.msra.mxu0 0
  %212 = vmatprep.subr.bf16.mxu0 0
  %213 = vmatpush1.bf16.msra.mxu0 0
  %214 = vmatprep.subr.bf16.mxu0 0
  %215 = vmatpush1.bf16.msra.mxu0 0
  %216 = vmatprep.mubr.bf16.mxu0 0
  %217 = vmatmul.mubr.bf16.gmra.mrb[0].mxu0 %v170
  %v218 = vpop.f32.mrb[0].mxu0
  %v219 = vadd.f32 %v139, %v218
  %v220 = vpop.f32.mrb[0].mxu0
  %v221 = vpop.f32.mrb[0].mxu0
  %v222 = vadd.f32 %v142, %v221
  %v223 = vpop.f32.mrb[0].mxu0
  %224 = vmatprep.mubr.bf16.mxu0 0
  %225 = vmatmul.mubr.bf16.gmra.mrb[0].mxu0 %v173
  %v226 = vpop.f32.mrb[0].mxu0
  %v227 = vadd.f32 %v147, %v226
  %v228 = vpop.f32.mrb[0].mxu0
  %v229 = vpop.f32.mrb[0].mxu0
  %v230 = vadd.f32 %v150, %v229
  %v231 = vpop.f32.mrb[0].mxu0
  %232 = vmatprep.mubr.bf16.mxu0 0
  %233 = vmatmul.mubr.bf16.gmra.mrb[0].mxu0 %v176
  %v234 = vpop.f32.mrb[0].mxu0
  %v235 = vadd.f32 %v155, %v234
  %v236 = vpop.f32.mrb[0].mxu0
  %v237 = vpop.f32.mrb[0].mxu0
  %v238 = vadd.f32 %v158, %v237
  %v239 = vpop.f32.mrb[0].mxu0
  %240 = vmatprep.mubr.bf16.mxu0 0
  %241 = vmatmul.mubr.bf16.gmra.mrb[0].mxu0 %v179
  %v242 = vpop.f32.mrb[0].mxu0
  %v243 = vadd.f32 %v163, %v242
  %v244 = vpop.f32.mrb[0].mxu0
  %v245 = vpop.f32.mrb[0].mxu0
  %v246 = vadd.f32 %v166, %v245
  %v247 = vpop.f32.mrb[0].mxu0
  %248 = vdwg.mxu0
  %s249 = scalar_lea.vmem %s0, 2
  %v250 = vld [vmem:[%s249] ss:$5 sm:$0xff]
  %s251 = scalar_lea.vmem %s0, 42
  %v252 = vld [vmem:[%s251] ss:$5 sm:$0xff]
  %s253 = scalar_lea.vmem %s0, 82
  %v254 = vld [vmem:[%s253] ss:$5 sm:$0xff]
  %s255 = scalar_lea.vmem %s0, 122
  %v256 = vld [vmem:[%s255] ss:$5 sm:$0xff]
  %s257 = scalar_lea.vmem %s0, 162
  %v258 = vld [vmem:[%s257] ss:$5 sm:$0xff]
  %s259 = scalar_lea.vmem %s0, 202
  %v260 = vld [vmem:[%s259] ss:$5 sm:$0xff]
  %s261 = scalar_lea.vmem %s0, 242
  %v262 = vld [vmem:[%s261] ss:$5 sm:$0xff]
  %s263 = scalar_lea.vmem %s0, 282
  %v264 = vld [vmem:[%s263] ss:$5 sm:$0x7f]
  %s265 = scalar_lea.vmem %s1, 2
  %v266 = vld [vmem:[%s265] sm:$0x1]
  %v267 = vpack.c.bf16 %v252, %v250
  %v268 = vpack.c.bf16 %v256, %v254
  %v269 = vpack.c.bf16 %v260, %v258
  %v270 = vpack.c.bf16 %v264, %v262
  %v272 = vsel %vm87, %v267, 0
  %v275 = vsel %vm87, %v268, 0
  %v278 = vsel %vm87, %v269, 0
  %v281 = vsel %vm87, %v270, 0
  %v284 = vsel %vm100, %v266, 0
  %286 = vmatprep.subr.bf16.mxu0 0
  %287 = vmatpush1.bf16.msra.mxu0 %v284
  %288 = vmatprep.subr.bf16.mxu0 0
  %289 = vmatpush1.bf16.msra.mxu0 0
  %290 = vmatprep.subr.bf16.mxu0 0
  %291 = vmatpush1.bf16.msra.mxu0 0
  %292 = vmatprep.subr.bf16.mxu0 0
  %293 = vmatpush1.bf16.msra.mxu0 0
  %294 = vmatprep.subr.bf16.mxu0 0
  %295 = vmatpush1.bf16.msra.mxu0 0
  %296 = vmatprep.subr.bf16.mxu0 0
  %297 = vmatpush1.bf16.msra.mxu0 0
  %298 = vmatprep.subr.bf16.mxu0 0
  %299 = vmatpush1.bf16.msra.mxu0 0
  %300 = vmatprep.subr.bf16.mxu0 0
  %301 = vmatpush1.bf16.msra.mxu0 0
  %302 = vmatprep.subr.bf16.mxu0 0
  %303 = vmatpush1.bf16.msra.mxu0 0
  %304 = vmatprep.subr.bf16.mxu0 0
  %305 = vmatpush1.bf16.msra.mxu0 0
  %306 = vmatprep.subr.bf16.mxu0 0
  %307 = vmatpush1.bf16.msra.mxu0 0
  %308 = vmatprep.subr.bf16.mxu0 0
  %309 = vmatpush1.bf16.msra.mxu0 0
  %310 = vmatprep.subr.bf16.mxu0 0
  %311 = vmatpush1.bf16.msra.mxu0 0
  %312 = vmatprep.subr.bf16.mxu0 0
  %313 = vmatpush1.bf16.msra.mxu0 0
  %314 = vmatprep.subr.bf16.mxu0 0
  %315 = vmatpush1.bf16.msra.mxu0 0
  %316 = vmatprep.subr.bf16.mxu0 0
  %317 = vmatpush1.bf16.msra.mxu0 0
  %318 = vmatprep.mubr.bf16.mxu0 0
  %319 = vmatmul.mubr.bf16.gmra.mrb[0].mxu0 %v272
  %v320 = vpop.f32.mrb[0].mxu0
  %v321 = vadd.f32 0.0, %v320
  %v322 = vpop.f32.mrb[0].mxu0
  %v323 = vpop.f32.mrb[0].mxu0
  %v324 = vadd.f32 0.0, %v323
  %v325 = vpop.f32.mrb[0].mxu0
  %326 = vmatprep.mubr.bf16.mxu0 0
  %327 = vmatmul.mubr.bf16.gmra.mrb[0].mxu0 %v275
  %v328 = vpop.f32.mrb[0].mxu0
  %v329 = vadd.f32 0.0, %v328
  %v330 = vpop.f32.mrb[0].mxu0
  %v331 = vpop.f32.mrb[0].mxu0
  %v332 = vadd.f32 0.0, %v331
  %v333 = vpop.f32.mrb[0].mxu0
  %334 = vmatprep.mubr.bf16.mxu0 0
  %335 = vmatmul.mubr.bf16.gmra.mrb[0].mxu0 %v278
  %v336 = vpop.f32.mrb[0].mxu0
  %v337 = vadd.f32 0.0, %v336
  %v338 = vpop.f32.mrb[0].mxu0
  %v339 = vpop.f32.mrb[0].mxu0
  %v340 = vadd.f32 0.0, %v339
  %v341 = vpop.f32.mrb[0].mxu0
  %342 = vmatprep.mubr.bf16.mxu0 0
  %343 = vmatmul.mubr.bf16.gmra.mrb[0].mxu0 %v281
  %v344 = vpop.f32.mrb[0].mxu0
  %v345 = vadd.f32 0.0, %v344
  %v346 = vpop.f32.mrb[0].mxu0
  %v347 = vpop.f32.mrb[0].mxu0
  %v348 = vadd.f32 0.0, %v347
  %v349 = vpop.f32.mrb[0].mxu0
  %350 = vdwg.mxu0
  %v351 = vadd.f32 %v219, %v321
  %v352 = vadd.f32 %v222, %v324
  %v353 = vadd.f32 %v227, %v329
  %v354 = vadd.f32 %v230, %v332
  %v355 = vadd.f32 %v235, %v337
  %v356 = vadd.f32 %v238, %v340
  %v357 = vadd.f32 %v243, %v345
  %v358 = vadd.f32 %v246, %v348
  %s359 = scalar_lea.vmem %s0, 3
  %v360 = vld [vmem:[%s359] ss:$5 sm:$0xff]
  %s361 = scalar_lea.vmem %s0, 43
  %v362 = vld [vmem:[%s361] ss:$5 sm:$0xff]
  %s363 = scalar_lea.vmem %s0, 83
  %v364 = vld [vmem:[%s363] ss:$5 sm:$0xff]
  %s365 = scalar_lea.vmem %s0, 123
  %v366 = vld [vmem:[%s365] ss:$5 sm:$0xff]
  %s367 = scalar_lea.vmem %s0, 163
  %v368 = vld [vmem:[%s367] ss:$5 sm:$0xff]
  %s369 = scalar_lea.vmem %s0, 203
  %v370 = vld [vmem:[%s369] ss:$5 sm:$0xff]
  %s371 = scalar_lea.vmem %s0, 243
  %v372 = vld [vmem:[%s371] ss:$5 sm:$0xff]
  %s373 = scalar_lea.vmem %s0, 283
  %v374 = vld [vmem:[%s373] ss:$5 sm:$0x7f]
  %s375 = scalar_lea.vmem %s1, 3
  %v376 = vld [vmem:[%s375] sm:$0x1]
  %v377 = vpack.c.bf16 %v362, %v360
  %v378 = vpack.c.bf16 %v366, %v364
  %v379 = vpack.c.bf16 %v370, %v368
  %v380 = vpack.c.bf16 %v374, %v372
  %v382 = vsel %vm87, %v377, 0
  %v385 = vsel %vm87, %v378, 0
  %v388 = vsel %vm87, %v379, 0
  %v391 = vsel %vm87, %v380, 0
  %v394 = vsel %vm100, %v376, 0
  %396 = vmatprep.subr.bf16.mxu0 0
  %397 = vmatpush1.bf16.msra.mxu0 %v394
  %398 = vmatprep.subr.bf16.mxu0 0
  %399 = vmatpush1.bf16.msra.mxu0 0
  %400 = vmatprep.subr.bf16.mxu0 0
  %401 = vmatpush1.bf16.msra.mxu0 0
  %402 = vmatprep.subr.bf16.mxu0 0
  %403 = vmatpush1.bf16.msra.mxu0 0
  %404 = vmatprep.subr.bf16.mxu0 0
  %405 = vmatpush1.bf16.msra.mxu0 0
  %406 = vmatprep.subr.bf16.mxu0 0
  %407 = vmatpush1.bf16.msra.mxu0 0
  %408 = vmatprep.subr.bf16.mxu0 0
  %409 = vmatpush1.bf16.msra.mxu0 0
  %410 = vmatprep.subr.bf16.mxu0 0
  %411 = vmatpush1.bf16.msra.mxu0 0
  %412 = vmatprep.subr.bf16.mxu0 0
  %413 = vmatpush1.bf16.msra.mxu0 0
  %414 = vmatprep.subr.bf16.mxu0 0
  %415 = vmatpush1.bf16.msra.mxu0 0
  %416 = vmatprep.subr.bf16.mxu0 0
  %417 = vmatpush1.bf16.msra.mxu0 0
  %418 = vmatprep.subr.bf16.mxu0 0
  %419 = vmatpush1.bf16.msra.mxu0 0
  %420 = vmatprep.subr.bf16.mxu0 0
  %421 = vmatpush1.bf16.msra.mxu0 0
  %422 = vmatprep.subr.bf16.mxu0 0
  %423 = vmatpush1.bf16.msra.mxu0 0
  %424 = vmatprep.subr.bf16.mxu0 0
  %425 = vmatpush1.bf16.msra.mxu0 0
  %426 = vmatprep.subr.bf16.mxu0 0
  %427 = vmatpush1.bf16.msra.mxu0 0
  %428 = vmatprep.mubr.bf16.mxu0 0
  %429 = vmatmul.mubr.bf16.gmra.mrb[0].mxu0 %v382
  %v430 = vpop.f32.mrb[0].mxu0
  %v431 = vadd.f32 0.0, %v430
  %v432 = vpop.f32.mrb[0].mxu0
  %v433 = vpop.f32.mrb[0].mxu0
  %v434 = vadd.f32 0.0, %v433
  %v435 = vpop.f32.mrb[0].mxu0
  %436 = vmatprep.mubr.bf16.mxu0 0
  %437 = vmatmul.mubr.bf16.gmra.mrb[0].mxu0 %v385
  %v438 = vpop.f32.mrb[0].mxu0
  %v439 = vadd.f32 0.0, %v438
  %v440 = vpop.f32.mrb[0].mxu0
  %v441 = vpop.f32.mrb[0].mxu0
  %v442 = vadd.f32 0.0, %v441
  %v443 = vpop.f32.mrb[0].mxu0
  %444 = vmatprep.mubr.bf16.mxu0 0
  %445 = vmatmul.mubr.bf16.gmra.mrb[0].mxu0 %v388
  %v446 = vpop.f32.mrb[0].mxu0
  %v447 = vadd.f32 0.0, %v446
  %v448 = vpop.f32.mrb[0].mxu0
  %v449 = vpop.f32.mrb[0].mxu0
  %v450 = vadd.f32 0.0, %v449
  %v451 = vpop.f32.mrb[0].mxu0
  %452 = vmatprep.mubr.bf16.mxu0 0
  %453 = vmatmul.mubr.bf16.gmra.mrb[0].mxu0 %v391
  %v454 = vpop.f32.mrb[0].mxu0
  %v455 = vadd.f32 0.0, %v454
  %v456 = vpop.f32.mrb[0].mxu0
  %v457 = vpop.f32.mrb[0].mxu0
  %v458 = vadd.f32 0.0, %v457
  %v459 = vpop.f32.mrb[0].mxu0
  %460 = vdwg.mxu0
  %v461 = vadd.f32 %v351, %v431
  %v462 = vadd.f32 %v352, %v434
  %v463 = vadd.f32 %v353, %v439
  %v464 = vadd.f32 %v354, %v442
  %v465 = vadd.f32 %v355, %v447
  %v466 = vadd.f32 %v356, %v450
  %v467 = vadd.f32 %v357, %v455
  %v468 = vadd.f32 %v358, %v458
  %s469 = scalar_lea.vmem %s0, 4
  %v470 = vld [vmem:[%s469] ss:$5 sm:$0xff]
  %s471 = scalar_lea.vmem %s0, 44
  %v472 = vld [vmem:[%s471] ss:$5 sm:$0xff]
  %s473 = scalar_lea.vmem %s0, 84
  %v474 = vld [vmem:[%s473] ss:$5 sm:$0xff]
  %s475 = scalar_lea.vmem %s0, 124
  %v476 = vld [vmem:[%s475] ss:$5 sm:$0xff]
  %s477 = scalar_lea.vmem %s0, 164
  %v478 = vld [vmem:[%s477] ss:$5 sm:$0xff]
  %s479 = scalar_lea.vmem %s0, 204
  %v480 = vld [vmem:[%s479] ss:$5 sm:$0xff]
  %s481 = scalar_lea.vmem %s0, 244
  %v482 = vld [vmem:[%s481] ss:$5 sm:$0xff]
  %s483 = scalar_lea.vmem %s0, 284
  %v484 = vld [vmem:[%s483] ss:$5 sm:$0x7f]
  %s485 = scalar_lea.vmem %s1, 4
  %v486 = vld [vmem:[%s485] sm:$0x1]
  %v487 = vpack.c.bf16 %v472, %v470
  %v488 = vpack.c.bf16 %v476, %v474
  %v489 = vpack.c.bf16 %v480, %v478
  %v490 = vpack.c.bf16 %v484, %v482
  %v492 = vsel %vm87, %v487, 0
  %v495 = vsel %vm87, %v488, 0
  %v498 = vsel %vm87, %v489, 0
  %v501 = vsel %vm87, %v490, 0
  %v504 = vsel %vm100, %v486, 0
  %506 = vmatprep.subr.bf16.mxu0 0
  %507 = vmatpush1.bf16.msra.mxu0 %v504
  %508 = vmatprep.subr.bf16.mxu0 0
  %509 = vmatpush1.bf16.msra.mxu0 0
  %510 = vmatprep.subr.bf16.mxu0 0
  %511 = vmatpush1.bf16.msra.mxu0 0
  %512 = vmatprep.subr.bf16.mxu0 0
  %513 = vmatpush1.bf16.msra.mxu0 0
  %514 = vmatprep.subr.bf16.mxu0 0
  %515 = vmatpush1.bf16.msra.mxu0 0
  %516 = vmatprep.subr.bf16.mxu0 0
  %517 = vmatpush1.bf16.msra.mxu0 0
  %518 = vmatprep.subr.bf16.mxu0 0
  %519 = vmatpush1.bf16.msra.mxu0 0
  %520 = vmatprep.subr.bf16.mxu0 0
  %521 = vmatpush1.bf16.msra.mxu0 0
  %522 = vmatprep.subr.bf16.mxu0 0
  %523 = vmatpush1.bf16.msra.mxu0 0
  %524 = vmatprep.subr.bf16.mxu0 0
  %525 = vmatpush1.bf16.msra.mxu0 0
  %526 = vmatprep.subr.bf16.mxu0 0
  %527 = vmatpush1.bf16.msra.mxu0 0
  %528 = vmatprep.subr.bf16.mxu0 0
  %529 = vmatpush1.bf16.msra.mxu0 0
  %530 = vmatprep.subr.bf16.mxu0 0
  %531 = vmatpush1.bf16.msra.mxu0 0
  %532 = vmatprep.subr.bf16.mxu0 0
  %533 = vmatpush1.bf16.msra.mxu0 0
  %534 = vmatprep.subr.bf16.mxu0 0
  %535 = vmatpush1.bf16.msra.mxu0 0
  %536 = vmatprep.subr.bf16.mxu0 0
  %537 = vmatpush1.bf16.msra.mxu0 0
  %538 = vmatprep.mubr.bf16.mxu0 0
  %539 = vmatmul.mubr.bf16.gmra.mrb[0].mxu0 %v492
  %v540 = vpop.f32.mrb[0].mxu0
  %v541 = vadd.f32 0.0, %v540
  %v542 = vpop.f32.mrb[0].mxu0
  %v543 = vpop.f32.mrb[0].mxu0
  %v544 = vadd.f32 0.0, %v543
  %v545 = vpop.f32.mrb[0].mxu0
  %546 = vmatprep.mubr.bf16.mxu0 0
  %547 = vmatmul.mubr.bf16.gmra.mrb[0].mxu0 %v495
  %v548 = vpop.f32.mrb[0].mxu0
  %v549 = vadd.f32 0.0, %v548
  %v550 = vpop.f32.mrb[0].mxu0
  %v551 = vpop.f32.mrb[0].mxu0
  %v552 = vadd.f32 0.0, %v551
  %v553 = vpop.f32.mrb[0].mxu0
  %554 = vmatprep.mubr.bf16.mxu0 0
  %555 = vmatmul.mubr.bf16.gmra.mrb[0].mxu0 %v498
  %v556 = vpop.f32.mrb[0].mxu0
  %v557 = vadd.f32 0.0, %v556
  %v558 = vpop.f32.mrb[0].mxu0
  %v559 = vpop.f32.mrb[0].mxu0
  %v560 = vadd.f32 0.0, %v559
  %v561 = vpop.f32.mrb[0].mxu0
  %562 = vmatprep.mubr.bf16.mxu0 0
  %563 = vmatmul.mubr.bf16.gmra.mrb[0].mxu0 %v501
  %v564 = vpop.f32.mrb[0].mxu0
  %v565 = vadd.f32 0.0, %v564
  %v566 = vpop.f32.mrb[0].mxu0
  %v567 = vpop.f32.mrb[0].mxu0
  %v568 = vadd.f32 0.0, %v567
  %v569 = vpop.f32.mrb[0].mxu0
  %570 = vdwg.mxu0
  %v571 = vadd.f32 %v461, %v541
  %v572 = vadd.f32 %v462, %v544
  %v573 = vadd.f32 %v463, %v549
  %v574 = vadd.f32 %v464, %v552
  %v575 = vadd.f32 %v465, %v557
  %v576 = vadd.f32 %v466, %v560
  %v577 = vadd.f32 %v467, %v565
  %v578 = vadd.f32 %v468, %v568
  %s579 = scalar_lea.vmem %s0, 5
  %v580 = vld [vmem:[%s579] ss:$5 sm:$0xff]
  %s581 = scalar_lea.vmem %s0, 45
  %v582 = vld [vmem:[%s581] ss:$5 sm:$0xff]
  %s583 = scalar_lea.vmem %s0, 85
  %v584 = vld [vmem:[%s583] ss:$5 sm:$0xff]
  %s585 = scalar_lea.vmem %s0, 125
  %v586 = vld [vmem:[%s585] ss:$5 sm:$0xff]
  %s587 = scalar_lea.vmem %s0, 165
  %v588 = vld [vmem:[%s587] ss:$5 sm:$0xff]
  %s589 = scalar_lea.vmem %s0, 205
  %v590 = vld [vmem:[%s589] ss:$5 sm:$0xff]
  %s591 = scalar_lea.vmem %s0, 245
  %v592 = vld [vmem:[%s591] ss:$5 sm:$0xff]
  %s593 = scalar_lea.vmem %s0, 285
  %v594 = vld [vmem:[%s593] ss:$5 sm:$0x7f]
  %s595 = scalar_lea.vmem %s1, 5
  %v596 = vld [vmem:[%s595] sm:$0x1]
  %v597 = vpack.c.bf16 %v582, %v580
  %v598 = vpack.c.bf16 %v586, %v584
  %v599 = vpack.c.bf16 %v590, %v588
  %v600 = vpack.c.bf16 %v594, %v592
  %v602 = vsel %vm87, %v597, 0
  %v605 = vsel %vm87, %v598, 0
  %v608 = vsel %vm87, %v599, 0
  %v611 = vsel %vm87, %v600, 0
  %v614 = vsel %vm100, %v596, 0
  %616 = vmatprep.subr.bf16.mxu0 0
  %617 = vmatpush1.bf16.msra.mxu0 %v614
  %618 = vmatprep.subr.bf16.mxu0 0
  %619 = vmatpush1.bf16.msra.mxu0 0
  %620 = vmatprep.subr.bf16.mxu0 0
  %621 = vmatpush1.bf16.msra.mxu0 0
  %622 = vmatprep.subr.bf16.mxu0 0
  %623 = vmatpush1.bf16.msra.mxu0 0
  %624 = vmatprep.subr.bf16.mxu0 0
  %625 = vmatpush1.bf16.msra.mxu0 0
  %626 = vmatprep.subr.bf16.mxu0 0
  %627 = vmatpush1.bf16.msra.mxu0 0
  %628 = vmatprep.subr.bf16.mxu0 0
  %629 = vmatpush1.bf16.msra.mxu0 0
  %630 = vmatprep.subr.bf16.mxu0 0
  %631 = vmatpush1.bf16.msra.mxu0 0
  %632 = vmatprep.subr.bf16.mxu0 0
  %633 = vmatpush1.bf16.msra.mxu0 0
  %634 = vmatprep.subr.bf16.mxu0 0
  %635 = vmatpush1.bf16.msra.mxu0 0
  %636 = vmatprep.subr.bf16.mxu0 0
  %637 = vmatpush1.bf16.msra.mxu0 0
  %638 = vmatprep.subr.bf16.mxu0 0
  %639 = vmatpush1.bf16.msra.mxu0 0
  %640 = vmatprep.subr.bf16.mxu0 0
  %641 = vmatpush1.bf16.msra.mxu0 0
  %642 = vmatprep.subr.bf16.mxu0 0
  %643 = vmatpush1.bf16.msra.mxu0 0
  %644 = vmatprep.subr.bf16.mxu0 0
  %645 = vmatpush1.bf16.msra.mxu0 0
  %646 = vmatprep.subr.bf16.mxu0 0
  %647 = vmatpush1.bf16.msra.mxu0 0
  %648 = vmatprep.mubr.bf16.mxu0 0
  %649 = vmatmul.mubr.bf16.gmra.mrb[0].mxu0 %v602
  %v650 = vpop.f32.mrb[0].mxu0
  %v651 = vadd.f32 0.0, %v650
  %v652 = vpop.f32.mrb[0].mxu0
  %v653 = vpop.f32.mrb[0].mxu0
  %v654 = vadd.f32 0.0, %v653
  %v655 = vpop.f32.mrb[0].mxu0
  %656 = vmatprep.mubr.bf16.mxu0 0
  %657 = vmatmul.mubr.bf16.gmra.mrb[0].mxu0 %v605
  %v658 = vpop.f32.mrb[0].mxu0
  %v659 = vadd.f32 0.0, %v658
  %v660 = vpop.f32.mrb[0].mxu0
  %v661 = vpop.f32.mrb[0].mxu0
  %v662 = vadd.f32 0.0, %v661
  %v663 = vpop.f32.mrb[0].mxu0
  %664 = vmatprep.mubr.bf16.mxu0 0
  %665 = vmatmul.mubr.bf16.gmra.mrb[0].mxu0 %v608
  %v666 = vpop.f32.mrb[0].mxu0
  %v667 = vadd.f32 0.0, %v666
  %v668 = vpop.f32.mrb[0].mxu0
  %v669 = vpop.f32.mrb[0].mxu0
  %v670 = vadd.f32 0.0, %v669
  %v671 = vpop.f32.mrb[0].mxu0
  %672 = vmatprep.mubr.bf16.mxu0 0
  %673 = vmatmul.mubr.bf16.gmra.mrb[0].mxu0 %v611
  %v674 = vpop.f32.mrb[0].mxu0
  %v675 = vadd.f32 0.0, %v674
  %v676 = vpop.f32.mrb[0].mxu0
  %v677 = vpop.f32.mrb[0].mxu0
  %v678 = vadd.f32 0.0, %v677
  %v679 = vpop.f32.mrb[0].mxu0
  %680 = vdwg.mxu0
  %v681 = vadd.f32 %v571, %v651
  %v682 = vadd.f32 %v572, %v654
  %v683 = vadd.f32 %v573, %v659
  %v684 = vadd.f32 %v574, %v662
  %v685 = vadd.f32 %v575, %v667
  %v686 = vadd.f32 %v576, %v670
  %v687 = vadd.f32 %v577, %v675
  %v688 = vadd.f32 %v578, %v678
  %s689 = scalar_lea.vmem %s0, 6
  %v690 = vld [vmem:[%s689] ss:$5 sm:$0xff]
  %s691 = scalar_lea.vmem %s0, 46
  %v692 = vld [vmem:[%s691] ss:$5 sm:$0xff]
  %s693 = scalar_lea.vmem %s0, 86
  %v694 = vld [vmem:[%s693] ss:$5 sm:$0xff]
  %s695 = scalar_lea.vmem %s0, 126
  %v696 = vld [vmem:[%s695] ss:$5 sm:$0xff]
  %s697 = scalar_lea.vmem %s0, 166
  %v698 = vld [vmem:[%s697] ss:$5 sm:$0xff]
  %s699 = scalar_lea.vmem %s0, 206
  %v700 = vld [vmem:[%s699] ss:$5 sm:$0xff]
  %s701 = scalar_lea.vmem %s0, 246
  %v702 = vld [vmem:[%s701] ss:$5 sm:$0xff]
  %s703 = scalar_lea.vmem %s0, 286
  %v704 = vld [vmem:[%s703] ss:$5 sm:$0x7f]
  %s705 = scalar_lea.vmem %s1, 6
  %v706 = vld [vmem:[%s705] sm:$0x1]
  %v707 = vpack.c.bf16 %v692, %v690
  %v708 = vpack.c.bf16 %v696, %v694
  %v709 = vpack.c.bf16 %v700, %v698
  %v710 = vpack.c.bf16 %v704, %v702
  %v712 = vsel %vm87, %v707, 0
  %v715 = vsel %vm87, %v708, 0
  %v718 = vsel %vm87, %v709, 0
  %v721 = vsel %vm87, %v710, 0
  %v724 = vsel %vm100, %v706, 0
  %726 = vmatprep.subr.bf16.mxu0 0
  %727 = vmatpush1.bf16.msra.mxu0 %v724
  %728 = vmatprep.subr.bf16.mxu0 0
  %729 = vmatpush1.bf16.msra.mxu0 0
  %730 = vmatprep.subr.bf16.mxu0 0
  %731 = vmatpush1.bf16.msra.mxu0 0
  %732 = vmatprep.subr.bf16.mxu0 0
  %733 = vmatpush1.bf16.msra.mxu0 0
  %734 = vmatprep.subr.bf16.mxu0 0
  %735 = vmatpush1.bf16.msra.mxu0 0
  %736 = vmatprep.subr.bf16.mxu0 0
  %737 = vmatpush1.bf16.msra.mxu0 0
  %738 = vmatprep.subr.bf16.mxu0 0
  %739 = vmatpush1.bf16.msra.mxu0 0
  %740 = vmatprep.subr.bf16.mxu0 0
  %741 = vmatpush1.bf16.msra.mxu0 0
  %742 = vmatprep.subr.bf16.mxu0 0
  %743 = vmatpush1.bf16.msra.mxu0 0
  %744 = vmatprep.subr.bf16.mxu0 0
  %745 = vmatpush1.bf16.msra.mxu0 0
  %746 = vmatprep.subr.bf16.mxu0 0
  %747 = vmatpush1.bf16.msra.mxu0 0
  %748 = vmatprep.subr.bf16.mxu0 0
  %749 = vmatpush1.bf16.msra.mxu0 0
  %750 = vmatprep.subr.bf16.mxu0 0
  %751 = vmatpush1.bf16.msra.mxu0 0
  %752 = vmatprep.subr.bf16.mxu0 0
  %753 = vmatpush1.bf16.msra.mxu0 0
  %754 = vmatprep.subr.bf16.mxu0 0
  %755 = vmatpush1.bf16.msra.mxu0 0
  %756 = vmatprep.subr.bf16.mxu0 0
  %757 = vmatpush1.bf16.msra.mxu0 0
  %758 = vmatprep.mubr.bf16.mxu0 0
  %759 = vmatmul.mubr.bf16.gmra.mrb[0].mxu0 %v712
  %v760 = vpop.f32.mrb[0].mxu0
  %v761 = vadd.f32 0.0, %v760
  %v762 = vpop.f32.mrb[0].mxu0
  %v763 = vpop.f32.mrb[0].mxu0
  %v764 = vadd.f32 0.0, %v763
  %v765 = vpop.f32.mrb[0].mxu0
  %766 = vmatprep.mubr.bf16.mxu0 0
  %767 = vmatmul.mubr.bf16.gmra.mrb[0].mxu0 %v715
  %v768 = vpop.f32.mrb[0].mxu0
  %v769 = vadd.f32 0.0, %v768
  %v770 = vpop.f32.mrb[0].mxu0
  %v771 = vpop.f32.mrb[0].mxu0
  %v772 = vadd.f32 0.0, %v771
  %v773 = vpop.f32.mrb[0].mxu0
  %774 = vmatprep.mubr.bf16.mxu0 0
  %775 = vmatmul.mubr.bf16.gmra.mrb[0].mxu0 %v718
  %v776 = vpop.f32.mrb[0].mxu0
  %v777 = vadd.f32 0.0, %v776
  %v778 = vpop.f32.mrb[0].mxu0
  %v779 = vpop.f32.mrb[0].mxu0
  %v780 = vadd.f32 0.0, %v779
  %v781 = vpop.f32.mrb[0].mxu0
  %782 = vmatprep.mubr.bf16.mxu0 0
  %783 = vmatmul.mubr.bf16.gmra.mrb[0].mxu0 %v721
  %v784 = vpop.f32.mrb[0].mxu0
  %v785 = vadd.f32 0.0, %v784
  %v786 = vpop.f32.mrb[0].mxu0
  %v787 = vpop.f32.mrb[0].mxu0
  %v788 = vadd.f32 0.0, %v787
  %v789 = vpop.f32.mrb[0].mxu0
  %790 = vdwg.mxu0
  %v791 = vadd.f32 %v681, %v761
  %v792 = vadd.f32 %v682, %v764
  %v793 = vadd.f32 %v683, %v769
  %v794 = vadd.f32 %v684, %v772
  %v795 = vadd.f32 %v685, %v777
  %v796 = vadd.f32 %v686, %v780
  %v797 = vadd.f32 %v687, %v785
  %v798 = vadd.f32 %v688, %v788
  %s799 = scalar_lea.vmem %s0, 7
  %v800 = vld [vmem:[%s799] ss:$5 sm:$0xff]
  %s801 = scalar_lea.vmem %s0, 47
  %v802 = vld [vmem:[%s801] ss:$5 sm:$0xff]
  %s803 = scalar_lea.vmem %s0, 87
  %v804 = vld [vmem:[%s803] ss:$5 sm:$0xff]
  %s805 = scalar_lea.vmem %s0, 127
  %v806 = vld [vmem:[%s805] ss:$5 sm:$0xff]
  %s807 = scalar_lea.vmem %s0, 167
  %v808 = vld [vmem:[%s807] ss:$5 sm:$0xff]
  %s809 = scalar_lea.vmem %s0, 207
  %v810 = vld [vmem:[%s809] ss:$5 sm:$0xff]
  %s811 = scalar_lea.vmem %s0, 247
  %v812 = vld [vmem:[%s811] ss:$5 sm:$0xff]
  %s813 = scalar_lea.vmem %s0, 287
  %v814 = vld [vmem:[%s813] ss:$5 sm:$0x7f]
  %s815 = scalar_lea.vmem %s1, 7
  %v816 = vld [vmem:[%s815] sm:$0x1]
  %v817 = vpack.c.bf16 %v802, %v800
  %v818 = vpack.c.bf16 %v806, %v804
  %v819 = vpack.c.bf16 %v810, %v808
  %v820 = vpack.c.bf16 %v814, %v812
  %v822 = vsel %vm87, %v817, 0
  %v825 = vsel %vm87, %v818, 0
  %v828 = vsel %vm87, %v819, 0
  %v831 = vsel %vm87, %v820, 0
  %v834 = vsel %vm100, %v816, 0
  %836 = vmatprep.subr.bf16.mxu0 0
  %837 = vmatpush1.bf16.msra.mxu0 %v834
  %838 = vmatprep.subr.bf16.mxu0 0
  %839 = vmatpush1.bf16.msra.mxu0 0
  %840 = vmatprep.subr.bf16.mxu0 0
  %841 = vmatpush1.bf16.msra.mxu0 0
  %842 = vmatprep.subr.bf16.mxu0 0
  %843 = vmatpush1.bf16.msra.mxu0 0
  %844 = vmatprep.subr.bf16.mxu0 0
  %845 = vmatpush1.bf16.msra.mxu0 0
  %846 = vmatprep.subr.bf16.mxu0 0
  %847 = vmatpush1.bf16.msra.mxu0 0
  %848 = vmatprep.subr.bf16.mxu0 0
  %849 = vmatpush1.bf16.msra.mxu0 0
  %850 = vmatprep.subr.bf16.mxu0 0
  %851 = vmatpush1.bf16.msra.mxu0 0
  %852 = vmatprep.subr.bf16.mxu0 0
  %853 = vmatpush1.bf16.msra.mxu0 0
  %854 = vmatprep.subr.bf16.mxu0 0
  %855 = vmatpush1.bf16.msra.mxu0 0
  %856 = vmatprep.subr.bf16.mxu0 0
  %857 = vmatpush1.bf16.msra.mxu0 0
  %858 = vmatprep.subr.bf16.mxu0 0
  %859 = vmatpush1.bf16.msra.mxu0 0
  %860 = vmatprep.subr.bf16.mxu0 0
  %861 = vmatpush1.bf16.msra.mxu0 0
  %862 = vmatprep.subr.bf16.mxu0 0
  %863 = vmatpush1.bf16.msra.mxu0 0
  %864 = vmatprep.subr.bf16.mxu0 0
  %865 = vmatpush1.bf16.msra.mxu0 0
  %866 = vmatprep.subr.bf16.mxu0 0
  %867 = vmatpush1.bf16.msra.mxu0 0
  %868 = vmatprep.mubr.bf16.mxu0 0
  %869 = vmatmul.mubr.bf16.gmra.mrb[0].mxu0 %v822
  %v870 = vpop.f32.mrb[0].mxu0
  %v871 = vadd.f32 0.0, %v870
  %v872 = vpop.f32.mrb[0].mxu0
  %v873 = vpop.f32.mrb[0].mxu0
  %v874 = vadd.f32 0.0, %v873
  %v875 = vpop.f32.mrb[0].mxu0
  %876 = vmatprep.mubr.bf16.mxu0 0
  %877 = vmatmul.mubr.bf16.gmra.mrb[0].mxu0 %v825
  %v878 = vpop.f32.mrb[0].mxu0
  %v879 = vadd.f32 0.0, %v878
  %v880 = vpop.f32.mrb[0].mxu0
  %v881 = vpop.f32.mrb[0].mxu0
  %v882 = vadd.f32 0.0, %v881
  %v883 = vpop.f32.mrb[0].mxu0
  %884 = vmatprep.mubr.bf16.mxu0 0
  %885 = vmatmul.mubr.bf16.gmra.mrb[0].mxu0 %v828
  %v886 = vpop.f32.mrb[0].mxu0
  %v887 = vadd.f32 0.0, %v886
  %v888 = vpop.f32.mrb[0].mxu0
  %v889 = vpop.f32.mrb[0].mxu0
  %v890 = vadd.f32 0.0, %v889
  %v891 = vpop.f32.mrb[0].mxu0
  %892 = vmatprep.mubr.bf16.mxu0 0
  %893 = vmatmul.mubr.bf16.gmra.mrb[0].mxu0 %v831
  %v894 = vpop.f32.mrb[0].mxu0
  %v895 = vadd.f32 0.0, %v894
  %v896 = vpop.f32.mrb[0].mxu0
  %v897 = vpop.f32.mrb[0].mxu0
  %v898 = vadd.f32 0.0, %v897
  %v899 = vpop.f32.mrb[0].mxu0
  %900 = vdwg.mxu0
  %v901 = vadd.f32 %v791, %v871
  %v902 = vadd.f32 %v792, %v874
  %v903 = vadd.f32 %v793, %v879
  %v904 = vadd.f32 %v794, %v882
  %v905 = vadd.f32 %v795, %v887
  %v906 = vadd.f32 %v796, %v890
  %v907 = vadd.f32 %v797, %v895
  %v908 = vadd.f32 %v798, %v898
  %s909 = scalar_lea.vmem %s0, 8
  %v910 = vld [vmem:[%s909] ss:$5 sm:$0xff]
  %s911 = scalar_lea.vmem %s0, 48
  %v912 = vld [vmem:[%s911] ss:$5 sm:$0xff]
  %s913 = scalar_lea.vmem %s0, 88
  %v914 = vld [vmem:[%s913] ss:$5 sm:$0xff]
  %s915 = scalar_lea.vmem %s0, 128
  %v916 = vld [vmem:[%s915] ss:$5 sm:$0xff]
  %s917 = scalar_lea.vmem %s0, 168
  %v918 = vld [vmem:[%s917] ss:$5 sm:$0xff]
  %s919 = scalar_lea.vmem %s0, 208
  %v920 = vld [vmem:[%s919] ss:$5 sm:$0xff]
  %s921 = scalar_lea.vmem %s0, 248
  %v922 = vld [vmem:[%s921] ss:$5 sm:$0xff]
  %s923 = scalar_lea.vmem %s0, 288
  %v924 = vld [vmem:[%s923] ss:$5 sm:$0x7f]
  %s925 = scalar_lea.vmem %s1, 8
  %v926 = vld [vmem:[%s925] sm:$0x1]
  %v927 = vpack.c.bf16 %v912, %v910
  %v928 = vpack.c.bf16 %v916, %v914
  %v929 = vpack.c.bf16 %v920, %v918
  %v930 = vpack.c.bf16 %v924, %v922
  %v932 = vsel %vm87, %v927, 0
  %v935 = vsel %vm87, %v928, 0
  %v938 = vsel %vm87, %v929, 0
  %v941 = vsel %vm87, %v930, 0
  %v944 = vsel %vm100, %v926, 0
  %946 = vmatprep.subr.bf16.mxu0 0
  %947 = vmatpush1.bf16.msra.mxu0 %v944
  %948 = vmatprep.subr.bf16.mxu0 0
  %949 = vmatpush1.bf16.msra.mxu0 0
  %950 = vmatprep.subr.bf16.mxu0 0
  %951 = vmatpush1.bf16.msra.mxu0 0
  %952 = vmatprep.subr.bf16.mxu0 0
  %953 = vmatpush1.bf16.msra.mxu0 0
  %954 = vmatprep.subr.bf16.mxu0 0
  %955 = vmatpush1.bf16.msra.mxu0 0
  %956 = vmatprep.subr.bf16.mxu0 0
  %957 = vmatpush1.bf16.msra.mxu0 0
  %958 = vmatprep.subr.bf16.mxu0 0
  %959 = vmatpush1.bf16.msra.mxu0 0
  %960 = vmatprep.subr.bf16.mxu0 0
  %961 = vmatpush1.bf16.msra.mxu0 0
  %962 = vmatprep.subr.bf16.mxu0 0
  %963 = vmatpush1.bf16.msra.mxu0 0
  %964 = vmatprep.subr.bf16.mxu0 0
  %965 = vmatpush1.bf16.msra.mxu0 0
  %966 = vmatprep.subr.bf16.mxu0 0
  %967 = vmatpush1.bf16.msra.mxu0 0
  %968 = vmatprep.subr.bf16.mxu0 0
  %969 = vmatpush1.bf16.msra.mxu0 0
  %970 = vmatprep.subr.bf16.mxu0 0
  %971 = vmatpush1.bf16.msra.mxu0 0
  %972 = vmatprep.subr.bf16.mxu0 0
  %973 = vmatpush1.bf16.msra.mxu0 0
  %974 = vmatprep.subr.bf16.mxu0 0
  %975 = vmatpush1.bf16.msra.mxu0 0
  %976 = vmatprep.subr.bf16.mxu0 0
  %977 = vmatpush1.bf16.msra.mxu0 0
  %978 = vmatprep.mubr.bf16.mxu0 0
  %979 = vmatmul.mubr.bf16.gmra.mrb[0].mxu0 %v932
  %v980 = vpop.f32.mrb[0].mxu0
  %v981 = vadd.f32 0.0, %v980
  %v982 = vpop.f32.mrb[0].mxu0
  %v983 = vpop.f32.mrb[0].mxu0
  %v984 = vadd.f32 0.0, %v983
  %v985 = vpop.f32.mrb[0].mxu0
  %986 = vmatprep.mubr.bf16.mxu0 0
  %987 = vmatmul.mubr.bf16.gmra.mrb[0].mxu0 %v935
  %v988 = vpop.f32.mrb[0].mxu0
  %v989 = vadd.f32 0.0, %v988
  %v990 = vpop.f32.mrb[0].mxu0
  %v991 = vpop.f32.mrb[0].mxu0
  %v992 = vadd.f32 0.0, %v991
  %v993 = vpop.f32.mrb[0].mxu0
  %994 = vmatprep.mubr.bf16.mxu0 0
  %995 = vmatmul.mubr.bf16.gmra.mrb[0].mxu0 %v938
  %v996 = vpop.f32.mrb[0].mxu0
  %v997 = vadd.f32 0.0, %v996
  %v998 = vpop.f32.mrb[0].mxu0
  %v999 = vpop.f32.mrb[0].mxu0
  %v1000 = vadd.f32 0.0, %v999
  %v1001 = vpop.f32.mrb[0].mxu0
  %1002 = vmatprep.mubr.bf16.mxu0 0
  %1003 = vmatmul.mubr.bf16.gmra.mrb[0].mxu0 %v941
  %v1004 = vpop.f32.mrb[0].mxu0
  %v1005 = vadd.f32 0.0, %v1004
  %v1006 = vpop.f32.mrb[0].mxu0
  %v1007 = vpop.f32.mrb[0].mxu0
  %v1008 = vadd.f32 0.0, %v1007
  %v1009 = vpop.f32.mrb[0].mxu0
  %1010 = vdwg.mxu0
  %v1011 = vadd.f32 %v901, %v981
  %v1012 = vadd.f32 %v902, %v984
  %v1013 = vadd.f32 %v903, %v989
  %v1014 = vadd.f32 %v904, %v992
  %v1015 = vadd.f32 %v905, %v997
  %v1016 = vadd.f32 %v906, %v1000
  %v1017 = vadd.f32 %v907, %v1005
  %v1018 = vadd.f32 %v908, %v1008
  %s1019 = scalar_lea.vmem %s0, 9
  %v1020 = vld [vmem:[%s1019] ss:$5 sm:$0xff]
  %s1021 = scalar_lea.vmem %s0, 49
  %v1022 = vld [vmem:[%s1021] ss:$5 sm:$0xff]
  %s1023 = scalar_lea.vmem %s0, 89
  %v1024 = vld [vmem:[%s1023] ss:$5 sm:$0xff]
  %s1025 = scalar_lea.vmem %s0, 129
  %v1026 = vld [vmem:[%s1025] ss:$5 sm:$0xff]
  %s1027 = scalar_lea.vmem %s0, 169
  %v1028 = vld [vmem:[%s1027] ss:$5 sm:$0xff]
  %s1029 = scalar_lea.vmem %s0, 209
  %v1030 = vld [vmem:[%s1029] ss:$5 sm:$0xff]
  %s1031 = scalar_lea.vmem %s0, 249
  %v1032 = vld [vmem:[%s1031] ss:$5 sm:$0xff]
  %s1033 = scalar_lea.vmem %s0, 289
  %v1034 = vld [vmem:[%s1033] ss:$5 sm:$0x7f]
  %s1035 = scalar_lea.vmem %s1, 9
  %v1036 = vld [vmem:[%s1035] sm:$0x1]
  %v1037 = vpack.c.bf16 %v1022, %v1020
  %v1038 = vpack.c.bf16 %v1026, %v1024
  %v1039 = vpack.c.bf16 %v1030, %v1028
  %v1040 = vpack.c.bf16 %v1034, %v1032
  %v1042 = vsel %vm87, %v1037, 0
  %v1045 = vsel %vm87, %v1038, 0
  %v1048 = vsel %vm87, %v1039, 0
  %v1051 = vsel %vm87, %v1040, 0
  %v1054 = vsel %vm100, %v1036, 0
  %1056 = vmatprep.subr.bf16.mxu0 0
  %1057 = vmatpush1.bf16.msra.mxu0 %v1054
  %1058 = vmatprep.subr.bf16.mxu0 0
  %1059 = vmatpush1.bf16.msra.mxu0 0
  %1060 = vmatprep.subr.bf16.mxu0 0
  %1061 = vmatpush1.bf16.msra.mxu0 0
  %1062 = vmatprep.subr.bf16.mxu0 0
  %1063 = vmatpush1.bf16.msra.mxu0 0
  %1064 = vmatprep.subr.bf16.mxu0 0
  %1065 = vmatpush1.bf16.msra.mxu0 0
  %1066 = vmatprep.subr.bf16.mxu0 0
  %1067 = vmatpush1.bf16.msra.mxu0 0
  %1068 = vmatprep.subr.bf16.mxu0 0
  %1069 = vmatpush1.bf16.msra.mxu0 0
  %1070 = vmatprep.subr.bf16.mxu0 0
  %1071 = vmatpush1.bf16.msra.mxu0 0
  %1072 = vmatprep.subr.bf16.mxu0 0
  %1073 = vmatpush1.bf16.msra.mxu0 0
  %1074 = vmatprep.subr.bf16.mxu0 0
  %1075 = vmatpush1.bf16.msra.mxu0 0
  %1076 = vmatprep.subr.bf16.mxu0 0
  %1077 = vmatpush1.bf16.msra.mxu0 0
  %1078 = vmatprep.subr.bf16.mxu0 0
  %1079 = vmatpush1.bf16.msra.mxu0 0
  %1080 = vmatprep.subr.bf16.mxu0 0
  %1081 = vmatpush1.bf16.msra.mxu0 0
  %1082 = vmatprep.subr.bf16.mxu0 0
  %1083 = vmatpush1.bf16.msra.mxu0 0
  %1084 = vmatprep.subr.bf16.mxu0 0
  %1085 = vmatpush1.bf16.msra.mxu0 0
  %1086 = vmatprep.subr.bf16.mxu0 0
  %1087 = vmatpush1.bf16.msra.mxu0 0
  %1088 = vmatprep.mubr.bf16.mxu0 0
  %1089 = vmatmul.mubr.bf16.gmra.mrb[0].mxu0 %v1042
  %v1090 = vpop.f32.mrb[0].mxu0
  %v1091 = vadd.f32 0.0, %v1090
  %v1092 = vpop.f32.mrb[0].mxu0
  %v1093 = vpop.f32.mrb[0].mxu0
  %v1094 = vadd.f32 0.0, %v1093
  %v1095 = vpop.f32.mrb[0].mxu0
  %1096 = vmatprep.mubr.bf16.mxu0 0
  %1097 = vmatmul.mubr.bf16.gmra.mrb[0].mxu0 %v1045
  %v1098 = vpop.f32.mrb[0].mxu0
  %v1099 = vadd.f32 0.0, %v1098
  %v1100 = vpop.f32.mrb[0].mxu0
  %v1101 = vpop.f32.mrb[0].mxu0
  %v1102 = vadd.f32 0.0, %v1101
  %v1103 = vpop.f32.mrb[0].mxu0
  %1104 = vmatprep.mubr.bf16.mxu0 0
  %1105 = vmatmul.mubr.bf16.gmra.mrb[0].mxu0 %v1048
  %v1106 = vpop.f32.mrb[0].mxu0
  %v1107 = vadd.f32 0.0, %v1106
  %v1108 = vpop.f32.mrb[0].mxu0
  %v1109 = vpop.f32.mrb[0].mxu0
  %v1110 = vadd.f32 0.0, %v1109
  %v1111 = vpop.f32.mrb[0].mxu0
  %1112 = vmatprep.mubr.bf16.mxu0 0
  %1113 = vmatmul.mubr.bf16.gmra.mrb[0].mxu0 %v1051
  %v1114 = vpop.f32.mrb[0].mxu0
  %v1115 = vadd.f32 0.0, %v1114
  %v1116 = vpop.f32.mrb[0].mxu0
  %v1117 = vpop.f32.mrb[0].mxu0
  %v1118 = vadd.f32 0.0, %v1117
  %v1119 = vpop.f32.mrb[0].mxu0
  %1120 = vdwg.mxu0
  %v1121 = vadd.f32 %v1011, %v1091
  %v1122 = vadd.f32 %v1012, %v1094
  %v1123 = vadd.f32 %v1013, %v1099
  %v1124 = vadd.f32 %v1014, %v1102
  %v1125 = vadd.f32 %v1015, %v1107
  %v1126 = vadd.f32 %v1016, %v1110
  %v1127 = vadd.f32 %v1017, %v1115
  %v1128 = vadd.f32 %v1018, %v1118
  %vm1129 = vcmask 261120
  %v1130 = vsel %vm1129, %v1121, 0.0
  %v1131 = vsel %vm1129, %v1122, 0.0
  %v1132 = vadd.f32 %v1130, %v1131
  %v1133 = vsel %vm1129, %v1123, 0.0
  %v1134 = vadd.f32 %v1132, %v1133
  %v1135 = vsel %vm1129, %v1124, 0.0
  %v1136 = vadd.f32 %v1134, %v1135
  %v1137 = vsel %vm1129, %v1125, 0.0
  %v1138 = vadd.f32 %v1136, %v1137
  %v1139 = vsel %vm1129, %v1126, 0.0
  %v1140 = vadd.f32 %v1138, %v1139
  %v1141 = vsel %vm1129, %v1127, 0.0
  %v1142 = vadd.f32 %v1140, %v1141
  %vm1143 = vcmask 260096
  %v1144 = vsel %vm1143, %v1128, 0.0
  %v1145 = vadd.f32 %v1142, %v1144
  %v1146 = vrot.slane %v1145, 4
  %v1147 = vadd.f32 %v1145, %v1146
  %v1148 = vrot.slane %v1147, 2
  %v1149 = vadd.f32 %v1147, %v1148
  %v1150 = vrot.slane %v1149, 1
  %v1151 = vadd.f32 %v1149, %v1150
  %v1152 = vrcp.pop 63.0
  %v1153 = vmul.f32 %v1151, %v1152
  %v1154 = vsub.f32 %v1121, %v1153
  %v1155 = vsub.f32 %v1122, %v1153
  %v1156 = vsub.f32 %v1123, %v1153
  %v1157 = vsub.f32 %v1124, %v1153
  %v1158 = vsub.f32 %v1125, %v1153
  %v1159 = vsub.f32 %v1126, %v1153
  %v1160 = vsub.f32 %v1127, %v1153
  %v1161 = vsub.f32 %v1128, %v1153
  %v1162 = vmul.f32 %v1154, %v1154
  %v1163 = vmul.f32 %v1155, %v1155
  %v1164 = vmul.f32 %v1156, %v1156
  %v1165 = vmul.f32 %v1157, %v1157
  %v1166 = vmul.f32 %v1158, %v1158
  %v1167 = vmul.f32 %v1159, %v1159
  %v1168 = vmul.f32 %v1160, %v1160
  %v1169 = vmul.f32 %v1161, %v1161
  %v1170 = vsel %vm1129, %v1162, 0.0
  %v1171 = vsel %vm1129, %v1163, 0.0
  %v1172 = vadd.f32 %v1170, %v1171
  %v1173 = vsel %vm1129, %v1164, 0.0
  %v1174 = vadd.f32 %v1172, %v1173
  %v1175 = vsel %vm1129, %v1165, 0.0
  %v1176 = vadd.f32 %v1174, %v1175
  %v1177 = vsel %vm1129, %v1166, 0.0
  %v1178 = vadd.f32 %v1176, %v1177
  %v1179 = vsel %vm1129, %v1167, 0.0
  %v1180 = vadd.f32 %v1178, %v1179
  %v1181 = vsel %vm1129, %v1168, 0.0
  %v1182 = vadd.f32 %v1180, %v1181
  %v1183 = vsel %vm1143, %v1169, 0.0
  %v1184 = vadd.f32 %v1182, %v1183
  %v1185 = vrot.slane %v1184, 4
  %v1186 = vadd.f32 %v1184, %v1185
  %v1187 = vrot.slane %v1186, 2
  %v1188 = vadd.f32 %v1186, %v1187
  %v1189 = vrot.slane %v1188, 1
  %v1190 = vadd.f32 %v1188, %v1189
  %v1191 = vmul.f32 %v1190, %v1152
  %v1192 = vadd.f32 %v1191, 1e-05
  %v1193 = vrsqrt.pop %v1192
  %v1194 = vmul.f32 %v1154, %v1193
  %v1195 = vmul.f32 %v1155, %v1193
  %v1196 = vmul.f32 %v1156, %v1193
  %v1197 = vmul.f32 %v1157, %v1193
  %v1198 = vmul.f32 %v1158, %v1193
  %v1199 = vmul.f32 %v1159, %v1193
  %v1200 = vmul.f32 %v1160, %v1193
  %v1201 = vmul.f32 %v1161, %v1193
  %v1202 = vld [vmem:[%s4] sm:$0x1]
  %v1204 = vlaneseq
  %v1205 = vshrl.u32 %v1204, 7
  %v1206 = vsub.s32 0, %v1205
  %v1207 = vrot.slane %v1202, %v1206
  %v1209 = vmul.f32 %v1194, %v1207
  %v1210 = vmul.f32 %v1195, %v1207
  %v1211 = vmul.f32 %v1196, %v1207
  %v1212 = vmul.f32 %v1197, %v1207
  %v1213 = vmul.f32 %v1198, %v1207
  %v1214 = vmul.f32 %v1199, %v1207
  %v1215 = vmul.f32 %v1200, %v1207
  %v1216 = vmul.f32 %v1201, %v1207
  %v1217 = vld [vmem:[%s5] sm:$0x1]
  %v1219 = vlaneseq
  %v1220 = vshrl.u32 %v1219, 7
  %v1221 = vsub.s32 0, %v1220
  %v1222 = vrot.slane %v1217, %v1221
  %v1224 = vadd.f32 %v1209, %v1222
  %v1225 = vadd.f32 %v1210, %v1222
  %v1226 = vadd.f32 %v1211, %v1222
  %v1227 = vadd.f32 %v1212, %v1222
  %v1228 = vadd.f32 %v1213, %v1222
  %v1229 = vadd.f32 %v1214, %v1222
  %v1230 = vadd.f32 %v1215, %v1222
  %v1231 = vadd.f32 %v1216, %v1222
  %v1232 = vmul.f32 %v1224, %v1224
  %v1233 = vmul.f32 %v1225, %v1225
  %v1234 = vmul.f32 %v1226, %v1226
  %v1235 = vmul.f32 %v1227, %v1227
  %v1236 = vmul.f32 %v1228, %v1228
  %v1237 = vmul.f32 %v1229, %v1229
  %v1238 = vmul.f32 %v1230, %v1230
  %v1239 = vmul.f32 %v1231, %v1231
  %v1240 = vmul.f32 %v1224, %v1232
  %v1241 = vmul.f32 %v1225, %v1233
  %v1242 = vmul.f32 %v1226, %v1234
  %v1243 = vmul.f32 %v1227, %v1235
  %v1244 = vmul.f32 %v1228, %v1236
  %v1245 = vmul.f32 %v1229, %v1237
  %v1246 = vmul.f32 %v1230, %v1238
  %v1247 = vmul.f32 %v1231, %v1239
  %v1248 = vmul.f32 %v1240, 0.044715
  %v1249 = vmul.f32 %v1241, 0.044715
  %v1250 = vmul.f32 %v1242, 0.044715
  %v1251 = vmul.f32 %v1243, 0.044715
  %v1252 = vmul.f32 %v1244, 0.044715
  %v1253 = vmul.f32 %v1245, 0.044715
  %v1254 = vmul.f32 %v1246, 0.044715
  %v1255 = vmul.f32 %v1247, 0.044715
  %v1256 = vadd.f32 %v1224, %v1248
  %v1257 = vadd.f32 %v1225, %v1249
  %v1258 = vadd.f32 %v1226, %v1250
  %v1259 = vadd.f32 %v1227, %v1251
  %v1260 = vadd.f32 %v1228, %v1252
  %v1261 = vadd.f32 %v1229, %v1253
  %v1262 = vadd.f32 %v1230, %v1254
  %v1263 = vadd.f32 %v1231, %v1255
  %v1264 = vmul.f32 %v1256, 0.7978846
  %v1265 = vmul.f32 %v1257, 0.7978846
  %v1266 = vmul.f32 %v1258, 0.7978846
  %v1267 = vmul.f32 %v1259, 0.7978846
  %v1268 = vmul.f32 %v1260, 0.7978846
  %v1269 = vmul.f32 %v1261, 0.7978846
  %v1270 = vmul.f32 %v1262, 0.7978846
  %v1271 = vmul.f32 %v1263, 0.7978846
  %v1272 = vtanh.pop %v1264
  %v1273 = vtanh.pop %v1265
  %v1274 = vtanh.pop %v1266
  %v1275 = vtanh.pop %v1267
  %v1276 = vtanh.pop %v1268
  %v1277 = vtanh.pop %v1269
  %v1278 = vtanh.pop %v1270
  %v1279 = vtanh.pop %v1271
  %v1280 = vadd.f32 %v1272, 1.0
  %v1281 = vadd.f32 %v1273, 1.0
  %v1282 = vadd.f32 %v1274, 1.0
  %v1283 = vadd.f32 %v1275, 1.0
  %v1284 = vadd.f32 %v1276, 1.0
  %v1285 = vadd.f32 %v1277, 1.0
  %v1286 = vadd.f32 %v1278, 1.0
  %v1287 = vadd.f32 %v1279, 1.0
  %v1288 = vmul.f32 %v1280, 0.5
  %v1289 = vmul.f32 %v1281, 0.5
  %v1290 = vmul.f32 %v1282, 0.5
  %v1291 = vmul.f32 %v1283, 0.5
  %v1292 = vmul.f32 %v1284, 0.5
  %v1293 = vmul.f32 %v1285, 0.5
  %v1294 = vmul.f32 %v1286, 0.5
  %v1295 = vmul.f32 %v1287, 0.5
  %v1296 = vmul.f32 %v1224, %v1288
  %v1297 = vmul.f32 %v1225, %v1289
  %v1298 = vmul.f32 %v1226, %v1290
  %v1299 = vmul.f32 %v1227, %v1291
  %v1300 = vmul.f32 %v1228, %v1292
  %v1301 = vmul.f32 %v1229, %v1293
  %v1302 = vmul.f32 %v1230, %v1294
  %v1303 = vmul.f32 %v1231, %v1295
  %1304 = vst.msk [vmem:[#allocation2] sm:$0xff] %vm1129, %v1296
  %1305 = vst.msk [vmem:[#allocation2 + $0x8] sm:$0xff] %vm1129, %v1297
  %1306 = vst.msk [vmem:[#allocation2 + $0x10] sm:$0xff] %vm1129, %v1298
  %1307 = vst.msk [vmem:[#allocation2 + $0x18] sm:$0xff] %vm1129, %v1299
  %1308 = vst.msk [vmem:[#allocation2 + $0x20] sm:$0xff] %vm1129, %v1300
  %1309 = vst.msk [vmem:[#allocation2 + $0x28] sm:$0xff] %vm1129, %v1301
  %1310 = vst.msk [vmem:[#allocation2 + $0x30] sm:$0xff] %vm1129, %v1302
  %1311 = vst.msk [vmem:[#allocation2 + $0x38] sm:$0x7f] %vm1143, %v1303
  %v1312 = vld [vmem:[#allocation2] ss:$2 sm:$0xff]
  %s1313 = scalar_lea.vmem [#allocation2], 16
  %v1314 = vld [vmem:[%s1313] ss:$2 sm:$0xff]
  %s1315 = scalar_lea.vmem [#allocation2], 32
  %v1316 = vld [vmem:[%s1315] ss:$2 sm:$0xff]
  %s1317 = scalar_lea.vmem [#allocation2], 48
  %v1318 = vld [vmem:[%s1317] ss:$2 sm:$0x7f]
  %v1319 = vld [vmem:[%s2] sm:$0xf]
  %v1320 = vld [vmem:[%s2 + $0x4] sm:$0xf]
  %v1321 = vld [vmem:[%s2 + $0x8] sm:$0xf]
  %v1322 = vld [vmem:[%s2 + $0xc] sm:$0xf]
  %v1323 = vpack.c.bf16 %v1314, %v1312
  %v1324 = vpack.c.bf16 %v1318, %v1316
  %s1325 = scalar_lea.vmem [#allocation2], 1
  %v1326 = vld [vmem:[%s1325] ss:$2 sm:$0xff]
  %s1327 = scalar_lea.vmem [#allocation2], 17
  %v1328 = vld [vmem:[%s1327] ss:$2 sm:$0xff]
  %s1329 = scalar_lea.vmem [#allocation2], 33
  %v1330 = vld [vmem:[%s1329] ss:$2 sm:$0xff]
  %s1331 = scalar_lea.vmem [#allocation2], 49
  %v1332 = vld [vmem:[%s1331] ss:$2 sm:$0x7f]
  %s1333 = scalar_lea.vmem %s2, 16
  %v1334 = vld [vmem:[%s1333] sm:$0xf]
  %v1335 = vld [vmem:[%s1333 + $0x4] sm:$0xf]
  %v1336 = vld [vmem:[%s1333 + $0x8] sm:$0xf]
  %v1337 = vld [vmem:[%s1333 + $0xc] sm:$0xf]
  %v1338 = vpack.c.bf16 %v1328, %v1326
  %v1339 = vpack.c.bf16 %v1332, %v1330
  %v1344 = vunpack.c.l.b16 %v1334
  %v1345 = vunpack.c.l.b16 %v1335
  %v1346 = vunpack.c.l.b16 %v1336
  %v1347 = vunpack.c.l.b16 %v1337
  %v1348 = vpack.c.b16 %v1345, %v1344
  %v1349 = vpack.c.b16 %v1347, %v1346
  %v1353 = vsel %vm1129, %v1338, 0
  %v1356 = vsel %vm1129, %v1339, 0
  %1358 = vmatprep.subr.bf16.mxu0 0
  %1359 = vmatpush1.bf16.msra.mxu0 %v1348
  %1360 = vmatprep.subr.bf16.mxu0 0
  %1361 = vmatpush1.bf16.msra.mxu0 %v1349
  %1362 = vmatprep.subr.bf16.mxu0 0
  %1363 = vmatpush1.bf16.msra.mxu0 0
  %1364 = vmatprep.subr.bf16.mxu0 0
  %1365 = vmatpush1.bf16.msra.mxu0 0
  %1366 = vmatprep.subr.bf16.mxu0 0
  %1367 = vmatpush1.bf16.msra.mxu0 0
  %1368 = vmatprep.subr.bf16.mxu0 0
  %1369 = vmatpush1.bf16.msra.mxu0 0
  %1370 = vmatprep.subr.bf16.mxu0 0
  %1371 = vmatpush1.bf16.msra.mxu0 0
  %1372 = vmatprep.subr.bf16.mxu0 0
  %1373 = vmatpush1.bf16.msra.mxu0 0
  %1374 = vmatprep.subr.bf16.mxu0 0
  %1375 = vmatpush1.bf16.msra.mxu0 0
  %1376 = vmatprep.subr.bf16.mxu0 0
  %1377 = vmatpush1.bf16.msra.mxu0 0
  %1378 = vmatprep.subr.bf16.mxu0 0
  %1379 = vmatpush1.bf16.msra.mxu0 0
  %1380 = vmatprep.subr.bf16.mxu0 0
  %1381 = vmatpush1.bf16.msra.mxu0 0
  %1382 = vmatprep.subr.bf16.mxu0 0
  %1383 = vmatpush1.bf16.msra.mxu0 0
  %1384 = vmatprep.subr.bf16.mxu0 0
  %1385 = vmatpush1.bf16.msra.mxu0 0
  %1386 = vmatprep.subr.bf16.mxu0 0
  %1387 = vmatpush1.bf16.msra.mxu0 0
  %1388 = vmatprep.subr.bf16.mxu0 0
  %1389 = vmatpush1.bf16.msra.mxu0 0
  %1390 = vmatprep.mubr.bf16.mxu0 0
  %1391 = vmatmul.mubr.bf16.gmra.mrb[0].mxu0 %v1353
  %v1392 = vpop.f32.mrb[0].mxu0
  %v1393 = vadd.f32 0.0, %v1392
  %v1394 = vpop.f32.mrb[0].mxu0
  %v1395 = vpop.f32.mrb[0].mxu0
  %v1396 = vadd.f32 0.0, %v1395
  %v1397 = vpop.f32.mrb[0].mxu0
  %1398 = vmatprep.mubr.bf16.mxu0 0
  %1399 = vmatmul.mubr.bf16.gmra.mrb[0].mxu0 %v1356
  %v1400 = vpop.f32.mrb[0].mxu0
  %v1401 = vadd.f32 0.0, %v1400
  %v1402 = vpop.f32.mrb[0].mxu0
  %v1403 = vpop.f32.mrb[0].mxu0
  %v1404 = vadd.f32 0.0, %v1403
  %v1405 = vpop.f32.mrb[0].mxu0
  %1406 = vdwg.mxu0
  %v1411 = vunpack.c.l.b16 %v1319
  %v1412 = vunpack.c.l.b16 %v1320
  %v1413 = vunpack.c.l.b16 %v1321
  %v1414 = vunpack.c.l.b16 %v1322
  %v1415 = vpack.c.b16 %v1412, %v1411
  %v1416 = vpack.c.b16 %v1414, %v1413
  %v1420 = vsel %vm1129, %v1323, 0
  %v1423 = vsel %vm1129, %v1324, 0
  %1425 = vmatprep.subr.bf16.mxu0 0
  %1426 = vmatpush1.bf16.msra.mxu0 %v1415
  %1427 = vmatprep.subr.bf16.mxu0 0
  %1428 = vmatpush1.bf16.msra.mxu0 %v1416
  %1429 = vmatprep.subr.bf16.mxu0 0
  %1430 = vmatpush1.bf16.msra.mxu0 0
  %1431 = vmatprep.subr.bf16.mxu0 0
  %1432 = vmatpush1.bf16.msra.mxu0 0
  %1433 = vmatprep.subr.bf16.mxu0 0
  %1434 = vmatpush1.bf16.msra.mxu0 0
  %1435 = vmatprep.subr.bf16.mxu0 0
  %1436 = vmatpush1.bf16.msra.mxu0 0
  %1437 = vmatprep.subr.bf16.mxu0 0
  %1438 = vmatpush1.bf16.msra.mxu0 0
  %1439 = vmatprep.subr.bf16.mxu0 0
  %1440 = vmatpush1.bf16.msra.mxu0 0
  %1441 = vmatprep.subr.bf16.mxu0 0
  %1442 = vmatpush1.bf16.msra.mxu0 0
  %1443 = vmatprep.subr.bf16.mxu0 0
  %1444 = vmatpush1.bf16.msra.mxu0 0
  %1445 = vmatprep.subr.bf16.mxu0 0
  %1446 = vmatpush1.bf16.msra.mxu0 0
  %1447 = vmatprep.subr.bf16.mxu0 0
  %1448 = vmatpush1.bf16.msra.mxu0 0
  %1449 = vmatprep.subr.bf16.mxu0 0
  %1450 = vmatpush1.bf16.msra.mxu0 0
  %1451 = vmatprep.subr.bf16.mxu0 0
  %1452 = vmatpush1.bf16.msra.mxu0 0
  %1453 = vmatprep.subr.bf16.mxu0 0
  %1454 = vmatpush1.bf16.msra.mxu0 0
  %1455 = vmatprep.subr.bf16.mxu0 0
  %1456 = vmatpush1.bf16.msra.mxu0 0
  %1457 = vmatprep.mubr.bf16.mxu0 0
  %1458 = vmatmul.mubr.bf16.gmra.mrb[0].mxu0 %v1420
  %v1459 = vpop.f32.mrb[0].mxu0
  %v1460 = vadd.f32 %v1393, %v1459
  %v1461 = vpop.f32.mrb[0].mxu0
  %v1462 = vpop.f32.mrb[0].mxu0
  %v1463 = vadd.f32 %v1396, %v1462
  %v1464 = vpop.f32.mrb[0].mxu0
  %1465 = vmatprep.mubr.bf16.mxu0 0
  %1466 = vmatmul.mubr.bf16.gmra.mrb[0].mxu0 %v1423
  %v1467 = vpop.f32.mrb[0].mxu0
  %v1468 = vadd.f32 %v1401, %v1467
  %v1469 = vpop.f32.mrb[0].mxu0
  %v1470 = vpop.f32.mrb[0].mxu0
  %v1471 = vadd.f32 %v1404, %v1470
  %v1472 = vpop.f32.mrb[0].mxu0
  %1473 = vdwg.mxu0
  %s1474 = scalar_lea.vmem [#allocation2], 2
  %v1475 = vld [vmem:[%s1474] ss:$2 sm:$0xff]
  %s1476 = scalar_lea.vmem [#allocation2], 18
  %v1477 = vld [vmem:[%s1476] ss:$2 sm:$0xff]
  %s1478 = scalar_lea.vmem [#allocation2], 34
  %v1479 = vld [vmem:[%s1478] ss:$2 sm:$0xff]
  %s1480 = scalar_lea.vmem [#allocation2], 50
  %v1481 = vld [vmem:[%s1480] ss:$2 sm:$0x7f]
  %s1482 = scalar_lea.vmem %s2, 32
  %v1483 = vld [vmem:[%s1482] sm:$0xf]
  %v1484 = vld [vmem:[%s1482 + $0x4] sm:$0xf]
  %v1485 = vld [vmem:[%s1482 + $0x8] sm:$0xf]
  %v1486 = vld [vmem:[%s1482 + $0xc] sm:$0xf]
  %v1487 = vpack.c.bf16 %v1477, %v1475
  %v1488 = vpack.c.bf16 %v1481, %v1479
  %v1493 = vunpack.c.l.b16 %v1483
  %v1494 = vunpack.c.l.b16 %v1484
  %v1495 = vunpack.c.l.b16 %v1485
  %v1496 = vunpack.c.l.b16 %v1486
  %v1497 = vpack.c.b16 %v1494, %v1493
  %v1498 = vpack.c.b16 %v1496, %v1495
  %v1502 = vsel %vm1129, %v1487, 0
  %v1505 = vsel %vm1129, %v1488, 0
  %1507 = vmatprep.subr.bf16.mxu0 0
  %1508 = vmatpush1.bf16.msra.mxu0 %v1497
  %1509 = vmatprep.subr.bf16.mxu0 0
  %1510 = vmatpush1.bf16.msra.mxu0 %v1498
  %1511 = vmatprep.subr.bf16.mxu0 0
  %1512 = vmatpush1.bf16.msra.mxu0 0
  %1513 = vmatprep.subr.bf16.mxu0 0
  %1514 = vmatpush1.bf16.msra.mxu0 0
  %1515 = vmatprep.subr.bf16.mxu0 0
  %1516 = vmatpush1.bf16.msra.mxu0 0
  %1517 = vmatprep.subr.bf16.mxu0 0
  %1518 = vmatpush1.bf16.msra.mxu0 0
  %1519 = vmatprep.subr.bf16.mxu0 0
  %1520 = vmatpush1.bf16.msra.mxu0 0
  %1521 = vmatprep.subr.bf16.mxu0 0
  %1522 = vmatpush1.bf16.msra.mxu0 0
  %1523 = vmatprep.subr.bf16.mxu0 0
  %1524 = vmatpush1.bf16.msra.mxu0 0
  %1525 = vmatprep.subr.bf16.mxu0 0
  %1526 = vmatpush1.bf16.msra.mxu0 0
  %1527 = vmatprep.subr.bf16.mxu0 0
  %1528 = vmatpush1.bf16.msra.mxu0 0
  %1529 = vmatprep.subr.bf16.mxu0 0
  %1530 = vmatpush1.bf16.msra.mxu0 0
  %1531 = vmatprep.subr.bf16.mxu0 0
  %1532 = vmatpush1.bf16.msra.mxu0 0
  %1533 = vmatprep.subr.bf16.mxu0 0
  %1534 = vmatpush1.bf16.msra.mxu0 0
  %1535 = vmatprep.subr.bf16.mxu0 0
  %1536 = vmatpush1.bf16.msra.mxu0 0
  %1537 = vmatprep.subr.bf16.mxu0 0
  %1538 = vmatpush1.bf16.msra.mxu0 0
  %1539 = vmatprep.mubr.bf16.mxu0 0
  %1540 = vmatmul.mubr.bf16.gmra.mrb[0].mxu0 %v1502
  %v1541 = vpop.f32.mrb[0].mxu0
  %v1542 = vadd.f32 0.0, %v1541
  %v1543 = vpop.f32.mrb[0].mxu0
  %v1544 = vpop.f32.mrb[0].mxu0
  %v1545 = vadd.f32 0.0, %v1544
  %v1546 = vpop.f32.mrb[0].mxu0
  %1547 = vmatprep.mubr.bf16.mxu0 0
  %1548 = vmatmul.mubr.bf16.gmra.mrb[0].mxu0 %v1505
  %v1549 = vpop.f32.mrb[0].mxu0
  %v1550 = vadd.f32 0.0, %v1549
  %v1551 = vpop.f32.mrb[0].mxu0
  %v1552 = vpop.f32.mrb[0].mxu0
  %v1553 = vadd.f32 0.0, %v1552
  %v1554 = vpop.f32.mrb[0].mxu0
  %1555 = vdwg.mxu0
  %v1556 = vadd.f32 %v1460, %v1542
  %v1557 = vadd.f32 %v1463, %v1545
  %v1558 = vadd.f32 %v1468, %v1550
  %v1559 = vadd.f32 %v1471, %v1553
  %v1560 = vmul.f32 %v1556, %v1556
  %v1561 = vmul.f32 %v1557, %v1557
  %v1562 = vmul.f32 %v1558, %v1558
  %v1563 = vmul.f32 %v1559, %v1559
  %v1564 = vmul.f32 %v1556, %v1560
  %v1565 = vmul.f32 %v1557, %v1561
  %v1566 = vmul.f32 %v1558, %v1562
  %v1567 = vmul.f32 %v1559, %v1563
  %v1568 = vmul.f32 %v1564, 0.044715
  %v1569 = vmul.f32 %v1565, 0.044715
  %v1570 = vmul.f32 %v1566, 0.044715
  %v1571 = vmul.f32 %v1567, 0.044715
  %v1572 = vadd.f32 %v1556, %v1568
  %v1573 = vadd.f32 %v1557, %v1569
  %v1574 = vadd.f32 %v1558, %v1570
  %v1575 = vadd.f32 %v1559, %v1571
  %v1576 = vmul.f32 %v1572, 0.7978846
  %v1577 = vmul.f32 %v1573, 0.7978846
  %v1578 = vmul.f32 %v1574, 0.7978846
  %v1579 = vmul.f32 %v1575, 0.7978846
  %v1580 = vtanh.pop %v1576
  %v1581 = vtanh.pop %v1577
  %v1582 = vtanh.pop %v1578
  %v1583 = vtanh.pop %v1579
  %v1584 = vadd.f32 %v1580, 1.0
  %v1585 = vadd.f32 %v1581, 1.0
  %v1586 = vadd.f32 %v1582, 1.0
  %v1587 = vadd.f32 %v1583, 1.0
  %v1588 = vmul.f32 %v1584, 0.5
  %v1589 = vmul.f32 %v1585, 0.5
  %v1590 = vmul.f32 %v1586, 0.5
  %v1591 = vmul.f32 %v1587, 0.5
  %v1592 = vmul.f32 %v1556, %v1588
  %v1593 = vmul.f32 %v1557, %v1589
  %v1594 = vmul.f32 %v1558, %v1590
  %v1595 = vmul.f32 %v1559, %v1591
  %1596 = vst.msk [vmem:[#allocation3] sm:$0xff] %vm1129, %v1592
  %1597 = vst.msk [vmem:[#allocation3 + $0x8] sm:$0xff] %vm1129, %v1593
  %1598 = vst.msk [vmem:[#allocation3 + $0x10] sm:$0xff] %vm1129, %v1594
  %1599 = vst.msk [vmem:[#allocation3 + $0x18] sm:$0x7f] %vm1143, %v1595
  %v1600 = vld [vmem:[#allocation3] ss:$2 sm:$0xff]
  %s1601 = scalar_lea.vmem [#allocation3], 16
  %v1602 = vld [vmem:[%s1601] ss:$2 sm:$0x7f]
  %v1603 = vld [vmem:[%s3] sm:$0xf]
  %v1604 = vld [vmem:[%s3 + $0x4] sm:$0xf]
  %v1605 = vld [vmem:[%s3 + $0x8] sm:$0xf]
  %v1606 = vld [vmem:[%s3 + $0xc] sm:$0xf]
  %v1607 = vpack.c.bf16 %v1602, %v1600
  %s1608 = scalar_lea.vmem [#allocation3], 1
  %v1609 = vld [vmem:[%s1608] ss:$2 sm:$0xff]
  %s1610 = scalar_lea.vmem [#allocation3], 17
  %v1611 = vld [vmem:[%s1610] ss:$2 sm:$0x7f]
  %s1612 = scalar_lea.vmem %s3, 16
  %v1613 = vld [vmem:[%s1612] sm:$0xf]
  %v1614 = vld [vmem:[%s1612 + $0x4] sm:$0xf]
  %v1615 = vld [vmem:[%s1612 + $0x8] sm:$0xf]
  %v1616 = vld [vmem:[%s1612 + $0xc] sm:$0xf]
  %v1617 = vpack.c.bf16 %v1611, %v1609
  %v1622 = vunpack.c.l.b16 %v1613
  %v1623 = vunpack.c.l.b16 %v1614
  %v1624 = vunpack.c.l.b16 %v1615
  %v1625 = vunpack.c.l.b16 %v1616
  %v1626 = vpack.c.b16 %v1623, %v1622
  %v1627 = vpack.c.b16 %v1625, %v1624
  %v1631 = vsel %vm1129, %v1617, 0
  %1633 = vmatprep.subr.bf16.mxu0 0
  %1634 = vmatpush1.bf16.msra.mxu0 %v1626
  %1635 = vmatprep.subr.bf16.mxu0 0
  %1636 = vmatpush1.bf16.msra.mxu0 %v1627
  %1637 = vmatprep.subr.bf16.mxu0 0
  %1638 = vmatpush1.bf16.msra.mxu0 0
  %1639 = vmatprep.subr.bf16.mxu0 0
  %1640 = vmatpush1.bf16.msra.mxu0 0
  %1641 = vmatprep.subr.bf16.mxu0 0
  %1642 = vmatpush1.bf16.msra.mxu0 0
  %1643 = vmatprep.subr.bf16.mxu0 0
  %1644 = vmatpush1.bf16.msra.mxu0 0
  %1645 = vmatprep.subr.bf16.mxu0 0
  %1646 = vmatpush1.bf16.msra.mxu0 0
  %1647 = vmatprep.subr.bf16.mxu0 0
  %1648 = vmatpush1.bf16.msra.mxu0 0
  %1649 = vmatprep.subr.bf16.mxu0 0
  %1650 = vmatpush1.bf16.msra.mxu0 0
  %1651 = vmatprep.subr.bf16.mxu0 0
  %1652 = vmatpush1.bf16.msra.mxu0 0
  %1653 = vmatprep.subr.bf16.mxu0 0
  %1654 = vmatpush1.bf16.msra.mxu0 0
  %1655 = vmatprep.subr.bf16.mxu0 0
  %1656 = vmatpush1.bf16.msra.mxu0 0
  %1657 = vmatprep.subr.bf16.mxu0 0
  %1658 = vmatpush1.bf16.msra.mxu0 0
  %1659 = vmatprep.subr.bf16.mxu0 0
  %1660 = vmatpush1.bf16.msra.mxu0 0
  %1661 = vmatprep.subr.bf16.mxu0 0
  %1662 = vmatpush1.bf16.msra.mxu0 0
  %1663 = vmatprep.subr.bf16.mxu0 0
  %1664 = vmatpush1.bf16.msra.mxu0 0
  %1665 = vmatprep.mubr.bf16.mxu0 0
  %1666 = vmatmul.mubr.bf16.gmra.mrb[0].mxu0 %v1631
  %v1667 = vpop.f32.mrb[0].mxu0
  %v1668 = vadd.f32 0.0, %v1667
  %v1669 = vpop.f32.mrb[0].mxu0
  %v1670 = vpop.f32.mrb[0].mxu0
  %v1671 = vadd.f32 0.0, %v1670
  %v1672 = vpop.f32.mrb[0].mxu0
  %1673 = vdwg.mxu0
  %v1678 = vunpack.c.l.b16 %v1603
  %v1679 = vunpack.c.l.b16 %v1604
  %v1680 = vunpack.c.l.b16 %v1605
  %v1681 = vunpack.c.l.b16 %v1606
  %v1682 = vpack.c.b16 %v1679, %v1678
  %v1683 = vpack.c.b16 %v1681, %v1680
  %v1687 = vsel %vm1129, %v1607, 0
  %1689 = vmatprep.subr.bf16.mxu0 0
  %1690 = vmatpush1.bf16.msra.mxu0 %v1682
  %1691 = vmatprep.subr.bf16.mxu0 0
  %1692 = vmatpush1.bf16.msra.mxu0 %v1683
  %1693 = vmatprep.subr.bf16.mxu0 0
  %1694 = vmatpush1.bf16.msra.mxu0 0
  %1695 = vmatprep.subr.bf16.mxu0 0
  %1696 = vmatpush1.bf16.msra.mxu0 0
  %1697 = vmatprep.subr.bf16.mxu0 0
  %1698 = vmatpush1.bf16.msra.mxu0 0
  %1699 = vmatprep.subr.bf16.mxu0 0
  %1700 = vmatpush1.bf16.msra.mxu0 0
  %1701 = vmatprep.subr.bf16.mxu0 0
  %1702 = vmatpush1.bf16.msra.mxu0 0
  %1703 = vmatprep.subr.bf16.mxu0 0
  %1704 = vmatpush1.bf16.msra.mxu0 0
  %1705 = vmatprep.subr.bf16.mxu0 0
  %1706 = vmatpush1.bf16.msra.mxu0 0
  %1707 = vmatprep.subr.bf16.mxu0 0
  %1708 = vmatpush1.bf16.msra.mxu0 0
  %1709 = vmatprep.subr.bf16.mxu0 0
  %1710 = vmatpush1.bf16.msra.mxu0 0
  %1711 = vmatprep.subr.bf16.mxu0 0
  %1712 = vmatpush1.bf16.msra.mxu0 0
  %1713 = vmatprep.subr.bf16.mxu0 0
  %1714 = vmatpush1.bf16.msra.mxu0 0
  %1715 = vmatprep.subr.bf16.mxu0 0
  %1716 = vmatpush1.bf16.msra.mxu0 0
  %1717 = vmatprep.subr.bf16.mxu0 0
  %1718 = vmatpush1.bf16.msra.mxu0 0
  %1719 = vmatprep.subr.bf16.mxu0 0
  %1720 = vmatpush1.bf16.msra.mxu0 0
  %1721 = vmatprep.mubr.bf16.mxu0 0
  %1722 = vmatmul.mubr.bf16.gmra.mrb[0].mxu0 %v1687
  %v1723 = vpop.f32.mrb[0].mxu0
  %v1724 = vadd.f32 %v1668, %v1723
  %v1725 = vpop.f32.mrb[0].mxu0
  %v1726 = vpop.f32.mrb[0].mxu0
  %v1727 = vadd.f32 %v1671, %v1726
  %v1728 = vpop.f32.mrb[0].mxu0
  %1729 = vdwg.mxu0
  %v1730 = vmul.f32 %v1724, %v1724
  %v1731 = vmul.f32 %v1727, %v1727
  %v1732 = vmul.f32 %v1724, %v1730
  %v1733 = vmul.f32 %v1727, %v1731
  %v1734 = vmul.f32 %v1732, 0.044715
  %v1735 = vmul.f32 %v1733, 0.044715
  %v1736 = vadd.f32 %v1724, %v1734
  %v1737 = vadd.f32 %v1727, %v1735
  %v1738 = vmul.f32 %v1736, 0.7978846
  %v1739 = vmul.f32 %v1737, 0.7978846
  %v1740 = vtanh.pop %v1738
  %v1741 = vtanh.pop %v1739
  %v1742 = vadd.f32 %v1740, 1.0
  %v1743 = vadd.f32 %v1741, 1.0
  %v1744 = vmul.f32 %v1742, 0.5
  %v1745 = vmul.f32 %v1743, 0.5
  %v1746 = vmul.f32 %v1724, %v1744
  %v1747 = vmul.f32 %v1727, %v1745
  %1748 = vst.msk [vmem:[#allocation4] sm:$0xff] %vm1129, %v1746
  %1749 = vst.msk [vmem:[#allocation4 + $0x8] sm:$0x7f] %vm1143, %v1747
  %v1750 = vld [vmem:[#allocation4] sm:$0xff]
  %v1751 = vld [vmem:[#allocation4 + $0x8] sm:$0x7f]
  %v1752 = vld [vmem:[%s6] sm:$0x1]
  %v1753 = vld [vmem:[%s7] sm:$0x1]
  %vm1754 = vcmask 130048
  %v1755 = vsel %vm1754, %v1750, 0.0
  %1756 = vadd.xlane.f32.xlu0 %v1755
  %v1757 = vpop.xlane.xlu0 %1756
  %vm1758 = vcmask 129024
  %v1759 = vsel %vm1758, %v1751, 0.0
  %1760 = vadd.xlane.f32.xlu0 %v1759
  %v1761 = vpop.xlane.xlu0 %1760
  %v1762 = vrcp.pop 16.0
  %v1763 = vmul.f32 %v1757, %v1762
  %v1764 = vmul.f32 %v1761, %v1762
  %v1765 = vsub.f32 %v1750, %v1763
  %v1766 = vsub.f32 %v1751, %v1764
  %v1767 = vmul.f32 %v1765, %v1765
  %v1768 = vmul.f32 %v1766, %v1766
  %v1769 = vsel %vm1754, %v1767, 0.0
  %1770 = vadd.xlane.f32.xlu0 %v1769
  %v1771 = vpop.xlane.xlu0 %1770
  %v1772 = vsel %vm1758, %v1768, 0.0
  %1773 = vadd.xlane.f32.xlu0 %v1772
  %v1774 = vpop.xlane.xlu0 %1773
  %v1775 = vmul.f32 %v1771, %v1762
  %v1776 = vmul.f32 %v1774, %v1762
  %v1777 = vadd.f32 %v1775, 1e-05
  %v1778 = vadd.f32 %v1776, 1e-05
  %v1779 = vrsqrt.pop %v1777
  %v1780 = vrsqrt.pop %v1778
  %v1781 = vmul.f32 %v1765, %v1779
  %v1782 = vmul.f32 %v1766, %v1780
  %v1784 = vlaneseq
  %v1785 = vshrl.u32 %v1784, 7
  %v1786 = vsub.s32 0, %v1785
  %v1787 = vrot.slane %v1752, %v1786
  %v1789 = vmul.f32 %v1781, %v1787
  %v1790 = vmul.f32 %v1782, %v1787
  %v1792 = vlaneseq
  %v1793 = vshrl.u32 %v1792, 7
  %v1794 = vsub.s32 0, %v1793
  %v1795 = vrot.slane %v1753, %v1794
  %v1797 = vadd.f32 %v1789, %v1795
  %v1798 = vadd.f32 %v1790, %v1795
  %v1799 = vld [vmem:[%s8] sm:$0xf]
  %v1800 = vld [vmem:[%s8 + $0x4] sm:$0xf]
  %v1801 = vpack.c.bf16 %v1798, %v1797
  %v1802 = vld [vmem:[%s9] sm:$0x1]
  %v1804 = vlaneseq
  %v1805 = vshrl.u32 %v1804, 7
  %v1806 = vsub.s32 0, %v1805
  %v1807 = vrot.slane %v1802, %v1806
  %v1811 = vunpack.c.l.b16 %v1799
  %v1812 = vunpack.c.l.b16 %v1800
  %v1813 = vpack.c.b16 %v1812, %v1811
  %v1816 = vsel %vm1754, %v1801, 0
  %1818 = vmatprep.subr.bf16.mxu0 0
  %1819 = vmatpush1.bf16.msra.mxu0 %v1813
  %1820 = vmatprep.subr.bf16.mxu0 0
  %1821 = vmatpush1.bf16.msra.mxu0 0
  %1822 = vmatprep.subr.bf16.mxu0 0
  %1823 = vmatpush1.bf16.msra.mxu0 0
  %1824 = vmatprep.subr.bf16.mxu0 0
  %1825 = vmatpush1.bf16.msra.mxu0 0
  %1826 = vmatprep.subr.bf16.mxu0 0
  %1827 = vmatpush1.bf16.msra.mxu0 0
  %1828 = vmatprep.subr.bf16.mxu0 0
  %1829 = vmatpush1.bf16.msra.mxu0 0
  %1830 = vmatprep.subr.bf16.mxu0 0
  %1831 = vmatpush1.bf16.msra.mxu0 0
  %1832 = vmatprep.subr.bf16.mxu0 0
  %1833 = vmatpush1.bf16.msra.mxu0 0
  %1834 = vmatprep.subr.bf16.mxu0 0
  %1835 = vmatpush1.bf16.msra.mxu0 0
  %1836 = vmatprep.subr.bf16.mxu0 0
  %1837 = vmatpush1.bf16.msra.mxu0 0
  %1838 = vmatprep.subr.bf16.mxu0 0
  %1839 = vmatpush1.bf16.msra.mxu0 0
  %1840 = vmatprep.subr.bf16.mxu0 0
  %1841 = vmatpush1.bf16.msra.mxu0 0
  %1842 = vmatprep.subr.bf16.mxu0 0
  %1843 = vmatpush1.bf16.msra.mxu0 0
  %1844 = vmatprep.subr.bf16.mxu0 0
  %1845 = vmatpush1.bf16.msra.mxu0 0
  %1846 = vmatprep.subr.bf16.mxu0 0
  %1847 = vmatpush1.bf16.msra.mxu0 0
  %1848 = vmatprep.subr.bf16.mxu0 0
  %1849 = vmatpush1.bf16.msra.mxu0 0
  %1850 = vmatprep.mubr.bf16.mxu0 0
  %1851 = vmatmul.mubr.bf16.gmra.mrb[0].mxu0 %v1816
  %v1852 = vpop.f32.mrb[0].mxu0
  %v1853 = vadd.f32 %v1807, %v1852
  %v1854 = vpop.f32.mrb[0].mxu0
  %v1855 = vpop.f32.mrb[0].mxu0
  %v1856 = vadd.f32 %v1807, %v1855
  %v1857 = vpop.f32.mrb[0].mxu0
  %1858 = vdwg.mxu0
  %v1859 = vld [vmem:[%s10] sm:$0xf]
  %v1860 = vld [vmem:[%s10 + $0x4] sm:$0xf]
  %v1861 = vld [vmem:[%s10 + $0x8] sm:$0xf]
  %v1862 = vld [vmem:[%s10 + $0xc] sm:$0xf]
  %v1863 = vpack.c.bf16 %v1856, %v1853
  %v1864 = vld [vmem:[%s11] sm:$0x1]
  %v1866 = vlaneseq
  %v1867 = vshrl.u32 %v1866, 7
  %v1868 = vsub.s32 0, %v1867
  %v1869 = vrot.slane %v1864, %v1868
  %v1875 = vunpack.c.l.b16 %v1859
  %v1876 = vunpack.c.l.b16 %v1860
  %v1877 = vunpack.c.l.b16 %v1861
  %v1878 = vunpack.c.l.b16 %v1862
  %v1879 = vpack.c.b16 %v1876, %v1875
  %v1880 = vpack.c.b16 %v1878, %v1877
  %v1884 = vsel %vm1129, %v1863, 0
  %1886 = vmatprep.subr.bf16.mxu0 0
  %1887 = vmatpush1.bf16.msra.mxu0 %v1879
  %1888 = vmatprep.subr.bf16.mxu0 0
  %1889 = vmatpush1.bf16.msra.mxu0 %v1880
  %1890 = vmatprep.subr.bf16.mxu0 0
  %1891 = vmatpush1.bf16.msra.mxu0 0
  %1892 = vmatprep.subr.bf16.mxu0 0
  %1893 = vmatpush1.bf16.msra.mxu0 0
  %1894 = vmatprep.subr.bf16.mxu0 0
  %1895 = vmatpush1.bf16.msra.mxu0 0
  %1896 = vmatprep.subr.bf16.mxu0 0
  %1897 = vmatpush1.bf16.msra.mxu0 0
  %1898 = vmatprep.subr.bf16.mxu0 0
  %1899 = vmatpush1.bf16.msra.mxu0 0
  %1900 = vmatprep.subr.bf16.mxu0 0
  %1901 = vmatpush1.bf16.msra.mxu0 0
  %1902 = vmatprep.subr.bf16.mxu0 0
  %1903 = vmatpush1.bf16.msra.mxu0 0
  %1904 = vmatprep.subr.bf16.mxu0 0
  %1905 = vmatpush1.bf16.msra.mxu0 0
  %1906 = vmatprep.subr.bf16.mxu0 0
  %1907 = vmatpush1.bf16.msra.mxu0 0
  %1908 = vmatprep.subr.bf16.mxu0 0
  %1909 = vmatpush1.bf16.msra.mxu0 0
  %1910 = vmatprep.subr.bf16.mxu0 0
  %1911 = vmatpush1.bf16.msra.mxu0 0
  %1912 = vmatprep.subr.bf16.mxu0 0
  %1913 = vmatpush1.bf16.msra.mxu0 0
  %1914 = vmatprep.subr.bf16.mxu0 0
  %1915 = vmatpush1.bf16.msra.mxu0 0
  %1916 = vmatprep.subr.bf16.mxu0 0
  %1917 = vmatpush1.bf16.msra.mxu0 0
  %1918 = vmatprep.mubr.bf16.mxu0 0
  %1919 = vmatmul.mubr.bf16.gmra.mrb[0].mxu0 %v1884
  %v1920 = vpop.f32.mrb[0].mxu0
  %v1921 = vadd.f32 %v1869, %v1920
  %v1922 = vpop.f32.mrb[0].mxu0
  %v1923 = vpop.f32.mrb[0].mxu0
  %v1924 = vadd.f32 %v1869, %v1923
  %v1925 = vpop.f32.mrb[0].mxu0
  %1926 = vdwg.mxu0
  %v1927 = vtanh.pop %v1921
  %v1928 = vtanh.pop %v1924
  %v1929 = vld [vmem:[%s12] sm:$0xf]
  %v1930 = vld [vmem:[%s12 + $0x4] sm:$0xf]
  %v1931 = vpack.c.bf16 %v1928, %v1927
  %v1934 = vunpack.c.l.b16 %v1929
  %v1935 = vunpack.c.l.b16 %v1930
  %v1936 = vpack.c.b16 %v1935, %v1934
  %v1939 = vsel %vm1754, %v1931, 0
  %1941 = vmatprep.subr.bf16.mxu0 0
  %1942 = vmatpush1.bf16.msra.mxu0 %v1936
  %1943 = vmatprep.subr.bf16.mxu0 0
  %1944 = vmatpush1.bf16.msra.mxu0 0
  %1945 = vmatprep.subr.bf16.mxu0 0
  %1946 = vmatpush1.bf16.msra.mxu0 0
  %1947 = vmatprep.subr.bf16.mxu0 0
  %1948 = vmatpush1.bf16.msra.mxu0 0
  %1949 = vmatprep.subr.bf16.mxu0 0
  %1950 = vmatpush1.bf16.msra.mxu0 0
  %1951 = vmatprep.subr.bf16.mxu0 0
  %1952 = vmatpush1.bf16.msra.mxu0 0
  %1953 = vmatprep.subr.bf16.mxu0 0
  %1954 = vmatpush1.bf16.msra.mxu0 0
  %1955 = vmatprep.subr.bf16.mxu0 0
  %1956 = vmatpush1.bf16.msra.mxu0 0
  %1957 = vmatprep.subr.bf16.mxu0 0
  %1958 = vmatpush1.bf16.msra.mxu0 0
  %1959 = vmatprep.subr.bf16.mxu0 0
  %1960 = vmatpush1.bf16.msra.mxu0 0
  %1961 = vmatprep.subr.bf16.mxu0 0
  %1962 = vmatpush1.bf16.msra.mxu0 0
  %1963 = vmatprep.subr.bf16.mxu0 0
  %1964 = vmatpush1.bf16.msra.mxu0 0
  %1965 = vmatprep.subr.bf16.mxu0 0
  %1966 = vmatpush1.bf16.msra.mxu0 0
  %1967 = vmatprep.subr.bf16.mxu0 0
  %1968 = vmatpush1.bf16.msra.mxu0 0
  %1969 = vmatprep.subr.bf16.mxu0 0
  %1970 = vmatpush1.bf16.msra.mxu0 0
  %1971 = vmatprep.subr.bf16.mxu0 0
  %1972 = vmatpush1.bf16.msra.mxu0 0
  %1973 = vmatprep.mubr.bf16.mxu0 0
  %1974 = vmatmul.mubr.bf16.gmra.mrb[0].mxu0 %v1939
  %v1975 = vpop.f32.mrb[0].mxu0
  %v1976 = vadd.f32 0.0, %v1975
  %v1977 = vpop.f32.mrb[0].mxu0
  %v1978 = vpop.f32.mrb[0].mxu0
  %v1979 = vadd.f32 0.0, %v1978
  %v1980 = vpop.f32.mrb[0].mxu0
  %1981 = vdwg.mxu0
  %v1982 = vsel %vm87, %v1976, -inf
  %vm1983 = vcmask 14336
  %v1984 = vsel %vm1983, %v1979, -inf
  %v1985 = vmax.f32 %v1982, %v1984
  %v1986 = vrot.slane %v1985, 4
  %v1987 = vmax.f32 %v1985, %v1986
  %v1988 = vrot.slane %v1987, 2
  %v1989 = vmax.f32 %v1987, %v1988
  %v1990 = vrot.slane %v1989, 1
  %v1991 = vmax.f32 %v1989, %v1990
  %v1992 = vsub.f32 %v1976, %v1991
  %v1993 = vsub.f32 %v1979, %v1991
  %v1994 = vmul.f32 %v1992, 1.442695
  %v1995 = vpow.pop %v1994
  %v1996 = vmul.f32 %v1993, 1.442695
  %v1997 = vpow.pop %v1996
  %v1998 = vsel %vm87, %v1995, 0.0
  %v1999 = vsel %vm1983, %v1997, 0.0
  %v2000 = vadd.f32 %v1998, %v1999
  %v2001 = vrot.slane %v2000, 4
  %v2002 = vadd.f32 %v2000, %v2001
  %v2003 = vrot.slane %v2002, 2
  %v2004 = vadd.f32 %v2002, %v2003
  %v2005 = vrot.slane %v2004, 1
  %v2006 = vadd.f32 %v2004, %v2005
  %v2007 = vrcp.pop %v2006
  %v2008 = vmul.f32 %v1995, %v2007
  %v2009 = vmul.f32 %v1997, %v2007
  %v2010 = vpack.c.bf16 %v2009, %v2008
  %2011 = vxpose.xlu0.c.b16.start [1/8] %v2010, 128
  %2012 = vxpose.xlu0.c.b16.cont [2/8] 0, 128
  %2013 = vxpose.xlu0.c.b16.cont [3/8] 0, 128
  %2014 = vxpose.xlu0.c.b16.cont [4/8] 0, 128
  %2015 = vxpose.xlu0.c.b16.cont [5/8] 0, 128
  %2016 = vxpose.xlu0.c.b16.cont [6/8] 0, 128
  %2017 = vxpose.xlu0.c.b16.cont [7/8] 0, 128
  %2018 = vxpose.xlu0.c.b16.end [8/8] 0, 128
  %v2019 = vpop.trf.xlu0
  %v2020 = vpop.trf.xlu0
  %v2021 = vpop.trf.xlu0
  %v2022 = vpop.trf.xlu0
  %v2023 = vpop.trf.xlu0
  %v2024 = vpop.trf.xlu0
  %v2025 = vpop.trf.xlu0
  %v2026 = vpop.trf.xlu0
  %vm2027 = vcmask 121856
  %v2029 = vsel %vm2027, %v2019, 0
  %vm2031 = vcmask 1046528
  %vm2032 = vcmask 1047552
  %v2033 = vsel %vm2031, 4294967295, 65535
  %v2034 = vsel %vm2032, %v2033, 0
  %v2035 = vand.u32 %v1863, %v2034
  %2037 = vmatprep.subr.bf16.mxu0 0
  %2038 = vmatpush1.bf16.msra.mxu0 %v2035
  %2039 = vmatprep.subr.bf16.mxu0 0
  %2040 = vmatpush1.bf16.msra.mxu0 0
  %2041 = vmatprep.subr.bf16.mxu0 0
  %2042 = vmatpush1.bf16.msra.mxu0 0
  %2043 = vmatprep.subr.bf16.mxu0 0
  %2044 = vmatpush1.bf16.msra.mxu0 0
  %2045 = vmatprep.subr.bf16.mxu0 0
  %2046 = vmatpush1.bf16.msra.mxu0 0
  %2047 = vmatprep.subr.bf16.mxu0 0
  %2048 = vmatpush1.bf16.msra.mxu0 0
  %2049 = vmatprep.subr.bf16.mxu0 0
  %2050 = vmatpush1.bf16.msra.mxu0 0
  %2051 = vmatprep.subr.bf16.mxu0 0
  %2052 = vmatpush1.bf16.msra.mxu0 0
  %2053 = vmatprep.subr.bf16.mxu0 0
  %2054 = vmatpush1.bf16.msra.mxu0 0
  %2055 = vmatprep.subr.bf16.mxu0 0
  %2056 = vmatpush1.bf16.msra.mxu0 0
  %2057 = vmatprep.subr.bf16.mxu0 0
  %2058 = vmatpush1.bf16.msra.mxu0 0
  %2059 = vmatprep.subr.bf16.mxu0 0
  %2060 = vmatpush1.bf16.msra.mxu0 0
  %2061 = vmatprep.subr.bf16.mxu0 0
  %2062 = vmatpush1.bf16.msra.mxu0 0
  %2063 = vmatprep.subr.bf16.mxu0 0
  %2064 = vmatpush1.bf16.msra.mxu0 0
  %2065 = vmatprep.subr.bf16.mxu0 0
  %2066 = vmatpush1.bf16.msra.mxu0 0
  %2067 = vmatprep.subr.bf16.mxu0 0
  %2068 = vmatpush1.bf16.msra.mxu0 0
  %2069 = vmatprep.mubr.bf16.mxu0 0
  %2070 = vmatmul.mubr.bf16.gmra.mrb[0].mxu0 %v2029
  %v2071 = vpop.f32.mrb[0].mxu0
  %v2072 = vadd.f32 0.0, %v2071
  %v2073 = vpop.f32.mrb[0].mxu0
  %v2074 = vpop.f32.mrb[0].mxu0
  %v2075 = vpop.f32.mrb[0].mxu0
  %2076 = vdwg.mxu0
  %vm2077 = vcmask 254976
  %2078 = vst.msk [vmem:[%s13] sm:$0x3] %vm2077, %v2072
  %v2079 = vld [vmem:[#allocation4] sm:$0xff]
  %v2080 = vld [vmem:[#allocation4 + $0x8] sm:$0x7f]
  %v2081 = vld [vmem:[%s6] sm:$0x1]
  %v2082 = vld [vmem:[%s7] sm:$0x1]
  %2085 = vrot.lane.b32.xlu0 %v2079, 112
  %v2086 = vpop.permute.xlu0 %2085
  %2087 = vrot.lane.b32.xlu0 %v2080, 112
  %v2088 = vpop.permute.xlu0 %2087
  %v2091 = vsel %vm1754, %v2086, 0.0
  %2092 = vadd.xlane.f32.xlu0 %v2091
  %v2093 = vpop.xlane.xlu0 %2092
  %v2094 = vsel %vm1758, %v2088, 0.0
  %2095 = vadd.xlane.f32.xlu0 %v2094
  %v2096 = vpop.xlane.xlu0 %2095
  %v2097 = vmul.f32 %v2093, %v1762
  %v2098 = vmul.f32 %v2096, %v1762
  %v2099 = vsub.f32 %v2079, %v2097
  %v2100 = vsub.f32 %v2080, %v2098
  %v2101 = vmul.f32 %v2099, %v2099
  %v2102 = vmul.f32 %v2100, %v2100
  %2105 = vrot.lane.b32.xlu0 %v2101, 112
  %v2106 = vpop.permute.xlu0 %2105
  %2107 = vrot.lane.b32.xlu0 %v2102, 112
  %v2108 = vpop.permute.xlu0 %2107
  %v2111 = vsel %vm1754, %v2106, 0.0
  %2112 = vadd.xlane.f32.xlu0 %v2111
  %v2113 = vpop.xlane.xlu0 %2112
  %v2114 = vsel %vm1758, %v2108, 0.0
  %2115 = vadd.xlane.f32.xlu0 %v2114
  %v2116 = vpop.xlane.xlu0 %2115
  %v2117 = vmul.f32 %v2113, %v1762
  %v2118 = vmul.f32 %v2116, %v1762
  %v2119 = vadd.f32 %v2117, 1e-05
  %v2120 = vadd.f32 %v2118, 1e-05
  %v2121 = vrsqrt.pop %v2119
  %v2122 = vrsqrt.pop %v2120
  %v2123 = vmul.f32 %v2099, %v2121
  %v2124 = vmul.f32 %v2100, %v2122
  %v2126 = vlaneseq
  %v2127 = vshrl.u32 %v2126, 7
  %v2128 = vsub.s32 0, %v2127
  %v2129 = vrot.slane %v2081, %v2128
  %2130 = vrot.lane.b32.xlu0 %v2129, 16
  %v2131 = vpop.permute.xlu0 %2130
  %v2133 = vmul.f32 %v2123, %v2131
  %v2134 = vmul.f32 %v2124, %v2131
  %v2136 = vlaneseq
  %v2137 = vshrl.u32 %v2136, 7
  %v2138 = vsub.s32 0, %v2137
  %v2139 = vrot.slane %v2082, %v2138
  %2140 = vrot.lane.b32.xlu0 %v2139, 16
  %v2141 = vpop.permute.xlu0 %2140
  %v2143 = vadd.f32 %v2133, %v2141
  %v2144 = vadd.f32 %v2134, %v2141
  %v2145 = vld [vmem:[%s8] sm:$0xf]
  %v2146 = vld [vmem:[%s8 + $0x4] sm:$0xf]
  %v2147 = vpack.c.bf16 %v2144, %v2143
  %v2148 = vld [vmem:[%s9] sm:$0x1]
  %v2150 = vlaneseq
  %v2151 = vshrl.u32 %v2150, 7
  %v2152 = vsub.s32 0, %v2151
  %v2153 = vrot.slane %v2148, %v2152
  %2156 = vrot.lane.b32.xlu0 %v2147, 112
  %v2157 = vpop.permute.xlu0 %2156
  %v2160 = vunpack.c.l.b16 %v2145
  %v2161 = vunpack.c.l.b16 %v2146
  %v2162 = vpack.c.b16 %v2161, %v2160
  %v2165 = vsel %vm1754, %v2157, 0
  %2167 = vmatprep.subr.bf16.mxu0 0
  %2168 = vmatpush1.bf16.msra.mxu0 %v2162
  %2169 = vmatprep.subr.bf16.mxu0 0
  %2170 = vmatpush1.bf16.msra.mxu0 0
  %2171 = vmatprep.subr.bf16.mxu0 0
  %2172 = vmatpush1.bf16.msra.mxu0 0
  %2173 = vmatprep.subr.bf16.mxu0 0
  %2174 = vmatpush1.bf16.msra.mxu0 0
  %2175 = vmatprep.subr.bf16.mxu0 0
  %2176 = vmatpush1.bf16.msra.mxu0 0
  %2177 = vmatprep.subr.bf16.mxu0 0
  %2178 = vmatpush1.bf16.msra.mxu0 0
  %2179 = vmatprep.subr.bf16.mxu0 0
  %2180 = vmatpush1.bf16.msra.mxu0 0
  %2181 = vmatprep.subr.bf16.mxu0 0
  %2182 = vmatpush1.bf16.msra.mxu0 0
  %2183 = vmatprep.subr.bf16.mxu0 0
  %2184 = vmatpush1.bf16.msra.mxu0 0
  %2185 = vmatprep.subr.bf16.mxu0 0
  %2186 = vmatpush1.bf16.msra.mxu0 0
  %2187 = vmatprep.subr.bf16.mxu0 0
  %2188 = vmatpush1.bf16.msra.mxu0 0
  %2189 = vmatprep.subr.bf16.mxu0 0
  %2190 = vmatpush1.bf16.msra.mxu0 0
  %2191 = vmatprep.subr.bf16.mxu0 0
  %2192 = vmatpush1.bf16.msra.mxu0 0
  %2193 = vmatprep.subr.bf16.mxu0 0
  %2194 = vmatpush1.bf16.msra.mxu0 0
  %2195 = vmatprep.subr.bf16.mxu0 0
  %2196 = vmatpush1.bf16.msra.mxu0 0
  %2197 = vmatprep.subr.bf16.mxu0 0
  %2198 = vmatpush1.bf16.msra.mxu0 0
  %2199 = vmatprep.mubr.bf16.mxu0 0
  %2200 = vmatmul.mubr.bf16.gmra.mrb[0].mxu0 %v2165
  %v2201 = vpop.f32.mrb[0].mxu0
  %v2202 = vadd.f32 %v2153, %v2201
  %v2203 = vpop.f32.mrb[0].mxu0
  %v2204 = vpop.f32.mrb[0].mxu0
  %v2205 = vadd.f32 %v2153, %v2204
  %v2206 = vpop.f32.mrb[0].mxu0
  %2207 = vdwg.mxu0
  %v2208 = vld [vmem:[%s10] sm:$0xf]
  %v2209 = vld [vmem:[%s10 + $0x4] sm:$0xf]
  %v2210 = vld [vmem:[%s10 + $0x8] sm:$0xf]
  %v2211 = vld [vmem:[%s10 + $0xc] sm:$0xf]
  %v2212 = vpack.c.bf16 %v2205, %v2202
  %v2213 = vld [vmem:[%s11] sm:$0x1]
  %v2215 = vlaneseq
  %v2216 = vshrl.u32 %v2215, 7
  %v2217 = vsub.s32 0, %v2216
  %v2218 = vrot.slane %v2213, %v2217
  %v2224 = vunpack.c.l.b16 %v2208
  %v2225 = vunpack.c.l.b16 %v2209
  %v2226 = vunpack.c.l.b16 %v2210
  %v2227 = vunpack.c.l.b16 %v2211
  %v2228 = vpack.c.b16 %v2225, %v2224
  %v2229 = vpack.c.b16 %v2227, %v2226
  %v2233 = vsel %vm1129, %v2212, 0
  %2235 = vmatprep.subr.bf16.mxu0 0
  %2236 = vmatpush1.bf16.msra.mxu0 %v2228
  %2237 = vmatprep.subr.bf16.mxu0 0
  %2238 = vmatpush1.bf16.msra.mxu0 %v2229
  %2239 = vmatprep.subr.bf16.mxu0 0
  %2240 = vmatpush1.bf16.msra.mxu0 0
  %2241 = vmatprep.subr.bf16.mxu0 0
  %2242 = vmatpush1.bf16.msra.mxu0 0
  %2243 = vmatprep.subr.bf16.mxu0 0
  %2244 = vmatpush1.bf16.msra.mxu0 0
  %2245 = vmatprep.subr.bf16.mxu0 0
  %2246 = vmatpush1.bf16.msra.mxu0 0
  %2247 = vmatprep.subr.bf16.mxu0 0
  %2248 = vmatpush1.bf16.msra.mxu0 0
  %2249 = vmatprep.subr.bf16.mxu0 0
  %2250 = vmatpush1.bf16.msra.mxu0 0
  %2251 = vmatprep.subr.bf16.mxu0 0
  %2252 = vmatpush1.bf16.msra.mxu0 0
  %2253 = vmatprep.subr.bf16.mxu0 0
  %2254 = vmatpush1.bf16.msra.mxu0 0
  %2255 = vmatprep.subr.bf16.mxu0 0
  %2256 = vmatpush1.bf16.msra.mxu0 0
  %2257 = vmatprep.subr.bf16.mxu0 0
  %2258 = vmatpush1.bf16.msra.mxu0 0
  %2259 = vmatprep.subr.bf16.mxu0 0
  %2260 = vmatpush1.bf16.msra.mxu0 0
  %2261 = vmatprep.subr.bf16.mxu0 0
  %2262 = vmatpush1.bf16.msra.mxu0 0
  %2263 = vmatprep.subr.bf16.mxu0 0
  %2264 = vmatpush1.bf16.msra.mxu0 0
  %2265 = vmatprep.subr.bf16.mxu0 0
  %2266 = vmatpush1.bf16.msra.mxu0 0
  %2267 = vmatprep.mubr.bf16.mxu0 0
  %2268 = vmatmul.mubr.bf16.gmra.mrb[0].mxu0 %v2233
  %v2269 = vpop.f32.mrb[0].mxu0
  %v2270 = vadd.f32 %v2218, %v2269
  %v2271 = vpop.f32.mrb[0].mxu0
  %v2272 = vpop.f32.mrb[0].mxu0
  %v2273 = vadd.f32 %v2218, %v2272
  %v2274 = vpop.f32.mrb[0].mxu0
  %2275 = vdwg.mxu0
  %v2276 = vtanh.pop %v2270
  %v2277 = vtanh.pop %v2273
  %v2278 = vld [vmem:[%s12] sm:$0xf]
  %v2279 = vld [vmem:[%s12 + $0x4] sm:$0xf]
  %v2280 = vpack.c.bf16 %v2277, %v2276
  %v2283 = vunpack.c.l.b16 %v2278
  %v2284 = vunpack.c.l.b16 %v2279
  %v2285 = vpack.c.b16 %v2284, %v2283
  %v2288 = vsel %vm1754, %v2280, 0
  %2290 = vmatprep.subr.bf16.mxu0 0
  %2291 = vmatpush1.bf16.msra.mxu0 %v2285
  %2292 = vmatprep.subr.bf16.mxu0 0
  %2293 = vmatpush1.bf16.msra.mxu0 0
  %2294 = vmatprep.subr.bf16.mxu0 0
  %2295 = vmatpush1.bf16.msra.mxu0 0
  %2296 = vmatprep.subr.bf16.mxu0 0
  %2297 = vmatpush1.bf16.msra.mxu0 0
  %2298 = vmatprep.subr.bf16.mxu0 0
  %2299 = vmatpush1.bf16.msra.mxu0 0
  %2300 = vmatprep.subr.bf16.mxu0 0
  %2301 = vmatpush1.bf16.msra.mxu0 0
  %2302 = vmatprep.subr.bf16.mxu0 0
  %2303 = vmatpush1.bf16.msra.mxu0 0
  %2304 = vmatprep.subr.bf16.mxu0 0
  %2305 = vmatpush1.bf16.msra.mxu0 0
  %2306 = vmatprep.subr.bf16.mxu0 0
  %2307 = vmatpush1.bf16.msra.mxu0 0
  %2308 = vmatprep.subr.bf16.mxu0 0
  %2309 = vmatpush1.bf16.msra.mxu0 0
  %2310 = vmatprep.subr.bf16.mxu0 0
  %2311 = vmatpush1.bf16.msra.mxu0 0
  %2312 = vmatprep.subr.bf16.mxu0 0
  %2313 = vmatpush1.bf16.msra.mxu0 0
  %2314 = vmatprep.subr.bf16.mxu0 0
  %2315 = vmatpush1.bf16.msra.mxu0 0
  %2316 = vmatprep.subr.bf16.mxu0 0
  %2317 = vmatpush1.bf16.msra.mxu0 0
  %2318 = vmatprep.subr.bf16.mxu0 0
  %2319 = vmatpush1.bf16.msra.mxu0 0
  %2320 = vmatprep.subr.bf16.mxu0 0
  %2321 = vmatpush1.bf16.msra.mxu0 0
  %2322 = vmatprep.mubr.bf16.mxu0 0
  %2323 = vmatmul.mubr.bf16.gmra.mrb[0].mxu0 %v2288
  %v2324 = vpop.f32.mrb[0].mxu0
  %v2325 = vadd.f32 0.0, %v2324
  %v2326 = vpop.f32.mrb[0].mxu0
  %v2327 = vpop.f32.mrb[0].mxu0
  %v2328 = vadd.f32 0.0, %v2327
  %v2329 = vpop.f32.mrb[0].mxu0
  %2330 = vdwg.mxu0
  %v2331 = vsel %vm87, %v2325, -inf
  %v2332 = vsel %vm1983, %v2328, -inf
  %v2333 = vmax.f32 %v2331, %v2332
  %v2334 = vrot.slane %v2333, 4
  %v2335 = vmax.f32 %v2333, %v2334
  %v2336 = vrot.slane %v2335, 2
  %v2337 = vmax.f32 %v2335, %v2336
  %v2338 = vrot.slane %v2337, 1
  %v2339 = vmax.f32 %v2337, %v2338
  %v2340 = vsub.f32 %v2325, %v2339
  %v2341 = vsub.f32 %v2328, %v2339
  %v2342 = vmul.f32 %v2340, 1.442695
  %v2343 = vpow.pop %v2342
  %v2344 = vmul.f32 %v2341, 1.442695
  %v2345 = vpow.pop %v2344
  %v2346 = vsel %vm87, %v2343, 0.0
  %v2347 = vsel %vm1983, %v2345, 0.0
  %v2348 = vadd.f32 %v2346, %v2347
  %v2349 = vrot.slane %v2348, 4
  %v2350 = vadd.f32 %v2348, %v2349
  %v2351 = vrot.slane %v2350, 2
  %v2352 = vadd.f32 %v2350, %v2351
  %v2353 = vrot.slane %v2352, 1
  %v2354 = vadd.f32 %v2352, %v2353
  %v2355 = vrcp.pop %v2354
  %v2356 = vmul.f32 %v2343, %v2355
  %v2357 = vmul.f32 %v2345, %v2355
  %v2358 = vpack.c.bf16 %v2357, %v2356
  %2359 = vxpose.xlu0.c.b16.start [1/8] %v2358, 128
  %2360 = vxpose.xlu0.c.b16.cont [2/8] 0, 128
  %2361 = vxpose.xlu0.c.b16.cont [3/8] 0, 128
  %2362 = vxpose.xlu0.c.b16.cont [4/8] 0, 128
  %2363 = vxpose.xlu0.c.b16.cont [5/8] 0, 128
  %2364 = vxpose.xlu0.c.b16.cont [6/8] 0, 128
  %2365 = vxpose.xlu0.c.b16.cont [7/8] 0, 128
  %2366 = vxpose.xlu0.c.b16.end [8/8] 0, 128
  %v2367 = vpop.trf.xlu0
  %v2368 = vpop.trf.xlu0
  %v2369 = vpop.trf.xlu0
  %v2370 = vpop.trf.xlu0
  %v2371 = vpop.trf.xlu0
  %v2372 = vpop.trf.xlu0
  %v2373 = vpop.trf.xlu0
  %v2374 = vpop.trf.xlu0
  %v2376 = vsel %vm2027, %v2367, 0
  %v2378 = vand.u32 %v2212, %v2034
  %2380 = vmatprep.subr.bf16.mxu0 0
  %2381 = vmatpush1.bf16.msra.mxu0 %v2378
  %2382 = vmatprep.subr.bf16.mxu0 0
  %2383 = vmatpush1.bf16.msra.mxu0 0
  %2384 = vmatprep.subr.bf16.mxu0 0
  %2385 = vmatpush1.bf16.msra.mxu0 0
  %2386 = vmatprep.subr.bf16.mxu0 0
  %2387 = vmatpush1.bf16.msra.mxu0 0
  %2388 = vmatprep.subr.bf16.mxu0 0
  %2389 = vmatpush1.bf16.msra.mxu0 0
  %2390 = vmatprep.subr.bf16.mxu0 0
  %2391 = vmatpush1.bf16.msra.mxu0 0
  %2392 = vmatprep.subr.bf16.mxu0 0
  %2393 = vmatpush1.bf16.msra.mxu0 0
  %2394 = vmatprep.subr.bf16.mxu0 0
  %2395 = vmatpush1.bf16.msra.mxu0 0
  %2396 = vmatprep.subr.bf16.mxu0 0
  %2397 = vmatpush1.bf16.msra.mxu0 0
  %2398 = vmatprep.subr.bf16.mxu0 0
  %2399 = vmatpush1.bf16.msra.mxu0 0
  %2400 = vmatprep.subr.bf16.mxu0 0
  %2401 = vmatpush1.bf16.msra.mxu0 0
  %2402 = vmatprep.subr.bf16.mxu0 0
  %2403 = vmatpush1.bf16.msra.mxu0 0
  %2404 = vmatprep.subr.bf16.mxu0 0
  %2405 = vmatpush1.bf16.msra.mxu0 0
  %2406 = vmatprep.subr.bf16.mxu0 0
  %2407 = vmatpush1.bf16.msra.mxu0 0
  %2408 = vmatprep.subr.bf16.mxu0 0
  %2409 = vmatpush1.bf16.msra.mxu0 0
  %2410 = vmatprep.subr.bf16.mxu0 0
  %2411 = vmatpush1.bf16.msra.mxu0 0
  %2412 = vmatprep.mubr.bf16.mxu0 0
  %2413 = vmatmul.mubr.bf16.gmra.mrb[0].mxu0 %v2376
  %v2414 = vpop.f32.mrb[0].mxu0
  %v2415 = vadd.f32 0.0, %v2414
  %v2416 = vpop.f32.mrb[0].mxu0
  %v2417 = vpop.f32.mrb[0].mxu0
  %v2418 = vpop.f32.mrb[0].mxu0
  %2419 = vdwg.mxu0
  %s2420 = scalar_lea.vmem %s13, 2
  %2421 = vst.msk [vmem:[%s2420] sm:$0x3] %vm2077, %v2415
  // Predicated region
  $region54: #{teasel_forward.2} parent=0 // pred_check
    _
  $region55: #{teasel_forward.2} parent=0 // pred_check_branch
    %2423 = sbr.rel (0) target = $region57
  $region56: #{teasel_forward.2} parent=0 // pred_region
    _
  $region57: #{teasel_forward.2} parent=0 // pred_fallthru
    _
  // Predicated region
  $region58: #{teasel_forward.2} parent=0 // pred_check
    _
  $region59: #{teasel_forward.2} parent=0 // pred_check_branch
    %2425 = sbr.rel (0) target = $region61
  $region60: #{teasel_forward.2} parent=0 // pred_region
    _
  $region61: #{teasel_forward.2} parent=0 // pred_fallthru
    _

// kernel: teasel_forward.3
$region0: #{teasel_forward.3}
  #allocation0 [shape = 'u32[]', space=smem, size = 0x4, offset = 0x4, fixed_abs, tag = 'smem constant byte address 0x4 - core index']
  #allocation1 [shape = 'u32[144,128]{1,0:T(1,128)}', space=vmem, size = 0x12000, scoped, tag = 'internal scratch']
  %s0 = inlined_call_operand.vmem [shape: f32[2,10,32], index: 0, kind: input, shape index: {}]
  %s1 = inlined_call_operand.vmem [shape: f32[2,1,10], index: 1, kind: input, shape index: {}]
  %s2 = inlined_call_operand.vmem [shape: f32[10,32], index: 2, kind: input, shape index: {}]
  %s3 = inlined_call_operand.vmem [shape: f32[1,32], index: 3, kind: input, shape index: {}]
  %s4 = inlined_call_operand.vmem [shape: f32[1,32], index: 4, kind: input, shape index: {}]
  %s5 = inlined_call_operand.vmem [shape: bf16[4,32,16], index: 5, kind: input, shape index: {}]
  %s6 = inlined_call_operand.vmem [shape: f32[4,1,16], index: 6, kind: input, shape index: {}]
  %s7 = inlined_call_operand.vmem [shape: bf16[4,32,16], index: 7, kind: input, shape index: {}]
  %s8 = inlined_call_operand.vmem [shape: f32[4,1,16], index: 8, kind: input, shape index: {}]
  %s9 = inlined_call_operand.vmem [shape: bf16[4,32,16], index: 9, kind: input, shape index: {}]
  %s10 = inlined_call_operand.vmem [shape: f32[4,1,16], index: 10, kind: input, shape index: {}]
  %s11 = inlined_call_operand.vmem [shape: bf16[4,16,32], index: 11, kind: input, shape index: {}]
  %s12 = inlined_call_operand.vmem [shape: f32[2,1,32], index: 12, kind: input, shape index: {}]
  %s13 = inlined_call_operand.vmem [shape: f32[2,1,32], index: 13, kind: input, shape index: {}]
  %s14 = inlined_call_operand.vmem [shape: f32[2,1,32], index: 14, kind: input, shape index: {}]
  %s15 = inlined_call_operand.vmem [shape: bf16[2,32,64], index: 15, kind: input, shape index: {}]
  %s16 = inlined_call_operand.vmem [shape: f32[2,1,64], index: 16, kind: input, shape index: {}]
  %s17 = inlined_call_operand.vmem [shape: bf16[2,64,32], index: 17, kind: input, shape index: {}]
  %s18 = inlined_call_operand.vmem [shape: f32[2,1,32], index: 18, kind: input, shape index: {}]
  %s19 = inlined_call_operand.vmem [shape: f32[2,1,32], index: 19, kind: input, shape index: {}]
  %s20 = inlined_call_operand.vmem [shape: f32[2,1,32], index: 20, kind: input, shape index: {}]
  %s21 = inlined_call_operand.vmem [shape: bf16[32,32], index: 21, kind: input, shape index: {}]
  %s22 = inlined_call_operand.vmem [shape: f32[1,32], index: 22, kind: input, shape index: {}]
  %s23 = inlined_call_operand.vmem [shape: f32[1,32], index: 23, kind: input, shape index: {}]
  %s24 = inlined_call_operand.vmem [shape: f32[1,32], index: 24, kind: input, shape index: {}]
  %s25 = inlined_call_operand.vmem [shape: bf16[32,64], index: 25, kind: input, shape index: {}]
  %s26 = inlined_call_operand.vmem [shape: f32[1,64], index: 26, kind: input, shape index: {}]
  %s27 = inlined_call_operand.vmem [shape: f32[2,10,64], index: 27, kind: output, shape index: {}]
  %s28 = sld [smem:[#allocation0]]
  $region118: #{teasel_forward.3} parent=0
    _
  %s30 = ssub.s32 1, %s28
  %s31 = scalar_select 0, %s30, %s28
  // Predicated region
  $region2: #{teasel_forward.3} parent=0 // pred_check
    _
  $region3: #{teasel_forward.3} parent=0 // pred_check_branch
    %33 = sbr.rel (0) target = $region5
  $region4: #{teasel_forward.3} parent=0 // pred_region
    _
  $region5: #{teasel_forward.3} parent=0 // pred_fallthru
    _
  // Predicated region
  $region6: #{teasel_forward.3} parent=0 // pred_check
    _
  $region7: #{teasel_forward.3} parent=0 // pred_check_branch
    %35 = sbr.rel (0) target = $region9
  $region8: #{teasel_forward.3} parent=0 // pred_region
    _
  $region9: #{teasel_forward.3} parent=0 // pred_fallthru
    _
  // Predicated region
  $region10: #{teasel_forward.3} parent=0 // pred_check
    _
  $region11: #{teasel_forward.3} parent=0 // pred_check_branch
    %37 = sbr.rel (0) target = $region13
  $region12: #{teasel_forward.3} parent=0 // pred_region
    _
  $region13: #{teasel_forward.3} parent=0 // pred_fallthru
    _
  // Predicated region
  $region14: #{teasel_forward.3} parent=0 // pred_check
    _
  $region15: #{teasel_forward.3} parent=0 // pred_check_branch
    %39 = sbr.rel (0) target = $region17
  $region16: #{teasel_forward.3} parent=0 // pred_region
    _
  $region17: #{teasel_forward.3} parent=0 // pred_fallthru
    _
  // Predicated region
  $region18: #{teasel_forward.3} parent=0 // pred_check
    _
  $region19: #{teasel_forward.3} parent=0 // pred_check_branch
    %41 = sbr.rel (0) target = $region21
  $region20: #{teasel_forward.3} parent=0 // pred_region
    _
  $region21: #{teasel_forward.3} parent=0 // pred_fallthru
    _
  // Predicated region
  $region22: #{teasel_forward.3} parent=0 // pred_check
    _
  $region23: #{teasel_forward.3} parent=0 // pred_check_branch
    %43 = sbr.rel (0) target = $region25
  $region24: #{teasel_forward.3} parent=0 // pred_region
    _
  $region25: #{teasel_forward.3} parent=0 // pred_fallthru
    _
  // Predicated region
  $region26: #{teasel_forward.3} parent=0 // pred_check
    _
  $region27: #{teasel_forward.3} parent=0 // pred_check_branch
    %45 = sbr.rel (0) target = $region29
  $region28: #{teasel_forward.3} parent=0 // pred_region
    _
  $region29: #{teasel_forward.3} parent=0 // pred_fallthru
    _
  // Predicated region
  $region30: #{teasel_forward.3} parent=0 // pred_check
    _
  $region31: #{teasel_forward.3} parent=0 // pred_check_branch
    %47 = sbr.rel (0) target = $region33
  $region32: #{teasel_forward.3} parent=0 // pred_region
    _
  $region33: #{teasel_forward.3} parent=0 // pred_fallthru
    _
  // Predicated region
  $region34: #{teasel_forward.3} parent=0 // pred_check
    _
  $region35: #{teasel_forward.3} parent=0 // pred_check_branch
    %49 = sbr.rel (0) target = $region37
  $region36: #{teasel_forward.3} parent=0 // pred_region
    _
  $region37: #{teasel_forward.3} parent=0 // pred_fallthru
    _
  // Predicated region
  $region38: #{teasel_forward.3} parent=0 // pred_check
    _
  $region39: #{teasel_forward.3} parent=0 // pred_check_branch
    %51 = sbr.rel (0) target = $region41
  $region40: #{teasel_forward.3} parent=0 // pred_region
    _
  $region41: #{teasel_forward.3} parent=0 // pred_fallthru
    _
  // Predicated region
  $region42: #{teasel_forward.3} parent=0 // pred_check
    _
  $region43: #{teasel_forward.3} parent=0 // pred_check_branch
    %53 = sbr.rel (0) target = $region45
  $region44: #{teasel_forward.3} parent=0 // pred_region
    _
  $region45: #{teasel_forward.3} parent=0 // pred_fallthru
    _
  // Predicated region
  $region46: #{teasel_forward.3} parent=0 // pred_check
    _
  $region47: #{teasel_forward.3} parent=0 // pred_check_branch
    %55 = sbr.rel (0) target = $region49
  $region48: #{teasel_forward.3} parent=0 // pred_region
    _
  $region49: #{teasel_forward.3} parent=0 // pred_fallthru
    _
  // Predicated region
  $region50: #{teasel_forward.3} parent=0 // pred_check
    _
  $region51: #{teasel_forward.3} parent=0 // pred_check_branch
    %57 = sbr.rel (0) target = $region53
  $region52: #{teasel_forward.3} parent=0 // pred_region
    _
  $region53: #{teasel_forward.3} parent=0 // pred_fallthru
    _
  // Predicated region
  $region54: #{teasel_forward.3} parent=0 // pred_check
    _
  $region55: #{teasel_forward.3} parent=0 // pred_check_branch
    %59 = sbr.rel (0) target = $region57
  $region56: #{teasel_forward.3} parent=0 // pred_region
    _
  $region57: #{teasel_forward.3} parent=0 // pred_fallthru
    _
  // Predicated region
  $region58: #{teasel_forward.3} parent=0 // pred_check
    _
  $region59: #{teasel_forward.3} parent=0 // pred_check_branch
    %61 = sbr.rel (0) target = $region61
  $region60: #{teasel_forward.3} parent=0 // pred_region
    _
  $region61: #{teasel_forward.3} parent=0 // pred_fallthru
    _
  // Predicated region
  $region62: #{teasel_forward.3} parent=0 // pred_check
    _
  $region63: #{teasel_forward.3} parent=0 // pred_check_branch
    %63 = sbr.rel (0) target = $region65
  $region64: #{teasel_forward.3} parent=0 // pred_region
    _
  $region65: #{teasel_forward.3} parent=0 // pred_fallthru
    _
  // Predicated region
  $region66: #{teasel_forward.3} parent=0 // pred_check
    _
  $region67: #{teasel_forward.3} parent=0 // pred_check_branch
    %65 = sbr.rel (0) target = $region69
  $region68: #{teasel_forward.3} parent=0 // pred_region
    _
  $region69: #{teasel_forward.3} parent=0 // pred_fallthru
    _
  // Predicated region
  $region70: #{teasel_forward.3} parent=0 // pred_check
    _
  $region71: #{teasel_forward.3} parent=0 // pred_check_branch
    %67 = sbr.rel (0) target = $region73
  $region72: #{teasel_forward.3} parent=0 // pred_region
    _
  $region73: #{teasel_forward.3} parent=0 // pred_fallthru
    _
  // Predicated region
  $region74: #{teasel_forward.3} parent=0 // pred_check
    _
  $region75: #{teasel_forward.3} parent=0 // pred_check_branch
    %69 = sbr.rel (0) target = $region77
  $region76: #{teasel_forward.3} parent=0 // pred_region
    _
  $region77: #{teasel_forward.3} parent=0 // pred_fallthru
    _
  // Predicated region
  $region78: #{teasel_forward.3} parent=0 // pred_check
    _
  $region79: #{teasel_forward.3} parent=0 // pred_check_branch
    %71 = sbr.rel (0) target = $region81
  $region80: #{teasel_forward.3} parent=0 // pred_region
    _
  $region81: #{teasel_forward.3} parent=0 // pred_fallthru
    _
  // Predicated region
  $region82: #{teasel_forward.3} parent=0 // pred_check
    _
  $region83: #{teasel_forward.3} parent=0 // pred_check_branch
    %73 = sbr.rel (0) target = $region85
  $region84: #{teasel_forward.3} parent=0 // pred_region
    _
  $region85: #{teasel_forward.3} parent=0 // pred_fallthru
    _
  // Predicated region
  $region86: #{teasel_forward.3} parent=0 // pred_check
    _
  $region87: #{teasel_forward.3} parent=0 // pred_check_branch
    %75 = sbr.rel (0) target = $region89
  $region88: #{teasel_forward.3} parent=0 // pred_region
    _
  $region89: #{teasel_forward.3} parent=0 // pred_fallthru
    _
  // Predicated region
  $region90: #{teasel_forward.3} parent=0 // pred_check
    _
  $region91: #{teasel_forward.3} parent=0 // pred_check_branch
    %77 = sbr.rel (0) target = $region93
  $region92: #{teasel_forward.3} parent=0 // pred_region
    _
  $region93: #{teasel_forward.3} parent=0 // pred_fallthru
    _
  // Predicated region
  $region94: #{teasel_forward.3} parent=0 // pred_check
    _
  $region95: #{teasel_forward.3} parent=0 // pred_check_branch
    %79 = sbr.rel (0) target = $region97
  $region96: #{teasel_forward.3} parent=0 // pred_region
    _
  $region97: #{teasel_forward.3} parent=0 // pred_fallthru
    _
  // Predicated region
  $region98: #{teasel_forward.3} parent=0 // pred_check
    _
  $region99: #{teasel_forward.3} parent=0 // pred_check_branch
    %81 = sbr.rel (0) target = $region101
  $region100: #{teasel_forward.3} parent=0 // pred_region
    _
  $region101: #{teasel_forward.3} parent=0 // pred_fallthru
    _
  // Predicated region
  $region102: #{teasel_forward.3} parent=0 // pred_check
    _
  $region103: #{teasel_forward.3} parent=0 // pred_check_branch
    %83 = sbr.rel (0) target = $region105
  $region104: #{teasel_forward.3} parent=0 // pred_region
    _
  $region105: #{teasel_forward.3} parent=0 // pred_fallthru
    _
  // Predicated region
  $region106: #{teasel_forward.3} parent=0 // pred_check
    _
  $region107: #{teasel_forward.3} parent=0 // pred_check_branch
    %85 = sbr.rel (0) target = $region109
  $region108: #{teasel_forward.3} parent=0 // pred_region
    _
  $region109: #{teasel_forward.3} parent=0 // pred_fallthru
    _
  %v87 = vld [vmem:[%s2] sm:$0xff]
  %v88 = vld [vmem:[%s2 + $0x8] sm:$0x3]
  %v89 = vld [vmem:[%s3] sm:$0x1]
  %v90 = vld [vmem:[%s4] sm:$0x1]
  %v91 = vld [vmem:[%s0] sm:$0xff]
  %v92 = vld [vmem:[%s0 + $0x8] sm:$0x3]
  %v93 = vadd.f32 %v91, %v87
  %v94 = vadd.f32 %v92, %v88
  %vm95 = vcmask 261120
  %v96 = vsel %vm95, %v93, 0.0
  %97 = vadd.xlane.f32.xlu0 %v96
  %v98 = vpop.xlane.xlu0 %97
  %vm99 = vcmask 254976
  %v100 = vsel %vm99, %v94, 0.0
  %101 = vadd.xlane.f32.xlu0 %v100
  %v102 = vpop.xlane.xlu0 %101
  %v103 = vrcp.pop 32.0
  %v104 = vmul.f32 %v98, %v103
  %v105 = vmul.f32 %v102, %v103
  %v106 = vsub.f32 %v93, %v104
  %v107 = vsub.f32 %v94, %v105
  %v108 = vmul.f32 %v106, %v106
  %v109 = vmul.f32 %v107, %v107
  %v110 = vsel %vm95, %v108, 0.0
  %111 = vadd.xlane.f32.xlu0 %v110
  %v112 = vpop.xlane.xlu0 %111
  %v113 = vsel %vm99, %v109, 0.0
  %114 = vadd.xlane.f32.xlu0 %v113
  %v115 = vpop.xlane.xlu0 %114
  %v116 = vmul.f32 %v112, %v103
  %v117 = vmul.f32 %v115, %v103
  %v118 = vadd.f32 %v116, 1e-05
  %v119 = vadd.f32 %v117, 1e-05
  %v120 = vrsqrt.pop %v118
  %v121 = vrsqrt.pop %v119
  %v122 = vmul.f32 %v106, %v120
  %v123 = vmul.f32 %v107, %v121
  %v125 = vlaneseq
  %v126 = vshrl.u32 %v125, 7
  %v127 = vsub.s32 0, %v126
  %v128 = vrot.slane %v89, %v127
  %v130 = vmul.f32 %v122, %v128
  %v131 = vmul.f32 %v123, %v128
  %v133 = vlaneseq
  %v134 = vshrl.u32 %v133, 7
  %v135 = vsub.s32 0, %v134
  %v136 = vrot.slane %v90, %v135
  %v138 = vadd.f32 %v130, %v136
  %v139 = vadd.f32 %v131, %v136
  %v140 = vld [vmem:[%s1] sm:$0x1]
  %v141 = vsub.f32 1.0, %v140
  %v142 = vmul.f32 %v141, -1e+09
  %v143 = vld [vmem:[%s5] sm:$0xf]
  %v144 = vld [vmem:[%s5 + $0x4] sm:$0xf]
  %v145 = vld [vmem:[%s5 + $0x8] sm:$0xf]
  %v146 = vld [vmem:[%s5 + $0xc] sm:$0xf]
  %v147 = vpack.c.bf16 %v139, %v138
  %v148 = vld [vmem:[%s6] sm:$0x1]
  %v150 = vlaneseq
  %v151 = vshrl.u32 %v150, 7
  %v152 = vsub.s32 0, %v151
  %v153 = vrot.slane %v148, %v152
  %v159 = vunpack.c.l.b16 %v143
  %v160 = vunpack.c.l.b16 %v144
  %v161 = vunpack.c.l.b16 %v145
  %v162 = vunpack.c.l.b16 %v146
  %v163 = vpack.c.b16 %v160, %v159
  %v164 = vpack.c.b16 %v162, %v161
  %v168 = vsel %vm95, %v147, 0
  %170 = vmatprep.subr.bf16.mxu0 0
  %171 = vmatpush1.bf16.msra.mxu0 %v163
  %172 = vmatprep.subr.bf16.mxu0 0
  %173 = vmatpush1.bf16.msra.mxu0 %v164
  %174 = vmatprep.subr.bf16.mxu0 0
  %175 = vmatpush1.bf16.msra.mxu0 0
  %176 = vmatprep.subr.bf16.mxu0 0
  %177 = vmatpush1.bf16.msra.mxu0 0
  %178 = vmatprep.subr.bf16.mxu0 0
  %179 = vmatpush1.bf16.msra.mxu0 0
  %180 = vmatprep.subr.bf16.mxu0 0
  %181 = vmatpush1.bf16.msra.mxu0 0
  %182 = vmatprep.subr.bf16.mxu0 0
  %183 = vmatpush1.bf16.msra.mxu0 0
  %184 = vmatprep.subr.bf16.mxu0 0
  %185 = vmatpush1.bf16.msra.mxu0 0
  %186 = vmatprep.subr.bf16.mxu0 0
  %187 = vmatpush1.bf16.msra.mxu0 0
  %188 = vmatprep.subr.bf16.mxu0 0
  %189 = vmatpush1.bf16.msra.mxu0 0
  %190 = vmatprep.subr.bf16.mxu0 0
  %191 = vmatpush1.bf16.msra.mxu0 0
  %192 = vmatprep.subr.bf16.mxu0 0
  %193 = vmatpush1.bf16.msra.mxu0 0
  %194 = vmatprep.subr.bf16.mxu0 0
  %195 = vmatpush1.bf16.msra.mxu0 0
  %196 = vmatprep.subr.bf16.mxu0 0
  %197 = vmatpush1.bf16.msra.mxu0 0
  %198 = vmatprep.subr.bf16.mxu0 0
  %199 = vmatpush1.bf16.msra.mxu0 0
  %200 = vmatprep.subr.bf16.mxu0 0
  %201 = vmatpush1.bf16.msra.mxu0 0
  %202 = vmatprep.mubr.bf16.mxu0 0
  %203 = vmatmul.mubr.bf16.gmra.mrb[0].mxu0 %v168
  %v204 = vpop.f32.mrb[0].mxu0
  %v205 = vadd.f32 %v153, %v204
  %v206 = vpop.f32.mrb[0].mxu0
  %v207 = vpop.f32.mrb[0].mxu0
  %v208 = vadd.f32 %v153, %v207
  %v209 = vpop.f32.mrb[0].mxu0
  %210 = vdwg.mxu0
  %v211 = vld [vmem:[%s7] sm:$0xf]
  %v212 = vld [vmem:[%s7 + $0x4] sm:$0xf]
  %v213 = vld [vmem:[%s7 + $0x8] sm:$0xf]
  %v214 = vld [vmem:[%s7 + $0xc] sm:$0xf]
  %v215 = vld [vmem:[%s8] sm:$0x1]
  %v217 = vlaneseq
  %v218 = vshrl.u32 %v217, 7
  %v219 = vsub.s32 0, %v218
  %v220 = vrot.slane %v215, %v219
  %v226 = vunpack.c.l.b16 %v211
  %v227 = vunpack.c.l.b16 %v212
  %v228 = vunpack.c.l.b16 %v213
  %v229 = vunpack.c.l.b16 %v214
  %v230 = vpack.c.b16 %v227, %v226
  %v231 = vpack.c.b16 %v229, %v228
  %234 = vmatprep.subr.bf16.mxu0 0
  %235 = vmatpush1.bf16.msra.mxu0 %v230
  %236 = vmatprep.subr.bf16.mxu0 0
  %237 = vmatpush1.bf16.msra.mxu0 %v231
  %238 = vmatprep.subr.bf16.mxu0 0
  %239 = vmatpush1.bf16.msra.mxu0 0
  %240 = vmatprep.subr.bf16.mxu0 0
  %241 = vmatpush1.bf16.msra.mxu0 0
  %242 = vmatprep.subr.bf16.mxu0 0
  %243 = vmatpush1.bf16.msra.mxu0 0
  %244 = vmatprep.subr.bf16.mxu0 0
  %245 = vmatpush1.bf16.msra.mxu0 0
  %246 = vmatprep.subr.bf16.mxu0 0
  %247 = vmatpush1.bf16.msra.mxu0 0
  %248 = vmatprep.subr.bf16.mxu0 0
  %249 = vmatpush1.bf16.msra.mxu0 0
  %250 = vmatprep.subr.bf16.mxu0 0
  %251 = vmatpush1.bf16.msra.mxu0 0
  %252 = vmatprep.subr.bf16.mxu0 0
  %253 = vmatpush1.bf16.msra.mxu0 0
  %254 = vmatprep.subr.bf16.mxu0 0
  %255 = vmatpush1.bf16.msra.mxu0 0
  %256 = vmatprep.subr.bf16.mxu0 0
  %257 = vmatpush1.bf16.msra.mxu0 0
  %258 = vmatprep.subr.bf16.mxu0 0
  %259 = vmatpush1.bf16.msra.mxu0 0
  %260 = vmatprep.subr.bf16.mxu0 0
  %261 = vmatpush1.bf16.msra.mxu0 0
  %262 = vmatprep.subr.bf16.mxu0 0
  %263 = vmatpush1.bf16.msra.mxu0 0
  %264 = vmatprep.subr.bf16.mxu0 0
  %265 = vmatpush1.bf16.msra.mxu0 0
  %266 = vmatprep.mubr.bf16.mxu0 0
  %267 = vmatmul.mubr.bf16.gmra.mrb[0].mxu0 %v168
  %v268 = vpop.f32.mrb[0].mxu0
  %v269 = vadd.f32 %v220, %v268
  %v270 = vpop.f32.mrb[0].mxu0
  %v271 = vpop.f32.mrb[0].mxu0
  %v272 = vadd.f32 %v220, %v271
  %v273 = vpop.f32.mrb[0].mxu0
  %274 = vdwg.mxu0
  %v275 = vld [vmem:[%s9] sm:$0xf]
  %v276 = vld [vmem:[%s9 + $0x4] sm:$0xf]
  %v277 = vld [vmem:[%s9 + $0x8] sm:$0xf]
  %v278 = vld [vmem:[%s9 + $0xc] sm:$0xf]
  %v279 = vld [vmem:[%s10] sm:$0x1]
  %v281 = vlaneseq
  %v282 = vshrl.u32 %v281, 7
  %v283 = vsub.s32 0, %v282
  %v284 = vrot.slane %v279, %v283
  %v290 = vunpack.c.l.b16 %v275
  %v291 = vunpack.c.l.b16 %v276
  %v292 = vunpack.c.l.b16 %v277
  %v293 = vunpack.c.l.b16 %v278
  %v294 = vpack.c.b16 %v291, %v290
  %v295 = vpack.c.b16 %v293, %v292
  %298 = vmatprep.subr.bf16.mxu0 0
  %299 = vmatpush1.bf16.msra.mxu0 %v294
  %300 = vmatprep.subr.bf16.mxu0 0
  %301 = vmatpush1.bf16.msra.mxu0 %v295
  %302 = vmatprep.subr.bf16.mxu0 0
  %303 = vmatpush1.bf16.msra.mxu0 0
  %304 = vmatprep.subr.bf16.mxu0 0
  %305 = vmatpush1.bf16.msra.mxu0 0
  %306 = vmatprep.subr.bf16.mxu0 0
  %307 = vmatpush1.bf16.msra.mxu0 0
  %308 = vmatprep.subr.bf16.mxu0 0
  %309 = vmatpush1.bf16.msra.mxu0 0
  %310 = vmatprep.subr.bf16.mxu0 0
  %311 = vmatpush1.bf16.msra.mxu0 0
  %312 = vmatprep.subr.bf16.mxu0 0
  %313 = vmatpush1.bf16.msra.mxu0 0
  %314 = vmatprep.subr.bf16.mxu0 0
  %315 = vmatpush1.bf16.msra.mxu0 0
  %316 = vmatprep.subr.bf16.mxu0 0
  %317 = vmatpush1.bf16.msra.mxu0 0
  %318 = vmatprep.subr.bf16.mxu0 0
  %319 = vmatpush1.bf16.msra.mxu0 0
  %320 = vmatprep.subr.bf16.mxu0 0
  %321 = vmatpush1.bf16.msra.mxu0 0
  %322 = vmatprep.subr.bf16.mxu0 0
  %323 = vmatpush1.bf16.msra.mxu0 0
  %324 = vmatprep.subr.bf16.mxu0 0
  %325 = vmatpush1.bf16.msra.mxu0 0
  %326 = vmatprep.subr.bf16.mxu0 0
  %327 = vmatpush1.bf16.msra.mxu0 0
  %328 = vmatprep.subr.bf16.mxu0 0
  %329 = vmatpush1.bf16.msra.mxu0 0
  %330 = vmatprep.mubr.bf16.mxu0 0
  %331 = vmatmul.mubr.bf16.gmra.mrb[0].mxu0 %v168
  %v332 = vpop.f32.mrb[0].mxu0
  %v333 = vadd.f32 %v284, %v332
  %v334 = vpop.f32.mrb[0].mxu0
  %v335 = vpop.f32.mrb[0].mxu0
  %v336 = vadd.f32 %v284, %v335
  %v337 = vpop.f32.mrb[0].mxu0
  %338 = vdwg.mxu0
  %v339 = vpack.c.bf16 %v208, %v205
  %v340 = vpack.c.bf16 %v272, %v269
  %vm341 = vcmask 130048
  %v343 = vsel %vm341, %v339, 0
  %v346 = vsel %vm341, %v340, 0
  %348 = vmatprep.subr.bf16.mxu0 0
  %349 = vmatpush1.bf16.xpose.msra.mxu0 %v346
  %350 = vmatprep.subr.bf16.mxu0 0
  %351 = vmatpush1.bf16.xpose.msra.mxu0 0
  %352 = vmatprep.subr.bf16.mxu0 0
  %353 = vmatpush1.bf16.xpose.msra.mxu0 0
  %354 = vmatprep.subr.bf16.mxu0 0
  %355 = vmatpush1.bf16.xpose.msra.mxu0 0
  %356 = vmatprep.subr.bf16.mxu0 0
  %357 = vmatpush1.bf16.xpose.msra.mxu0 0
  %358 = vmatprep.subr.bf16.mxu0 0
  %359 = vmatpush1.bf16.xpose.msra.mxu0 0
  %360 = vmatprep.subr.bf16.mxu0 0
  %361 = vmatpush1.bf16.xpose.msra.mxu0 0
  %362 = vmatprep.subr.bf16.mxu0 0
  %363 = vmatpush1.bf16.xpose.msra.mxu0 0
  %364 = vmatprep.subr.bf16.mxu0 0
  %365 = vmatpush1.bf16.xpose.msra.mxu0 0
  %366 = vmatprep.subr.bf16.mxu0 0
  %367 = vmatpush1.bf16.xpose.msra.mxu0 0
  %368 = vmatprep.subr.bf16.mxu0 0
  %369 = vmatpush1.bf16.xpose.msra.mxu0 0
  %370 = vmatprep.subr.bf16.mxu0 0
  %371 = vmatpush1.bf16.xpose.msra.mxu0 0
  %372 = vmatprep.subr.bf16.mxu0 0
  %373 = vmatpush1.bf16.xpose.msra.mxu0 0
  %374 = vmatprep.subr.bf16.mxu0 0
  %375 = vmatpush1.bf16.xpose.msra.mxu0 0
  %376 = vmatprep.subr.bf16.mxu0 0
  %377 = vmatpush1.bf16.xpose.msra.mxu0 0
  %378 = vmatprep.subr.bf16.mxu0 0
  %379 = vmatpush1.bf16.xpose.msra.mxu0 0
  %380 = vmatprep.mubr.bf16.mxu0 0
  %381 = vmatmul.mubr.bf16.gmra.mrb[0].mxu0 %v343
  %v382 = vpop.f32.mrb[0].mxu0
  %v383 = vadd.f32 0.0, %v382
  %v384 = vpop.f32.mrb[0].mxu0
  %v385 = vpop.f32.mrb[0].mxu0
  %v386 = vadd.f32 0.0, %v385
  %v387 = vpop.f32.mrb[0].mxu0
  %388 = vdwg.mxu0
  %v389 = vmul.f32 %v383, 0.25
  %v390 = vmul.f32 %v386, 0.25
  %v392 = vlaneseq
  %v393 = vshrl.u32 %v392, 7
  %v394 = vsub.s32 0, %v393
  %v395 = vrot.slane %v142, %v394
  %v397 = vadd.f32 %v389, %v395
  %v398 = vadd.f32 %v390, %v395
  %vm399 = vcmask 80896
  %v400 = vsel %vm399, %v397, -inf
  %401 = vmax.xlane.f32.xlu0 %v400
  %v402 = vpop.xlane.xlu0 %401
  %vm403 = vcmask 74752
  %v404 = vsel %vm403, %v398, -inf
  %405 = vmax.xlane.f32.xlu0 %v404
  %v406 = vpop.xlane.xlu0 %405
  %v407 = vsub.f32 %v397, %v402
  %v408 = vsub.f32 %v398, %v406
  %v409 = vmul.f32 %v407, 1.442695
  %v410 = vpow.pop %v409
  %v411 = vmul.f32 %v408, 1.442695
  %v412 = vpow.pop %v411
  %v413 = vsel %vm399, %v410, 0.0
  %414 = vadd.xlane.f32.xlu0 %v413
  %v415 = vpop.xlane.xlu0 %414
  %v416 = vsel %vm403, %v412, 0.0
  %417 = vadd.xlane.f32.xlu0 %v416
  %v418 = vpop.xlane.xlu0 %417
  %v419 = vrcp.pop %v415
  %v420 = vmul.f32 %v410, %v419
  %v421 = vrcp.pop %v418
  %v422 = vmul.f32 %v412, %v421
  %v423 = vpack.c.bf16 %v422, %v420
  %v424 = vpack.c.bf16 %v336, %v333
  %v426 = vsel %vm399, %v423, 0
  %vm428 = vcmask 1044480
  %v430 = vsel %vm428, %v424, 0
  %432 = vmatprep.subr.bf16.mxu0 0
  %433 = vmatpush1.bf16.msra.mxu0 %v430
  %434 = vmatprep.subr.bf16.mxu0 0
  %435 = vmatpush1.bf16.msra.mxu0 0
  %436 = vmatprep.subr.bf16.mxu0 0
  %437 = vmatpush1.bf16.msra.mxu0 0
  %438 = vmatprep.subr.bf16.mxu0 0
  %439 = vmatpush1.bf16.msra.mxu0 0
  %440 = vmatprep.subr.bf16.mxu0 0
  %441 = vmatpush1.bf16.msra.mxu0 0
  %442 = vmatprep.subr.bf16.mxu0 0
  %443 = vmatpush1.bf16.msra.mxu0 0
  %444 = vmatprep.subr.bf16.mxu0 0
  %445 = vmatpush1.bf16.msra.mxu0 0
  %446 = vmatprep.subr.bf16.mxu0 0
  %447 = vmatpush1.bf16.msra.mxu0 0
  %448 = vmatprep.subr.bf16.mxu0 0
  %449 = vmatpush1.bf16.msra.mxu0 0
  %450 = vmatprep.subr.bf16.mxu0 0
  %451 = vmatpush1.bf16.msra.mxu0 0
  %452 = vmatprep.subr.bf16.mxu0 0
  %453 = vmatpush1.bf16.msra.mxu0 0
  %454 = vmatprep.subr.bf16.mxu0 0
  %455 = vmatpush1.bf16.msra.mxu0 0
  %456 = vmatprep.subr.bf16.mxu0 0
  %457 = vmatpush1.bf16.msra.mxu0 0
  %458 = vmatprep.subr.bf16.mxu0 0
  %459 = vmatpush1.bf16.msra.mxu0 0
  %460 = vmatprep.subr.bf16.mxu0 0
  %461 = vmatpush1.bf16.msra.mxu0 0
  %462 = vmatprep.subr.bf16.mxu0 0
  %463 = vmatpush1.bf16.msra.mxu0 0
  %464 = vmatprep.mubr.bf16.mxu0 0
  %465 = vmatmul.mubr.bf16.gmra.mrb[0].mxu0 %v426
  %v466 = vpop.f32.mrb[0].mxu0
  %v467 = vadd.f32 0.0, %v466
  %v468 = vpop.f32.mrb[0].mxu0
  %v469 = vpop.f32.mrb[0].mxu0
  %v470 = vadd.f32 0.0, %v469
  %v471 = vpop.f32.mrb[0].mxu0
  %472 = vdwg.mxu0
  %v473 = vld [vmem:[%s11] sm:$0xf]
  %v474 = vld [vmem:[%s11 + $0x4] sm:$0xf]
  %v475 = vpack.c.bf16 %v470, %v467
  %s476 = scalar_lea.vmem %s5, 16
  %v477 = vld [vmem:[%s476] sm:$0xf]
  %v478 = vld [vmem:[%s476 + $0x4] sm:$0xf]
  %v479 = vld [vmem:[%s476 + $0x8] sm:$0xf]
  %v480 = vld [vmem:[%s476 + $0xc] sm:$0xf]
  %s481 = scalar_lea.vmem %s6, 1
  %v482 = vld [vmem:[%s481] sm:$0x1]
  %v484 = vlaneseq
  %v485 = vshrl.u32 %v484, 7
  %v486 = vsub.s32 0, %v485
  %v487 = vrot.slane %v482, %v486
  %v493 = vunpack.c.l.b16 %v477
  %v494 = vunpack.c.l.b16 %v478
  %v495 = vunpack.c.l.b16 %v479
  %v496 = vunpack.c.l.b16 %v480
  %v497 = vpack.c.b16 %v494, %v493
  %v498 = vpack.c.b16 %v496, %v495
  %501 = vmatprep.subr.bf16.mxu0 0
  %502 = vmatpush1.bf16.msra.mxu0 %v497
  %503 = vmatprep.subr.bf16.mxu0 0
  %504 = vmatpush1.bf16.msra.mxu0 %v498
  %505 = vmatprep.subr.bf16.mxu0 0
  %506 = vmatpush1.bf16.msra.mxu0 0
  %507 = vmatprep.subr.bf16.mxu0 0
  %508 = vmatpush1.bf16.msra.mxu0 0
  %509 = vmatprep.subr.bf16.mxu0 0
  %510 = vmatpush1.bf16.msra.mxu0 0
  %511 = vmatprep.subr.bf16.mxu0 0
  %512 = vmatpush1.bf16.msra.mxu0 0
  %513 = vmatprep.subr.bf16.mxu0 0
  %514 = vmatpush1.bf16.msra.mxu0 0
  %515 = vmatprep.subr.bf16.mxu0 0
  %516 = vmatpush1.bf16.msra.mxu0 0
  %517 = vmatprep.subr.bf16.mxu0 0
  %518 = vmatpush1.bf16.msra.mxu0 0
  %519 = vmatprep.subr.bf16.mxu0 0
  %520 = vmatpush1.bf16.msra.mxu0 0
  %521 = vmatprep.subr.bf16.mxu0 0
  %522 = vmatpush1.bf16.msra.mxu0 0
  %523 = vmatprep.subr.bf16.mxu0 0
  %524 = vmatpush1.bf16.msra.mxu0 0
  %525 = vmatprep.subr.bf16.mxu0 0
  %526 = vmatpush1.bf16.msra.mxu0 0
  %527 = vmatprep.subr.bf16.mxu0 0
  %528 = vmatpush1.bf16.msra.mxu0 0
  %529 = vmatprep.subr.bf16.mxu0 0
  %530 = vmatpush1.bf16.msra.mxu0 0
  %531 = vmatprep.subr.bf16.mxu0 0
  %532 = vmatpush1.bf16.msra.mxu0 0
  %533 = vmatprep.mubr.bf16.mxu0 0
  %534 = vmatmul.mubr.bf16.gmra.mrb[0].mxu0 %v168
  %v535 = vpop.f32.mrb[0].mxu0
  %v536 = vadd.f32 %v487, %v535
  %v537 = vpop.f32.mrb[0].mxu0
  %v538 = vpop.f32.mrb[0].mxu0
  %v539 = vadd.f32 %v487, %v538
  %v540 = vpop.f32.mrb[0].mxu0
  %541 = vdwg.mxu0
  %s542 = scalar_lea.vmem %s7, 16
  %v543 = vld [vmem:[%s542] sm:$0xf]
  %v544 = vld [vmem:[%s542 + $0x4] sm:$0xf]
  %v545 = vld [vmem:[%s542 + $0x8] sm:$0xf]
  %v546 = vld [vmem:[%s542 + $0xc] sm:$0xf]
  %s547 = scalar_lea.vmem %s8, 1
  %v548 = vld [vmem:[%s547] sm:$0x1]
  %v550 = vlaneseq
  %v551 = vshrl.u32 %v550, 7
  %v552 = vsub.s32 0, %v551
  %v553 = vrot.slane %v548, %v552
  %v559 = vunpack.c.l.b16 %v543
  %v560 = vunpack.c.l.b16 %v544
  %v561 = vunpack.c.l.b16 %v545
  %v562 = vunpack.c.l.b16 %v546
  %v563 = vpack.c.b16 %v560, %v559
  %v564 = vpack.c.b16 %v562, %v561
  %567 = vmatprep.subr.bf16.mxu0 0
  %568 = vmatpush1.bf16.msra.mxu0 %v563
  %569 = vmatprep.subr.bf16.mxu0 0
  %570 = vmatpush1.bf16.msra.mxu0 %v564
  %571 = vmatprep.subr.bf16.mxu0 0
  %572 = vmatpush1.bf16.msra.mxu0 0
  %573 = vmatprep.subr.bf16.mxu0 0
  %574 = vmatpush1.bf16.msra.mxu0 0
  %575 = vmatprep.subr.bf16.mxu0 0
  %576 = vmatpush1.bf16.msra.mxu0 0
  %577 = vmatprep.subr.bf16.mxu0 0
  %578 = vmatpush1.bf16.msra.mxu0 0
  %579 = vmatprep.subr.bf16.mxu0 0
  %580 = vmatpush1.bf16.msra.mxu0 0
  %581 = vmatprep.subr.bf16.mxu0 0
  %582 = vmatpush1.bf16.msra.mxu0 0
  %583 = vmatprep.subr.bf16.mxu0 0
  %584 = vmatpush1.bf16.msra.mxu0 0
  %585 = vmatprep.subr.bf16.mxu0 0
  %586 = vmatpush1.bf16.msra.mxu0 0
  %587 = vmatprep.subr.bf16.mxu0 0
  %588 = vmatpush1.bf16.msra.mxu0 0
  %589 = vmatprep.subr.bf16.mxu0 0
  %590 = vmatpush1.bf16.msra.mxu0 0
  %591 = vmatprep.subr.bf16.mxu0 0
  %592 = vmatpush1.bf16.msra.mxu0 0
  %593 = vmatprep.subr.bf16.mxu0 0
  %594 = vmatpush1.bf16.msra.mxu0 0
  %595 = vmatprep.subr.bf16.mxu0 0
  %596 = vmatpush1.bf16.msra.mxu0 0
  %597 = vmatprep.subr.bf16.mxu0 0
  %598 = vmatpush1.bf16.msra.mxu0 0
  %599 = vmatprep.mubr.bf16.mxu0 0
  %600 = vmatmul.mubr.bf16.gmra.mrb[0].mxu0 %v168
  %v601 = vpop.f32.mrb[0].mxu0
  %v602 = vadd.f32 %v553, %v601
  %v603 = vpop.f32.mrb[0].mxu0
  %v604 = vpop.f32.mrb[0].mxu0
  %v605 = vadd.f32 %v553, %v604
  %v606 = vpop.f32.mrb[0].mxu0
  %607 = vdwg.mxu0
  %s608 = scalar_lea.vmem %s9, 16
  %v609 = vld [vmem:[%s608] sm:$0xf]
  %v610 = vld [vmem:[%s608 + $0x4] sm:$0xf]
  %v611 = vld [vmem:[%s608 + $0x8] sm:$0xf]
  %v612 = vld [vmem:[%s608 + $0xc] sm:$0xf]
  %s613 = scalar_lea.vmem %s10, 1
  %v614 = vld [vmem:[%s613] sm:$0x1]
  %v616 = vlaneseq
  %v617 = vshrl.u32 %v616, 7
  %v618 = vsub.s32 0, %v617
  %v619 = vrot.slane %v614, %v618
  %v625 = vunpack.c.l.b16 %v609
  %v626 = vunpack.c.l.b16 %v610
  %v627 = vunpack.c.l.b16 %v611
  %v628 = vunpack.c.l.b16 %v612
  %v629 = vpack.c.b16 %v626, %v625
  %v630 = vpack.c.b16 %v628, %v627
  %633 = vmatprep.subr.bf16.mxu0 0
  %634 = vmatpush1.bf16.msra.mxu0 %v629
  %635 = vmatprep.subr.bf16.mxu0 0
  %636 = vmatpush1.bf16.msra.mxu0 %v630
  %637 = vmatprep.subr.bf16.mxu0 0
  %638 = vmatpush1.bf16.msra.mxu0 0
  %639 = vmatprep.subr.bf16.mxu0 0
  %640 = vmatpush1.bf16.msra.mxu0 0
  %641 = vmatprep.subr.bf16.mxu0 0
  %642 = vmatpush1.bf16.msra.mxu0 0
  %643 = vmatprep.subr.bf16.mxu0 0
  %644 = vmatpush1.bf16.msra.mxu0 0
  %645 = vmatprep.subr.bf16.mxu0 0
  %646 = vmatpush1.bf16.msra.mxu0 0
  %647 = vmatprep.subr.bf16.mxu0 0
  %648 = vmatpush1.bf16.msra.mxu0 0
  %649 = vmatprep.subr.bf16.mxu0 0
  %650 = vmatpush1.bf16.msra.mxu0 0
  %651 = vmatprep.subr.bf16.mxu0 0
  %652 = vmatpush1.bf16.msra.mxu0 0
  %653 = vmatprep.subr.bf16.mxu0 0
  %654 = vmatpush1.bf16.msra.mxu0 0
  %655 = vmatprep.subr.bf16.mxu0 0
  %656 = vmatpush1.bf16.msra.mxu0 0
  %657 = vmatprep.subr.bf16.mxu0 0
  %658 = vmatpush1.bf16.msra.mxu0 0
  %659 = vmatprep.subr.bf16.mxu0 0
  %660 = vmatpush1.bf16.msra.mxu0 0
  %661 = vmatprep.subr.bf16.mxu0 0
  %662 = vmatpush1.bf16.msra.mxu0 0
  %663 = vmatprep.subr.bf16.mxu0 0
  %664 = vmatpush1.bf16.msra.mxu0 0
  %665 = vmatprep.mubr.bf16.mxu0 0
  %666 = vmatmul.mubr.bf16.gmra.mrb[0].mxu0 %v168
  %v667 = vpop.f32.mrb[0].mxu0
  %v668 = vadd.f32 %v619, %v667
  %v669 = vpop.f32.mrb[0].mxu0
  %v670 = vpop.f32.mrb[0].mxu0
  %v671 = vadd.f32 %v619, %v670
  %v672 = vpop.f32.mrb[0].mxu0
  %673 = vdwg.mxu0
  %v674 = vpack.c.bf16 %v539, %v536
  %v675 = vpack.c.bf16 %v605, %v602
  %v677 = vsel %vm341, %v674, 0
  %v680 = vsel %vm341, %v675, 0
  %682 = vmatprep.subr.bf16.mxu0 0
  %683 = vmatpush1.bf16.xpose.msra.mxu0 %v680
  %684 = vmatprep.subr.bf16.mxu0 0
  %685 = vmatpush1.bf16.xpose.msra.mxu0 0
  %686 = vmatprep.subr.bf16.mxu0 0
  %687 = vmatpush1.bf16.xpose.msra.mxu0 0
  %688 = vmatprep.subr.bf16.mxu0 0
  %689 = vmatpush1.bf16.xpose.msra.mxu0 0
  %690 = vmatprep.subr.bf16.mxu0 0
  %691 = vmatpush1.bf16.xpose.msra.mxu0 0
  %692 = vmatprep.subr.bf16.mxu0 0
  %693 = vmatpush1.bf16.xpose.msra.mxu0 0
  %694 = vmatprep.subr.bf16.mxu0 0
  %695 = vmatpush1.bf16.xpose.msra.mxu0 0
  %696 = vmatprep.subr.bf16.mxu0 0
  %697 = vmatpush1.bf16.xpose.msra.mxu0 0
  %698 = vmatprep.subr.bf16.mxu0 0
  %699 = vmatpush1.bf16.xpose.msra.mxu0 0
  %700 = vmatprep.subr.bf16.mxu0 0
  %701 = vmatpush1.bf16.xpose.msra.mxu0 0
  %702 = vmatprep.subr.bf16.mxu0 0
  %703 = vmatpush1.bf16.xpose.msra.mxu0 0
  %704 = vmatprep.subr.bf16.mxu0 0
  %705 = vmatpush1.bf16.xpose.msra.mxu0 0
  %706 = vmatprep.subr.bf16.mxu0 0
  %707 = vmatpush1.bf16.xpose.msra.mxu0 0
  %708 = vmatprep.subr.bf16.mxu0 0
  %709 = vmatpush1.bf16.xpose.msra.mxu0 0
  %710 = vmatprep.subr.bf16.mxu0 0
  %711 = vmatpush1.bf16.xpose.msra.mxu0 0
  %712 = vmatprep.subr.bf16.mxu0 0
  %713 = vmatpush1.bf16.xpose.msra.mxu0 0
  %714 = vmatprep.mubr.bf16.mxu0 0
  %715 = vmatmul.mubr.bf16.gmra.mrb[0].mxu0 %v677
  %v716 = vpop.f32.mrb[0].mxu0
  %v717 = vadd.f32 0.0, %v716
  %v718 = vpop.f32.mrb[0].mxu0
  %v719 = vpop.f32.mrb[0].mxu0
  %v720 = vadd.f32 0.0, %v719
  %v721 = vpop.f32.mrb[0].mxu0
  %722 = vdwg.mxu0
  %v723 = vmul.f32 %v717, 0.25
  %v724 = vmul.f32 %v720, 0.25
  %v725 = vadd.f32 %v723, %v395
  %v726 = vadd.f32 %v724, %v395
  %v727 = vsel %vm399, %v725, -inf
  %728 = vmax.xlane.f32.xlu0 %v727
  %v729 = vpop.xlane.xlu0 %728
  %v730 = vsel %vm403, %v726, -inf
  %731 = vmax.xlane.f32.xlu0 %v730
  %v732 = vpop.xlane.xlu0 %731
  %v733 = vsub.f32 %v725, %v729
  %v734 = vsub.f32 %v726, %v732
  %v735 = vmul.f32 %v733, 1.442695
  %v736 = vpow.pop %v735
  %v737 = vmul.f32 %v734, 1.442695
  %v738 = vpow.pop %v737
  %v739 = vsel %vm399, %v736, 0.0
  %740 = vadd.xlane.f32.xlu0 %v739
  %v741 = vpop.xlane.xlu0 %740
  %v742 = vsel %vm403, %v738, 0.0
  %743 = vadd.xlane.f32.xlu0 %v742
  %v744 = vpop.xlane.xlu0 %743
  %v745 = vrcp.pop %v741
  %v746 = vmul.f32 %v736, %v745
  %v747 = vrcp.pop %v744
  %v748 = vmul.f32 %v738, %v747
  %v749 = vpack.c.bf16 %v748, %v746
  %v750 = vpack.c.bf16 %v671, %v668
  %v752 = vsel %vm399, %v749, 0
  %v755 = vsel %vm428, %v750, 0
  %757 = vmatprep.subr.bf16.mxu0 0
  %758 = vmatpush1.bf16.msra.mxu0 %v755
  %759 = vmatprep.subr.bf16.mxu0 0
  %760 = vmatpush1.bf16.msra.mxu0 0
  %761 = vmatprep.subr.bf16.mxu0 0
  %762 = vmatpush1.bf16.msra.mxu0 0
  %763 = vmatprep.subr.bf16.mxu0 0
  %764 = vmatpush1.bf16.msra.mxu0 0
  %765 = vmatprep.subr.bf16.mxu0 0
  %766 = vmatpush1.bf16.msra.mxu0 0
  %767 = vmatprep.subr.bf16.mxu0 0
  %768 = vmatpush1.bf16.msra.mxu0 0
  %769 = vmatprep.subr.bf16.mxu0 0
  %770 = vmatpush1.bf16.msra.mxu0 0
  %771 = vmatprep.subr.bf16.mxu0 0
  %772 = vmatpush1.bf16.msra.mxu0 0
  %773 = vmatprep.subr.bf16.mxu0 0
  %774 = vmatpush1.bf16.msra.mxu0 0
  %775 = vmatprep.subr.bf16.mxu0 0
  %776 = vmatpush1.bf16.msra.mxu0 0
  %777 = vmatprep.subr.bf16.mxu0 0
  %778 = vmatpush1.bf16.msra.mxu0 0
  %779 = vmatprep.subr.bf16.mxu0 0
  %780 = vmatpush1.bf16.msra.mxu0 0
  %781 = vmatprep.subr.bf16.mxu0 0
  %782 = vmatpush1.bf16.msra.mxu0 0
  %783 = vmatprep.subr.bf16.mxu0 0
  %784 = vmatpush1.bf16.msra.mxu0 0
  %785 = vmatprep.subr.bf16.mxu0 0
  %786 = vmatpush1.bf16.msra.mxu0 0
  %787 = vmatprep.subr.bf16.mxu0 0
  %788 = vmatpush1.bf16.msra.mxu0 0
  %789 = vmatprep.mubr.bf16.mxu0 0
  %790 = vmatmul.mubr.bf16.gmra.mrb[0].mxu0 %v752
  %v791 = vpop.f32.mrb[0].mxu0
  %v792 = vadd.f32 0.0, %v791
  %v793 = vpop.f32.mrb[0].mxu0
  %v794 = vpop.f32.mrb[0].mxu0
  %v795 = vadd.f32 0.0, %v794
  %v796 = vpop.f32.mrb[0].mxu0
  %797 = vdwg.mxu0
  %s798 = scalar_lea.vmem %s11, 8
  %v799 = vld [vmem:[%s798] sm:$0xf]
  %v800 = vld [vmem:[%s798 + $0x4] sm:$0xf]
  %v801 = vpack.c.bf16 %v795, %v792
  %v804 = vunpack.c.l.b16 %v799
  %v805 = vunpack.c.l.b16 %v800
  %v806 = vpack.c.b16 %v805, %v804
  %v809 = vsel %vm341, %v801, 0
  %811 = vmatprep.subr.bf16.mxu0 0
  %812 = vmatpush1.bf16.msra.mxu0 %v806
  %813 = vmatprep.subr.bf16.mxu0 0
  %814 = vmatpush1.bf16.msra.mxu0 0
  %815 = vmatprep.subr.bf16.mxu0 0
  %816 = vmatpush1.bf16.msra.mxu0 0
  %817 = vmatprep.subr.bf16.mxu0 0
  %818 = vmatpush1.bf16.msra.mxu0 0
  %819 = vmatprep.subr.bf16.mxu0 0
  %820 = vmatpush1.bf16.msra.mxu0 0
  %821 = vmatprep.subr.bf16.mxu0 0
  %822 = vmatpush1.bf16.msra.mxu0 0
  %823 = vmatprep.subr.bf16.mxu0 0
  %824 = vmatpush1.bf16.msra.mxu0 0
  %825 = vmatprep.subr.bf16.mxu0 0
  %826 = vmatpush1.bf16.msra.mxu0 0
  %827 = vmatprep.subr.bf16.mxu0 0
  %828 = vmatpush1.bf16.msra.mxu0 0
  %829 = vmatprep.subr.bf16.mxu0 0
  %830 = vmatpush1.bf16.msra.mxu0 0
  %831 = vmatprep.subr.bf16.mxu0 0
  %832 = vmatpush1.bf16.msra.mxu0 0
  %833 = vmatprep.subr.bf16.mxu0 0
  %834 = vmatpush1.bf16.msra.mxu0 0
  %835 = vmatprep.subr.bf16.mxu0 0
  %836 = vmatpush1.bf16.msra.mxu0 0
  %837 = vmatprep.subr.bf16.mxu0 0
  %838 = vmatpush1.bf16.msra.mxu0 0
  %839 = vmatprep.subr.bf16.mxu0 0
  %840 = vmatpush1.bf16.msra.mxu0 0
  %841 = vmatprep.subr.bf16.mxu0 0
  %842 = vmatpush1.bf16.msra.mxu0 0
  %843 = vmatprep.mubr.bf16.mxu0 0
  %844 = vmatmul.mubr.bf16.gmra.mrb[0].mxu0 %v809
  %v845 = vpop.f32.mrb[0].mxu0
  %v846 = vadd.f32 0.0, %v845
  %v847 = vpop.f32.mrb[0].mxu0
  %v848 = vpop.f32.mrb[0].mxu0
  %v849 = vadd.f32 0.0, %v848
  %v850 = vpop.f32.mrb[0].mxu0
  %851 = vdwg.mxu0
  %v854 = vunpack.c.l.b16 %v473
  %v855 = vunpack.c.l.b16 %v474
  %v856 = vpack.c.b16 %v855, %v854
  %v859 = vsel %vm341, %v475, 0
  %861 = vmatprep.subr.bf16.mxu0 0
  %862 = vmatpush1.bf16.msra.mxu0 %v856
  %863 = vmatprep.subr.bf16.mxu0 0
  %864 = vmatpush1.bf16.msra.mxu0 0
  %865 = vmatprep.subr.bf16.mxu0 0
  %866 = vmatpush1.bf16.msra.mxu0 0
  %867 = vmatprep.subr.bf16.mxu0 0
  %868 = vmatpush1.bf16.msra.mxu0 0
  %869 = vmatprep.subr.bf16.mxu0 0
  %870 = vmatpush1.bf16.msra.mxu0 0
  %871 = vmatprep.subr.bf16.mxu0 0
  %872 = vmatpush1.bf16.msra.mxu0 0
  %873 = vmatprep.subr.bf16.mxu0 0
  %874 = vmatpush1.bf16.msra.mxu0 0
  %875 = vmatprep.subr.bf16.mxu0 0
  %876 = vmatpush1.bf16.msra.mxu0 0
  %877 = vmatprep.subr.bf16.mxu0 0
  %878 = vmatpush1.bf16.msra.mxu0 0
  %879 = vmatprep.subr.bf16.mxu0 0
  %880 = vmatpush1.bf16.msra.mxu0 0
  %881 = vmatprep.subr.bf16.mxu0 0
  %882 = vmatpush1.bf16.msra.mxu0 0
  %883 = vmatprep.subr.bf16.mxu0 0
  %884 = vmatpush1.bf16.msra.mxu0 0
  %885 = vmatprep.subr.bf16.mxu0 0
  %886 = vmatpush1.bf16.msra.mxu0 0
  %887 = vmatprep.subr.bf16.mxu0 0
  %888 = vmatpush1.bf16.msra.mxu0 0
  %889 = vmatprep.subr.bf16.mxu0 0
  %890 = vmatpush1.bf16.msra.mxu0 0
  %891 = vmatprep.subr.bf16.mxu0 0
  %892 = vmatpush1.bf16.msra.mxu0 0
  %893 = vmatprep.mubr.bf16.mxu0 0
  %894 = vmatmul.mubr.bf16.gmra.mrb[0].mxu0 %v859
  %v895 = vpop.f32.mrb[0].mxu0
  %v896 = vadd.f32 %v846, %v895
  %v897 = vpop.f32.mrb[0].mxu0
  %v898 = vpop.f32.mrb[0].mxu0
  %v899 = vadd.f32 %v849, %v898
  %v900 = vpop.f32.mrb[0].mxu0
  %901 = vdwg.mxu0
  %v902 = vadd.f32 %v138, %v896
  %v903 = vadd.f32 %v139, %v899
  %v904 = vld [vmem:[%s12] sm:$0x1]
  %v906 = vlaneseq
  %v907 = vshrl.u32 %v906, 7
  %v908 = vsub.s32 0, %v907
  %v909 = vrot.slane %v904, %v908
  %v911 = vadd.f32 %v902, %v909
  %v912 = vadd.f32 %v903, %v909
  %v913 = vld [vmem:[%s13] sm:$0x1]
  %v914 = vld [vmem:[%s14] sm:$0x1]
  %v915 = vsel %vm95, %v911, 0.0
  %916 = vadd.xlane.f32.xlu0 %v915
  %v917 = vpop.xlane.xlu0 %916
  %v918 = vsel %vm99, %v912, 0.0
  %919 = vadd.xlane.f32.xlu0 %v918
  %v920 = vpop.xlane.xlu0 %919
  %v921 = vmul.f32 %v917, %v103
  %v922 = vmul.f32 %v920, %v103
  %v923 = vsub.f32 %v911, %v921
  %v924 = vsub.f32 %v912, %v922
  %v925 = vmul.f32 %v923, %v923
  %v926 = vmul.f32 %v924, %v924
  %v927 = vsel %vm95, %v925, 0.0
  %928 = vadd.xlane.f32.xlu0 %v927
  %v929 = vpop.xlane.xlu0 %928
  %v930 = vsel %vm99, %v926, 0.0
  %931 = vadd.xlane.f32.xlu0 %v930
  %v932 = vpop.xlane.xlu0 %931
  %v933 = vmul.f32 %v929, %v103
  %v934 = vmul.f32 %v932, %v103
  %v935 = vadd.f32 %v933, 1e-05
  %v936 = vadd.f32 %v934, 1e-05
  %v937 = vrsqrt.pop %v935
  %v938 = vrsqrt.pop %v936
  %v939 = vmul.f32 %v923, %v937
  %v940 = vmul.f32 %v924, %v938
  %v942 = vlaneseq
  %v943 = vshrl.u32 %v942, 7
  %v944 = vsub.s32 0, %v943
  %v945 = vrot.slane %v913, %v944
  %v947 = vmul.f32 %v939, %v945
  %v948 = vmul.f32 %v940, %v945
  %v950 = vlaneseq
  %v951 = vshrl.u32 %v950, 7
  %v952 = vsub.s32 0, %v951
  %v953 = vrot.slane %v914, %v952
  %v955 = vadd.f32 %v947, %v953
  %v956 = vadd.f32 %v948, %v953
  %v957 = vld [vmem:[%s15] sm:$0xf]
  %v958 = vld [vmem:[%s15 + $0x4] sm:$0xf]
  %v959 = vld [vmem:[%s15 + $0x8] sm:$0xf]
  %v960 = vld [vmem:[%s15 + $0xc] sm:$0xf]
  %v961 = vpack.c.bf16 %v956, %v955
  %v962 = vld [vmem:[%s16] sm:$0x1]
  %v964 = vlaneseq
  %v965 = vshrl.u32 %v964, 7
  %v966 = vsub.s32 0, %v965
  %v967 = vrot.slane %v962, %v966
  %v973 = vunpack.c.l.b16 %v957
  %v974 = vunpack.c.l.b16 %v958
  %v975 = vunpack.c.l.b16 %v959
  %v976 = vunpack.c.l.b16 %v960
  %v977 = vpack.c.b16 %v974, %v973
  %v978 = vpack.c.b16 %v976, %v975
  %v982 = vsel %vm95, %v961, 0
  %984 = vmatprep.subr.bf16.mxu0 0
  %985 = vmatpush1.bf16.msra.mxu0 %v977
  %986 = vmatprep.subr.bf16.mxu0 0
  %987 = vmatpush1.bf16.msra.mxu0 %v978
  %988 = vmatprep.subr.bf16.mxu0 0
  %989 = vmatpush1.bf16.msra.mxu0 0
  %990 = vmatprep.subr.bf16.mxu0 0
  %991 = vmatpush1.bf16.msra.mxu0 0
  %992 = vmatprep.subr.bf16.mxu0 0
  %993 = vmatpush1.bf16.msra.mxu0 0
  %994 = vmatprep.subr.bf16.mxu0 0
  %995 = vmatpush1.bf16.msra.mxu0 0
  %996 = vmatprep.subr.bf16.mxu0 0
  %997 = vmatpush1.bf16.msra.mxu0 0
  %998 = vmatprep.subr.bf16.mxu0 0
  %999 = vmatpush1.bf16.msra.mxu0 0
  %1000 = vmatprep.subr.bf16.mxu0 0
  %1001 = vmatpush1.bf16.msra.mxu0 0
  %1002 = vmatprep.subr.bf16.mxu0 0
  %1003 = vmatpush1.bf16.msra.mxu0 0
  %1004 = vmatprep.subr.bf16.mxu0 0
  %1005 = vmatpush1.bf16.msra.mxu0 0
  %1006 = vmatprep.subr.bf16.mxu0 0
  %1007 = vmatpush1.bf16.msra.mxu0 0
  %1008 = vmatprep.subr.bf16.mxu0 0
  %1009 = vmatpush1.bf16.msra.mxu0 0
  %1010 = vmatprep.subr.bf16.mxu0 0
  %1011 = vmatpush1.bf16.msra.mxu0 0
  %1012 = vmatprep.subr.bf16.mxu0 0
  %1013 = vmatpush1.bf16.msra.mxu0 0
  %1014 = vmatprep.subr.bf16.mxu0 0
  %1015 = vmatpush1.bf16.msra.mxu0 0
  %1016 = vmatprep.mubr.bf16.mxu0 0
  %1017 = vmatmul.mubr.bf16.gmra.mrb[0].mxu0 %v982
  %v1018 = vpop.f32.mrb[0].mxu0
  %v1019 = vadd.f32 %v967, %v1018
  %v1020 = vpop.f32.mrb[0].mxu0
  %v1021 = vpop.f32.mrb[0].mxu0
  %v1022 = vadd.f32 %v967, %v1021
  %v1023 = vpop.f32.mrb[0].mxu0
  %1024 = vdwg.mxu0
  %v1025 = vmul.f32 %v1019, %v1019
  %v1026 = vmul.f32 %v1022, %v1022
  %v1027 = vmul.f32 %v1019, %v1025
  %v1028 = vmul.f32 %v1022, %v1026
  %v1029 = vmul.f32 %v1027, 0.044715
  %v1030 = vmul.f32 %v1028, 0.044715
  %v1031 = vadd.f32 %v1019, %v1029
  %v1032 = vadd.f32 %v1022, %v1030
  %v1033 = vmul.f32 %v1031, 0.7978846
  %v1034 = vmul.f32 %v1032, 0.7978846
  %v1035 = vtanh.pop %v1033
  %v1036 = vtanh.pop %v1034
  %v1037 = vadd.f32 %v1035, 1.0
  %v1038 = vadd.f32 %v1036, 1.0
  %v1039 = vmul.f32 %v1037, 0.5
  %v1040 = vmul.f32 %v1038, 0.5
  %v1041 = vmul.f32 %v1019, %v1039
  %v1042 = vmul.f32 %v1022, %v1040
  %v1043 = vld [vmem:[%s17] sm:$0xf]
  %v1044 = vld [vmem:[%s17 + $0x4] sm:$0xf]
  %v1045 = vld [vmem:[%s17 + $0x8] sm:$0xf]
  %v1046 = vld [vmem:[%s17 + $0xc] sm:$0xf]
  %v1047 = vld [vmem:[%s17 + $0x10] sm:$0xf]
  %v1048 = vld [vmem:[%s17 + $0x14] sm:$0xf]
  %v1049 = vld [vmem:[%s17 + $0x18] sm:$0xf]
  %v1050 = vld [vmem:[%s17 + $0x1c] sm:$0xf]
  %v1051 = vpack.c.bf16 %v1042, %v1041
  %v1052 = vld [vmem:[%s18] sm:$0x1]
  %v1054 = vlaneseq
  %v1055 = vshrl.u32 %v1054, 7
  %v1056 = vsub.s32 0, %v1055
  %v1057 = vrot.slane %v1052, %v1056
  %v1067 = vunpack.c.l.b16 %v1043
  %v1068 = vunpack.c.l.b16 %v1044
  %v1069 = vunpack.c.l.b16 %v1045
  %v1070 = vunpack.c.l.b16 %v1046
  %v1071 = vunpack.c.l.b16 %v1047
  %v1072 = vunpack.c.l.b16 %v1048
  %v1073 = vunpack.c.l.b16 %v1049
  %v1074 = vunpack.c.l.b16 %v1050
  %v1075 = vpack.c.b16 %v1068, %v1067
  %v1076 = vpack.c.b16 %v1070, %v1069
  %v1077 = vpack.c.b16 %v1072, %v1071
  %v1078 = vpack.c.b16 %v1074, %v1073
  %vm1083 = vcmask 523264
  %v1085 = vsel %vm1083, %v1051, 0
  %1087 = vmatprep.subr.bf16.mxu0 0
  %1088 = vmatpush1.bf16.msra.mxu0 %v1075
  %1089 = vmatprep.subr.bf16.mxu0 0
  %1090 = vmatpush1.bf16.msra.mxu0 %v1076
  %1091 = vmatprep.subr.bf16.mxu0 0
  %1092 = vmatpush1.bf16.msra.mxu0 %v1077
  %1093 = vmatprep.subr.bf16.mxu0 0
  %1094 = vmatpush1.bf16.msra.mxu0 %v1078
  %1095 = vmatprep.subr.bf16.mxu0 0
  %1096 = vmatpush1.bf16.msra.mxu0 0
  %1097 = vmatprep.subr.bf16.mxu0 0
  %1098 = vmatpush1.bf16.msra.mxu0 0
  %1099 = vmatprep.subr.bf16.mxu0 0
  %1100 = vmatpush1.bf16.msra.mxu0 0
  %1101 = vmatprep.subr.bf16.mxu0 0
  %1102 = vmatpush1.bf16.msra.mxu0 0
  %1103 = vmatprep.subr.bf16.mxu0 0
  %1104 = vmatpush1.bf16.msra.mxu0 0
  %1105 = vmatprep.subr.bf16.mxu0 0
  %1106 = vmatpush1.bf16.msra.mxu0 0
  %1107 = vmatprep.subr.bf16.mxu0 0
  %1108 = vmatpush1.bf16.msra.mxu0 0
  %1109 = vmatprep.subr.bf16.mxu0 0
  %1110 = vmatpush1.bf16.msra.mxu0 0
  %1111 = vmatprep.subr.bf16.mxu0 0
  %1112 = vmatpush1.bf16.msra.mxu0 0
  %1113 = vmatprep.subr.bf16.mxu0 0
  %1114 = vmatpush1.bf16.msra.mxu0 0
  %1115 = vmatprep.subr.bf16.mxu0 0
  %1116 = vmatpush1.bf16.msra.mxu0 0
  %1117 = vmatprep.subr.bf16.mxu0 0
  %1118 = vmatpush1.bf16.msra.mxu0 0
  %1119 = vmatprep.mubr.bf16.mxu0 0
  %1120 = vmatmul.mubr.bf16.gmra.mrb[0].mxu0 %v1085
  %v1121 = vpop.f32.mrb[0].mxu0
  %v1122 = vadd.f32 %v1057, %v1121
  %v1123 = vpop.f32.mrb[0].mxu0
  %v1124 = vpop.f32.mrb[0].mxu0
  %v1125 = vadd.f32 %v1057, %v1124
  %v1126 = vpop.f32.mrb[0].mxu0
  %1127 = vdwg.mxu0
  %v1128 = vadd.f32 %v955, %v1122
  %v1129 = vadd.f32 %v956, %v1125
  %v1130 = vld [vmem:[%s19] sm:$0x1]
  %v1131 = vld [vmem:[%s20] sm:$0x1]
  %v1132 = vsel %vm95, %v1128, 0.0
  %1133 = vadd.xlane.f32.xlu0 %v1132
  %v1134 = vpop.xlane.xlu0 %1133
  %v1135 = vsel %vm99, %v1129, 0.0
  %1136 = vadd.xlane.f32.xlu0 %v1135
  %v1137 = vpop.xlane.xlu0 %1136
  %v1138 = vmul.f32 %v1134, %v103
  %v1139 = vmul.f32 %v1137, %v103
  %v1140 = vsub.f32 %v1128, %v1138
  %v1141 = vsub.f32 %v1129, %v1139
  %v1142 = vmul.f32 %v1140, %v1140
  %v1143 = vmul.f32 %v1141, %v1141
  %v1144 = vsel %vm95, %v1142, 0.0
  %1145 = vadd.xlane.f32.xlu0 %v1144
  %v1146 = vpop.xlane.xlu0 %1145
  %v1147 = vsel %vm99, %v1143, 0.0
  %1148 = vadd.xlane.f32.xlu0 %v1147
  %v1149 = vpop.xlane.xlu0 %1148
  %v1150 = vmul.f32 %v1146, %v103
  %v1151 = vmul.f32 %v1149, %v103
  %v1152 = vadd.f32 %v1150, 1e-05
  %v1153 = vadd.f32 %v1151, 1e-05
  %v1154 = vrsqrt.pop %v1152
  %v1155 = vrsqrt.pop %v1153
  %v1156 = vmul.f32 %v1140, %v1154
  %v1157 = vmul.f32 %v1141, %v1155
  %v1159 = vlaneseq
  %v1160 = vshrl.u32 %v1159, 7
  %v1161 = vsub.s32 0, %v1160
  %v1162 = vrot.slane %v1130, %v1161
  %v1164 = vmul.f32 %v1156, %v1162
  %v1165 = vmul.f32 %v1157, %v1162
  %v1167 = vlaneseq
  %v1168 = vshrl.u32 %v1167, 7
  %v1169 = vsub.s32 0, %v1168
  %v1170 = vrot.slane %v1131, %v1169
  %v1172 = vadd.f32 %v1164, %v1170
  %v1173 = vadd.f32 %v1165, %v1170
  %s1174 = scalar_lea.vmem %s5, 32
  %v1175 = vld [vmem:[%s1174] sm:$0xf]
  %v1176 = vld [vmem:[%s1174 + $0x4] sm:$0xf]
  %v1177 = vld [vmem:[%s1174 + $0x8] sm:$0xf]
  %v1178 = vld [vmem:[%s1174 + $0xc] sm:$0xf]
  %v1179 = vpack.c.bf16 %v1173, %v1172
  %s1180 = scalar_lea.vmem %s6, 2
  %v1181 = vld [vmem:[%s1180] sm:$0x1]
  %v1183 = vlaneseq
  %v1184 = vshrl.u32 %v1183, 7
  %v1185 = vsub.s32 0, %v1184
  %v1186 = vrot.slane %v1181, %v1185
  %v1192 = vunpack.c.l.b16 %v1175
  %v1193 = vunpack.c.l.b16 %v1176
  %v1194 = vunpack.c.l.b16 %v1177
  %v1195 = vunpack.c.l.b16 %v1178
  %v1196 = vpack.c.b16 %v1193, %v1192
  %v1197 = vpack.c.b16 %v1195, %v1194
  %v1201 = vsel %vm95, %v1179, 0
  %1203 = vmatprep.subr.bf16.mxu0 0
  %1204 = vmatpush1.bf16.msra.mxu0 %v1196
  %1205 = vmatprep.subr.bf16.mxu0 0
  %1206 = vmatpush1.bf16.msra.mxu0 %v1197
  %1207 = vmatprep.subr.bf16.mxu0 0
  %1208 = vmatpush1.bf16.msra.mxu0 0
  %1209 = vmatprep.subr.bf16.mxu0 0
  %1210 = vmatpush1.bf16.msra.mxu0 0
  %1211 = vmatprep.subr.bf16.mxu0 0
  %1212 = vmatpush1.bf16.msra.mxu0 0
  %1213 = vmatprep.subr.bf16.mxu0 0
  %1214 = vmatpush1.bf16.msra.mxu0 0
  %1215 = vmatprep.subr.bf16.mxu0 0
  %1216 = vmatpush1.bf16.msra.mxu0 0
  %1217 = vmatprep.subr.bf16.mxu0 0
  %1218 = vmatpush1.bf16.msra.mxu0 0
  %1219 = vmatprep.subr.bf16.mxu0 0
  %1220 = vmatpush1.bf16.msra.mxu0 0
  %1221 = vmatprep.subr.bf16.mxu0 0
  %1222 = vmatpush1.bf16.msra.mxu0 0
  %1223 = vmatprep.subr.bf16.mxu0 0
  %1224 = vmatpush1.bf16.msra.mxu0 0
  %1225 = vmatprep.subr.bf16.mxu0 0
  %1226 = vmatpush1.bf16.msra.mxu0 0
  %1227 = vmatprep.subr.bf16.mxu0 0
  %1228 = vmatpush1.bf16.msra.mxu0 0
  %1229 = vmatprep.subr.bf16.mxu0 0
  %1230 = vmatpush1.bf16.msra.mxu0 0
  %1231 = vmatprep.subr.bf16.mxu0 0
  %1232 = vmatpush1.bf16.msra.mxu0 0
  %1233 = vmatprep.subr.bf16.mxu0 0
  %1234 = vmatpush1.bf16.msra.mxu0 0
  %1235 = vmatprep.mubr.bf16.mxu0 0
  %1236 = vmatmul.mubr.bf16.gmra.mrb[0].mxu0 %v1201
  %v1237 = vpop.f32.mrb[0].mxu0
  %v1238 = vadd.f32 %v1186, %v1237
  %v1239 = vpop.f32.mrb[0].mxu0
  %v1240 = vpop.f32.mrb[0].mxu0
  %v1241 = vadd.f32 %v1186, %v1240
  %v1242 = vpop.f32.mrb[0].mxu0
  %1243 = vdwg.mxu0
  %s1244 = scalar_lea.vmem %s7, 32
  %v1245 = vld [vmem:[%s1244] sm:$0xf]
  %v1246 = vld [vmem:[%s1244 + $0x4] sm:$0xf]
  %v1247 = vld [vmem:[%s1244 + $0x8] sm:$0xf]
  %v1248 = vld [vmem:[%s1244 + $0xc] sm:$0xf]
  %s1249 = scalar_lea.vmem %s8, 2
  %v1250 = vld [vmem:[%s1249] sm:$0x1]
  %v1252 = vlaneseq
  %v1253 = vshrl.u32 %v1252, 7
  %v1254 = vsub.s32 0, %v1253
  %v1255 = vrot.slane %v1250, %v1254
  %v1261 = vunpack.c.l.b16 %v1245
  %v1262 = vunpack.c.l.b16 %v1246
  %v1263 = vunpack.c.l.b16 %v1247
  %v1264 = vunpack.c.l.b16 %v1248
  %v1265 = vpack.c.b16 %v1262, %v1261
  %v1266 = vpack.c.b16 %v1264, %v1263
  %1269 = vmatprep.subr.bf16.mxu0 0
  %1270 = vmatpush1.bf16.msra.mxu0 %v1265
  %1271 = vmatprep.subr.bf16.mxu0 0
  %1272 = vmatpush1.bf16.msra.mxu0 %v1266
  %1273 = vmatprep.subr.bf16.mxu0 0
  %1274 = vmatpush1.bf16.msra.mxu0 0
  %1275 = vmatprep.subr.bf16.mxu0 0
  %1276 = vmatpush1.bf16.msra.mxu0 0
  %1277 = vmatprep.subr.bf16.mxu0 0
  %1278 = vmatpush1.bf16.msra.mxu0 0
  %1279 = vmatprep.subr.bf16.mxu0 0
  %1280 = vmatpush1.bf16.msra.mxu0 0
  %1281 = vmatprep.subr.bf16.mxu0 0
  %1282 = vmatpush1.bf16.msra.mxu0 0
  %1283 = vmatprep.subr.bf16.mxu0 0
  %1284 = vmatpush1.bf16.msra.mxu0 0
  %1285 = vmatprep.subr.bf16.mxu0 0
  %1286 = vmatpush1.bf16.msra.mxu0 0
  %1287 = vmatprep.subr.bf16.mxu0 0
  %1288 = vmatpush1.bf16.msra.mxu0 0
  %1289 = vmatprep.subr.bf16.mxu0 0
  %1290 = vmatpush1.bf16.msra.mxu0 0
  %1291 = vmatprep.subr.bf16.mxu0 0
  %1292 = vmatpush1.bf16.msra.mxu0 0
  %1293 = vmatprep.subr.bf16.mxu0 0
  %1294 = vmatpush1.bf16.msra.mxu0 0
  %1295 = vmatprep.subr.bf16.mxu0 0
  %1296 = vmatpush1.bf16.msra.mxu0 0
  %1297 = vmatprep.subr.bf16.mxu0 0
  %1298 = vmatpush1.bf16.msra.mxu0 0
  %1299 = vmatprep.subr.bf16.mxu0 0
  %1300 = vmatpush1.bf16.msra.mxu0 0
  %1301 = vmatprep.mubr.bf16.mxu0 0
  %1302 = vmatmul.mubr.bf16.gmra.mrb[0].mxu0 %v1201
  %v1303 = vpop.f32.mrb[0].mxu0
  %v1304 = vadd.f32 %v1255, %v1303
  %v1305 = vpop.f32.mrb[0].mxu0
  %v1306 = vpop.f32.mrb[0].mxu0
  %v1307 = vadd.f32 %v1255, %v1306
  %v1308 = vpop.f32.mrb[0].mxu0
  %1309 = vdwg.mxu0
  %s1310 = scalar_lea.vmem %s9, 32
  %v1311 = vld [vmem:[%s1310] sm:$0xf]
  %v1312 = vld [vmem:[%s1310 + $0x4] sm:$0xf]
  %v1313 = vld [vmem:[%s1310 + $0x8] sm:$0xf]
  %v1314 = vld [vmem:[%s1310 + $0xc] sm:$0xf]
  %s1315 = scalar_lea.vmem %s10, 2
  %v1316 = vld [vmem:[%s1315] sm:$0x1]
  %v1318 = vlaneseq
  %v1319 = vshrl.u32 %v1318, 7
  %v1320 = vsub.s32 0, %v1319
  %v1321 = vrot.slane %v1316, %v1320
  %v1327 = vunpack.c.l.b16 %v1311
  %v1328 = vunpack.c.l.b16 %v1312
  %v1329 = vunpack.c.l.b16 %v1313
  %v1330 = vunpack.c.l.b16 %v1314
  %v1331 = vpack.c.b16 %v1328, %v1327
  %v1332 = vpack.c.b16 %v1330, %v1329
  %1335 = vmatprep.subr.bf16.mxu0 0
  %1336 = vmatpush1.bf16.msra.mxu0 %v1331
  %1337 = vmatprep.subr.bf16.mxu0 0
  %1338 = vmatpush1.bf16.msra.mxu0 %v1332
  %1339 = vmatprep.subr.bf16.mxu0 0
  %1340 = vmatpush1.bf16.msra.mxu0 0
  %1341 = vmatprep.subr.bf16.mxu0 0
  %1342 = vmatpush1.bf16.msra.mxu0 0
  %1343 = vmatprep.subr.bf16.mxu0 0
  %1344 = vmatpush1.bf16.msra.mxu0 0
  %1345 = vmatprep.subr.bf16.mxu0 0
  %1346 = vmatpush1.bf16.msra.mxu0 0
  %1347 = vmatprep.subr.bf16.mxu0 0
  %1348 = vmatpush1.bf16.msra.mxu0 0
  %1349 = vmatprep.subr.bf16.mxu0 0
  %1350 = vmatpush1.bf16.msra.mxu0 0
  %1351 = vmatprep.subr.bf16.mxu0 0
  %1352 = vmatpush1.bf16.msra.mxu0 0
  %1353 = vmatprep.subr.bf16.mxu0 0
  %1354 = vmatpush1.bf16.msra.mxu0 0
  %1355 = vmatprep.subr.bf16.mxu0 0
  %1356 = vmatpush1.bf16.msra.mxu0 0
  %1357 = vmatprep.subr.bf16.mxu0 0
  %1358 = vmatpush1.bf16.msra.mxu0 0
  %1359 = vmatprep.subr.bf16.mxu0 0
  %1360 = vmatpush1.bf16.msra.mxu0 0
  %1361 = vmatprep.subr.bf16.mxu0 0
  %1362 = vmatpush1.bf16.msra.mxu0 0
  %1363 = vmatprep.subr.bf16.mxu0 0
  %1364 = vmatpush1.bf16.msra.mxu0 0
  %1365 = vmatprep.subr.bf16.mxu0 0
  %1366 = vmatpush1.bf16.msra.mxu0 0
  %1367 = vmatprep.mubr.bf16.mxu0 0
  %1368 = vmatmul.mubr.bf16.gmra.mrb[0].mxu0 %v1201
  %v1369 = vpop.f32.mrb[0].mxu0
  %v1370 = vadd.f32 %v1321, %v1369
  %v1371 = vpop.f32.mrb[0].mxu0
  %v1372 = vpop.f32.mrb[0].mxu0
  %v1373 = vadd.f32 %v1321, %v1372
  %v1374 = vpop.f32.mrb[0].mxu0
  %1375 = vdwg.mxu0
  %v1376 = vpack.c.bf16 %v1241, %v1238
  %v1377 = vpack.c.bf16 %v1307, %v1304
  %v1379 = vsel %vm341, %v1376, 0
  %v1382 = vsel %vm341, %v1377, 0
  %1384 = vmatprep.subr.bf16.mxu0 0
  %1385 = vmatpush1.bf16.xpose.msra.mxu0 %v1382
  %1386 = vmatprep.subr.bf16.mxu0 0
  %1387 = vmatpush1.bf16.xpose.msra.mxu0 0
  %1388 = vmatprep.subr.bf16.mxu0 0
  %1389 = vmatpush1.bf16.xpose.msra.mxu0 0
  %1390 = vmatprep.subr.bf16.mxu0 0
  %1391 = vmatpush1.bf16.xpose.msra.mxu0 0
  %1392 = vmatprep.subr.bf16.mxu0 0
  %1393 = vmatpush1.bf16.xpose.msra.mxu0 0
  %1394 = vmatprep.subr.bf16.mxu0 0
  %1395 = vmatpush1.bf16.xpose.msra.mxu0 0
  %1396 = vmatprep.subr.bf16.mxu0 0
  %1397 = vmatpush1.bf16.xpose.msra.mxu0 0
  %1398 = vmatprep.subr.bf16.mxu0 0
  %1399 = vmatpush1.bf16.xpose.msra.mxu0 0
  %1400 = vmatprep.subr.bf16.mxu0 0
  %1401 = vmatpush1.bf16.xpose.msra.mxu0 0
  %1402 = vmatprep.subr.bf16.mxu0 0
  %1403 = vmatpush1.bf16.xpose.msra.mxu0 0
  %1404 = vmatprep.subr.bf16.mxu0 0
  %1405 = vmatpush1.bf16.xpose.msra.mxu0 0
  %1406 = vmatprep.subr.bf16.mxu0 0
  %1407 = vmatpush1.bf16.xpose.msra.mxu0 0
  %1408 = vmatprep.subr.bf16.mxu0 0
  %1409 = vmatpush1.bf16.xpose.msra.mxu0 0
  %1410 = vmatprep.subr.bf16.mxu0 0
  %1411 = vmatpush1.bf16.xpose.msra.mxu0 0
  %1412 = vmatprep.subr.bf16.mxu0 0
  %1413 = vmatpush1.bf16.xpose.msra.mxu0 0
  %1414 = vmatprep.subr.bf16.mxu0 0
  %1415 = vmatpush1.bf16.xpose.msra.mxu0 0
  %1416 = vmatprep.mubr.bf16.mxu0 0
  %1417 = vmatmul.mubr.bf16.gmra.mrb[0].mxu0 %v1379
  %v1418 = vpop.f32.mrb[0].mxu0
  %v1419 = vadd.f32 0.0, %v1418
  %v1420 = vpop.f32.mrb[0].mxu0
  %v1421 = vpop.f32.mrb[0].mxu0
  %v1422 = vadd.f32 0.0, %v1421
  %v1423 = vpop.f32.mrb[0].mxu0
  %1424 = vdwg.mxu0
  %v1425 = vmul.f32 %v1419, 0.25
  %v1426 = vmul.f32 %v1422, 0.25
  %v1427 = vadd.f32 %v1425, %v395
  %v1428 = vadd.f32 %v1426, %v395
  %v1429 = vsel %vm399, %v1427, -inf
  %1430 = vmax.xlane.f32.xlu0 %v1429
  %v1431 = vpop.xlane.xlu0 %1430
  %v1432 = vsel %vm403, %v1428, -inf
  %1433 = vmax.xlane.f32.xlu0 %v1432
  %v1434 = vpop.xlane.xlu0 %1433
  %v1435 = vsub.f32 %v1427, %v1431
  %v1436 = vsub.f32 %v1428, %v1434
  %v1437 = vmul.f32 %v1435, 1.442695
  %v1438 = vpow.pop %v1437
  %v1439 = vmul.f32 %v1436, 1.442695
  %v1440 = vpow.pop %v1439
  %v1441 = vsel %vm399, %v1438, 0.0
  %1442 = vadd.xlane.f32.xlu0 %v1441
  %v1443 = vpop.xlane.xlu0 %1442
  %v1444 = vsel %vm403, %v1440, 0.0
  %1445 = vadd.xlane.f32.xlu0 %v1444
  %v1446 = vpop.xlane.xlu0 %1445
  %v1447 = vrcp.pop %v1443
  %v1448 = vmul.f32 %v1438, %v1447
  %v1449 = vrcp.pop %v1446
  %v1450 = vmul.f32 %v1440, %v1449
  %v1451 = vpack.c.bf16 %v1450, %v1448
  %v1452 = vpack.c.bf16 %v1373, %v1370
  %v1454 = vsel %vm399, %v1451, 0
  %v1457 = vsel %vm428, %v1452, 0
  %1459 = vmatprep.subr.bf16.mxu0 0
  %1460 = vmatpush1.bf16.msra.mxu0 %v1457
  %1461 = vmatprep.subr.bf16.mxu0 0
  %1462 = vmatpush1.bf16.msra.mxu0 0
  %1463 = vmatprep.subr.bf16.mxu0 0
  %1464 = vmatpush1.bf16.msra.mxu0 0
  %1465 = vmatprep.subr.bf16.mxu0 0
  %1466 = vmatpush1.bf16.msra.mxu0 0
  %1467 = vmatprep.subr.bf16.mxu0 0
  %1468 = vmatpush1.bf16.msra.mxu0 0
  %1469 = vmatprep.subr.bf16.mxu0 0
  %1470 = vmatpush1.bf16.msra.mxu0 0
  %1471 = vmatprep.subr.bf16.mxu0 0
  %1472 = vmatpush1.bf16.msra.mxu0 0
  %1473 = vmatprep.subr.bf16.mxu0 0
  %1474 = vmatpush1.bf16.msra.mxu0 0
  %1475 = vmatprep.subr.bf16.mxu0 0
  %1476 = vmatpush1.bf16.msra.mxu0 0
  %1477 = vmatprep.subr.bf16.mxu0 0
  %1478 = vmatpush1.bf16.msra.mxu0 0
  %1479 = vmatprep.subr.bf16.mxu0 0
  %1480 = vmatpush1.bf16.msra.mxu0 0
  %1481 = vmatprep.subr.bf16.mxu0 0
  %1482 = vmatpush1.bf16.msra.mxu0 0
  %1483 = vmatprep.subr.bf16.mxu0 0
  %1484 = vmatpush1.bf16.msra.mxu0 0
  %1485 = vmatprep.subr.bf16.mxu0 0
  %1486 = vmatpush1.bf16.msra.mxu0 0
  %1487 = vmatprep.subr.bf16.mxu0 0
  %1488 = vmatpush1.bf16.msra.mxu0 0
  %1489 = vmatprep.subr.bf16.mxu0 0
  %1490 = vmatpush1.bf16.msra.mxu0 0
  %1491 = vmatprep.mubr.bf16.mxu0 0
  %1492 = vmatmul.mubr.bf16.gmra.mrb[0].mxu0 %v1454
  %v1493 = vpop.f32.mrb[0].mxu0
  %v1494 = vadd.f32 0.0, %v1493
  %v1495 = vpop.f32.mrb[0].mxu0
  %v1496 = vpop.f32.mrb[0].mxu0
  %v1497 = vadd.f32 0.0, %v1496
  %v1498 = vpop.f32.mrb[0].mxu0
  %1499 = vdwg.mxu0
  %s1500 = scalar_lea.vmem %s11, 16
  %v1501 = vld [vmem:[%s1500] sm:$0xf]
  %v1502 = vld [vmem:[%s1500 + $0x4] sm:$0xf]
  %v1503 = vpack.c.bf16 %v1497, %v1494
  %s1504 = scalar_lea.vmem %s5, 48
  %v1505 = vld [vmem:[%s1504] sm:$0xf]
  %v1506 = vld [vmem:[%s1504 + $0x4] sm:$0xf]
  %v1507 = vld [vmem:[%s1504 + $0x8] sm:$0xf]
  %v1508 = vld [vmem:[%s1504 + $0xc] sm:$0xf]
  %s1509 = scalar_lea.vmem %s6, 3
  %v1510 = vld [vmem:[%s1509] sm:$0x1]
  %v1512 = vlaneseq
  %v1513 = vshrl.u32 %v1512, 7
  %v1514 = vsub.s32 0, %v1513
  %v1515 = vrot.slane %v1510, %v1514
  %v1521 = vunpack.c.l.b16 %v1505
  %v1522 = vunpack.c.l.b16 %v1506
  %v1523 = vunpack.c.l.b16 %v1507
  %v1524 = vunpack.c.l.b16 %v1508
  %v1525 = vpack.c.b16 %v1522, %v1521
  %v1526 = vpack.c.b16 %v1524, %v1523
  %1529 = vmatprep.subr.bf16.mxu0 0
  %1530 = vmatpush1.bf16.msra.mxu0 %v1525
  %1531 = vmatprep.subr.bf16.mxu0 0
  %1532 = vmatpush1.bf16.msra.mxu0 %v1526
  %1533 = vmatprep.subr.bf16.mxu0 0
  %1534 = vmatpush1.bf16.msra.mxu0 0
  %1535 = vmatprep.subr.bf16.mxu0 0
  %1536 = vmatpush1.bf16.msra.mxu0 0
  %1537 = vmatprep.subr.bf16.mxu0 0
  %1538 = vmatpush1.bf16.msra.mxu0 0
  %1539 = vmatprep.subr.bf16.mxu0 0
  %1540 = vmatpush1.bf16.msra.mxu0 0
  %1541 = vmatprep.subr.bf16.mxu0 0
  %1542 = vmatpush1.bf16.msra.mxu0 0
  %1543 = vmatprep.subr.bf16.mxu0 0
  %1544 = vmatpush1.bf16.msra.mxu0 0
  %1545 = vmatprep.subr.bf16.mxu0 0
  %1546 = vmatpush1.bf16.msra.mxu0 0
  %1547 = vmatprep.subr.bf16.mxu0 0
  %1548 = vmatpush1.bf16.msra.mxu0 0
  %1549 = vmatprep.subr.bf16.mxu0 0
  %1550 = vmatpush1.bf16.msra.mxu0 0
  %1551 = vmatprep.subr.bf16.mxu0 0
  %1552 = vmatpush1.bf16.msra.mxu0 0
  %1553 = vmatprep.subr.bf16.mxu0 0
  %1554 = vmatpush1.bf16.msra.mxu0 0
  %1555 = vmatprep.subr.bf16.mxu0 0
  %1556 = vmatpush1.bf16.msra.mxu0 0
  %1557 = vmatprep.subr.bf16.mxu0 0
  %1558 = vmatpush1.bf16.msra.mxu0 0
  %1559 = vmatprep.subr.bf16.mxu0 0
  %1560 = vmatpush1.bf16.msra.mxu0 0
  %1561 = vmatprep.mubr.bf16.mxu0 0
  %1562 = vmatmul.mubr.bf16.gmra.mrb[0].mxu0 %v1201
  %v1563 = vpop.f32.mrb[0].mxu0
  %v1564 = vadd.f32 %v1515, %v1563
  %v1565 = vpop.f32.mrb[0].mxu0
  %v1566 = vpop.f32.mrb[0].mxu0
  %v1567 = vadd.f32 %v1515, %v1566
  %v1568 = vpop.f32.mrb[0].mxu0
  %1569 = vdwg.mxu0
  %s1570 = scalar_lea.vmem %s7, 48
  %v1571 = vld [vmem:[%s1570] sm:$0xf]
  %v1572 = vld [vmem:[%s1570 + $0x4] sm:$0xf]
  %v1573 = vld [vmem:[%s1570 + $0x8] sm:$0xf]
  %v1574 = vld [vmem:[%s1570 + $0xc] sm:$0xf]
  %s1575 = scalar_lea.vmem %s8, 3
  %v1576 = vld [vmem:[%s1575] sm:$0x1]
  %v1578 = vlaneseq
  %v1579 = vshrl.u32 %v1578, 7
  %v1580 = vsub.s32 0, %v1579
  %v1581 = vrot.slane %v1576, %v1580
  %v1587 = vunpack.c.l.b16 %v1571
  %v1588 = vunpack.c.l.b16 %v1572
  %v1589 = vunpack.c.l.b16 %v1573
  %v1590 = vunpack.c.l.b16 %v1574
  %v1591 = vpack.c.b16 %v1588, %v1587
  %v1592 = vpack.c.b16 %v1590, %v1589
  %1595 = vmatprep.subr.bf16.mxu0 0
  %1596 = vmatpush1.bf16.msra.mxu0 %v1591
  %1597 = vmatprep.subr.bf16.mxu0 0
  %1598 = vmatpush1.bf16.msra.mxu0 %v1592
  %1599 = vmatprep.subr.bf16.mxu0 0
  %1600 = vmatpush1.bf16.msra.mxu0 0
  %1601 = vmatprep.subr.bf16.mxu0 0
  %1602 = vmatpush1.bf16.msra.mxu0 0
  %1603 = vmatprep.subr.bf16.mxu0 0
  %1604 = vmatpush1.bf16.msra.mxu0 0
  %1605 = vmatprep.subr.bf16.mxu0 0
  %1606 = vmatpush1.bf16.msra.mxu0 0
  %1607 = vmatprep.subr.bf16.mxu0 0
  %1608 = vmatpush1.bf16.msra.mxu0 0
  %1609 = vmatprep.subr.bf16.mxu0 0
  %1610 = vmatpush1.bf16.msra.mxu0 0
  %1611 = vmatprep.subr.bf16.mxu0 0
  %1612 = vmatpush1.bf16.msra.mxu0 0
  %1613 = vmatprep.subr.bf16.mxu0 0
  %1614 = vmatpush1.bf16.msra.mxu0 0
  %1615 = vmatprep.subr.bf16.mxu0 0
  %1616 = vmatpush1.bf16.msra.mxu0 0
  %1617 = vmatprep.subr.bf16.mxu0 0
  %1618 = vmatpush1.bf16.msra.mxu0 0
  %1619 = vmatprep.subr.bf16.mxu0 0
  %1620 = vmatpush1.bf16.msra.mxu0 0
  %1621 = vmatprep.subr.bf16.mxu0 0
  %1622 = vmatpush1.bf16.msra.mxu0 0
  %1623 = vmatprep.subr.bf16.mxu0 0
  %1624 = vmatpush1.bf16.msra.mxu0 0
  %1625 = vmatprep.subr.bf16.mxu0 0
  %1626 = vmatpush1.bf16.msra.mxu0 0
  %1627 = vmatprep.mubr.bf16.mxu0 0
  %1628 = vmatmul.mubr.bf16.gmra.mrb[0].mxu0 %v1201
  %v1629 = vpop.f32.mrb[0].mxu0
  %v1630 = vadd.f32 %v1581, %v1629
  %v1631 = vpop.f32.mrb[0].mxu0
  %v1632 = vpop.f32.mrb[0].mxu0
  %v1633 = vadd.f32 %v1581, %v1632
  %v1634 = vpop.f32.mrb[0].mxu0
  %1635 = vdwg.mxu0
  %s1636 = scalar_lea.vmem %s9, 48
  %v1637 = vld [vmem:[%s1636] sm:$0xf]
  %v1638 = vld [vmem:[%s1636 + $0x4] sm:$0xf]
  %v1639 = vld [vmem:[%s1636 + $0x8] sm:$0xf]
  %v1640 = vld [vmem:[%s1636 + $0xc] sm:$0xf]
  %s1641 = scalar_lea.vmem %s10, 3
  %v1642 = vld [vmem:[%s1641] sm:$0x1]
  %v1644 = vlaneseq
  %v1645 = vshrl.u32 %v1644, 7
  %v1646 = vsub.s32 0, %v1645
  %v1647 = vrot.slane %v1642, %v1646
  %v1653 = vunpack.c.l.b16 %v1637
  %v1654 = vunpack.c.l.b16 %v1638
  %v1655 = vunpack.c.l.b16 %v1639
  %v1656 = vunpack.c.l.b16 %v1640
  %v1657 = vpack.c.b16 %v1654, %v1653
  %v1658 = vpack.c.b16 %v1656, %v1655
  %1661 = vmatprep.subr.bf16.mxu0 0
  %1662 = vmatpush1.bf16.msra.mxu0 %v1657
  %1663 = vmatprep.subr.bf16.mxu0 0
  %1664 = vmatpush1.bf16.msra.mxu0 %v1658
  %1665 = vmatprep.subr.bf16.mxu0 0
  %1666 = vmatpush1.bf16.msra.mxu0 0
  %1667 = vmatprep.subr.bf16.mxu0 0
  %1668 = vmatpush1.bf16.msra.mxu0 0
  %1669 = vmatprep.subr.bf16.mxu0 0
  %1670 = vmatpush1.bf16.msra.mxu0 0
  %1671 = vmatprep.subr.bf16.mxu0 0
  %1672 = vmatpush1.bf16.msra.mxu0 0
  %1673 = vmatprep.subr.bf16.mxu0 0
  %1674 = vmatpush1.bf16.msra.mxu0 0
  %1675 = vmatprep.subr.bf16.mxu0 0
  %1676 = vmatpush1.bf16.msra.mxu0 0
  %1677 = vmatprep.subr.bf16.mxu0 0
  %1678 = vmatpush1.bf16.msra.mxu0 0
  %1679 = vmatprep.subr.bf16.mxu0 0
  %1680 = vmatpush1.bf16.msra.mxu0 0
  %1681 = vmatprep.subr.bf16.mxu0 0
  %1682 = vmatpush1.bf16.msra.mxu0 0
  %1683 = vmatprep.subr.bf16.mxu0 0
  %1684 = vmatpush1.bf16.msra.mxu0 0
  %1685 = vmatprep.subr.bf16.mxu0 0
  %1686 = vmatpush1.bf16.msra.mxu0 0
  %1687 = vmatprep.subr.bf16.mxu0 0
  %1688 = vmatpush1.bf16.msra.mxu0 0
  %1689 = vmatprep.subr.bf16.mxu0 0
  %1690 = vmatpush1.bf16.msra.mxu0 0
  %1691 = vmatprep.subr.bf16.mxu0 0
  %1692 = vmatpush1.bf16.msra.mxu0 0
  %1693 = vmatprep.mubr.bf16.mxu0 0
  %1694 = vmatmul.mubr.bf16.gmra.mrb[0].mxu0 %v1201
  %v1695 = vpop.f32.mrb[0].mxu0
  %v1696 = vadd.f32 %v1647, %v1695
  %v1697 = vpop.f32.mrb[0].mxu0
  %v1698 = vpop.f32.mrb[0].mxu0
  %v1699 = vadd.f32 %v1647, %v1698
  %v1700 = vpop.f32.mrb[0].mxu0
  %1701 = vdwg.mxu0
  %v1702 = vpack.c.bf16 %v1567, %v1564
  %v1703 = vpack.c.bf16 %v1633, %v1630
  %v1705 = vsel %vm341, %v1702, 0
  %v1708 = vsel %vm341, %v1703, 0
  %1710 = vmatprep.subr.bf16.mxu0 0
  %1711 = vmatpush1.bf16.xpose.msra.mxu0 %v1708
  %1712 = vmatprep.subr.bf16.mxu0 0
  %1713 = vmatpush1.bf16.xpose.msra.mxu0 0
  %1714 = vmatprep.subr.bf16.mxu0 0
  %1715 = vmatpush1.bf16.xpose.msra.mxu0 0
  %1716 = vmatprep.subr.bf16.mxu0 0
  %1717 = vmatpush1.bf16.xpose.msra.mxu0 0
  %1718 = vmatprep.subr.bf16.mxu0 0
  %1719 = vmatpush1.bf16.xpose.msra.mxu0 0
  %1720 = vmatprep.subr.bf16.mxu0 0
  %1721 = vmatpush1.bf16.xpose.msra.mxu0 0
  %1722 = vmatprep.subr.bf16.mxu0 0
  %1723 = vmatpush1.bf16.xpose.msra.mxu0 0
  %1724 = vmatprep.subr.bf16.mxu0 0
  %1725 = vmatpush1.bf16.xpose.msra.mxu0 0
  %1726 = vmatprep.subr.bf16.mxu0 0
  %1727 = vmatpush1.bf16.xpose.msra.mxu0 0
  %1728 = vmatprep.subr.bf16.mxu0 0
  %1729 = vmatpush1.bf16.xpose.msra.mxu0 0
  %1730 = vmatprep.subr.bf16.mxu0 0
  %1731 = vmatpush1.bf16.xpose.msra.mxu0 0
  %1732 = vmatprep.subr.bf16.mxu0 0
  %1733 = vmatpush1.bf16.xpose.msra.mxu0 0
  %1734 = vmatprep.subr.bf16.mxu0 0
  %1735 = vmatpush1.bf16.xpose.msra.mxu0 0
  %1736 = vmatprep.subr.bf16.mxu0 0
  %1737 = vmatpush1.bf16.xpose.msra.mxu0 0
  %1738 = vmatprep.subr.bf16.mxu0 0
  %1739 = vmatpush1.bf16.xpose.msra.mxu0 0
  %1740 = vmatprep.subr.bf16.mxu0 0
  %1741 = vmatpush1.bf16.xpose.msra.mxu0 0
  %1742 = vmatprep.mubr.bf16.mxu0 0
  %1743 = vmatmul.mubr.bf16.gmra.mrb[0].mxu0 %v1705
  %v1744 = vpop.f32.mrb[0].mxu0
  %v1745 = vadd.f32 0.0, %v1744
  %v1746 = vpop.f32.mrb[0].mxu0
  %v1747 = vpop.f32.mrb[0].mxu0
  %v1748 = vadd.f32 0.0, %v1747
  %v1749 = vpop.f32.mrb[0].mxu0
  %1750 = vdwg.mxu0
  %v1751 = vmul.f32 %v1745, 0.25
  %v1752 = vmul.f32 %v1748, 0.25
  %v1753 = vadd.f32 %v1751, %v395
  %v1754 = vadd.f32 %v1752, %v395
  %v1755 = vsel %vm399, %v1753, -inf
  %1756 = vmax.xlane.f32.xlu0 %v1755
  %v1757 = vpop.xlane.xlu0 %1756
  %v1758 = vsel %vm403, %v1754, -inf
  %1759 = vmax.xlane.f32.xlu0 %v1758
  %v1760 = vpop.xlane.xlu0 %1759
  %v1761 = vsub.f32 %v1753, %v1757
  %v1762 = vsub.f32 %v1754, %v1760
  %v1763 = vmul.f32 %v1761, 1.442695
  %v1764 = vpow.pop %v1763
  %v1765 = vmul.f32 %v1762, 1.442695
  %v1766 = vpow.pop %v1765
  %v1767 = vsel %vm399, %v1764, 0.0
  %1768 = vadd.xlane.f32.xlu0 %v1767
  %v1769 = vpop.xlane.xlu0 %1768
  %v1770 = vsel %vm403, %v1766, 0.0
  %1771 = vadd.xlane.f32.xlu0 %v1770
  %v1772 = vpop.xlane.xlu0 %1771
  %v1773 = vrcp.pop %v1769
  %v1774 = vmul.f32 %v1764, %v1773
  %v1775 = vrcp.pop %v1772
  %v1776 = vmul.f32 %v1766, %v1775
  %v1777 = vpack.c.bf16 %v1776, %v1774
  %v1778 = vpack.c.bf16 %v1699, %v1696
  %v1780 = vsel %vm399, %v1777, 0
  %v1783 = vsel %vm428, %v1778, 0
  %1785 = vmatprep.subr.bf16.mxu0 0
  %1786 = vmatpush1.bf16.msra.mxu0 %v1783
  %1787 = vmatprep.subr.bf16.mxu0 0
  %1788 = vmatpush1.bf16.msra.mxu0 0
  %1789 = vmatprep.subr.bf16.mxu0 0
  %1790 = vmatpush1.bf16.msra.mxu0 0
  %1791 = vmatprep.subr.bf16.mxu0 0
  %1792 = vmatpush1.bf16.msra.mxu0 0
  %1793 = vmatprep.subr.bf16.mxu0 0
  %1794 = vmatpush1.bf16.msra.mxu0 0
  %1795 = vmatprep.subr.bf16.mxu0 0
  %1796 = vmatpush1.bf16.msra.mxu0 0
  %1797 = vmatprep.subr.bf16.mxu0 0
  %1798 = vmatpush1.bf16.msra.mxu0 0
  %1799 = vmatprep.subr.bf16.mxu0 0
  %1800 = vmatpush1.bf16.msra.mxu0 0
  %1801 = vmatprep.subr.bf16.mxu0 0
  %1802 = vmatpush1.bf16.msra.mxu0 0
  %1803 = vmatprep.subr.bf16.mxu0 0
  %1804 = vmatpush1.bf16.msra.mxu0 0
  %1805 = vmatprep.subr.bf16.mxu0 0
  %1806 = vmatpush1.bf16.msra.mxu0 0
  %1807 = vmatprep.subr.bf16.mxu0 0
  %1808 = vmatpush1.bf16.msra.mxu0 0
  %1809 = vmatprep.subr.bf16.mxu0 0
  %1810 = vmatpush1.bf16.msra.mxu0 0
  %1811 = vmatprep.subr.bf16.mxu0 0
  %1812 = vmatpush1.bf16.msra.mxu0 0
  %1813 = vmatprep.subr.bf16.mxu0 0
  %1814 = vmatpush1.bf16.msra.mxu0 0
  %1815 = vmatprep.subr.bf16.mxu0 0
  %1816 = vmatpush1.bf16.msra.mxu0 0
  %1817 = vmatprep.mubr.bf16.mxu0 0
  %1818 = vmatmul.mubr.bf16.gmra.mrb[0].mxu0 %v1780
  %v1819 = vpop.f32.mrb[0].mxu0
  %v1820 = vadd.f32 0.0, %v1819
  %v1821 = vpop.f32.mrb[0].mxu0
  %v1822 = vpop.f32.mrb[0].mxu0
  %v1823 = vadd.f32 0.0, %v1822
  %v1824 = vpop.f32.mrb[0].mxu0
  %1825 = vdwg.mxu0
  %s1826 = scalar_lea.vmem %s11, 24
  %v1827 = vld [vmem:[%s1826] sm:$0xf]
  %v1828 = vld [vmem:[%s1826 + $0x4] sm:$0xf]
  %v1829 = vpack.c.bf16 %v1823, %v1820
  %v1832 = vunpack.c.l.b16 %v1827
  %v1833 = vunpack.c.l.b16 %v1828
  %v1834 = vpack.c.b16 %v1833, %v1832
  %v1837 = vsel %vm341, %v1829, 0
  %1839 = vmatprep.subr.bf16.mxu0 0
  %1840 = vmatpush1.bf16.msra.mxu0 %v1834
  %1841 = vmatprep.subr.bf16.mxu0 0
  %1842 = vmatpush1.bf16.msra.mxu0 0
  %1843 = vmatprep.subr.bf16.mxu0 0
  %1844 = vmatpush1.bf16.msra.mxu0 0
  %1845 = vmatprep.subr.bf16.mxu0 0
  %1846 = vmatpush1.bf16.msra.mxu0 0
  %1847 = vmatprep.subr.bf16.mxu0 0
  %1848 = vmatpush1.bf16.msra.mxu0 0
  %1849 = vmatprep.subr.bf16.mxu0 0
  %1850 = vmatpush1.bf16.msra.mxu0 0
  %1851 = vmatprep.subr.bf16.mxu0 0
  %1852 = vmatpush1.bf16.msra.mxu0 0
  %1853 = vmatprep.subr.bf16.mxu0 0
  %1854 = vmatpush1.bf16.msra.mxu0 0
  %1855 = vmatprep.subr.bf16.mxu0 0
  %1856 = vmatpush1.bf16.msra.mxu0 0
  %1857 = vmatprep.subr.bf16.mxu0 0
  %1858 = vmatpush1.bf16.msra.mxu0 0
  %1859 = vmatprep.subr.bf16.mxu0 0
  %1860 = vmatpush1.bf16.msra.mxu0 0
  %1861 = vmatprep.subr.bf16.mxu0 0
  %1862 = vmatpush1.bf16.msra.mxu0 0
  %1863 = vmatprep.subr.bf16.mxu0 0
  %1864 = vmatpush1.bf16.msra.mxu0 0
  %1865 = vmatprep.subr.bf16.mxu0 0
  %1866 = vmatpush1.bf16.msra.mxu0 0
  %1867 = vmatprep.subr.bf16.mxu0 0
  %1868 = vmatpush1.bf16.msra.mxu0 0
  %1869 = vmatprep.subr.bf16.mxu0 0
  %1870 = vmatpush1.bf16.msra.mxu0 0
  %1871 = vmatprep.mubr.bf16.mxu0 0
  %1872 = vmatmul.mubr.bf16.gmra.mrb[0].mxu0 %v1837
  %v1873 = vpop.f32.mrb[0].mxu0
  %v1874 = vadd.f32 0.0, %v1873
  %v1875 = vpop.f32.mrb[0].mxu0
  %v1876 = vpop.f32.mrb[0].mxu0
  %v1877 = vadd.f32 0.0, %v1876
  %v1878 = vpop.f32.mrb[0].mxu0
  %1879 = vdwg.mxu0
  %v1882 = vunpack.c.l.b16 %v1501
  %v1883 = vunpack.c.l.b16 %v1502
  %v1884 = vpack.c.b16 %v1883, %v1882
  %v1887 = vsel %vm341, %v1503, 0
  %1889 = vmatprep.subr.bf16.mxu0 0
  %1890 = vmatpush1.bf16.msra.mxu0 %v1884
  %1891 = vmatprep.subr.bf16.mxu0 0
  %1892 = vmatpush1.bf16.msra.mxu0 0
  %1893 = vmatprep.subr.bf16.mxu0 0
  %1894 = vmatpush1.bf16.msra.mxu0 0
  %1895 = vmatprep.subr.bf16.mxu0 0
  %1896 = vmatpush1.bf16.msra.mxu0 0
  %1897 = vmatprep.subr.bf16.mxu0 0
  %1898 = vmatpush1.bf16.msra.mxu0 0
  %1899 = vmatprep.subr.bf16.mxu0 0
  %1900 = vmatpush1.bf16.msra.mxu0 0
  %1901 = vmatprep.subr.bf16.mxu0 0
  %1902 = vmatpush1.bf16.msra.mxu0 0
  %1903 = vmatprep.subr.bf16.mxu0 0
  %1904 = vmatpush1.bf16.msra.mxu0 0
  %1905 = vmatprep.subr.bf16.mxu0 0
  %1906 = vmatpush1.bf16.msra.mxu0 0
  %1907 = vmatprep.subr.bf16.mxu0 0
  %1908 = vmatpush1.bf16.msra.mxu0 0
  %1909 = vmatprep.subr.bf16.mxu0 0
  %1910 = vmatpush1.bf16.msra.mxu0 0
  %1911 = vmatprep.subr.bf16.mxu0 0
  %1912 = vmatpush1.bf16.msra.mxu0 0
  %1913 = vmatprep.subr.bf16.mxu0 0
  %1914 = vmatpush1.bf16.msra.mxu0 0
  %1915 = vmatprep.subr.bf16.mxu0 0
  %1916 = vmatpush1.bf16.msra.mxu0 0
  %1917 = vmatprep.subr.bf16.mxu0 0
  %1918 = vmatpush1.bf16.msra.mxu0 0
  %1919 = vmatprep.subr.bf16.mxu0 0
  %1920 = vmatpush1.bf16.msra.mxu0 0
  %1921 = vmatprep.mubr.bf16.mxu0 0
  %1922 = vmatmul.mubr.bf16.gmra.mrb[0].mxu0 %v1887
  %v1923 = vpop.f32.mrb[0].mxu0
  %v1924 = vadd.f32 %v1874, %v1923
  %v1925 = vpop.f32.mrb[0].mxu0
  %v1926 = vpop.f32.mrb[0].mxu0
  %v1927 = vadd.f32 %v1877, %v1926
  %v1928 = vpop.f32.mrb[0].mxu0
  %1929 = vdwg.mxu0
  %v1930 = vadd.f32 %v1172, %v1924
  %v1931 = vadd.f32 %v1173, %v1927
  %s1932 = scalar_lea.vmem %s12, 1
  %v1933 = vld [vmem:[%s1932] sm:$0x1]
  %v1935 = vlaneseq
  %v1936 = vshrl.u32 %v1935, 7
  %v1937 = vsub.s32 0, %v1936
  %v1938 = vrot.slane %v1933, %v1937
  %v1940 = vadd.f32 %v1930, %v1938
  %v1941 = vadd.f32 %v1931, %v1938
  %s1942 = scalar_lea.vmem %s13, 1
  %v1943 = vld [vmem:[%s1942] sm:$0x1]
  %s1944 = scalar_lea.vmem %s14, 1
  %v1945 = vld [vmem:[%s1944] sm:$0x1]
  %v1946 = vsel %vm95, %v1940, 0.0
  %1947 = vadd.xlane.f32.xlu0 %v1946
  %v1948 = vpop.xlane.xlu0 %1947
  %v1949 = vsel %vm99, %v1941, 0.0
  %1950 = vadd.xlane.f32.xlu0 %v1949
  %v1951 = vpop.xlane.xlu0 %1950
  %v1952 = vmul.f32 %v1948, %v103
  %v1953 = vmul.f32 %v1951, %v103
  %v1954 = vsub.f32 %v1940, %v1952
  %v1955 = vsub.f32 %v1941, %v1953
  %v1956 = vmul.f32 %v1954, %v1954
  %v1957 = vmul.f32 %v1955, %v1955
  %v1958 = vsel %vm95, %v1956, 0.0
  %1959 = vadd.xlane.f32.xlu0 %v1958
  %v1960 = vpop.xlane.xlu0 %1959
  %v1961 = vsel %vm99, %v1957, 0.0
  %1962 = vadd.xlane.f32.xlu0 %v1961
  %v1963 = vpop.xlane.xlu0 %1962
  %v1964 = vmul.f32 %v1960, %v103
  %v1965 = vmul.f32 %v1963, %v103
  %v1966 = vadd.f32 %v1964, 1e-05
  %v1967 = vadd.f32 %v1965, 1e-05
  %v1968 = vrsqrt.pop %v1966
  %v1969 = vrsqrt.pop %v1967
  %v1970 = vmul.f32 %v1954, %v1968
  %v1971 = vmul.f32 %v1955, %v1969
  %v1973 = vlaneseq
  %v1974 = vshrl.u32 %v1973, 7
  %v1975 = vsub.s32 0, %v1974
  %v1976 = vrot.slane %v1943, %v1975
  %v1978 = vmul.f32 %v1970, %v1976
  %v1979 = vmul.f32 %v1971, %v1976
  %v1981 = vlaneseq
  %v1982 = vshrl.u32 %v1981, 7
  %v1983 = vsub.s32 0, %v1982
  %v1984 = vrot.slane %v1945, %v1983
  %v1986 = vadd.f32 %v1978, %v1984
  %v1987 = vadd.f32 %v1979, %v1984
  %s1988 = scalar_lea.vmem %s15, 16
  %v1989 = vld [vmem:[%s1988] sm:$0xf]
  %v1990 = vld [vmem:[%s1988 + $0x4] sm:$0xf]
  %v1991 = vld [vmem:[%s1988 + $0x8] sm:$0xf]
  %v1992 = vld [vmem:[%s1988 + $0xc] sm:$0xf]
  %v1993 = vpack.c.bf16 %v1987, %v1986
  %s1994 = scalar_lea.vmem %s16, 1
  %v1995 = vld [vmem:[%s1994] sm:$0x1]
  %v1997 = vlaneseq
  %v1998 = vshrl.u32 %v1997, 7
  %v1999 = vsub.s32 0, %v1998
  %v2000 = vrot.slane %v1995, %v1999
  %v2006 = vunpack.c.l.b16 %v1989
  %v2007 = vunpack.c.l.b16 %v1990
  %v2008 = vunpack.c.l.b16 %v1991
  %v2009 = vunpack.c.l.b16 %v1992
  %v2010 = vpack.c.b16 %v2007, %v2006
  %v2011 = vpack.c.b16 %v2009, %v2008
  %v2015 = vsel %vm95, %v1993, 0
  %2017 = vmatprep.subr.bf16.mxu0 0
  %2018 = vmatpush1.bf16.msra.mxu0 %v2010
  %2019 = vmatprep.subr.bf16.mxu0 0
  %2020 = vmatpush1.bf16.msra.mxu0 %v2011
  %2021 = vmatprep.subr.bf16.mxu0 0
  %2022 = vmatpush1.bf16.msra.mxu0 0
  %2023 = vmatprep.subr.bf16.mxu0 0
  %2024 = vmatpush1.bf16.msra.mxu0 0
  %2025 = vmatprep.subr.bf16.mxu0 0
  %2026 = vmatpush1.bf16.msra.mxu0 0
  %2027 = vmatprep.subr.bf16.mxu0 0
  %2028 = vmatpush1.bf16.msra.mxu0 0
  %2029 = vmatprep.subr.bf16.mxu0 0
  %2030 = vmatpush1.bf16.msra.mxu0 0
  %2031 = vmatprep.subr.bf16.mxu0 0
  %2032 = vmatpush1.bf16.msra.mxu0 0
  %2033 = vmatprep.subr.bf16.mxu0 0
  %2034 = vmatpush1.bf16.msra.mxu0 0
  %2035 = vmatprep.subr.bf16.mxu0 0
  %2036 = vmatpush1.bf16.msra.mxu0 0
  %2037 = vmatprep.subr.bf16.mxu0 0
  %2038 = vmatpush1.bf16.msra.mxu0 0
  %2039 = vmatprep.subr.bf16.mxu0 0
  %2040 = vmatpush1.bf16.msra.mxu0 0
  %2041 = vmatprep.subr.bf16.mxu0 0
  %2042 = vmatpush1.bf16.msra.mxu0 0
  %2043 = vmatprep.subr.bf16.mxu0 0
  %2044 = vmatpush1.bf16.msra.mxu0 0
  %2045 = vmatprep.subr.bf16.mxu0 0
  %2046 = vmatpush1.bf16.msra.mxu0 0
  %2047 = vmatprep.subr.bf16.mxu0 0
  %2048 = vmatpush1.bf16.msra.mxu0 0
  %2049 = vmatprep.mubr.bf16.mxu0 0
  %2050 = vmatmul.mubr.bf16.gmra.mrb[0].mxu0 %v2015
  %v2051 = vpop.f32.mrb[0].mxu0
  %v2052 = vadd.f32 %v2000, %v2051
  %v2053 = vpop.f32.mrb[0].mxu0
  %v2054 = vpop.f32.mrb[0].mxu0
  %v2055 = vadd.f32 %v2000, %v2054
  %v2056 = vpop.f32.mrb[0].mxu0
  %2057 = vdwg.mxu0
  %v2058 = vmul.f32 %v2052, %v2052
  %v2059 = vmul.f32 %v2055, %v2055
  %v2060 = vmul.f32 %v2052, %v2058
  %v2061 = vmul.f32 %v2055, %v2059
  %v2062 = vmul.f32 %v2060, 0.044715
  %v2063 = vmul.f32 %v2061, 0.044715
  %v2064 = vadd.f32 %v2052, %v2062
  %v2065 = vadd.f32 %v2055, %v2063
  %v2066 = vmul.f32 %v2064, 0.7978846
  %v2067 = vmul.f32 %v2065, 0.7978846
  %v2068 = vtanh.pop %v2066
  %v2069 = vtanh.pop %v2067
  %v2070 = vadd.f32 %v2068, 1.0
  %v2071 = vadd.f32 %v2069, 1.0
  %v2072 = vmul.f32 %v2070, 0.5
  %v2073 = vmul.f32 %v2071, 0.5
  %v2074 = vmul.f32 %v2052, %v2072
  %v2075 = vmul.f32 %v2055, %v2073
  %s2076 = scalar_lea.vmem %s17, 32
  %v2077 = vld [vmem:[%s2076] sm:$0xf]
  %v2078 = vld [vmem:[%s2076 + $0x4] sm:$0xf]
  %v2079 = vld [vmem:[%s2076 + $0x8] sm:$0xf]
  %v2080 = vld [vmem:[%s2076 + $0xc] sm:$0xf]
  %v2081 = vld [vmem:[%s2076 + $0x10] sm:$0xf]
  %v2082 = vld [vmem:[%s2076 + $0x14] sm:$0xf]
  %v2083 = vld [vmem:[%s2076 + $0x18] sm:$0xf]
  %v2084 = vld [vmem:[%s2076 + $0x1c] sm:$0xf]
  %v2085 = vpack.c.bf16 %v2075, %v2074
  %s2086 = scalar_lea.vmem %s18, 1
  %v2087 = vld [vmem:[%s2086] sm:$0x1]
  %v2089 = vlaneseq
  %v2090 = vshrl.u32 %v2089, 7
  %v2091 = vsub.s32 0, %v2090
  %v2092 = vrot.slane %v2087, %v2091
  %v2102 = vunpack.c.l.b16 %v2077
  %v2103 = vunpack.c.l.b16 %v2078
  %v2104 = vunpack.c.l.b16 %v2079
  %v2105 = vunpack.c.l.b16 %v2080
  %v2106 = vunpack.c.l.b16 %v2081
  %v2107 = vunpack.c.l.b16 %v2082
  %v2108 = vunpack.c.l.b16 %v2083
  %v2109 = vunpack.c.l.b16 %v2084
  %v2110 = vpack.c.b16 %v2103, %v2102
  %v2111 = vpack.c.b16 %v2105, %v2104
  %v2112 = vpack.c.b16 %v2107, %v2106
  %v2113 = vpack.c.b16 %v2109, %v2108
  %v2119 = vsel %vm1083, %v2085, 0
  %2121 = vmatprep.subr.bf16.mxu0 0
  %2122 = vmatpush1.bf16.msra.mxu0 %v2110
  %2123 = vmatprep.subr.bf16.mxu0 0
  %2124 = vmatpush1.bf16.msra.mxu0 %v2111
  %2125 = vmatprep.subr.bf16.mxu0 0
  %2126 = vmatpush1.bf16.msra.mxu0 %v2112
  %2127 = vmatprep.subr.bf16.mxu0 0
  %2128 = vmatpush1.bf16.msra.mxu0 %v2113
  %2129 = vmatprep.subr.bf16.mxu0 0
  %2130 = vmatpush1.bf16.msra.mxu0 0
  %2131 = vmatprep.subr.bf16.mxu0 0
  %2132 = vmatpush1.bf16.msra.mxu0 0
  %2133 = vmatprep.subr.bf16.mxu0 0
  %2134 = vmatpush1.bf16.msra.mxu0 0
  %2135 = vmatprep.subr.bf16.mxu0 0
  %2136 = vmatpush1.bf16.msra.mxu0 0
  %2137 = vmatprep.subr.bf16.mxu0 0
  %2138 = vmatpush1.bf16.msra.mxu0 0
  %2139 = vmatprep.subr.bf16.mxu0 0
  %2140 = vmatpush1.bf16.msra.mxu0 0
  %2141 = vmatprep.subr.bf16.mxu0 0
  %2142 = vmatpush1.bf16.msra.mxu0 0
  %2143 = vmatprep.subr.bf16.mxu0 0
  %2144 = vmatpush1.bf16.msra.mxu0 0
  %2145 = vmatprep.subr.bf16.mxu0 0
  %2146 = vmatpush1.bf16.msra.mxu0 0
  %2147 = vmatprep.subr.bf16.mxu0 0
  %2148 = vmatpush1.bf16.msra.mxu0 0
  %2149 = vmatprep.subr.bf16.mxu0 0
  %2150 = vmatpush1.bf16.msra.mxu0 0
  %2151 = vmatprep.subr.bf16.mxu0 0
  %2152 = vmatpush1.bf16.msra.mxu0 0
  %2153 = vmatprep.mubr.bf16.mxu0 0
  %2154 = vmatmul.mubr.bf16.gmra.mrb[0].mxu0 %v2119
  %v2155 = vpop.f32.mrb[0].mxu0
  %v2156 = vadd.f32 %v2092, %v2155
  %v2157 = vpop.f32.mrb[0].mxu0
  %v2158 = vpop.f32.mrb[0].mxu0
  %v2159 = vadd.f32 %v2092, %v2158
  %v2160 = vpop.f32.mrb[0].mxu0
  %2161 = vdwg.mxu0
  %v2162 = vadd.f32 %v1986, %v2156
  %v2163 = vadd.f32 %v1987, %v2159
  %s2164 = scalar_lea.vmem %s19, 1
  %v2165 = vld [vmem:[%s2164] sm:$0x1]
  %s2166 = scalar_lea.vmem %s20, 1
  %v2167 = vld [vmem:[%s2166] sm:$0x1]
  %v2168 = vsel %vm95, %v2162, 0.0
  %2169 = vadd.xlane.f32.xlu0 %v2168
  %v2170 = vpop.xlane.xlu0 %2169
  %v2171 = vsel %vm99, %v2163, 0.0
  %2172 = vadd.xlane.f32.xlu0 %v2171
  %v2173 = vpop.xlane.xlu0 %2172
  %v2174 = vmul.f32 %v2170, %v103
  %v2175 = vmul.f32 %v2173, %v103
  %v2176 = vsub.f32 %v2162, %v2174
  %v2177 = vsub.f32 %v2163, %v2175
  %v2178 = vmul.f32 %v2176, %v2176
  %v2179 = vmul.f32 %v2177, %v2177
  %v2180 = vsel %vm95, %v2178, 0.0
  %2181 = vadd.xlane.f32.xlu0 %v2180
  %v2182 = vpop.xlane.xlu0 %2181
  %v2183 = vsel %vm99, %v2179, 0.0
  %2184 = vadd.xlane.f32.xlu0 %v2183
  %v2185 = vpop.xlane.xlu0 %2184
  %v2186 = vmul.f32 %v2182, %v103
  %v2187 = vmul.f32 %v2185, %v103
  %v2188 = vadd.f32 %v2186, 1e-05
  %v2189 = vadd.f32 %v2187, 1e-05
  %v2190 = vrsqrt.pop %v2188
  %v2191 = vrsqrt.pop %v2189
  %v2192 = vmul.f32 %v2176, %v2190
  %v2193 = vmul.f32 %v2177, %v2191
  %v2195 = vlaneseq
  %v2196 = vshrl.u32 %v2195, 7
  %v2197 = vsub.s32 0, %v2196
  %v2198 = vrot.slane %v2165, %v2197
  %v2200 = vmul.f32 %v2192, %v2198
  %v2201 = vmul.f32 %v2193, %v2198
  %v2203 = vlaneseq
  %v2204 = vshrl.u32 %v2203, 7
  %v2205 = vsub.s32 0, %v2204
  %v2206 = vrot.slane %v2167, %v2205
  %v2208 = vadd.f32 %v2200, %v2206
  %v2209 = vadd.f32 %v2201, %v2206
  %v2210 = vld [vmem:[%s21] sm:$0xf]
  %v2211 = vld [vmem:[%s21 + $0x4] sm:$0xf]
  %v2212 = vld [vmem:[%s21 + $0x8] sm:$0xf]
  %v2213 = vld [vmem:[%s21 + $0xc] sm:$0xf]
  %v2214 = vpack.c.bf16 %v2209, %v2208
  %v2215 = vld [vmem:[%s22] sm:$0x1]
  %v2217 = vlaneseq
  %v2218 = vshrl.u32 %v2217, 7
  %v2219 = vsub.s32 0, %v2218
  %v2220 = vrot.slane %v2215, %v2219
  %v2226 = vunpack.c.l.b16 %v2210
  %v2227 = vunpack.c.l.b16 %v2211
  %v2228 = vunpack.c.l.b16 %v2212
  %v2229 = vunpack.c.l.b16 %v2213
  %v2230 = vpack.c.b16 %v2227, %v2226
  %v2231 = vpack.c.b16 %v2229, %v2228
  %v2235 = vsel %vm95, %v2214, 0
  %2237 = vmatprep.subr.bf16.mxu0 0
  %2238 = vmatpush1.bf16.msra.mxu0 %v2230
  %2239 = vmatprep.subr.bf16.mxu0 0
  %2240 = vmatpush1.bf16.msra.mxu0 %v2231
  %2241 = vmatprep.subr.bf16.mxu0 0
  %2242 = vmatpush1.bf16.msra.mxu0 0
  %2243 = vmatprep.subr.bf16.mxu0 0
  %2244 = vmatpush1.bf16.msra.mxu0 0
  %2245 = vmatprep.subr.bf16.mxu0 0
  %2246 = vmatpush1.bf16.msra.mxu0 0
  %2247 = vmatprep.subr.bf16.mxu0 0
  %2248 = vmatpush1.bf16.msra.mxu0 0
  %2249 = vmatprep.subr.bf16.mxu0 0
  %2250 = vmatpush1.bf16.msra.mxu0 0
  %2251 = vmatprep.subr.bf16.mxu0 0
  %2252 = vmatpush1.bf16.msra.mxu0 0
  %2253 = vmatprep.subr.bf16.mxu0 0
  %2254 = vmatpush1.bf16.msra.mxu0 0
  %2255 = vmatprep.subr.bf16.mxu0 0
  %2256 = vmatpush1.bf16.msra.mxu0 0
  %2257 = vmatprep.subr.bf16.mxu0 0
  %2258 = vmatpush1.bf16.msra.mxu0 0
  %2259 = vmatprep.subr.bf16.mxu0 0
  %2260 = vmatpush1.bf16.msra.mxu0 0
  %2261 = vmatprep.subr.bf16.mxu0 0
  %2262 = vmatpush1.bf16.msra.mxu0 0
  %2263 = vmatprep.subr.bf16.mxu0 0
  %2264 = vmatpush1.bf16.msra.mxu0 0
  %2265 = vmatprep.subr.bf16.mxu0 0
  %2266 = vmatpush1.bf16.msra.mxu0 0
  %2267 = vmatprep.subr.bf16.mxu0 0
  %2268 = vmatpush1.bf16.msra.mxu0 0
  %2269 = vmatprep.mubr.bf16.mxu0 0
  %2270 = vmatmul.mubr.bf16.gmra.mrb[0].mxu0 %v2235
  %v2271 = vpop.f32.mrb[0].mxu0
  %v2272 = vadd.f32 %v2220, %v2271
  %v2273 = vpop.f32.mrb[0].mxu0
  %v2274 = vpop.f32.mrb[0].mxu0
  %v2275 = vadd.f32 %v2220, %v2274
  %v2276 = vpop.f32.mrb[0].mxu0
  %2277 = vdwg.mxu0
  %v2278 = vmul.f32 %v2272, %v2272
  %v2279 = vmul.f32 %v2275, %v2275
  %v2280 = vmul.f32 %v2272, %v2278
  %v2281 = vmul.f32 %v2275, %v2279
  %v2282 = vmul.f32 %v2280, 0.044715
  %v2283 = vmul.f32 %v2281, 0.044715
  %v2284 = vadd.f32 %v2272, %v2282
  %v2285 = vadd.f32 %v2275, %v2283
  %v2286 = vmul.f32 %v2284, 0.7978846
  %v2287 = vmul.f32 %v2285, 0.7978846
  %v2288 = vtanh.pop %v2286
  %v2289 = vtanh.pop %v2287
  %v2290 = vadd.f32 %v2288, 1.0
  %v2291 = vadd.f32 %v2289, 1.0
  %v2292 = vmul.f32 %v2290, 0.5
  %v2293 = vmul.f32 %v2291, 0.5
  %v2294 = vmul.f32 %v2272, %v2292
  %v2295 = vmul.f32 %v2275, %v2293
  %v2296 = vld [vmem:[%s23] sm:$0x1]
  %v2297 = vld [vmem:[%s24] sm:$0x1]
  %v2298 = vsel %vm95, %v2294, 0.0
  %2299 = vadd.xlane.f32.xlu0 %v2298
  %v2300 = vpop.xlane.xlu0 %2299
  %v2301 = vsel %vm99, %v2295, 0.0
  %2302 = vadd.xlane.f32.xlu0 %v2301
  %v2303 = vpop.xlane.xlu0 %2302
  %v2304 = vmul.f32 %v2300, %v103
  %v2305 = vmul.f32 %v2303, %v103
  %v2306 = vsub.f32 %v2294, %v2304
  %v2307 = vsub.f32 %v2295, %v2305
  %v2308 = vmul.f32 %v2306, %v2306
  %v2309 = vmul.f32 %v2307, %v2307
  %v2310 = vsel %vm95, %v2308, 0.0
  %2311 = vadd.xlane.f32.xlu0 %v2310
  %v2312 = vpop.xlane.xlu0 %2311
  %v2313 = vsel %vm99, %v2309, 0.0
  %2314 = vadd.xlane.f32.xlu0 %v2313
  %v2315 = vpop.xlane.xlu0 %2314
  %v2316 = vmul.f32 %v2312, %v103
  %v2317 = vmul.f32 %v2315, %v103
  %v2318 = vadd.f32 %v2316, 1e-05
  %v2319 = vadd.f32 %v2317, 1e-05
  %v2320 = vrsqrt.pop %v2318
  %v2321 = vrsqrt.pop %v2319
  %v2322 = vmul.f32 %v2306, %v2320
  %v2323 = vmul.f32 %v2307, %v2321
  %v2325 = vlaneseq
  %v2326 = vshrl.u32 %v2325, 7
  %v2327 = vsub.s32 0, %v2326
  %v2328 = vrot.slane %v2296, %v2327
  %v2330 = vmul.f32 %v2322, %v2328
  %v2331 = vmul.f32 %v2323, %v2328
  %v2333 = vlaneseq
  %v2334 = vshrl.u32 %v2333, 7
  %v2335 = vsub.s32 0, %v2334
  %v2336 = vrot.slane %v2297, %v2335
  %v2338 = vadd.f32 %v2330, %v2336
  %v2339 = vadd.f32 %v2331, %v2336
  %v2340 = vld [vmem:[%s25] sm:$0xf]
  %v2341 = vld [vmem:[%s25 + $0x4] sm:$0xf]
  %v2342 = vld [vmem:[%s25 + $0x8] sm:$0xf]
  %v2343 = vld [vmem:[%s25 + $0xc] sm:$0xf]
  %v2344 = vpack.c.bf16 %v2339, %v2338
  %v2345 = vld [vmem:[%s26] sm:$0x1]
  %v2347 = vlaneseq
  %v2348 = vshrl.u32 %v2347, 7
  %v2349 = vsub.s32 0, %v2348
  %v2350 = vrot.slane %v2345, %v2349
  %v2356 = vunpack.c.l.b16 %v2340
  %v2357 = vunpack.c.l.b16 %v2341
  %v2358 = vunpack.c.l.b16 %v2342
  %v2359 = vunpack.c.l.b16 %v2343
  %v2360 = vpack.c.b16 %v2357, %v2356
  %v2361 = vpack.c.b16 %v2359, %v2358
  %v2365 = vsel %vm95, %v2344, 0
  %2367 = vmatprep.subr.bf16.mxu0 0
  %2368 = vmatpush1.bf16.msra.mxu0 %v2360
  %2369 = vmatprep.subr.bf16.mxu0 0
  %2370 = vmatpush1.bf16.msra.mxu0 %v2361
  %2371 = vmatprep.subr.bf16.mxu0 0
  %2372 = vmatpush1.bf16.msra.mxu0 0
  %2373 = vmatprep.subr.bf16.mxu0 0
  %2374 = vmatpush1.bf16.msra.mxu0 0
  %2375 = vmatprep.subr.bf16.mxu0 0
  %2376 = vmatpush1.bf16.msra.mxu0 0
  %2377 = vmatprep.subr.bf16.mxu0 0
  %2378 = vmatpush1.bf16.msra.mxu0 0
  %2379 = vmatprep.subr.bf16.mxu0 0
  %2380 = vmatpush1.bf16.msra.mxu0 0
  %2381 = vmatprep.subr.bf16.mxu0 0
  %2382 = vmatpush1.bf16.msra.mxu0 0
  %2383 = vmatprep.subr.bf16.mxu0 0
  %2384 = vmatpush1.bf16.msra.mxu0 0
  %2385 = vmatprep.subr.bf16.mxu0 0
  %2386 = vmatpush1.bf16.msra.mxu0 0
  %2387 = vmatprep.subr.bf16.mxu0 0
  %2388 = vmatpush1.bf16.msra.mxu0 0
  %2389 = vmatprep.subr.bf16.mxu0 0
  %2390 = vmatpush1.bf16.msra.mxu0 0
  %2391 = vmatprep.subr.bf16.mxu0 0
  %2392 = vmatpush1.bf16.msra.mxu0 0
  %2393 = vmatprep.subr.bf16.mxu0 0
  %2394 = vmatpush1.bf16.msra.mxu0 0
  %2395 = vmatprep.subr.bf16.mxu0 0
  %2396 = vmatpush1.bf16.msra.mxu0 0
  %2397 = vmatprep.subr.bf16.mxu0 0
  %2398 = vmatpush1.bf16.msra.mxu0 0
  %2399 = vmatprep.mubr.bf16.mxu0 0
  %2400 = vmatmul.mubr.bf16.gmra.mrb[0].mxu0 %v2365
  %v2401 = vpop.f32.mrb[0].mxu0
  %v2402 = vadd.f32 %v2350, %v2401
  %v2403 = vpop.f32.mrb[0].mxu0
  %v2404 = vpop.f32.mrb[0].mxu0
  %v2405 = vadd.f32 %v2350, %v2404
  %v2406 = vpop.f32.mrb[0].mxu0
  %2407 = vdwg.mxu0
  %2408 = vst.msk [vmem:[%s27] sm:$0xff] %vm1083, %v2402
  %vm2409 = vcmask 517120
  %2410 = vst.msk [vmem:[%s27 + $0x8] sm:$0x3] %vm2409, %v2405
  %s2411 = scalar_lea.vmem %s0, 16
  %v2412 = vld [vmem:[%s2411] sm:$0xff]
  %v2413 = vld [vmem:[%s2411 + $0x8] sm:$0x3]
  %v2414 = vadd.f32 %v2412, %v87
  %v2415 = vadd.f32 %v2413, %v88
  %v2416 = vsel %vm95, %v2414, 0.0
  %2417 = vadd.xlane.f32.xlu0 %v2416
  %v2418 = vpop.xlane.xlu0 %2417
  %v2419 = vsel %vm99, %v2415, 0.0
  %2420 = vadd.xlane.f32.xlu0 %v2419
  %v2421 = vpop.xlane.xlu0 %2420
  %v2422 = vmul.f32 %v2418, %v103
  %v2423 = vmul.f32 %v2421, %v103
  %v2424 = vsub.f32 %v2414, %v2422
  %v2425 = vsub.f32 %v2415, %v2423
  %v2426 = vmul.f32 %v2424, %v2424
  %v2427 = vmul.f32 %v2425, %v2425
  %v2428 = vsel %vm95, %v2426, 0.0
  %2429 = vadd.xlane.f32.xlu0 %v2428
  %v2430 = vpop.xlane.xlu0 %2429
  %v2431 = vsel %vm99, %v2427, 0.0
  %2432 = vadd.xlane.f32.xlu0 %v2431
  %v2433 = vpop.xlane.xlu0 %2432
  %v2434 = vmul.f32 %v2430, %v103
  %v2435 = vmul.f32 %v2433, %v103
  %v2436 = vadd.f32 %v2434, 1e-05
  %v2437 = vadd.f32 %v2435, 1e-05
  %v2438 = vrsqrt.pop %v2436
  %v2439 = vrsqrt.pop %v2437
  %v2440 = vmul.f32 %v2424, %v2438
  %v2441 = vmul.f32 %v2425, %v2439
  %v2442 = vmul.f32 %v2440, %v128
  %v2443 = vmul.f32 %v2441, %v128
  %v2444 = vadd.f32 %v2442, %v136
  %v2445 = vadd.f32 %v2443, %v136
  %s2446 = scalar_lea.vmem %s1, 1
  %v2447 = vld [vmem:[%s2446] sm:$0x1]
  %v2448 = vsub.f32 1.0, %v2447
  %v2449 = vmul.f32 %v2448, -1e+09
  %v2450 = vld [vmem:[%s5] sm:$0xf]
  %v2451 = vld [vmem:[%s5 + $0x4] sm:$0xf]
  %v2452 = vld [vmem:[%s5 + $0x8] sm:$0xf]
  %v2453 = vld [vmem:[%s5 + $0xc] sm:$0xf]
  %v2454 = vpack.c.bf16 %v2445, %v2444
  %v2455 = vld [vmem:[%s6] sm:$0x1]
  %v2457 = vlaneseq
  %v2458 = vshrl.u32 %v2457, 7
  %v2459 = vsub.s32 0, %v2458
  %v2460 = vrot.slane %v2455, %v2459
  %v2466 = vunpack.c.l.b16 %v2450
  %v2467 = vunpack.c.l.b16 %v2451
  %v2468 = vunpack.c.l.b16 %v2452
  %v2469 = vunpack.c.l.b16 %v2453
  %v2470 = vpack.c.b16 %v2467, %v2466
  %v2471 = vpack.c.b16 %v2469, %v2468
  %v2475 = vsel %vm95, %v2454, 0
  %2477 = vmatprep.subr.bf16.mxu0 0
  %2478 = vmatpush1.bf16.msra.mxu0 %v2470
  %2479 = vmatprep.subr.bf16.mxu0 0
  %2480 = vmatpush1.bf16.msra.mxu0 %v2471
  %2481 = vmatprep.subr.bf16.mxu0 0
  %2482 = vmatpush1.bf16.msra.mxu0 0
  %2483 = vmatprep.subr.bf16.mxu0 0
  %2484 = vmatpush1.bf16.msra.mxu0 0
  %2485 = vmatprep.subr.bf16.mxu0 0
  %2486 = vmatpush1.bf16.msra.mxu0 0
  %2487 = vmatprep.subr.bf16.mxu0 0
  %2488 = vmatpush1.bf16.msra.mxu0 0
  %2489 = vmatprep.subr.bf16.mxu0 0
  %2490 = vmatpush1.bf16.msra.mxu0 0
  %2491 = vmatprep.subr.bf16.mxu0 0
  %2492 = vmatpush1.bf16.msra.mxu0 0
  %2493 = vmatprep.subr.bf16.mxu0 0
  %2494 = vmatpush1.bf16.msra.mxu0 0
  %2495 = vmatprep.subr.bf16.mxu0 0
  %2496 = vmatpush1.bf16.msra.mxu0 0
  %2497 = vmatprep.subr.bf16.mxu0 0
  %2498 = vmatpush1.bf16.msra.mxu0 0
  %2499 = vmatprep.subr.bf16.mxu0 0
  %2500 = vmatpush1.bf16.msra.mxu0 0
  %2501 = vmatprep.subr.bf16.mxu0 0
  %2502 = vmatpush1.bf16.msra.mxu0 0
  %2503 = vmatprep.subr.bf16.mxu0 0
  %2504 = vmatpush1.bf16.msra.mxu0 0
  %2505 = vmatprep.subr.bf16.mxu0 0
  %2506 = vmatpush1.bf16.msra.mxu0 0
  %2507 = vmatprep.subr.bf16.mxu0 0
  %2508 = vmatpush1.bf16.msra.mxu0 0
  %2509 = vmatprep.mubr.bf16.mxu0 0
  %2510 = vmatmul.mubr.bf16.gmra.mrb[0].mxu0 %v2475
  %v2511 = vpop.f32.mrb[0].mxu0
  %v2512 = vadd.f32 %v2460, %v2511
  %v2513 = vpop.f32.mrb[0].mxu0
  %v2514 = vpop.f32.mrb[0].mxu0
  %v2515 = vadd.f32 %v2460, %v2514
  %v2516 = vpop.f32.mrb[0].mxu0
  %2517 = vdwg.mxu0
  %v2518 = vld [vmem:[%s7] sm:$0xf]
  %v2519 = vld [vmem:[%s7 + $0x4] sm:$0xf]
  %v2520 = vld [vmem:[%s7 + $0x8] sm:$0xf]
  %v2521 = vld [vmem:[%s7 + $0xc] sm:$0xf]
  %v2522 = vld [vmem:[%s8] sm:$0x1]
  %v2524 = vlaneseq
  %v2525 = vshrl.u32 %v2524, 7
  %v2526 = vsub.s32 0, %v2525
  %v2527 = vrot.slane %v2522, %v2526
  %v2533 = vunpack.c.l.b16 %v2518
  %v2534 = vunpack.c.l.b16 %v2519
  %v2535 = vunpack.c.l.b16 %v2520
  %v2536 = vunpack.c.l.b16 %v2521
  %v2537 = vpack.c.b16 %v2534, %v2533
  %v2538 = vpack.c.b16 %v2536, %v2535
  %2541 = vmatprep.subr.bf16.mxu0 0
  %2542 = vmatpush1.bf16.msra.mxu0 %v2537
  %2543 = vmatprep.subr.bf16.mxu0 0
  %2544 = vmatpush1.bf16.msra.mxu0 %v2538
  %2545 = vmatprep.subr.bf16.mxu0 0
  %2546 = vmatpush1.bf16.msra.mxu0 0
  %2547 = vmatprep.subr.bf16.mxu0 0
  %2548 = vmatpush1.bf16.msra.mxu0 0
  %2549 = vmatprep.subr.bf16.mxu0 0
  %2550 = vmatpush1.bf16.msra.mxu0 0
  %2551 = vmatprep.subr.bf16.mxu0 0
  %2552 = vmatpush1.bf16.msra.mxu0 0
  %2553 = vmatprep.subr.bf16.mxu0 0
  %2554 = vmatpush1.bf16.msra.mxu0 0
  %2555 = vmatprep.subr.bf16.mxu0 0
  %2556 = vmatpush1.bf16.msra.mxu0 0
  %2557 = vmatprep.subr.bf16.mxu0 0
  %2558 = vmatpush1.bf16.msra.mxu0 0
  %2559 = vmatprep.subr.bf16.mxu0 0
  %2560 = vmatpush1.bf16.msra.mxu0 0
  %2561 = vmatprep.subr.bf16.mxu0 0
  %2562 = vmatpush1.bf16.msra.mxu0 0
  %2563 = vmatprep.subr.bf16.mxu0 0
  %2564 = vmatpush1.bf16.msra.mxu0 0
  %2565 = vmatprep.subr.bf16.mxu0 0
  %2566 = vmatpush1.bf16.msra.mxu0 0
  %2567 = vmatprep.subr.bf16.mxu0 0
  %2568 = vmatpush1.bf16.msra.mxu0 0
  %2569 = vmatprep.subr.bf16.mxu0 0
  %2570 = vmatpush1.bf16.msra.mxu0 0
  %2571 = vmatprep.subr.bf16.mxu0 0
  %2572 = vmatpush1.bf16.msra.mxu0 0
  %2573 = vmatprep.mubr.bf16.mxu0 0
  %2574 = vmatmul.mubr.bf16.gmra.mrb[0].mxu0 %v2475
  %v2575 = vpop.f32.mrb[0].mxu0
  %v2576 = vadd.f32 %v2527, %v2575
  %v2577 = vpop.f32.mrb[0].mxu0
  %v2578 = vpop.f32.mrb[0].mxu0
  %v2579 = vadd.f32 %v2527, %v2578
  %v2580 = vpop.f32.mrb[0].mxu0
  %2581 = vdwg.mxu0
  %v2582 = vld [vmem:[%s9] sm:$0xf]
  %v2583 = vld [vmem:[%s9 + $0x4] sm:$0xf]
  %v2584 = vld [vmem:[%s9 + $0x8] sm:$0xf]
  %v2585 = vld [vmem:[%s9 + $0xc] sm:$0xf]
  %v2586 = vld [vmem:[%s10] sm:$0x1]
  %v2588 = vlaneseq
  %v2589 = vshrl.u32 %v2588, 7
  %v2590 = vsub.s32 0, %v2589
  %v2591 = vrot.slane %v2586, %v2590
  %v2597 = vunpack.c.l.b16 %v2582
  %v2598 = vunpack.c.l.b16 %v2583
  %v2599 = vunpack.c.l.b16 %v2584
  %v2600 = vunpack.c.l.b16 %v2585
  %v2601 = vpack.c.b16 %v2598, %v2597
  %v2602 = vpack.c.b16 %v2600, %v2599
  %2605 = vmatprep.subr.bf16.mxu0 0
  %2606 = vmatpush1.bf16.msra.mxu0 %v2601
  %2607 = vmatprep.subr.bf16.mxu0 0
  %2608 = vmatpush1.bf16.msra.mxu0 %v2602
  %2609 = vmatprep.subr.bf16.mxu0 0
  %2610 = vmatpush1.bf16.msra.mxu0 0
  %2611 = vmatprep.subr.bf16.mxu0 0
  %2612 = vmatpush1.bf16.msra.mxu0 0
  %2613 = vmatprep.subr.bf16.mxu0 0
  %2614 = vmatpush1.bf16.msra.mxu0 0
  %2615 = vmatprep.subr.bf16.mxu0 0
  %2616 = vmatpush1.bf16.msra.mxu0 0
  %2617 = vmatprep.subr.bf16.mxu0 0
  %2618 = vmatpush1.bf16.msra.mxu0 0
  %2619 = vmatprep.subr.bf16.mxu0 0
  %2620 = vmatpush1.bf16.msra.mxu0 0
  %2621 = vmatprep.subr.bf16.mxu0 0
  %2622 = vmatpush1.bf16.msra.mxu0 0
  %2623 = vmatprep.subr.bf16.mxu0 0
  %2624 = vmatpush1.bf16.msra.mxu0 0
  %2625 = vmatprep.subr.bf16.mxu0 0
  %2626 = vmatpush1.bf16.msra.mxu0 0
  %2627 = vmatprep.subr.bf16.mxu0 0
  %2628 = vmatpush1.bf16.msra.mxu0 0
  %2629 = vmatprep.subr.bf16.mxu0 0
  %2630 = vmatpush1.bf16.msra.mxu0 0
  %2631 = vmatprep.subr.bf16.mxu0 0
  %2632 = vmatpush1.bf16.msra.mxu0 0
  %2633 = vmatprep.subr.bf16.mxu0 0
  %2634 = vmatpush1.bf16.msra.mxu0 0
  %2635 = vmatprep.subr.bf16.mxu0 0
  %2636 = vmatpush1.bf16.msra.mxu0 0
  %2637 = vmatprep.mubr.bf16.mxu0 0
  %2638 = vmatmul.mubr.bf16.gmra.mrb[0].mxu0 %v2475
  %v2639 = vpop.f32.mrb[0].mxu0
  %v2640 = vadd.f32 %v2591, %v2639
  %v2641 = vpop.f32.mrb[0].mxu0
  %v2642 = vpop.f32.mrb[0].mxu0
  %v2643 = vadd.f32 %v2591, %v2642
  %v2644 = vpop.f32.mrb[0].mxu0
  %2645 = vdwg.mxu0
  %v2646 = vpack.c.bf16 %v2515, %v2512
  %v2647 = vpack.c.bf16 %v2579, %v2576
  %v2649 = vsel %vm341, %v2646, 0
  %v2652 = vsel %vm341, %v2647, 0
  %2654 = vmatprep.subr.bf16.mxu0 0
  %2655 = vmatpush1.bf16.xpose.msra.mxu0 %v2652
  %2656 = vmatprep.subr.bf16.mxu0 0
  %2657 = vmatpush1.bf16.xpose.msra.mxu0 0
  %2658 = vmatprep.subr.bf16.mxu0 0
  %2659 = vmatpush1.bf16.xpose.msra.mxu0 0
  %2660 = vmatprep.subr.bf16.mxu0 0
  %2661 = vmatpush1.bf16.xpose.msra.mxu0 0
  %2662 = vmatprep.subr.bf16.mxu0 0
  %2663 = vmatpush1.bf16.xpose.msra.mxu0 0
  %2664 = vmatprep.subr.bf16.mxu0 0
  %2665 = vmatpush1.bf16.xpose.msra.mxu0 0
  %2666 = vmatprep.subr.bf16.mxu0 0
  %2667 = vmatpush1.bf16.xpose.msra.mxu0 0
  %2668 = vmatprep.subr.bf16.mxu0 0
  %2669 = vmatpush1.bf16.xpose.msra.mxu0 0
  %2670 = vmatprep.subr.bf16.mxu0 0
  %2671 = vmatpush1.bf16.xpose.msra.mxu0 0
  %2672 = vmatprep.subr.bf16.mxu0 0
  %2673 = vmatpush1.bf16.xpose.msra.mxu0 0
  %2674 = vmatprep.subr.bf16.mxu0 0
  %2675 = vmatpush1.bf16.xpose.msra.mxu0 0
  %2676 = vmatprep.subr.bf16.mxu0 0
  %2677 = vmatpush1.bf16.xpose.msra.mxu0 0
  %2678 = vmatprep.subr.bf16.mxu0 0
  %2679 = vmatpush1.bf16.xpose.msra.mxu0 0
  %2680 = vmatprep.subr.bf16.mxu0 0
  %2681 = vmatpush1.bf16.xpose.msra.mxu0 0
  %2682 = vmatprep.subr.bf16.mxu0 0
  %2683 = vmatpush1.bf16.xpose.msra.mxu0 0
  %2684 = vmatprep.subr.bf16.mxu0 0
  %2685 = vmatpush1.bf16.xpose.msra.mxu0 0
  %2686 = vmatprep.mubr.bf16.mxu0 0
  %2687 = vmatmul.mubr.bf16.gmra.mrb[0].mxu0 %v2649
  %v2688 = vpop.f32.mrb[0].mxu0
  %v2689 = vadd.f32 0.0, %v2688
  %v2690 = vpop.f32.mrb[0].mxu0
  %v2691 = vpop.f32.mrb[0].mxu0
  %v2692 = vadd.f32 0.0, %v2691
  %v2693 = vpop.f32.mrb[0].mxu0
  %2694 = vdwg.mxu0
  %v2695 = vmul.f32 %v2689, 0.25
  %v2696 = vmul.f32 %v2692, 0.25
  %v2698 = vlaneseq
  %v2699 = vshrl.u32 %v2698, 7
  %v2700 = vsub.s32 0, %v2699
  %v2701 = vrot.slane %v2449, %v2700
  %v2703 = vadd.f32 %v2695, %v2701
  %v2704 = vadd.f32 %v2696, %v2701
  %v2705 = vsel %vm399, %v2703, -inf
  %2706 = vmax.xlane.f32.xlu0 %v2705
  %v2707 = vpop.xlane.xlu0 %2706
  %v2708 = vsel %vm403, %v2704, -inf
  %2709 = vmax.xlane.f32.xlu0 %v2708
  %v2710 = vpop.xlane.xlu0 %2709
  %v2711 = vsub.f32 %v2703, %v2707
  %v2712 = vsub.f32 %v2704, %v2710
  %v2713 = vmul.f32 %v2711, 1.442695
  %v2714 = vpow.pop %v2713
  %v2715 = vmul.f32 %v2712, 1.442695
  %v2716 = vpow.pop %v2715
  %v2717 = vsel %vm399, %v2714, 0.0
  %2718 = vadd.xlane.f32.xlu0 %v2717
  %v2719 = vpop.xlane.xlu0 %2718
  %v2720 = vsel %vm403, %v2716, 0.0
  %2721 = vadd.xlane.f32.xlu0 %v2720
  %v2722 = vpop.xlane.xlu0 %2721
  %v2723 = vrcp.pop %v2719
  %v2724 = vmul.f32 %v2714, %v2723
  %v2725 = vrcp.pop %v2722
  %v2726 = vmul.f32 %v2716, %v2725
  %v2727 = vpack.c.bf16 %v2726, %v2724
  %v2728 = vpack.c.bf16 %v2643, %v2640
  %v2730 = vsel %vm399, %v2727, 0
  %v2733 = vsel %vm428, %v2728, 0
  %2735 = vmatprep.subr.bf16.mxu0 0
  %2736 = vmatpush1.bf16.msra.mxu0 %v2733
  %2737 = vmatprep.subr.bf16.mxu0 0
  %2738 = vmatpush1.bf16.msra.mxu0 0
  %2739 = vmatprep.subr.bf16.mxu0 0
  %2740 = vmatpush1.bf16.msra.mxu0 0
  %2741 = vmatprep.subr.bf16.mxu0 0
  %2742 = vmatpush1.bf16.msra.mxu0 0
  %2743 = vmatprep.subr.bf16.mxu0 0
  %2744 = vmatpush1.bf16.msra.mxu0 0
  %2745 = vmatprep.subr.bf16.mxu0 0
  %2746 = vmatpush1.bf16.msra.mxu0 0
  %2747 = vmatprep.subr.bf16.mxu0 0
  %2748 = vmatpush1.bf16.msra.mxu0 0
  %2749 = vmatprep.subr.bf16.mxu0 0
  %2750 = vmatpush1.bf16.msra.mxu0 0
  %2751 = vmatprep.subr.bf16.mxu0 0
  %2752 = vmatpush1.bf16.msra.mxu0 0
  %2753 = vmatprep.subr.bf16.mxu0 0
  %2754 = vmatpush1.bf16.msra.mxu0 0
  %2755 = vmatprep.subr.bf16.mxu0 0
  %2756 = vmatpush1.bf16.msra.mxu0 0
  %2757 = vmatprep.subr.bf16.mxu0 0
  %2758 = vmatpush1.bf16.msra.mxu0 0
  %2759 = vmatprep.subr.bf16.mxu0 0
  %2760 = vmatpush1.bf16.msra.mxu0 0
  %2761 = vmatprep.subr.bf16.mxu0 0
  %2762 = vmatpush1.bf16.msra.mxu0 0
  %2763 = vmatprep.subr.bf16.mxu0 0
  %2764 = vmatpush1.bf16.msra.mxu0 0
  %2765 = vmatprep.subr.bf16.mxu0 0
  %2766 = vmatpush1.bf16.msra.mxu0 0
  %2767 = vmatprep.mubr.bf16.mxu0 0
  %2768 = vmatmul.mubr.bf16.gmra.mrb[0].mxu0 %v2730
  %v2769 = vpop.f32.mrb[0].mxu0
  %v2770 = vadd.f32 0.0, %v2769
  %v2771 = vpop.f32.mrb[0].mxu0
  %v2772 = vpop.f32.mrb[0].mxu0
  %v2773 = vadd.f32 0.0, %v2772
  %v2774 = vpop.f32.mrb[0].mxu0
  %2775 = vdwg.mxu0
  %v2776 = vld [vmem:[%s11] sm:$0xf]
  %v2777 = vld [vmem:[%s11 + $0x4] sm:$0xf]
  %v2778 = vpack.c.bf16 %v2773, %v2770
  %v2779 = vld [vmem:[%s476] sm:$0xf]
  %v2780 = vld [vmem:[%s476 + $0x4] sm:$0xf]
  %v2781 = vld [vmem:[%s476 + $0x8] sm:$0xf]
  %v2782 = vld [vmem:[%s476 + $0xc] sm:$0xf]
  %v2783 = vld [vmem:[%s481] sm:$0x1]
  %v2785 = vlaneseq
  %v2786 = vshrl.u32 %v2785, 7
  %v2787 = vsub.s32 0, %v2786
  %v2788 = vrot.slane %v2783, %v2787
  %v2794 = vunpack.c.l.b16 %v2779
  %v2795 = vunpack.c.l.b16 %v2780
  %v2796 = vunpack.c.l.b16 %v2781
  %v2797 = vunpack.c.l.b16 %v2782
  %v2798 = vpack.c.b16 %v2795, %v2794
  %v2799 = vpack.c.b16 %v2797, %v2796
  %2802 = vmatprep.subr.bf16.mxu0 0
  %2803 = vmatpush1.bf16.msra.mxu0 %v2798
  %2804 = vmatprep.subr.bf16.mxu0 0
  %2805 = vmatpush1.bf16.msra.mxu0 %v2799
  %2806 = vmatprep.subr.bf16.mxu0 0
  %2807 = vmatpush1.bf16.msra.mxu0 0
  %2808 = vmatprep.subr.bf16.mxu0 0
  %2809 = vmatpush1.bf16.msra.mxu0 0
  %2810 = vmatprep.subr.bf16.mxu0 0
  %2811 = vmatpush1.bf16.msra.mxu0 0
  %2812 = vmatprep.subr.bf16.mxu0 0
  %2813 = vmatpush1.bf16.msra.mxu0 0
  %2814 = vmatprep.subr.bf16.mxu0 0
  %2815 = vmatpush1.bf16.msra.mxu0 0
  %2816 = vmatprep.subr.bf16.mxu0 0
  %2817 = vmatpush1.bf16.msra.mxu0 0
  %2818 = vmatprep.subr.bf16.mxu0 0
  %2819 = vmatpush1.bf16.msra.mxu0 0
  %2820 = vmatprep.subr.bf16.mxu0 0
  %2821 = vmatpush1.bf16.msra.mxu0 0
  %2822 = vmatprep.subr.bf16.mxu0 0
  %2823 = vmatpush1.bf16.msra.mxu0 0
  %2824 = vmatprep.subr.bf16.mxu0 0
  %2825 = vmatpush1.bf16.msra.mxu0 0
  %2826 = vmatprep.subr.bf16.mxu0 0
  %2827 = vmatpush1.bf16.msra.mxu0 0
  %2828 = vmatprep.subr.bf16.mxu0 0
  %2829 = vmatpush1.bf16.msra.mxu0 0
  %2830 = vmatprep.subr.bf16.mxu0 0
  %2831 = vmatpush1.bf16.msra.mxu0 0
  %2832 = vmatprep.subr.bf16.mxu0 0
  %2833 = vmatpush1.bf16.msra.mxu0 0
  %2834 = vmatprep.mubr.bf16.mxu0 0
  %2835 = vmatmul.mubr.bf16.gmra.mrb[0].mxu0 %v2475
  %v2836 = vpop.f32.mrb[0].mxu0
  %v2837 = vadd.f32 %v2788, %v2836
  %v2838 = vpop.f32.mrb[0].mxu0
  %v2839 = vpop.f32.mrb[0].mxu0
  %v2840 = vadd.f32 %v2788, %v2839
  %v2841 = vpop.f32.mrb[0].mxu0
  %2842 = vdwg.mxu0
  %v2843 = vld [vmem:[%s542] sm:$0xf]
  %v2844 = vld [vmem:[%s542 + $0x4] sm:$0xf]
  %v2845 = vld [vmem:[%s542 + $0x8] sm:$0xf]
  %v2846 = vld [vmem:[%s542 + $0xc] sm:$0xf]
  %v2847 = vld [vmem:[%s547] sm:$0x1]
  %v2849 = vlaneseq
  %v2850 = vshrl.u32 %v2849, 7
  %v2851 = vsub.s32 0, %v2850
  %v2852 = vrot.slane %v2847, %v2851
  %v2858 = vunpack.c.l.b16 %v2843
  %v2859 = vunpack.c.l.b16 %v2844
  %v2860 = vunpack.c.l.b16 %v2845
  %v2861 = vunpack.c.l.b16 %v2846
  %v2862 = vpack.c.b16 %v2859, %v2858
  %v2863 = vpack.c.b16 %v2861, %v2860
  %2866 = vmatprep.subr.bf16.mxu0 0
  %2867 = vmatpush1.bf16.msra.mxu0 %v2862
  %2868 = vmatprep.subr.bf16.mxu0 0
  %2869 = vmatpush1.bf16.msra.mxu0 %v2863
  %2870 = vmatprep.subr.bf16.mxu0 0
  %2871 = vmatpush1.bf16.msra.mxu0 0
  %2872 = vmatprep.subr.bf16.mxu0 0
  %2873 = vmatpush1.bf16.msra.mxu0 0
  %2874 = vmatprep.subr.bf16.mxu0 0
  %2875 = vmatpush1.bf16.msra.mxu0 0
  %2876 = vmatprep.subr.bf16.mxu0 0
  %2877 = vmatpush1.bf16.msra.mxu0 0
  %2878 = vmatprep.subr.bf16.mxu0 0
  %2879 = vmatpush1.bf16.msra.mxu0 0
  %2880 = vmatprep.subr.bf16.mxu0 0
  %2881 = vmatpush1.bf16.msra.mxu0 0
  %2882 = vmatprep.subr.bf16.mxu0 0
  %2883 = vmatpush1.bf16.msra.mxu0 0
  %2884 = vmatprep.subr.bf16.mxu0 0
  %2885 = vmatpush1.bf16.msra.mxu0 0
  %2886 = vmatprep.subr.bf16.mxu0 0
  %2887 = vmatpush1.bf16.msra.mxu0 0
  %2888 = vmatprep.subr.bf16.mxu0 0
  %2889 = vmatpush1.bf16.msra.mxu0 0
  %2890 = vmatprep.subr.bf16.mxu0 0
  %2891 = vmatpush1.bf16.msra.mxu0 0
  %2892 = vmatprep.subr.bf16.mxu0 0
  %2893 = vmatpush1.bf16.msra.mxu0 0
  %2894 = vmatprep.subr.bf16.mxu0 0
  %2895 = vmatpush1.bf16.msra.mxu0 0
  %2896 = vmatprep.subr.bf16.mxu0 0
  %2897 = vmatpush1.bf16.msra.mxu0 0
  %2898 = vmatprep.mubr.bf16.mxu0 0
  %2899 = vmatmul.mubr.bf16.gmra.mrb[0].mxu0 %v2475
  %v2900 = vpop.f32.mrb[0].mxu0
  %v2901 = vadd.f32 %v2852, %v2900
  %v2902 = vpop.f32.mrb[0].mxu0
  %v2903 = vpop.f32.mrb[0].mxu0
  %v2904 = vadd.f32 %v2852, %v2903
  %v2905 = vpop.f32.mrb[0].mxu0
  %2906 = vdwg.mxu0
  %v2907 = vld [vmem:[%s608] sm:$0xf]
  %v2908 = vld [vmem:[%s608 + $0x4] sm:$0xf]
  %v2909 = vld [vmem:[%s608 + $0x8] sm:$0xf]
  %v2910 = vld [vmem:[%s608 + $0xc] sm:$0xf]
  %v2911 = vld [vmem:[%s613] sm:$0x1]
  %v2913 = vlaneseq
  %v2914 = vshrl.u32 %v2913, 7
  %v2915 = vsub.s32 0, %v2914
  %v2916 = vrot.slane %v2911, %v2915
  %v2922 = vunpack.c.l.b16 %v2907
  %v2923 = vunpack.c.l.b16 %v2908
  %v2924 = vunpack.c.l.b16 %v2909
  %v2925 = vunpack.c.l.b16 %v2910
  %v2926 = vpack.c.b16 %v2923, %v2922
  %v2927 = vpack.c.b16 %v2925, %v2924
  %2930 = vmatprep.subr.bf16.mxu0 0
  %2931 = vmatpush1.bf16.msra.mxu0 %v2926
  %2932 = vmatprep.subr.bf16.mxu0 0
  %2933 = vmatpush1.bf16.msra.mxu0 %v2927
  %2934 = vmatprep.subr.bf16.mxu0 0
  %2935 = vmatpush1.bf16.msra.mxu0 0
  %2936 = vmatprep.subr.bf16.mxu0 0
  %2937 = vmatpush1.bf16.msra.mxu0 0
  %2938 = vmatprep.subr.bf16.mxu0 0
  %2939 = vmatpush1.bf16.msra.mxu0 0
  %2940 = vmatprep.subr.bf16.mxu0 0
  %2941 = vmatpush1.bf16.msra.mxu0 0
  %2942 = vmatprep.subr.bf16.mxu0 0
  %2943 = vmatpush1.bf16.msra.mxu0 0
  %2944 = vmatprep.subr.bf16.mxu0 0
  %2945 = vmatpush1.bf16.msra.mxu0 0
  %2946 = vmatprep.subr.bf16.mxu0 0
  %2947 = vmatpush1.bf16.msra.mxu0 0
  %2948 = vmatprep.subr.bf16.mxu0 0
  %2949 = vmatpush1.bf16.msra.mxu0 0
  %2950 = vmatprep.subr.bf16.mxu0 0
  %2951 = vmatpush1.bf16.msra.mxu0 0
  %2952 = vmatprep.subr.bf16.mxu0 0
  %2953 = vmatpush1.bf16.msra.mxu0 0
  %2954 = vmatprep.subr.bf16.mxu0 0
  %2955 = vmatpush1.bf16.msra.mxu0 0
  %2956 = vmatprep.subr.bf16.mxu0 0
  %2957 = vmatpush1.bf16.msra.mxu0 0
  %2958 = vmatprep.subr.bf16.mxu0 0
  %2959 = vmatpush1.bf16.msra.mxu0 0
  %2960 = vmatprep.subr.bf16.mxu0 0
  %2961 = vmatpush1.bf16.msra.mxu0 0
  %2962 = vmatprep.mubr.bf16.mxu0 0
  %2963 = vmatmul.mubr.bf16.gmra.mrb[0].mxu0 %v2475
  %v2964 = vpop.f32.mrb[0].mxu0
  %v2965 = vadd.f32 %v2916, %v2964
  %v2966 = vpop.f32.mrb[0].mxu0
  %v2967 = vpop.f32.mrb[0].mxu0
  %v2968 = vadd.f32 %v2916, %v2967
  %v2969 = vpop.f32.mrb[0].mxu0
  %2970 = vdwg.mxu0
  %v2971 = vpack.c.bf16 %v2840, %v2837
  %v2972 = vpack.c.bf16 %v2904, %v2901
  %v2974 = vsel %vm341, %v2971, 0
  %v2977 = vsel %vm341, %v2972, 0
  %2979 = vmatprep.subr.bf16.mxu0 0
  %2980 = vmatpush1.bf16.xpose.msra.mxu0 %v2977
  %2981 = vmatprep.subr.bf16.mxu0 0
  %2982 = vmatpush1.bf16.xpose.msra.mxu0 0
  %2983 = vmatprep.subr.bf16.mxu0 0
  %2984 = vmatpush1.bf16.xpose.msra.mxu0 0
  %2985 = vmatprep.subr.bf16.mxu0 0
  %2986 = vmatpush1.bf16.xpose.msra.mxu0 0
  %2987 = vmatprep.subr.bf16.mxu0 0
  %2988 = vmatpush1.bf16.xpose.msra.mxu0 0
  %2989 = vmatprep.subr.bf16.mxu0 0
  %2990 = vmatpush1.bf16.xpose.msra.mxu0 0
  %2991 = vmatprep.subr.bf16.mxu0 0
  %2992 = vmatpush1.bf16.xpose.msra.mxu0 0
  %2993 = vmatprep.subr.bf16.mxu0 0
  %2994 = vmatpush1.bf16.xpose.msra.mxu0 0
  %2995 = vmatprep.subr.bf16.mxu0 0
  %2996 = vmatpush1.bf16.xpose.msra.mxu0 0
  %2997 = vmatprep.subr.bf16.mxu0 0
  %2998 = vmatpush1.bf16.xpose.msra.mxu0 0
  %2999 = vmatprep.subr.bf16.mxu0 0
  %3000 = vmatpush1.bf16.xpose.msra.mxu0 0
  %3001 = vmatprep.subr.bf16.mxu0 0
  %3002 = vmatpush1.bf16.xpose.msra.mxu0 0
  %3003 = vmatprep.subr.bf16.mxu0 0
  %3004 = vmatpush1.bf16.xpose.msra.mxu0 0
  %3005 = vmatprep.subr.bf16.mxu0 0
  %3006 = vmatpush1.bf16.xpose.msra.mxu0 0
  %3007 = vmatprep.subr.bf16.mxu0 0
  %3008 = vmatpush1.bf16.xpose.msra.mxu0 0
  %3009 = vmatprep.subr.bf16.mxu0 0
  %3010 = vmatpush1.bf16.xpose.msra.mxu0 0
  %3011 = vmatprep.mubr.bf16.mxu0 0
  %3012 = vmatmul.mubr.bf16.gmra.mrb[0].mxu0 %v2974
  %v3013 = vpop.f32.mrb[0].mxu0
  %v3014 = vadd.f32 0.0, %v3013
  %v3015 = vpop.f32.mrb[0].mxu0
  %v3016 = vpop.f32.mrb[0].mxu0
  %v3017 = vadd.f32 0.0, %v3016
  %v3018 = vpop.f32.mrb[0].mxu0
  %3019 = vdwg.mxu0
  %v3020 = vmul.f32 %v3014, 0.25
  %v3021 = vmul.f32 %v3017, 0.25
  %v3022 = vadd.f32 %v3020, %v2701
  %v3023 = vadd.f32 %v3021, %v2701
  %v3024 = vsel %vm399, %v3022, -inf
  %3025 = vmax.xlane.f32.xlu0 %v3024
  %v3026 = vpop.xlane.xlu0 %3025
  %v3027 = vsel %vm403, %v3023, -inf
  %3028 = vmax.xlane.f32.xlu0 %v3027
  %v3029 = vpop.xlane.xlu0 %3028
  %v3030 = vsub.f32 %v3022, %v3026
  %v3031 = vsub.f32 %v3023, %v3029
  %v3032 = vmul.f32 %v3030, 1.442695
  %v3033 = vpow.pop %v3032
  %v3034 = vmul.f32 %v3031, 1.442695
  %v3035 = vpow.pop %v3034
  %v3036 = vsel %vm399, %v3033, 0.0
  %3037 = vadd.xlane.f32.xlu0 %v3036
  %v3038 = vpop.xlane.xlu0 %3037
  %v3039 = vsel %vm403, %v3035, 0.0
  %3040 = vadd.xlane.f32.xlu0 %v3039
  %v3041 = vpop.xlane.xlu0 %3040
  %v3042 = vrcp.pop %v3038
  %v3043 = vmul.f32 %v3033, %v3042
  %v3044 = vrcp.pop %v3041
  %v3045 = vmul.f32 %v3035, %v3044
  %v3046 = vpack.c.bf16 %v3045, %v3043
  %v3047 = vpack.c.bf16 %v2968, %v2965
  %v3049 = vsel %vm399, %v3046, 0
  %v3052 = vsel %vm428, %v3047, 0
  %3054 = vmatprep.subr.bf16.mxu0 0
  %3055 = vmatpush1.bf16.msra.mxu0 %v3052
  %3056 = vmatprep.subr.bf16.mxu0 0
  %3057 = vmatpush1.bf16.msra.mxu0 0
  %3058 = vmatprep.subr.bf16.mxu0 0
  %3059 = vmatpush1.bf16.msra.mxu0 0
  %3060 = vmatprep.subr.bf16.mxu0 0
  %3061 = vmatpush1.bf16.msra.mxu0 0
  %3062 = vmatprep.subr.bf16.mxu0 0
  %3063 = vmatpush1.bf16.msra.mxu0 0
  %3064 = vmatprep.subr.bf16.mxu0 0
  %3065 = vmatpush1.bf16.msra.mxu0 0
  %3066 = vmatprep.subr.bf16.mxu0 0
  %3067 = vmatpush1.bf16.msra.mxu0 0
  %3068 = vmatprep.subr.bf16.mxu0 0
  %3069 = vmatpush1.bf16.msra.mxu0 0
  %3070 = vmatprep.subr.bf16.mxu0 0
  %3071 = vmatpush1.bf16.msra.mxu0 0
  %3072 = vmatprep.subr.bf16.mxu0 0
  %3073 = vmatpush1.bf16.msra.mxu0 0
  %3074 = vmatprep.subr.bf16.mxu0 0
  %3075 = vmatpush1.bf16.msra.mxu0 0
  %3076 = vmatprep.subr.bf16.mxu0 0
  %3077 = vmatpush1.bf16.msra.mxu0 0
  %3078 = vmatprep.subr.bf16.mxu0 0
  %3079 = vmatpush1.bf16.msra.mxu0 0
  %3080 = vmatprep.subr.bf16.mxu0 0
  %3081 = vmatpush1.bf16.msra.mxu0 0
  %3082 = vmatprep.subr.bf16.mxu0 0
  %3083 = vmatpush1.bf16.msra.mxu0 0
  %3084 = vmatprep.subr.bf16.mxu0 0
  %3085 = vmatpush1.bf16.msra.mxu0 0
  %3086 = vmatprep.mubr.bf16.mxu0 0
  %3087 = vmatmul.mubr.bf16.gmra.mrb[0].mxu0 %v3049
  %v3088 = vpop.f32.mrb[0].mxu0
  %v3089 = vadd.f32 0.0, %v3088
  %v3090 = vpop.f32.mrb[0].mxu0
  %v3091 = vpop.f32.mrb[0].mxu0
  %v3092 = vadd.f32 0.0, %v3091
  %v3093 = vpop.f32.mrb[0].mxu0
  %3094 = vdwg.mxu0
  %v3095 = vld [vmem:[%s798] sm:$0xf]
  %v3096 = vld [vmem:[%s798 + $0x4] sm:$0xf]
  %v3097 = vpack.c.bf16 %v3092, %v3089
  %v3100 = vunpack.c.l.b16 %v3095
  %v3101 = vunpack.c.l.b16 %v3096
  %v3102 = vpack.c.b16 %v3101, %v3100
  %v3105 = vsel %vm341, %v3097, 0
  %3107 = vmatprep.subr.bf16.mxu0 0
  %3108 = vmatpush1.bf16.msra.mxu0 %v3102
  %3109 = vmatprep.subr.bf16.mxu0 0
  %3110 = vmatpush1.bf16.msra.mxu0 0
  %3111 = vmatprep.subr.bf16.mxu0 0
  %3112 = vmatpush1.bf16.msra.mxu0 0
  %3113 = vmatprep.subr.bf16.mxu0 0
  %3114 = vmatpush1.bf16.msra.mxu0 0
  %3115 = vmatprep.subr.bf16.mxu0 0
  %3116 = vmatpush1.bf16.msra.mxu0 0
  %3117 = vmatprep.subr.bf16.mxu0 0
  %3118 = vmatpush1.bf16.msra.mxu0 0
  %3119 = vmatprep.subr.bf16.mxu0 0
  %3120 = vmatpush1.bf16.msra.mxu0 0
  %3121 = vmatprep.subr.bf16.mxu0 0
  %3122 = vmatpush1.bf16.msra.mxu0 0
  %3123 = vmatprep.subr.bf16.mxu0 0
  %3124 = vmatpush1.bf16.msra.mxu0 0
  %3125 = vmatprep.subr.bf16.mxu0 0
  %3126 = vmatpush1.bf16.msra.mxu0 0
  %3127 = vmatprep.subr.bf16.mxu0 0
  %3128 = vmatpush1.bf16.msra.mxu0 0
  %3129 = vmatprep.subr.bf16.mxu0 0
  %3130 = vmatpush1.bf16.msra.mxu0 0
  %3131 = vmatprep.subr.bf16.mxu0 0
  %3132 = vmatpush1.bf16.msra.mxu0 0
  %3133 = vmatprep.subr.bf16.mxu0 0
  %3134 = vmatpush1.bf16.msra.mxu0 0
  %3135 = vmatprep.subr.bf16.mxu0 0
  %3136 = vmatpush1.bf16.msra.mxu0 0
  %3137 = vmatprep.subr.bf16.mxu0 0
  %3138 = vmatpush1.bf16.msra.mxu0 0
  %3139 = vmatprep.mubr.bf16.mxu0 0
  %3140 = vmatmul.mubr.bf16.gmra.mrb[0].mxu0 %v3105
  %v3141 = vpop.f32.mrb[0].mxu0
  %v3142 = vadd.f32 0.0, %v3141
  %v3143 = vpop.f32.mrb[0].mxu0
  %v3144 = vpop.f32.mrb[0].mxu0
  %v3145 = vadd.f32 0.0, %v3144
  %v3146 = vpop.f32.mrb[0].mxu0
  %3147 = vdwg.mxu0
  %v3150 = vunpack.c.l.b16 %v2776
  %v3151 = vunpack.c.l.b16 %v2777
  %v3152 = vpack.c.b16 %v3151, %v3150
  %v3155 = vsel %vm341, %v2778, 0
  %3157 = vmatprep.subr.bf16.mxu0 0
  %3158 = vmatpush1.bf16.msra.mxu0 %v3152
  %3159 = vmatprep.subr.bf16.mxu0 0
  %3160 = vmatpush1.bf16.msra.mxu0 0
  %3161 = vmatprep.subr.bf16.mxu0 0
  %3162 = vmatpush1.bf16.msra.mxu0 0
  %3163 = vmatprep.subr.bf16.mxu0 0
  %3164 = vmatpush1.bf16.msra.mxu0 0
  %3165 = vmatprep.subr.bf16.mxu0 0
  %3166 = vmatpush1.bf16.msra.mxu0 0
  %3167 = vmatprep.subr.bf16.mxu0 0
  %3168 = vmatpush1.bf16.msra.mxu0 0
  %3169 = vmatprep.subr.bf16.mxu0 0
  %3170 = vmatpush1.bf16.msra.mxu0 0
  %3171 = vmatprep.subr.bf16.mxu0 0
  %3172 = vmatpush1.bf16.msra.mxu0 0
  %3173 = vmatprep.subr.bf16.mxu0 0
  %3174 = vmatpush1.bf16.msra.mxu0 0
  %3175 = vmatprep.subr.bf16.mxu0 0
  %3176 = vmatpush1.bf16.msra.mxu0 0
  %3177 = vmatprep.subr.bf16.mxu0 0
  %3178 = vmatpush1.bf16.msra.mxu0 0
  %3179 = vmatprep.subr.bf16.mxu0 0
  %3180 = vmatpush1.bf16.msra.mxu0 0
  %3181 = vmatprep.subr.bf16.mxu0 0
  %3182 = vmatpush1.bf16.msra.mxu0 0
  %3183 = vmatprep.subr.bf16.mxu0 0
  %3184 = vmatpush1.bf16.msra.mxu0 0
  %3185 = vmatprep.subr.bf16.mxu0 0
  %3186 = vmatpush1.bf16.msra.mxu0 0
  %3187 = vmatprep.subr.bf16.mxu0 0
  %3188 = vmatpush1.bf16.msra.mxu0 0
  %3189 = vmatprep.mubr.bf16.mxu0 0
  %3190 = vmatmul.mubr.bf16.gmra.mrb[0].mxu0 %v3155
  %v3191 = vpop.f32.mrb[0].mxu0
  %v3192 = vadd.f32 %v3142, %v3191
  %v3193 = vpop.f32.mrb[0].mxu0
  %v3194 = vpop.f32.mrb[0].mxu0
  %v3195 = vadd.f32 %v3145, %v3194
  %v3196 = vpop.f32.mrb[0].mxu0
  %3197 = vdwg.mxu0
  %v3198 = vadd.f32 %v2444, %v3192
  %v3199 = vadd.f32 %v2445, %v3195
  %v3200 = vld [vmem:[%s12] sm:$0x1]
  %v3202 = vlaneseq
  %v3203 = vshrl.u32 %v3202, 7
  %v3204 = vsub.s32 0, %v3203
  %v3205 = vrot.slane %v3200, %v3204
  %v3207 = vadd.f32 %v3198, %v3205
  %v3208 = vadd.f32 %v3199, %v3205
  %v3209 = vld [vmem:[%s13] sm:$0x1]
  %v3210 = vld [vmem:[%s14] sm:$0x1]
  %v3211 = vsel %vm95, %v3207, 0.0
  %3212 = vadd.xlane.f32.xlu0 %v3211
  %v3213 = vpop.xlane.xlu0 %3212
  %v3214 = vsel %vm99, %v3208, 0.0
  %3215 = vadd.xlane.f32.xlu0 %v3214
  %v3216 = vpop.xlane.xlu0 %3215
  %v3217 = vmul.f32 %v3213, %v103
  %v3218 = vmul.f32 %v3216, %v103
  %v3219 = vsub.f32 %v3207, %v3217
  %v3220 = vsub.f32 %v3208, %v3218
  %v3221 = vmul.f32 %v3219, %v3219
  %v3222 = vmul.f32 %v3220, %v3220
  %v3223 = vsel %vm95, %v3221, 0.0
  %3224 = vadd.xlane.f32.xlu0 %v3223
  %v3225 = vpop.xlane.xlu0 %3224
  %v3226 = vsel %vm99, %v3222, 0.0
  %3227 = vadd.xlane.f32.xlu0 %v3226
  %v3228 = vpop.xlane.xlu0 %3227
  %v3229 = vmul.f32 %v3225, %v103
  %v3230 = vmul.f32 %v3228, %v103
  %v3231 = vadd.f32 %v3229, 1e-05
  %v3232 = vadd.f32 %v3230, 1e-05
  %v3233 = vrsqrt.pop %v3231
  %v3234 = vrsqrt.pop %v3232
  %v3235 = vmul.f32 %v3219, %v3233
  %v3236 = vmul.f32 %v3220, %v3234
  %v3238 = vlaneseq
  %v3239 = vshrl.u32 %v3238, 7
  %v3240 = vsub.s32 0, %v3239
  %v3241 = vrot.slane %v3209, %v3240
  %v3243 = vmul.f32 %v3235, %v3241
  %v3244 = vmul.f32 %v3236, %v3241
  %v3246 = vlaneseq
  %v3247 = vshrl.u32 %v3246, 7
  %v3248 = vsub.s32 0, %v3247
  %v3249 = vrot.slane %v3210, %v3248
  %v3251 = vadd.f32 %v3243, %v3249
  %v3252 = vadd.f32 %v3244, %v3249
  %v3253 = vld [vmem:[%s15] sm:$0xf]
  %v3254 = vld [vmem:[%s15 + $0x4] sm:$0xf]
  %v3255 = vld [vmem:[%s15 + $0x8] sm:$0xf]
  %v3256 = vld [vmem:[%s15 + $0xc] sm:$0xf]
  %v3257 = vpack.c.bf16 %v3252, %v3251
  %v3258 = vld [vmem:[%s16] sm:$0x1]
  %v3260 = vlaneseq
  %v3261 = vshrl.u32 %v3260, 7
  %v3262 = vsub.s32 0, %v3261
  %v3263 = vrot.slane %v3258, %v3262
  %v3269 = vunpack.c.l.b16 %v3253
  %v3270 = vunpack.c.l.b16 %v3254
  %v3271 = vunpack.c.l.b16 %v3255
  %v3272 = vunpack.c.l.b16 %v3256
  %v3273 = vpack.c.b16 %v3270, %v3269
  %v3274 = vpack.c.b16 %v3272, %v3271
  %v3278 = vsel %vm95, %v3257, 0
  %3280 = vmatprep.subr.bf16.mxu0 0
  %3281 = vmatpush1.bf16.msra.mxu0 %v3273
  %3282 = vmatprep.subr.bf16.mxu0 0
  %3283 = vmatpush1.bf16.msra.mxu0 %v3274
  %3284 = vmatprep.subr.bf16.mxu0 0
  %3285 = vmatpush1.bf16.msra.mxu0 0
  %3286 = vmatprep.subr.bf16.mxu0 0
  %3287 = vmatpush1.bf16.msra.mxu0 0
  %3288 = vmatprep.subr.bf16.mxu0 0
  %3289 = vmatpush1.bf16.msra.mxu0 0
  %3290 = vmatprep.subr.bf16.mxu0 0
  %3291 = vmatpush1.bf16.msra.mxu0 0
  %3292 = vmatprep.subr.bf16.mxu0 0
  %3293 = vmatpush1.bf16.msra.mxu0 0
  %3294 = vmatprep.subr.bf16.mxu0 0
  %3295 = vmatpush1.bf16.msra.mxu0 0
  %3296 = vmatprep.subr.bf16.mxu0 0
  %3297 = vmatpush1.bf16.msra.mxu0 0
  %3298 = vmatprep.subr.bf16.mxu0 0
  %3299 = vmatpush1.bf16.msra.mxu0 0
  %3300 = vmatprep.subr.bf16.mxu0 0
  %3301 = vmatpush1.bf16.msra.mxu0 0
  %3302 = vmatprep.subr.bf16.mxu0 0
  %3303 = vmatpush1.bf16.msra.mxu0 0
  %3304 = vmatprep.subr.bf16.mxu0 0
  %3305 = vmatpush1.bf16.msra.mxu0 0
  %3306 = vmatprep.subr.bf16.mxu0 0
  %3307 = vmatpush1.bf16.msra.mxu0 0
  %3308 = vmatprep.subr.bf16.mxu0 0
  %3309 = vmatpush1.bf16.msra.mxu0 0
  %3310 = vmatprep.subr.bf16.mxu0 0
  %3311 = vmatpush1.bf16.msra.mxu0 0
  %3312 = vmatprep.mubr.bf16.mxu0 0
  %3313 = vmatmul.mubr.bf16.gmra.mrb[0].mxu0 %v3278
  %v3314 = vpop.f32.mrb[0].mxu0
  %v3315 = vadd.f32 %v3263, %v3314
  %v3316 = vpop.f32.mrb[0].mxu0
  %v3317 = vpop.f32.mrb[0].mxu0
  %v3318 = vadd.f32 %v3263, %v3317
  %v3319 = vpop.f32.mrb[0].mxu0
  %3320 = vdwg.mxu0
  %v3321 = vmul.f32 %v3315, %v3315
  %v3322 = vmul.f32 %v3318, %v3318
  %v3323 = vmul.f32 %v3315, %v3321
  %v3324 = vmul.f32 %v3318, %v3322
  %v3325 = vmul.f32 %v3323, 0.044715
  %v3326 = vmul.f32 %v3324, 0.044715
  %v3327 = vadd.f32 %v3315, %v3325
  %v3328 = vadd.f32 %v3318, %v3326
  %v3329 = vmul.f32 %v3327, 0.7978846
  %v3330 = vmul.f32 %v3328, 0.7978846
  %v3331 = vtanh.pop %v3329
  %v3332 = vtanh.pop %v3330
  %v3333 = vadd.f32 %v3331, 1.0
  %v3334 = vadd.f32 %v3332, 1.0
  %v3335 = vmul.f32 %v3333, 0.5
  %v3336 = vmul.f32 %v3334, 0.5
  %v3337 = vmul.f32 %v3315, %v3335
  %v3338 = vmul.f32 %v3318, %v3336
  %v3339 = vld [vmem:[%s17] sm:$0xf]
  %v3340 = vld [vmem:[%s17 + $0x4] sm:$0xf]
  %v3341 = vld [vmem:[%s17 + $0x8] sm:$0xf]
  %v3342 = vld [vmem:[%s17 + $0xc] sm:$0xf]
  %v3343 = vld [vmem:[%s17 + $0x10] sm:$0xf]
  %v3344 = vld [vmem:[%s17 + $0x14] sm:$0xf]
  %v3345 = vld [vmem:[%s17 + $0x18] sm:$0xf]
  %v3346 = vld [vmem:[%s17 + $0x1c] sm:$0xf]
  %v3347 = vpack.c.bf16 %v3338, %v3337
  %v3348 = vld [vmem:[%s18] sm:$0x1]
  %v3350 = vlaneseq
  %v3351 = vshrl.u32 %v3350, 7
  %v3352 = vsub.s32 0, %v3351
  %v3353 = vrot.slane %v3348, %v3352
  %v3363 = vunpack.c.l.b16 %v3339
  %v3364 = vunpack.c.l.b16 %v3340
  %v3365 = vunpack.c.l.b16 %v3341
  %v3366 = vunpack.c.l.b16 %v3342
  %v3367 = vunpack.c.l.b16 %v3343
  %v3368 = vunpack.c.l.b16 %v3344
  %v3369 = vunpack.c.l.b16 %v3345
  %v3370 = vunpack.c.l.b16 %v3346
  %v3371 = vpack.c.b16 %v3364, %v3363
  %v3372 = vpack.c.b16 %v3366, %v3365
  %v3373 = vpack.c.b16 %v3368, %v3367
  %v3374 = vpack.c.b16 %v3370, %v3369
  %v3380 = vsel %vm1083, %v3347, 0
  %3382 = vmatprep.subr.bf16.mxu0 0
  %3383 = vmatpush1.bf16.msra.mxu0 %v3371
  %3384 = vmatprep.subr.bf16.mxu0 0
  %3385 = vmatpush1.bf16.msra.mxu0 %v3372
  %3386 = vmatprep.subr.bf16.mxu0 0
  %3387 = vmatpush1.bf16.msra.mxu0 %v3373
  %3388 = vmatprep.subr.bf16.mxu0 0
  %3389 = vmatpush1.bf16.msra.mxu0 %v3374
  %3390 = vmatprep.subr.bf16.mxu0 0
  %3391 = vmatpush1.bf16.msra.mxu0 0
  %3392 = vmatprep.subr.bf16.mxu0 0
  %3393 = vmatpush1.bf16.msra.mxu0 0
  %3394 = vmatprep.subr.bf16.mxu0 0
  %3395 = vmatpush1.bf16.msra.mxu0 0
  %3396 = vmatprep.subr.bf16.mxu0 0
  %3397 = vmatpush1.bf16.msra.mxu0 0
  %3398 = vmatprep.subr.bf16.mxu0 0
  %3399 = vmatpush1.bf16.msra.mxu0 0
  %3400 = vmatprep.subr.bf16.mxu0 0
  %3401 = vmatpush1.bf16.msra.mxu0 0
  %3402 = vmatprep.subr.bf16.mxu0 0
  %3403 = vmatpush1.bf16.msra.mxu0 0
  %3404 = vmatprep.subr.bf16.mxu0 0
  %3405 = vmatpush1.bf16.msra.mxu0 0
  %3406 = vmatprep.subr.bf16.mxu0 0
  %3407 = vmatpush1.bf16.msra.mxu0 0
  %3408 = vmatprep.subr.bf16.mxu0 0
  %3409 = vmatpush1.bf16.msra.mxu0 0
  %3410 = vmatprep.subr.bf16.mxu0 0
  %3411 = vmatpush1.bf16.msra.mxu0 0
  %3412 = vmatprep.subr.bf16.mxu0 0
  %3413 = vmatpush1.bf16.msra.mxu0 0
  %3414 = vmatprep.mubr.bf16.mxu0 0
  %3415 = vmatmul.mubr.bf16.gmra.mrb[0].mxu0 %v3380
  %v3416 = vpop.f32.mrb[0].mxu0
  %v3417 = vadd.f32 %v3353, %v3416
  %v3418 = vpop.f32.mrb[0].mxu0
  %v3419 = vpop.f32.mrb[0].mxu0
  %v3420 = vadd.f32 %v3353, %v3419
  %v3421 = vpop.f32.mrb[0].mxu0
  %3422 = vdwg.mxu0
  %v3423 = vadd.f32 %v3251, %v3417
  %v3424 = vadd.f32 %v3252, %v3420
  %v3425 = vld [vmem:[%s19] sm:$0x1]
  %v3426 = vld [vmem:[%s20] sm:$0x1]
  %v3427 = vsel %vm95, %v3423, 0.0
  %3428 = vadd.xlane.f32.xlu0 %v3427
  %v3429 = vpop.xlane.xlu0 %3428
  %v3430 = vsel %vm99, %v3424, 0.0
  %3431 = vadd.xlane.f32.xlu0 %v3430
  %v3432 = vpop.xlane.xlu0 %3431
  %v3433 = vmul.f32 %v3429, %v103
  %v3434 = vmul.f32 %v3432, %v103
  %v3435 = vsub.f32 %v3423, %v3433
  %v3436 = vsub.f32 %v3424, %v3434
  %v3437 = vmul.f32 %v3435, %v3435
  %v3438 = vmul.f32 %v3436, %v3436
  %v3439 = vsel %vm95, %v3437, 0.0
  %3440 = vadd.xlane.f32.xlu0 %v3439
  %v3441 = vpop.xlane.xlu0 %3440
  %v3442 = vsel %vm99, %v3438, 0.0
  %3443 = vadd.xlane.f32.xlu0 %v3442
  %v3444 = vpop.xlane.xlu0 %3443
  %v3445 = vmul.f32 %v3441, %v103
  %v3446 = vmul.f32 %v3444, %v103
  %v3447 = vadd.f32 %v3445, 1e-05
  %v3448 = vadd.f32 %v3446, 1e-05
  %v3449 = vrsqrt.pop %v3447
  %v3450 = vrsqrt.pop %v3448
  %v3451 = vmul.f32 %v3435, %v3449
  %v3452 = vmul.f32 %v3436, %v3450
  %v3454 = vlaneseq
  %v3455 = vshrl.u32 %v3454, 7
  %v3456 = vsub.s32 0, %v3455
  %v3457 = vrot.slane %v3425, %v3456
  %v3459 = vmul.f32 %v3451, %v3457
  %v3460 = vmul.f32 %v3452, %v3457
  %v3462 = vlaneseq
  %v3463 = vshrl.u32 %v3462, 7
  %v3464 = vsub.s32 0, %v3463
  %v3465 = vrot.slane %v3426, %v3464
  %v3467 = vadd.f32 %v3459, %v3465
  %v3468 = vadd.f32 %v3460, %v3465
  %v3469 = vld [vmem:[%s1174] sm:$0xf]
  %v3470 = vld [vmem:[%s1174 + $0x4] sm:$0xf]
  %v3471 = vld [vmem:[%s1174 + $0x8] sm:$0xf]
  %v3472 = vld [vmem:[%s1174 + $0xc] sm:$0xf]
  %v3473 = vpack.c.bf16 %v3468, %v3467
  %v3474 = vld [vmem:[%s1180] sm:$0x1]
  %v3476 = vlaneseq
  %v3477 = vshrl.u32 %v3476, 7
  %v3478 = vsub.s32 0, %v3477
  %v3479 = vrot.slane %v3474, %v3478
  %v3485 = vunpack.c.l.b16 %v3469
  %v3486 = vunpack.c.l.b16 %v3470
  %v3487 = vunpack.c.l.b16 %v3471
  %v3488 = vunpack.c.l.b16 %v3472
  %v3489 = vpack.c.b16 %v3486, %v3485
  %v3490 = vpack.c.b16 %v3488, %v3487
  %v3494 = vsel %vm95, %v3473, 0
  %3496 = vmatprep.subr.bf16.mxu0 0
  %3497 = vmatpush1.bf16.msra.mxu0 %v3489
  %3498 = vmatprep.subr.bf16.mxu0 0
  %3499 = vmatpush1.bf16.msra.mxu0 %v3490
  %3500 = vmatprep.subr.bf16.mxu0 0
  %3501 = vmatpush1.bf16.msra.mxu0 0
  %3502 = vmatprep.subr.bf16.mxu0 0
  %3503 = vmatpush1.bf16.msra.mxu0 0
  %3504 = vmatprep.subr.bf16.mxu0 0
  %3505 = vmatpush1.bf16.msra.mxu0 0
  %3506 = vmatprep.subr.bf16.mxu0 0
  %3507 = vmatpush1.bf16.msra.mxu0 0
  %3508 = vmatprep.subr.bf16.mxu0 0
  %3509 = vmatpush1.bf16.msra.mxu0 0
  %3510 = vmatprep.subr.bf16.mxu0 0
  %3511 = vmatpush1.bf16.msra.mxu0 0
  %3512 = vmatprep.subr.bf16.mxu0 0
  %3513 = vmatpush1.bf16.msra.mxu0 0
  %3514 = vmatprep.subr.bf16.mxu0 0
  %3515 = vmatpush1.bf16.msra.mxu0 0
  %3516 = vmatprep.subr.bf16.mxu0 0
  %3517 = vmatpush1.bf16.msra.mxu0 0
  %3518 = vmatprep.subr.bf16.mxu0 0
  %3519 = vmatpush1.bf16.msra.mxu0 0
  %3520 = vmatprep.subr.bf16.mxu0 0
  %3521 = vmatpush1.bf16.msra.mxu0 0
  %3522 = vmatprep.subr.bf16.mxu0 0
  %3523 = vmatpush1.bf16.msra.mxu0 0
  %3524 = vmatprep.subr.bf16.mxu0 0
  %3525 = vmatpush1.bf16.msra.mxu0 0
  %3526 = vmatprep.subr.bf16.mxu0 0
  %3527 = vmatpush1.bf16.msra.mxu0 0
  %3528 = vmatprep.mubr.bf16.mxu0 0
  %3529 = vmatmul.mubr.bf16.gmra.mrb[0].mxu0 %v3494
  %v3530 = vpop.f32.mrb[0].mxu0
  %v3531 = vadd.f32 %v3479, %v3530
  %v3532 = vpop.f32.mrb[0].mxu0
  %v3533 = vpop.f32.mrb[0].mxu0
  %v3534 = vadd.f32 %v3479, %v3533
  %v3535 = vpop.f32.mrb[0].mxu0
  %3536 = vdwg.mxu0
  %v3537 = vld [vmem:[%s1244] sm:$0xf]
  %v3538 = vld [vmem:[%s1244 + $0x4] sm:$0xf]
  %v3539 = vld [vmem:[%s1244 + $0x8] sm:$0xf]
  %v3540 = vld [vmem:[%s1244 + $0xc] sm:$0xf]
  %v3541 = vld [vmem:[%s1249] sm:$0x1]
  %v3543 = vlaneseq
  %v3544 = vshrl.u32 %v3543, 7
  %v3545 = vsub.s32 0, %v3544
  %v3546 = vrot.slane %v3541, %v3545
  %v3552 = vunpack.c.l.b16 %v3537
  %v3553 = vunpack.c.l.b16 %v3538
  %v3554 = vunpack.c.l.b16 %v3539
  %v3555 = vunpack.c.l.b16 %v3540
  %v3556 = vpack.c.b16 %v3553, %v3552
  %v3557 = vpack.c.b16 %v3555, %v3554
  %3560 = vmatprep.subr.bf16.mxu0 0
  %3561 = vmatpush1.bf16.msra.mxu0 %v3556
  %3562 = vmatprep.subr.bf16.mxu0 0
  %3563 = vmatpush1.bf16.msra.mxu0 %v3557
  %3564 = vmatprep.subr.bf16.mxu0 0
  %3565 = vmatpush1.bf16.msra.mxu0 0
  %3566 = vmatprep.subr.bf16.mxu0 0
  %3567 = vmatpush1.bf16.msra.mxu0 0
  %3568 = vmatprep.subr.bf16.mxu0 0
  %3569 = vmatpush1.bf16.msra.mxu0 0
  %3570 = vmatprep.subr.bf16.mxu0 0
  %3571 = vmatpush1.bf16.msra.mxu0 0
  %3572 = vmatprep.subr.bf16.mxu0 0
  %3573 = vmatpush1.bf16.msra.mxu0 0
  %3574 = vmatprep.subr.bf16.mxu0 0
  %3575 = vmatpush1.bf16.msra.mxu0 0
  %3576 = vmatprep.subr.bf16.mxu0 0
  %3577 = vmatpush1.bf16.msra.mxu0 0
  %3578 = vmatprep.subr.bf16.mxu0 0
  %3579 = vmatpush1.bf16.msra.mxu0 0
  %3580 = vmatprep.subr.bf16.mxu0 0
  %3581 = vmatpush1.bf16.msra.mxu0 0
  %3582 = vmatprep.subr.bf16.mxu0 0
  %3583 = vmatpush1.bf16.msra.mxu0 0
  %3584 = vmatprep.subr.bf16.mxu0 0
  %3585 = vmatpush1.bf16.msra.mxu0 0
  %3586 = vmatprep.subr.bf16.mxu0 0
  %3587 = vmatpush1.bf16.msra.mxu0 0
  %3588 = vmatprep.subr.bf16.mxu0 0
  %3589 = vmatpush1.bf16.msra.mxu0 0
  %3590 = vmatprep.subr.bf16.mxu0 0
  %3591 = vmatpush1.bf16.msra.mxu0 0
  %3592 = vmatprep.mubr.bf16.mxu0 0
  %3593 = vmatmul.mubr.bf16.gmra.mrb[0].mxu0 %v3494
  %v3594 = vpop.f32.mrb[0].mxu0
  %v3595 = vadd.f32 %v3546, %v3594
  %v3596 = vpop.f32.mrb[0].mxu0
  %v3597 = vpop.f32.mrb[0].mxu0
  %v3598 = vadd.f32 %v3546, %v3597
  %v3599 = vpop.f32.mrb[0].mxu0
  %3600 = vdwg.mxu0
  %v3601 = vld [vmem:[%s1310] sm:$0xf]
  %v3602 = vld [vmem:[%s1310 + $0x4] sm:$0xf]
  %v3603 = vld [vmem:[%s1310 + $0x8] sm:$0xf]
  %v3604 = vld [vmem:[%s1310 + $0xc] sm:$0xf]
  %v3605 = vld [vmem:[%s1315] sm:$0x1]
  %v3607 = vlaneseq
  %v3608 = vshrl.u32 %v3607, 7
  %v3609 = vsub.s32 0, %v3608
  %v3610 = vrot.slane %v3605, %v3609
  %v3616 = vunpack.c.l.b16 %v3601
  %v3617 = vunpack.c.l.b16 %v3602
  %v3618 = vunpack.c.l.b16 %v3603
  %v3619 = vunpack.c.l.b16 %v3604
  %v3620 = vpack.c.b16 %v3617, %v3616
  %v3621 = vpack.c.b16 %v3619, %v3618
  %3624 = vmatprep.subr.bf16.mxu0 0
  %3625 = vmatpush1.bf16.msra.mxu0 %v3620
  %3626 = vmatprep.subr.bf16.mxu0 0
  %3627 = vmatpush1.bf16.msra.mxu0 %v3621
  %3628 = vmatprep.subr.bf16.mxu0 0
  %3629 = vmatpush1.bf16.msra.mxu0 0
  %3630 = vmatprep.subr.bf16.mxu0 0
  %3631 = vmatpush1.bf16.msra.mxu0 0
  %3632 = vmatprep.subr.bf16.mxu0 0
  %3633 = vmatpush1.bf16.msra.mxu0 0
  %3634 = vmatprep.subr.bf16.mxu0 0
  %3635 = vmatpush1.bf16.msra.mxu0 0
  %3636 = vmatprep.subr.bf16.mxu0 0
  %3637 = vmatpush1.bf16.msra.mxu0 0
  %3638 = vmatprep.subr.bf16.mxu0 0
  %3639 = vmatpush1.bf16.msra.mxu0 0
  %3640 = vmatprep.subr.bf16.mxu0 0
  %3641 = vmatpush1.bf16.msra.mxu0 0
  %3642 = vmatprep.subr.bf16.mxu0 0
  %3643 = vmatpush1.bf16.msra.mxu0 0
  %3644 = vmatprep.subr.bf16.mxu0 0
  %3645 = vmatpush1.bf16.msra.mxu0 0
  %3646 = vmatprep.subr.bf16.mxu0 0
  %3647 = vmatpush1.bf16.msra.mxu0 0
  %3648 = vmatprep.subr.bf16.mxu0 0
  %3649 = vmatpush1.bf16.msra.mxu0 0
  %3650 = vmatprep.subr.bf16.mxu0 0
  %3651 = vmatpush1.bf16.msra.mxu0 0
  %3652 = vmatprep.subr.bf16.mxu0 0
  %3653 = vmatpush1.bf16.msra.mxu0 0
  %3654 = vmatprep.subr.bf16.mxu0 0
  %3655 = vmatpush1.bf16.msra.mxu0 0
  %3656 = vmatprep.mubr.bf16.mxu0 0
  %3657 = vmatmul.mubr.bf16.gmra.mrb[0].mxu0 %v3494
  %v3658 = vpop.f32.mrb[0].mxu0
  %v3659 = vadd.f32 %v3610, %v3658
  %v3660 = vpop.f32.mrb[0].mxu0
  %v3661 = vpop.f32.mrb[0].mxu0
  %v3662 = vadd.f32 %v3610, %v3661
  %v3663 = vpop.f32.mrb[0].mxu0
  %3664 = vdwg.mxu0
  %v3665 = vpack.c.bf16 %v3534, %v3531
  %v3666 = vpack.c.bf16 %v3598, %v3595
  %v3668 = vsel %vm341, %v3665, 0
  %v3671 = vsel %vm341, %v3666, 0
  %3673 = vmatprep.subr.bf16.mxu0 0
  %3674 = vmatpush1.bf16.xpose.msra.mxu0 %v3671
  %3675 = vmatprep.subr.bf16.mxu0 0
  %3676 = vmatpush1.bf16.xpose.msra.mxu0 0
  %3677 = vmatprep.subr.bf16.mxu0 0
  %3678 = vmatpush1.bf16.xpose.msra.mxu0 0
  %3679 = vmatprep.subr.bf16.mxu0 0
  %3680 = vmatpush1.bf16.xpose.msra.mxu0 0
  %3681 = vmatprep.subr.bf16.mxu0 0
  %3682 = vmatpush1.bf16.xpose.msra.mxu0 0
  %3683 = vmatprep.subr.bf16.mxu0 0
  %3684 = vmatpush1.bf16.xpose.msra.mxu0 0
  %3685 = vmatprep.subr.bf16.mxu0 0
  %3686 = vmatpush1.bf16.xpose.msra.mxu0 0
  %3687 = vmatprep.subr.bf16.mxu0 0
  %3688 = vmatpush1.bf16.xpose.msra.mxu0 0
  %3689 = vmatprep.subr.bf16.mxu0 0
  %3690 = vmatpush1.bf16.xpose.msra.mxu0 0
  %3691 = vmatprep.subr.bf16.mxu0 0
  %3692 = vmatpush1.bf16.xpose.msra.mxu0 0
  %3693 = vmatprep.subr.bf16.mxu0 0
  %3694 = vmatpush1.bf16.xpose.msra.mxu0 0
  %3695 = vmatprep.subr.bf16.mxu0 0
  %3696 = vmatpush1.bf16.xpose.msra.mxu0 0
  %3697 = vmatprep.subr.bf16.mxu0 0
  %3698 = vmatpush1.bf16.xpose.msra.mxu0 0
  %3699 = vmatprep.subr.bf16.mxu0 0
  %3700 = vmatpush1.bf16.xpose.msra.mxu0 0
  %3701 = vmatprep.subr.bf16.mxu0 0
  %3702 = vmatpush1.bf16.xpose.msra.mxu0 0
  %3703 = vmatprep.subr.bf16.mxu0 0
  %3704 = vmatpush1.bf16.xpose.msra.mxu0 0
  %3705 = vmatprep.mubr.bf16.mxu0 0
  %3706 = vmatmul.mubr.bf16.gmra.mrb[0].mxu0 %v3668
  %v3707 = vpop.f32.mrb[0].mxu0
  %v3708 = vadd.f32 0.0, %v3707
  %v3709 = vpop.f32.mrb[0].mxu0
  %v3710 = vpop.f32.mrb[0].mxu0
  %v3711 = vadd.f32 0.0, %v3710
  %v3712 = vpop.f32.mrb[0].mxu0
  %3713 = vdwg.mxu0
  %v3714 = vmul.f32 %v3708, 0.25
  %v3715 = vmul.f32 %v3711, 0.25
  %v3716 = vadd.f32 %v3714, %v2701
  %v3717 = vadd.f32 %v3715, %v2701
  %v3718 = vsel %vm399, %v3716, -inf
  %3719 = vmax.xlane.f32.xlu0 %v3718
  %v3720 = vpop.xlane.xlu0 %3719
  %v3721 = vsel %vm403, %v3717, -inf
  %3722 = vmax.xlane.f32.xlu0 %v3721
  %v3723 = vpop.xlane.xlu0 %3722
  %v3724 = vsub.f32 %v3716, %v3720
  %v3725 = vsub.f32 %v3717, %v3723
  %v3726 = vmul.f32 %v3724, 1.442695
  %v3727 = vpow.pop %v3726
  %v3728 = vmul.f32 %v3725, 1.442695
  %v3729 = vpow.pop %v3728
  %v3730 = vsel %vm399, %v3727, 0.0
  %3731 = vadd.xlane.f32.xlu0 %v3730
  %v3732 = vpop.xlane.xlu0 %3731
  %v3733 = vsel %vm403, %v3729, 0.0
  %3734 = vadd.xlane.f32.xlu0 %v3733
  %v3735 = vpop.xlane.xlu0 %3734
  %v3736 = vrcp.pop %v3732
  %v3737 = vmul.f32 %v3727, %v3736
  %v3738 = vrcp.pop %v3735
  %v3739 = vmul.f32 %v3729, %v3738
  %v3740 = vpack.c.bf16 %v3739, %v3737
  %v3741 = vpack.c.bf16 %v3662, %v3659
  %v3743 = vsel %vm399, %v3740, 0
  %v3746 = vsel %vm428, %v3741, 0
  %3748 = vmatprep.subr.bf16.mxu0 0
  %3749 = vmatpush1.bf16.msra.mxu0 %v3746
  %3750 = vmatprep.subr.bf16.mxu0 0
  %3751 = vmatpush1.bf16.msra.mxu0 0
  %3752 = vmatprep.subr.bf16.mxu0 0
  %3753 = vmatpush1.bf16.msra.mxu0 0
  %3754 = vmatprep.subr.bf16.mxu0 0
  %3755 = vmatpush1.bf16.msra.mxu0 0
  %3756 = vmatprep.subr.bf16.mxu0 0
  %3757 = vmatpush1.bf16.msra.mxu0 0
  %3758 = vmatprep.subr.bf16.mxu0 0
  %3759 = vmatpush1.bf16.msra.mxu0 0
  %3760 = vmatprep.subr.bf16.mxu0 0
  %3761 = vmatpush1.bf16.msra.mxu0 0
  %3762 = vmatprep.subr.bf16.mxu0 0
  %3763 = vmatpush1.bf16.msra.mxu0 0
  %3764 = vmatprep.subr.bf16.mxu0 0
  %3765 = vmatpush1.bf16.msra.mxu0 0
  %3766 = vmatprep.subr.bf16.mxu0 0
  %3767 = vmatpush1.bf16.msra.mxu0 0
  %3768 = vmatprep.subr.bf16.mxu0 0
  %3769 = vmatpush1.bf16.msra.mxu0 0
  %3770 = vmatprep.subr.bf16.mxu0 0
  %3771 = vmatpush1.bf16.msra.mxu0 0
  %3772 = vmatprep.subr.bf16.mxu0 0
  %3773 = vmatpush1.bf16.msra.mxu0 0
  %3774 = vmatprep.subr.bf16.mxu0 0
  %3775 = vmatpush1.bf16.msra.mxu0 0
  %3776 = vmatprep.subr.bf16.mxu0 0
  %3777 = vmatpush1.bf16.msra.mxu0 0
  %3778 = vmatprep.subr.bf16.mxu0 0
  %3779 = vmatpush1.bf16.msra.mxu0 0
  %3780 = vmatprep.mubr.bf16.mxu0 0
  %3781 = vmatmul.mubr.bf16.gmra.mrb[0].mxu0 %v3743
  %v3782 = vpop.f32.mrb[0].mxu0
  %v3783 = vadd.f32 0.0, %v3782
  %v3784 = vpop.f32.mrb[0].mxu0
  %v3785 = vpop.f32.mrb[0].mxu0
  %v3786 = vadd.f32 0.0, %v3785
  %v3787 = vpop.f32.mrb[0].mxu0
  %3788 = vdwg.mxu0
  %v3789 = vld [vmem:[%s1500] sm:$0xf]
  %v3790 = vld [vmem:[%s1500 + $0x4] sm:$0xf]
  %v3791 = vpack.c.bf16 %v3786, %v3783
  %v3792 = vld [vmem:[%s1504] sm:$0xf]
  %v3793 = vld [vmem:[%s1504 + $0x4] sm:$0xf]
  %v3794 = vld [vmem:[%s1504 + $0x8] sm:$0xf]
  %v3795 = vld [vmem:[%s1504 + $0xc] sm:$0xf]
  %v3796 = vld [vmem:[%s1509] sm:$0x1]
  %v3798 = vlaneseq
  %v3799 = vshrl.u32 %v3798, 7
  %v3800 = vsub.s32 0, %v3799
  %v3801 = vrot.slane %v3796, %v3800
  %v3807 = vunpack.c.l.b16 %v3792
  %v3808 = vunpack.c.l.b16 %v3793
  %v3809 = vunpack.c.l.b16 %v3794
  %v3810 = vunpack.c.l.b16 %v3795
  %v3811 = vpack.c.b16 %v3808, %v3807
  %v3812 = vpack.c.b16 %v3810, %v3809
  %3815 = vmatprep.subr.bf16.mxu0 0
  %3816 = vmatpush1.bf16.msra.mxu0 %v3811
  %3817 = vmatprep.subr.bf16.mxu0 0
  %3818 = vmatpush1.bf16.msra.mxu0 %v3812
  %3819 = vmatprep.subr.bf16.mxu0 0
  %3820 = vmatpush1.bf16.msra.mxu0 0
  %3821 = vmatprep.subr.bf16.mxu0 0
  %3822 = vmatpush1.bf16.msra.mxu0 0
  %3823 = vmatprep.subr.bf16.mxu0 0
  %3824 = vmatpush1.bf16.msra.mxu0 0
  %3825 = vmatprep.subr.bf16.mxu0 0
  %3826 = vmatpush1.bf16.msra.mxu0 0
  %3827 = vmatprep.subr.bf16.mxu0 0
  %3828 = vmatpush1.bf16.msra.mxu0 0
  %3829 = vmatprep.subr.bf16.mxu0 0
  %3830 = vmatpush1.bf16.msra.mxu0 0
  %3831 = vmatprep.subr.bf16.mxu0 0
  %3832 = vmatpush1.bf16.msra.mxu0 0
  %3833 = vmatprep.subr.bf16.mxu0 0
  %3834 = vmatpush1.bf16.msra.mxu0 0
  %3835 = vmatprep.subr.bf16.mxu0 0
  %3836 = vmatpush1.bf16.msra.mxu0 0
  %3837 = vmatprep.subr.bf16.mxu0 0
  %3838 = vmatpush1.bf16.msra.mxu0 0
  %3839 = vmatprep.subr.bf16.mxu0 0
  %3840 = vmatpush1.bf16.msra.mxu0 0
  %3841 = vmatprep.subr.bf16.mxu0 0
  %3842 = vmatpush1.bf16.msra.mxu0 0
  %3843 = vmatprep.subr.bf16.mxu0 0
  %3844 = vmatpush1.bf16.msra.mxu0 0
  %3845 = vmatprep.subr.bf16.mxu0 0
  %3846 = vmatpush1.bf16.msra.mxu0 0
  %3847 = vmatprep.mubr.bf16.mxu0 0
  %3848 = vmatmul.mubr.bf16.gmra.mrb[0].mxu0 %v3494
  %v3849 = vpop.f32.mrb[0].mxu0
  %v3850 = vadd.f32 %v3801, %v3849
  %v3851 = vpop.f32.mrb[0].mxu0
  %v3852 = vpop.f32.mrb[0].mxu0
  %v3853 = vadd.f32 %v3801, %v3852
  %v3854 = vpop.f32.mrb[0].mxu0
  %3855 = vdwg.mxu0
  %v3856 = vld [vmem:[%s1570] sm:$0xf]
  %v3857 = vld [vmem:[%s1570 + $0x4] sm:$0xf]
  %v3858 = vld [vmem:[%s1570 + $0x8] sm:$0xf]
  %v3859 = vld [vmem:[%s1570 + $0xc] sm:$0xf]
  %v3860 = vld [vmem:[%s1575] sm:$0x1]
  %v3862 = vlaneseq
  %v3863 = vshrl.u32 %v3862, 7
  %v3864 = vsub.s32 0, %v3863
  %v3865 = vrot.slane %v3860, %v3864
  %v3871 = vunpack.c.l.b16 %v3856
  %v3872 = vunpack.c.l.b16 %v3857
  %v3873 = vunpack.c.l.b16 %v3858
  %v3874 = vunpack.c.l.b16 %v3859
  %v3875 = vpack.c.b16 %v3872, %v3871
  %v3876 = vpack.c.b16 %v3874, %v3873
  %3879 = vmatprep.subr.bf16.mxu0 0
  %3880 = vmatpush1.bf16.msra.mxu0 %v3875
  %3881 = vmatprep.subr.bf16.mxu0 0
  %3882 = vmatpush1.bf16.msra.mxu0 %v3876
  %3883 = vmatprep.subr.bf16.mxu0 0
  %3884 = vmatpush1.bf16.msra.mxu0 0
  %3885 = vmatprep.subr.bf16.mxu0 0
  %3886 = vmatpush1.bf16.msra.mxu0 0
  %3887 = vmatprep.subr.bf16.mxu0 0
  %3888 = vmatpush1.bf16.msra.mxu0 0
  %3889 = vmatprep.subr.bf16.mxu0 0
  %3890 = vmatpush1.bf16.msra.mxu0 0
  %3891 = vmatprep.subr.bf16.mxu0 0
  %3892 = vmatpush1.bf16.msra.mxu0 0
  %3893 = vmatprep.subr.bf16.mxu0 0
  %3894 = vmatpush1.bf16.msra.mxu0 0
  %3895 = vmatprep.subr.bf16.mxu0 0
  %3896 = vmatpush1.bf16.msra.mxu0 0
  %3897 = vmatprep.subr.bf16.mxu0 0
  %3898 = vmatpush1.bf16.msra.mxu0 0
  %3899 = vmatprep.subr.bf16.mxu0 0
  %3900 = vmatpush1.bf16.msra.mxu0 0
  %3901 = vmatprep.subr.bf16.mxu0 0
  %3902 = vmatpush1.bf16.msra.mxu0 0
  %3903 = vmatprep.subr.bf16.mxu0 0
  %3904 = vmatpush1.bf16.msra.mxu0 0
  %3905 = vmatprep.subr.bf16.mxu0 0
  %3906 = vmatpush1.bf16.msra.mxu0 0
  %3907 = vmatprep.subr.bf16.mxu0 0
  %3908 = vmatpush1.bf16.msra.mxu0 0
  %3909 = vmatprep.subr.bf16.mxu0 0
  %3910 = vmatpush1.bf16.msra.mxu0 0
  %3911 = vmatprep.mubr.bf16.mxu0 0
  %3912 = vmatmul.mubr.bf16.gmra.mrb[0].mxu0 %v3494
  %v3913 = vpop.f32.mrb[0].mxu0
  %v3914 = vadd.f32 %v3865, %v3913
  %v3915 = vpop.f32.mrb[0].mxu0
  %v3916 = vpop.f32.mrb[0].mxu0
  %v3917 = vadd.f32 %v3865, %v3916
  %v3918 = vpop.f32.mrb[0].mxu0
  %3919 = vdwg.mxu0
  %v3920 = vld [vmem:[%s1636] sm:$0xf]
  %v3921 = vld [vmem:[%s1636 + $0x4] sm:$0xf]
  %v3922 = vld [vmem:[%s1636 + $0x8] sm:$0xf]
  %v3923 = vld [vmem:[%s1636 + $0xc] sm:$0xf]
  %v3924 = vld [vmem:[%s1641] sm:$0x1]
  %v3926 = vlaneseq
  %v3927 = vshrl.u32 %v3926, 7
  %v3928 = vsub.s32 0, %v3927
  %v3929 = vrot.slane %v3924, %v3928
  %v3935 = vunpack.c.l.b16 %v3920
  %v3936 = vunpack.c.l.b16 %v3921
  %v3937 = vunpack.c.l.b16 %v3922
  %v3938 = vunpack.c.l.b16 %v3923
  %v3939 = vpack.c.b16 %v3936, %v3935
  %v3940 = vpack.c.b16 %v3938, %v3937
  %3943 = vmatprep.subr.bf16.mxu0 0
  %3944 = vmatpush1.bf16.msra.mxu0 %v3939
  %3945 = vmatprep.subr.bf16.mxu0 0
  %3946 = vmatpush1.bf16.msra.mxu0 %v3940
  %3947 = vmatprep.subr.bf16.mxu0 0
  %3948 = vmatpush1.bf16.msra.mxu0 0
  %3949 = vmatprep.subr.bf16.mxu0 0
  %3950 = vmatpush1.bf16.msra.mxu0 0
  %3951 = vmatprep.subr.bf16.mxu0 0
  %3952 = vmatpush1.bf16.msra.mxu0 0
  %3953 = vmatprep.subr.bf16.mxu0 0
  %3954 = vmatpush1.bf16.msra.mxu0 0
  %3955 = vmatprep.subr.bf16.mxu0 0
  %3956 = vmatpush1.bf16.msra.mxu0 0
  %3957 = vmatprep.subr.bf16.mxu0 0
  %3958 = vmatpush1.bf16.msra.mxu0 0
  %3959 = vmatprep.subr.bf16.mxu0 0
  %3960 = vmatpush1.bf16.msra.mxu0 0
  %3961 = vmatprep.subr.bf16.mxu0 0
  %3962 = vmatpush1.bf16.msra.mxu0 0
  %3963 = vmatprep.subr.bf16.mxu0 0
  %3964 = vmatpush1.bf16.msra.mxu0 0
  %3965 = vmatprep.subr.bf16.mxu0 0
  %3966 = vmatpush1.bf16.msra.mxu0 0
  %3967 = vmatprep.subr.bf16.mxu0 0
  %3968 = vmatpush1.bf16.msra.mxu0 0
  %3969 = vmatprep.subr.bf16.mxu0 0
  %3970 = vmatpush1.bf16.msra.mxu0 0
  %3971 = vmatprep.subr.bf16.mxu0 0
  %3972 = vmatpush1.bf16.msra.mxu0 0
  %3973 = vmatprep.subr.bf16.mxu0 0
  %3974 = vmatpush1.bf16.msra.mxu0 0
  %3975 = vmatprep.mubr.bf16.mxu0 0
  %3976 = vmatmul.mubr.bf16.gmra.mrb[0].mxu0 %v3494
  %v3977 = vpop.f32.mrb[0].mxu0
  %v3978 = vadd.f32 %v3929, %v3977
  %v3979 = vpop.f32.mrb[0].mxu0
  %v3980 = vpop.f32.mrb[0].mxu0
  %v3981 = vadd.f32 %v3929, %v3980
  %v3982 = vpop.f32.mrb[0].mxu0
  %3983 = vdwg.mxu0
  %v3984 = vpack.c.bf16 %v3853, %v3850
  %v3985 = vpack.c.bf16 %v3917, %v3914
  %v3987 = vsel %vm341, %v3984, 0
  %v3990 = vsel %vm341, %v3985, 0
  %3992 = vmatprep.subr.bf16.mxu0 0
  %3993 = vmatpush1.bf16.xpose.msra.mxu0 %v3990
  %3994 = vmatprep.subr.bf16.mxu0 0
  %3995 = vmatpush1.bf16.xpose.msra.mxu0 0
  %3996 = vmatprep.subr.bf16.mxu0 0
  %3997 = vmatpush1.bf16.xpose.msra.mxu0 0
  %3998 = vmatprep.subr.bf16.mxu0 0
  %3999 = vmatpush1.bf16.xpose.msra.mxu0 0
  %4000 = vmatprep.subr.bf16.mxu0 0
  %4001 = vmatpush1.bf16.xpose.msra.mxu0 0
  %4002 = vmatprep.subr.bf16.mxu0 0
  %4003 = vmatpush1.bf16.xpose.msra.mxu0 0
  %4004 = vmatprep.subr.bf16.mxu0 0
  %4005 = vmatpush1.bf16.xpose.msra.mxu0 0
  %4006 = vmatprep.subr.bf16.mxu0 0
  %4007 = vmatpush1.bf16.xpose.msra.mxu0 0
  %4008 = vmatprep.subr.bf16.mxu0 0
  %4009 = vmatpush1.bf16.xpose.msra.mxu0 0
  %4010 = vmatprep.subr.bf16.mxu0 0
  %4011 = vmatpush1.bf16.xpose.msra.mxu0 0
  %4012 = vmatprep.subr.bf16.mxu0 0
  %4013 = vmatpush1.bf16.xpose.msra.mxu0 0
  %4014 = vmatprep.subr.bf16.mxu0 0
  %4015 = vmatpush1.bf16.xpose.msra.mxu0 0
  %4016 = vmatprep.subr.bf16.mxu0 0
  %4017 = vmatpush1.bf16.xpose.msra.mxu0 0
  %4018 = vmatprep.subr.bf16.mxu0 0
  %4019 = vmatpush1.bf16.xpose.msra.mxu0 0
  %4020 = vmatprep.subr.bf16.mxu0 0
  %4021 = vmatpush1.bf16.xpose.msra.mxu0 0
  %4022 = vmatprep.subr.bf16.mxu0 0
  %4023 = vmatpush1.bf16.xpose.msra.mxu0 0
  %4024 = vmatprep.mubr.bf16.mxu0 0
  %4025 = vmatmul.mubr.bf16.gmra.mrb[0].mxu0 %v3987
  %v4026 = vpop.f32.mrb[0].mxu0
  %v4027 = vadd.f32 0.0, %v4026
  %v4028 = vpop.f32.mrb[0].mxu0
  %v4029 = vpop.f32.mrb[0].mxu0
  %v4030 = vadd.f32 0.0, %v4029
  %v4031 = vpop.f32.mrb[0].mxu0
  %4032 = vdwg.mxu0
  %v4033 = vmul.f32 %v4027, 0.25
  %v4034 = vmul.f32 %v4030, 0.25
  %v4035 = vadd.f32 %v4033, %v2701
  %v4036 = vadd.f32 %v4034, %v2701
  %v4037 = vsel %vm399, %v4035, -inf
  %4038 = vmax.xlane.f32.xlu0 %v4037
  %v4039 = vpop.xlane.xlu0 %4038
  %v4040 = vsel %vm403, %v4036, -inf
  %4041 = vmax.xlane.f32.xlu0 %v4040
  %v4042 = vpop.xlane.xlu0 %4041
  %v4043 = vsub.f32 %v4035, %v4039
  %v4044 = vsub.f32 %v4036, %v4042
  %v4045 = vmul.f32 %v4043, 1.442695
  %v4046 = vpow.pop %v4045
  %v4047 = vmul.f32 %v4044, 1.442695
  %v4048 = vpow.pop %v4047
  %v4049 = vsel %vm399, %v4046, 0.0
  %4050 = vadd.xlane.f32.xlu0 %v4049
  %v4051 = vpop.xlane.xlu0 %4050
  %v4052 = vsel %vm403, %v4048, 0.0
  %4053 = vadd.xlane.f32.xlu0 %v4052
  %v4054 = vpop.xlane.xlu0 %4053
  %v4055 = vrcp.pop %v4051
  %v4056 = vmul.f32 %v4046, %v4055
  %v4057 = vrcp.pop %v4054
  %v4058 = vmul.f32 %v4048, %v4057
  %v4059 = vpack.c.bf16 %v4058, %v4056
  %v4060 = vpack.c.bf16 %v3981, %v3978
  %v4062 = vsel %vm399, %v4059, 0
  %v4065 = vsel %vm428, %v4060, 0
  %4067 = vmatprep.subr.bf16.mxu0 0
  %4068 = vmatpush1.bf16.msra.mxu0 %v4065
  %4069 = vmatprep.subr.bf16.mxu0 0
  %4070 = vmatpush1.bf16.msra.mxu0 0
  %4071 = vmatprep.subr.bf16.mxu0 0
  %4072 = vmatpush1.bf16.msra.mxu0 0
  %4073 = vmatprep.subr.bf16.mxu0 0
  %4074 = vmatpush1.bf16.msra.mxu0 0
  %4075 = vmatprep.subr.bf16.mxu0 0
  %4076 = vmatpush1.bf16.msra.mxu0 0
  %4077 = vmatprep.subr.bf16.mxu0 0
  %4078 = vmatpush1.bf16.msra.mxu0 0
  %4079 = vmatprep.subr.bf16.mxu0 0
  %4080 = vmatpush1.bf16.msra.mxu0 0
  %4081 = vmatprep.subr.bf16.mxu0 0
  %4082 = vmatpush1.bf16.msra.mxu0 0
  %4083 = vmatprep.subr.bf16.mxu0 0
  %4084 = vmatpush1.bf16.msra.mxu0 0
  %4085 = vmatprep.subr.bf16.mxu0 0
  %4086 = vmatpush1.bf16.msra.mxu0 0
  %4087 = vmatprep.subr.bf16.mxu0 0
  %4088 = vmatpush1.bf16.msra.mxu0 0
  %4089 = vmatprep.subr.bf16.mxu0 0
  %4090 = vmatpush1.bf16.msra.mxu0 0
  %4091 = vmatprep.subr.bf16.mxu0 0
  %4092 = vmatpush1.bf16.msra.mxu0 0
  %4093 = vmatprep.subr.bf16.mxu0 0
  %4094 = vmatpush1.bf16.msra.mxu0 0
  %4095 = vmatprep.subr.bf16.mxu0 0
  %4096 = vmatpush1.bf16.msra.mxu0 0
  %4097 = vmatprep.subr.bf16.mxu0 0
  %4098 = vmatpush1.bf16.msra.mxu0 0
  %4099 = vmatprep.mubr.bf16.mxu0 0
  %4100 = vmatmul.mubr.bf16.gmra.mrb[0].mxu0 %v4062
  %v4101 = vpop.f32.mrb[0].mxu0
  %v4102 = vadd.f32 0.0, %v4101
  %v4103 = vpop.f32.mrb[0].mxu0
  %v4104 = vpop.f32.mrb[0].mxu0
  %v4105 = vadd.f32 0.0, %v4104
  %v4106 = vpop.f32.mrb[0].mxu0
  %4107 = vdwg.mxu0
  %v4108 = vld [vmem:[%s1826] sm:$0xf]
  %v4109 = vld [vmem:[%s1826 + $0x4] sm:$0xf]
  %v4110 = vpack.c.bf16 %v4105, %v4102
  %v4113 = vunpack.c.l.b16 %v4108
  %v4114 = vunpack.c.l.b16 %v4109
  %v4115 = vpack.c.b16 %v4114, %v4113
  %v4118 = vsel %vm341, %v4110, 0
  %4120 = vmatprep.subr.bf16.mxu0 0
  %4121 = vmatpush1.bf16.msra.mxu0 %v4115
  %4122 = vmatprep.subr.bf16.mxu0 0
  %4123 = vmatpush1.bf16.msra.mxu0 0
  %4124 = vmatprep.subr.bf16.mxu0 0
  %4125 = vmatpush1.bf16.msra.mxu0 0
  %4126 = vmatprep.subr.bf16.mxu0 0
  %4127 = vmatpush1.bf16.msra.mxu0 0
  %4128 = vmatprep.subr.bf16.mxu0 0
  %4129 = vmatpush1.bf16.msra.mxu0 0
  %4130 = vmatprep.subr.bf16.mxu0 0
  %4131 = vmatpush1.bf16.msra.mxu0 0
  %4132 = vmatprep.subr.bf16.mxu0 0
  %4133 = vmatpush1.bf16.msra.mxu0 0
  %4134 = vmatprep.subr.bf16.mxu0 0
  %4135 = vmatpush1.bf16.msra.mxu0 0
  %4136 = vmatprep.subr.bf16.mxu0 0
  %4137 = vmatpush1.bf16.msra.mxu0 0
  %4138 = vmatprep.subr.bf16.mxu0 0
  %4139 = vmatpush1.bf16.msra.mxu0 0
  %4140 = vmatprep.subr.bf16.mxu0 0
  %4141 = vmatpush1.bf16.msra.mxu0 0
  %4142 = vmatprep.subr.bf16.mxu0 0
  %4143 = vmatpush1.bf16.msra.mxu0 0
  %4144 = vmatprep.subr.bf16.mxu0 0
  %4145 = vmatpush1.bf16.msra.mxu0 0
  %4146 = vmatprep.subr.bf16.mxu0 0
  %4147 = vmatpush1.bf16.msra.mxu0 0
  %4148 = vmatprep.subr.bf16.mxu0 0
  %4149 = vmatpush1.bf16.msra.mxu0 0
  %4150 = vmatprep.subr.bf16.mxu0 0
  %4151 = vmatpush1.bf16.msra.mxu0 0
  %4152 = vmatprep.mubr.bf16.mxu0 0
  %4153 = vmatmul.mubr.bf16.gmra.mrb[0].mxu0 %v4118
  %v4154 = vpop.f32.mrb[0].mxu0
  %v4155 = vadd.f32 0.0, %v4154
  %v4156 = vpop.f32.mrb[0].mxu0
  %v4157 = vpop.f32.mrb[0].mxu0
  %v4158 = vadd.f32 0.0, %v4157
  %v4159 = vpop.f32.mrb[0].mxu0
  %4160 = vdwg.mxu0
  %v4163 = vunpack.c.l.b16 %v3789
  %v4164 = vunpack.c.l.b16 %v3790
  %v4165 = vpack.c.b16 %v4164, %v4163
  %v4168 = vsel %vm341, %v3791, 0
  %4170 = vmatprep.subr.bf16.mxu0 0
  %4171 = vmatpush1.bf16.msra.mxu0 %v4165
  %4172 = vmatprep.subr.bf16.mxu0 0
  %4173 = vmatpush1.bf16.msra.mxu0 0
  %4174 = vmatprep.subr.bf16.mxu0 0
  %4175 = vmatpush1.bf16.msra.mxu0 0
  %4176 = vmatprep.subr.bf16.mxu0 0
  %4177 = vmatpush1.bf16.msra.mxu0 0
  %4178 = vmatprep.subr.bf16.mxu0 0
  %4179 = vmatpush1.bf16.msra.mxu0 0
  %4180 = vmatprep.subr.bf16.mxu0 0
  %4181 = vmatpush1.bf16.msra.mxu0 0
  %4182 = vmatprep.subr.bf16.mxu0 0
  %4183 = vmatpush1.bf16.msra.mxu0 0
  %4184 = vmatprep.subr.bf16.mxu0 0
  %4185 = vmatpush1.bf16.msra.mxu0 0
  %4186 = vmatprep.subr.bf16.mxu0 0
  %4187 = vmatpush1.bf16.msra.mxu0 0
  %4188 = vmatprep.subr.bf16.mxu0 0
  %4189 = vmatpush1.bf16.msra.mxu0 0
  %4190 = vmatprep.subr.bf16.mxu0 0
  %4191 = vmatpush1.bf16.msra.mxu0 0
  %4192 = vmatprep.subr.bf16.mxu0 0
  %4193 = vmatpush1.bf16.msra.mxu0 0
  %4194 = vmatprep.subr.bf16.mxu0 0
  %4195 = vmatpush1.bf16.msra.mxu0 0
  %4196 = vmatprep.subr.bf16.mxu0 0
  %4197 = vmatpush1.bf16.msra.mxu0 0
  %4198 = vmatprep.subr.bf16.mxu0 0
  %4199 = vmatpush1.bf16.msra.mxu0 0
  %4200 = vmatprep.subr.bf16.mxu0 0
  %4201 = vmatpush1.bf16.msra.mxu0 0
  %4202 = vmatprep.mubr.bf16.mxu0 0
  %4203 = vmatmul.mubr.bf16.gmra.mrb[0].mxu0 %v4168
  %v4204 = vpop.f32.mrb[0].mxu0
  %v4205 = vadd.f32 %v4155, %v4204
  %v4206 = vpop.f32.mrb[0].mxu0
  %v4207 = vpop.f32.mrb[0].mxu0
  %v4208 = vadd.f32 %v4158, %v4207
  %v4209 = vpop.f32.mrb[0].mxu0
  %4210 = vdwg.mxu0
  %v4211 = vadd.f32 %v3467, %v4205
  %v4212 = vadd.f32 %v3468, %v4208
  %v4213 = vld [vmem:[%s1932] sm:$0x1]
  %v4215 = vlaneseq
  %v4216 = vshrl.u32 %v4215, 7
  %v4217 = vsub.s32 0, %v4216
  %v4218 = vrot.slane %v4213, %v4217
  %v4220 = vadd.f32 %v4211, %v4218
  %v4221 = vadd.f32 %v4212, %v4218
  %v4222 = vld [vmem:[%s1942] sm:$0x1]
  %v4223 = vld [vmem:[%s1944] sm:$0x1]
  %v4224 = vsel %vm95, %v4220, 0.0
  %4225 = vadd.xlane.f32.xlu0 %v4224
  %v4226 = vpop.xlane.xlu0 %4225
  %v4227 = vsel %vm99, %v4221, 0.0
  %4228 = vadd.xlane.f32.xlu0 %v4227
  %v4229 = vpop.xlane.xlu0 %4228
  %v4230 = vmul.f32 %v4226, %v103
  %v4231 = vmul.f32 %v4229, %v103
  %v4232 = vsub.f32 %v4220, %v4230
  %v4233 = vsub.f32 %v4221, %v4231
  %v4234 = vmul.f32 %v4232, %v4232
  %v4235 = vmul.f32 %v4233, %v4233
  %v4236 = vsel %vm95, %v4234, 0.0
  %4237 = vadd.xlane.f32.xlu0 %v4236
  %v4238 = vpop.xlane.xlu0 %4237
  %v4239 = vsel %vm99, %v4235, 0.0
  %4240 = vadd.xlane.f32.xlu0 %v4239
  %v4241 = vpop.xlane.xlu0 %4240
  %v4242 = vmul.f32 %v4238, %v103
  %v4243 = vmul.f32 %v4241, %v103
  %v4244 = vadd.f32 %v4242, 1e-05
  %v4245 = vadd.f32 %v4243, 1e-05
  %v4246 = vrsqrt.pop %v4244
  %v4247 = vrsqrt.pop %v4245
  %v4248 = vmul.f32 %v4232, %v4246
  %v4249 = vmul.f32 %v4233, %v4247
  %v4251 = vlaneseq
  %v4252 = vshrl.u32 %v4251, 7
  %v4253 = vsub.s32 0, %v4252
  %v4254 = vrot.slane %v4222, %v4253
  %v4256 = vmul.f32 %v4248, %v4254
  %v4257 = vmul.f32 %v4249, %v4254
  %v4259 = vlaneseq
  %v4260 = vshrl.u32 %v4259, 7
  %v4261 = vsub.s32 0, %v4260
  %v4262 = vrot.slane %v4223, %v4261
  %v4264 = vadd.f32 %v4256, %v4262
  %v4265 = vadd.f32 %v4257, %v4262
  %v4266 = vld [vmem:[%s1988] sm:$0xf]
  %v4267 = vld [vmem:[%s1988 + $0x4] sm:$0xf]
  %v4268 = vld [vmem:[%s1988 + $0x8] sm:$0xf]
  %v4269 = vld [vmem:[%s1988 + $0xc] sm:$0xf]
  %v4270 = vpack.c.bf16 %v4265, %v4264
  %v4271 = vld [vmem:[%s1994] sm:$0x1]
  %v4273 = vlaneseq
  %v4274 = vshrl.u32 %v4273, 7
  %v4275 = vsub.s32 0, %v4274
  %v4276 = vrot.slane %v4271, %v4275
  %v4282 = vunpack.c.l.b16 %v4266
  %v4283 = vunpack.c.l.b16 %v4267
  %v4284 = vunpack.c.l.b16 %v4268
  %v4285 = vunpack.c.l.b16 %v4269
  %v4286 = vpack.c.b16 %v4283, %v4282
  %v4287 = vpack.c.b16 %v4285, %v4284
  %v4291 = vsel %vm95, %v4270, 0
  %4293 = vmatprep.subr.bf16.mxu0 0
  %4294 = vmatpush1.bf16.msra.mxu0 %v4286
  %4295 = vmatprep.subr.bf16.mxu0 0
  %4296 = vmatpush1.bf16.msra.mxu0 %v4287
  %4297 = vmatprep.subr.bf16.mxu0 0
  %4298 = vmatpush1.bf16.msra.mxu0 0
  %4299 = vmatprep.subr.bf16.mxu0 0
  %4300 = vmatpush1.bf16.msra.mxu0 0
  %4301 = vmatprep.subr.bf16.mxu0 0
  %4302 = vmatpush1.bf16.msra.mxu0 0
  %4303 = vmatprep.subr.bf16.mxu0 0
  %4304 = vmatpush1.bf16.msra.mxu0 0
  %4305 = vmatprep.subr.bf16.mxu0 0
  %4306 = vmatpush1.bf16.msra.mxu0 0
  %4307 = vmatprep.subr.bf16.mxu0 0
  %4308 = vmatpush1.bf16.msra.mxu0 0
  %4309 = vmatprep.subr.bf16.mxu0 0
  %4310 = vmatpush1.bf16.msra.mxu0 0
  %4311 = vmatprep.subr.bf16.mxu0 0
  %4312 = vmatpush1.bf16.msra.mxu0 0
  %4313 = vmatprep.subr.bf16.mxu0 0
  %4314 = vmatpush1.bf16.msra.mxu0 0
  %4315 = vmatprep.subr.bf16.mxu0 0
  %4316 = vmatpush1.bf16.msra.mxu0 0
  %4317 = vmatprep.subr.bf16.mxu0 0
  %4318 = vmatpush1.bf16.msra.mxu0 0
  %4319 = vmatprep.subr.bf16.mxu0 0
  %4320 = vmatpush1.bf16.msra.mxu0 0
  %4321 = vmatprep.subr.bf16.mxu0 0
  %4322 = vmatpush1.bf16.msra.mxu0 0
  %4323 = vmatprep.subr.bf16.mxu0 0
  %4324 = vmatpush1.bf16.msra.mxu0 0
  %4325 = vmatprep.mubr.bf16.mxu0 0
  %4326 = vmatmul.mubr.bf16.gmra.mrb[0].mxu0 %v4291
  %v4327 = vpop.f32.mrb[0].mxu0
  %v4328 = vadd.f32 %v4276, %v4327
  %v4329 = vpop.f32.mrb[0].mxu0
  %v4330 = vpop.f32.mrb[0].mxu0
  %v4331 = vadd.f32 %v4276, %v4330
  %v4332 = vpop.f32.mrb[0].mxu0
  %4333 = vdwg.mxu0
  %v4334 = vmul.f32 %v4328, %v4328
  %v4335 = vmul.f32 %v4331, %v4331
  %v4336 = vmul.f32 %v4328, %v4334
  %v4337 = vmul.f32 %v4331, %v4335
  %v4338 = vmul.f32 %v4336, 0.044715
  %v4339 = vmul.f32 %v4337, 0.044715
  %v4340 = vadd.f32 %v4328, %v4338
  %v4341 = vadd.f32 %v4331, %v4339
  %v4342 = vmul.f32 %v4340, 0.7978846
  %v4343 = vmul.f32 %v4341, 0.7978846
  %v4344 = vtanh.pop %v4342
  %v4345 = vtanh.pop %v4343
  %v4346 = vadd.f32 %v4344, 1.0
  %v4347 = vadd.f32 %v4345, 1.0
  %v4348 = vmul.f32 %v4346, 0.5
  %v4349 = vmul.f32 %v4347, 0.5
  %v4350 = vmul.f32 %v4328, %v4348
  %v4351 = vmul.f32 %v4331, %v4349
  %v4352 = vld [vmem:[%s2076] sm:$0xf]
  %v4353 = vld [vmem:[%s2076 + $0x4] sm:$0xf]
  %v4354 = vld [vmem:[%s2076 + $0x8] sm:$0xf]
  %v4355 = vld [vmem:[%s2076 + $0xc] sm:$0xf]
  %v4356 = vld [vmem:[%s2076 + $0x10] sm:$0xf]
  %v4357 = vld [vmem:[%s2076 + $0x14] sm:$0xf]
  %v4358 = vld [vmem:[%s2076 + $0x18] sm:$0xf]
  %v4359 = vld [vmem:[%s2076 + $0x1c] sm:$0xf]
  %v4360 = vpack.c.bf16 %v4351, %v4350
  %v4361 = vld [vmem:[%s2086] sm:$0x1]
  %v4363 = vlaneseq
  %v4364 = vshrl.u32 %v4363, 7
  %v4365 = vsub.s32 0, %v4364
  %v4366 = vrot.slane %v4361, %v4365
  %v4376 = vunpack.c.l.b16 %v4352
  %v4377 = vunpack.c.l.b16 %v4353
  %v4378 = vunpack.c.l.b16 %v4354
  %v4379 = vunpack.c.l.b16 %v4355
  %v4380 = vunpack.c.l.b16 %v4356
  %v4381 = vunpack.c.l.b16 %v4357
  %v4382 = vunpack.c.l.b16 %v4358
  %v4383 = vunpack.c.l.b16 %v4359
  %v4384 = vpack.c.b16 %v4377, %v4376
  %v4385 = vpack.c.b16 %v4379, %v4378
  %v4386 = vpack.c.b16 %v4381, %v4380
  %v4387 = vpack.c.b16 %v4383, %v4382
  %v4393 = vsel %vm1083, %v4360, 0
  %4395 = vmatprep.subr.bf16.mxu0 0
  %4396 = vmatpush1.bf16.msra.mxu0 %v4384
  %4397 = vmatprep.subr.bf16.mxu0 0
  %4398 = vmatpush1.bf16.msra.mxu0 %v4385
  %4399 = vmatprep.subr.bf16.mxu0 0
  %4400 = vmatpush1.bf16.msra.mxu0 %v4386
  %4401 = vmatprep.subr.bf16.mxu0 0
  %4402 = vmatpush1.bf16.msra.mxu0 %v4387
  %4403 = vmatprep.subr.bf16.mxu0 0
  %4404 = vmatpush1.bf16.msra.mxu0 0
  %4405 = vmatprep.subr.bf16.mxu0 0
  %4406 = vmatpush1.bf16.msra.mxu0 0
  %4407 = vmatprep.subr.bf16.mxu0 0
  %4408 = vmatpush1.bf16.msra.mxu0 0
  %4409 = vmatprep.subr.bf16.mxu0 0
  %4410 = vmatpush1.bf16.msra.mxu0 0
  %4411 = vmatprep.subr.bf16.mxu0 0
  %4412 = vmatpush1.bf16.msra.mxu0 0
  %4413 = vmatprep.subr.bf16.mxu0 0
  %4414 = vmatpush1.bf16.msra.mxu0 0
  %4415 = vmatprep.subr.bf16.mxu0 0
  %4416 = vmatpush1.bf16.msra.mxu0 0
  %4417 = vmatprep.subr.bf16.mxu0 0
  %4418 = vmatpush1.bf16.msra.mxu0 0
  %4419 = vmatprep.subr.bf16.mxu0 0
  %4420 = vmatpush1.bf16.msra.mxu0 0
  %4421 = vmatprep.subr.bf16.mxu0 0
  %4422 = vmatpush1.bf16.msra.mxu0 0
  %4423 = vmatprep.subr.bf16.mxu0 0
  %4424 = vmatpush1.bf16.msra.mxu0 0
  %4425 = vmatprep.subr.bf16.mxu0 0
  %4426 = vmatpush1.bf16.msra.mxu0 0
  %4427 = vmatprep.mubr.bf16.mxu0 0
  %4428 = vmatmul.mubr.bf16.gmra.mrb[0].mxu0 %v4393
  %v4429 = vpop.f32.mrb[0].mxu0
  %v4430 = vadd.f32 %v4366, %v4429
  %v4431 = vpop.f32.mrb[0].mxu0
  %v4432 = vpop.f32.mrb[0].mxu0
  %v4433 = vadd.f32 %v4366, %v4432
  %v4434 = vpop.f32.mrb[0].mxu0
  %4435 = vdwg.mxu0
  %v4436 = vadd.f32 %v4264, %v4430
  %v4437 = vadd.f32 %v4265, %v4433
  %v4438 = vld [vmem:[%s2164] sm:$0x1]
  %v4439 = vld [vmem:[%s2166] sm:$0x1]
  %v4440 = vsel %vm95, %v4436, 0.0
  %4441 = vadd.xlane.f32.xlu0 %v4440
  %v4442 = vpop.xlane.xlu0 %4441
  %v4443 = vsel %vm99, %v4437, 0.0
  %4444 = vadd.xlane.f32.xlu0 %v4443
  %v4445 = vpop.xlane.xlu0 %4444
  %v4446 = vmul.f32 %v4442, %v103
  %v4447 = vmul.f32 %v4445, %v103
  %v4448 = vsub.f32 %v4436, %v4446
  %v4449 = vsub.f32 %v4437, %v4447
  %v4450 = vmul.f32 %v4448, %v4448
  %v4451 = vmul.f32 %v4449, %v4449
  %v4452 = vsel %vm95, %v4450, 0.0
  %4453 = vadd.xlane.f32.xlu0 %v4452
  %v4454 = vpop.xlane.xlu0 %4453
  %v4455 = vsel %vm99, %v4451, 0.0
  %4456 = vadd.xlane.f32.xlu0 %v4455
  %v4457 = vpop.xlane.xlu0 %4456
  %v4458 = vmul.f32 %v4454, %v103
  %v4459 = vmul.f32 %v4457, %v103
  %v4460 = vadd.f32 %v4458, 1e-05
  %v4461 = vadd.f32 %v4459, 1e-05
  %v4462 = vrsqrt.pop %v4460
  %v4463 = vrsqrt.pop %v4461
  %v4464 = vmul.f32 %v4448, %v4462
  %v4465 = vmul.f32 %v4449, %v4463
  %v4467 = vlaneseq
  %v4468 = vshrl.u32 %v4467, 7
  %v4469 = vsub.s32 0, %v4468
  %v4470 = vrot.slane %v4438, %v4469
  %v4472 = vmul.f32 %v4464, %v4470
  %v4473 = vmul.f32 %v4465, %v4470
  %v4475 = vlaneseq
  %v4476 = vshrl.u32 %v4475, 7
  %v4477 = vsub.s32 0, %v4476
  %v4478 = vrot.slane %v4439, %v4477
  %v4480 = vadd.f32 %v4472, %v4478
  %v4481 = vadd.f32 %v4473, %v4478
  %v4482 = vld [vmem:[%s21] sm:$0xf]
  %v4483 = vld [vmem:[%s21 + $0x4] sm:$0xf]
  %v4484 = vld [vmem:[%s21 + $0x8] sm:$0xf]
  %v4485 = vld [vmem:[%s21 + $0xc] sm:$0xf]
  %v4486 = vpack.c.bf16 %v4481, %v4480
  %v4487 = vld [vmem:[%s22] sm:$0x1]
  %v4489 = vlaneseq
  %v4490 = vshrl.u32 %v4489, 7
  %v4491 = vsub.s32 0, %v4490
  %v4492 = vrot.slane %v4487, %v4491
  %v4498 = vunpack.c.l.b16 %v4482
  %v4499 = vunpack.c.l.b16 %v4483
  %v4500 = vunpack.c.l.b16 %v4484
  %v4501 = vunpack.c.l.b16 %v4485
  %v4502 = vpack.c.b16 %v4499, %v4498
  %v4503 = vpack.c.b16 %v4501, %v4500
  %v4507 = vsel %vm95, %v4486, 0
  %4509 = vmatprep.subr.bf16.mxu0 0
  %4510 = vmatpush1.bf16.msra.mxu0 %v4502
  %4511 = vmatprep.subr.bf16.mxu0 0
  %4512 = vmatpush1.bf16.msra.mxu0 %v4503
  %4513 = vmatprep.subr.bf16.mxu0 0
  %4514 = vmatpush1.bf16.msra.mxu0 0
  %4515 = vmatprep.subr.bf16.mxu0 0
  %4516 = vmatpush1.bf16.msra.mxu0 0
  %4517 = vmatprep.subr.bf16.mxu0 0
  %4518 = vmatpush1.bf16.msra.mxu0 0
  %4519 = vmatprep.subr.bf16.mxu0 0
  %4520 = vmatpush1.bf16.msra.mxu0 0
  %4521 = vmatprep.subr.bf16.mxu0 0
  %4522 = vmatpush1.bf16.msra.mxu0 0
  %4523 = vmatprep.subr.bf16.mxu0 0
  %4524 = vmatpush1.bf16.msra.mxu0 0
  %4525 = vmatprep.subr.bf16.mxu0 0
  %4526 = vmatpush1.bf16.msra.mxu0 0
  %4527 = vmatprep.subr.bf16.mxu0 0
  %4528 = vmatpush1.bf16.msra.mxu0 0
  %4529 = vmatprep.subr.bf16.mxu0 0
  %4530 = vmatpush1.bf16.msra.mxu0 0
  %4531 = vmatprep.subr.bf16.mxu0 0
  %4532 = vmatpush1.bf16.msra.mxu0 0
  %4533 = vmatprep.subr.bf16.mxu0 0
  %4534 = vmatpush1.bf16.msra.mxu0 0
  %4535 = vmatprep.subr.bf16.mxu0 0
  %4536 = vmatpush1.bf16.msra.mxu0 0
  %4537 = vmatprep.subr.bf16.mxu0 0
  %4538 = vmatpush1.bf16.msra.mxu0 0
  %4539 = vmatprep.subr.bf16.mxu0 0
  %4540 = vmatpush1.bf16.msra.mxu0 0
  %4541 = vmatprep.mubr.bf16.mxu0 0
  %4542 = vmatmul.mubr.bf16.gmra.mrb[0].mxu0 %v4507
  %v4543 = vpop.f32.mrb[0].mxu0
  %v4544 = vadd.f32 %v4492, %v4543
  %v4545 = vpop.f32.mrb[0].mxu0
  %v4546 = vpop.f32.mrb[0].mxu0
  %v4547 = vadd.f32 %v4492, %v4546
  %v4548 = vpop.f32.mrb[0].mxu0
  %4549 = vdwg.mxu0
  %v4550 = vmul.f32 %v4544, %v4544
  %v4551 = vmul.f32 %v4547, %v4547
  %v4552 = vmul.f32 %v4544, %v4550
  %v4553 = vmul.f32 %v4547, %v4551
  %v4554 = vmul.f32 %v4552, 0.044715
  %v4555 = vmul.f32 %v4553, 0.044715
  %v4556 = vadd.f32 %v4544, %v4554
  %v4557 = vadd.f32 %v4547, %v4555
  %v4558 = vmul.f32 %v4556, 0.7978846
  %v4559 = vmul.f32 %v4557, 0.7978846
  %v4560 = vtanh.pop %v4558
  %v4561 = vtanh.pop %v4559
  %v4562 = vadd.f32 %v4560, 1.0
  %v4563 = vadd.f32 %v4561, 1.0
  %v4564 = vmul.f32 %v4562, 0.5
  %v4565 = vmul.f32 %v4563, 0.5
  %v4566 = vmul.f32 %v4544, %v4564
  %v4567 = vmul.f32 %v4547, %v4565
  %v4568 = vld [vmem:[%s23] sm:$0x1]
  %v4569 = vld [vmem:[%s24] sm:$0x1]
  %v4570 = vsel %vm95, %v4566, 0.0
  %4571 = vadd.xlane.f32.xlu0 %v4570
  %v4572 = vpop.xlane.xlu0 %4571
  %v4573 = vsel %vm99, %v4567, 0.0
  %4574 = vadd.xlane.f32.xlu0 %v4573
  %v4575 = vpop.xlane.xlu0 %4574
  %v4576 = vmul.f32 %v4572, %v103
  %v4577 = vmul.f32 %v4575, %v103
  %v4578 = vsub.f32 %v4566, %v4576
  %v4579 = vsub.f32 %v4567, %v4577
  %v4580 = vmul.f32 %v4578, %v4578
  %v4581 = vmul.f32 %v4579, %v4579
  %v4582 = vsel %vm95, %v4580, 0.0
  %4583 = vadd.xlane.f32.xlu0 %v4582
  %v4584 = vpop.xlane.xlu0 %4583
  %v4585 = vsel %vm99, %v4581, 0.0
  %4586 = vadd.xlane.f32.xlu0 %v4585
  %v4587 = vpop.xlane.xlu0 %4586
  %v4588 = vmul.f32 %v4584, %v103
  %v4589 = vmul.f32 %v4587, %v103
  %v4590 = vadd.f32 %v4588, 1e-05
  %v4591 = vadd.f32 %v4589, 1e-05
  %v4592 = vrsqrt.pop %v4590
  %v4593 = vrsqrt.pop %v4591
  %v4594 = vmul.f32 %v4578, %v4592
  %v4595 = vmul.f32 %v4579, %v4593
  %v4597 = vlaneseq
  %v4598 = vshrl.u32 %v4597, 7
  %v4599 = vsub.s32 0, %v4598
  %v4600 = vrot.slane %v4568, %v4599
  %v4602 = vmul.f32 %v4594, %v4600
  %v4603 = vmul.f32 %v4595, %v4600
  %v4605 = vlaneseq
  %v4606 = vshrl.u32 %v4605, 7
  %v4607 = vsub.s32 0, %v4606
  %v4608 = vrot.slane %v4569, %v4607
  %v4610 = vadd.f32 %v4602, %v4608
  %v4611 = vadd.f32 %v4603, %v4608
  %v4612 = vld [vmem:[%s25] sm:$0xf]
  %v4613 = vld [vmem:[%s25 + $0x4] sm:$0xf]
  %v4614 = vld [vmem:[%s25 + $0x8] sm:$0xf]
  %v4615 = vld [vmem:[%s25 + $0xc] sm:$0xf]
  %v4616 = vpack.c.bf16 %v4611, %v4610
  %v4617 = vld [vmem:[%s26] sm:$0x1]
  %v4619 = vlaneseq
  %v4620 = vshrl.u32 %v4619, 7
  %v4621 = vsub.s32 0, %v4620
  %v4622 = vrot.slane %v4617, %v4621
  %v4628 = vunpack.c.l.b16 %v4612
  %v4629 = vunpack.c.l.b16 %v4613
  %v4630 = vunpack.c.l.b16 %v4614
  %v4631 = vunpack.c.l.b16 %v4615
  %v4632 = vpack.c.b16 %v4629, %v4628
  %v4633 = vpack.c.b16 %v4631, %v4630
  %v4637 = vsel %vm95, %v4616, 0
  %4639 = vmatprep.subr.bf16.mxu0 0
  %4640 = vmatpush1.bf16.msra.mxu0 %v4632
  %4641 = vmatprep.subr.bf16.mxu0 0
  %4642 = vmatpush1.bf16.msra.mxu0 %v4633
  %4643 = vmatprep.subr.bf16.mxu0 0
  %4644 = vmatpush1.bf16.msra.mxu0 0
  %4645 = vmatprep.subr.bf16.mxu0 0
  %4646 = vmatpush1.bf16.msra.mxu0 0
  %4647 = vmatprep.subr.bf16.mxu0 0
  %4648 = vmatpush1.bf16.msra.mxu0 0
  %4649 = vmatprep.subr.bf16.mxu0 0
  %4650 = vmatpush1.bf16.msra.mxu0 0
  %4651 = vmatprep.subr.bf16.mxu0 0
  %4652 = vmatpush1.bf16.msra.mxu0 0
  %4653 = vmatprep.subr.bf16.mxu0 0
  %4654 = vmatpush1.bf16.msra.mxu0 0
  %4655 = vmatprep.subr.bf16.mxu0 0
  %4656 = vmatpush1.bf16.msra.mxu0 0
  %4657 = vmatprep.subr.bf16.mxu0 0
  %4658 = vmatpush1.bf16.msra.mxu0 0
  %4659 = vmatprep.subr.bf16.mxu0 0
  %4660 = vmatpush1.bf16.msra.mxu0 0
  %4661 = vmatprep.subr.bf16.mxu0 0
  %4662 = vmatpush1.bf16.msra.mxu0 0
  %4663 = vmatprep.subr.bf16.mxu0 0
  %4664 = vmatpush1.bf16.msra.mxu0 0
  %4665 = vmatprep.subr.bf16.mxu0 0
  %4666 = vmatpush1.bf16.msra.mxu0 0
  %4667 = vmatprep.subr.bf16.mxu0 0
  %4668 = vmatpush1.bf16.msra.mxu0 0
  %4669 = vmatprep.subr.bf16.mxu0 0
  %4670 = vmatpush1.bf16.msra.mxu0 0
  %4671 = vmatprep.mubr.bf16.mxu0 0
  %4672 = vmatmul.mubr.bf16.gmra.mrb[0].mxu0 %v4637
  %v4673 = vpop.f32.mrb[0].mxu0
  %v4674 = vadd.f32 %v4622, %v4673
  %v4675 = vpop.f32.mrb[0].mxu0
  %v4676 = vpop.f32.mrb[0].mxu0
  %v4677 = vadd.f32 %v4622, %v4676
  %v4678 = vpop.f32.mrb[0].mxu0
  %4679 = vdwg.mxu0
  %s4680 = scalar_lea.vmem %s27, 16
  %4681 = vst.msk [vmem:[%s4680] sm:$0xff] %vm1083, %v4674
  %4682 = vst.msk [vmem:[%s4680 + $0x8] sm:$0x3] %vm2409, %v4677
  // Predicated region
  $region110: #{teasel_forward.3} parent=0 // pred_check
    _
  $region111: #{teasel_forward.3} parent=0 // pred_check_branch
    %4684 = sbr.rel (0) target = $region113
  $region112: #{teasel_forward.3} parent=0 // pred_region
    _
  $region113: #{teasel_forward.3} parent=0 // pred_fallthru
    _
  // Predicated region
  $region114: #{teasel_forward.3} parent=0 // pred_check
    _
  $region115: #{teasel_forward.3} parent=0 // pred_check_branch
    %4686 = sbr.rel (0) target = $region117
  $region116: #{teasel_forward.3} parent=0 // pred_region
    _
  $region117: #{teasel_forward.3} parent=0 // pred_fallthru
    _

</llo_original>
